<compile_context>
chip_gen: v5e
topology: v5e:2x2
jax: 0.10.0
libtpu: 0.0.40
codegen_flags: <defaults>
</compile_context>

<pallas_src>
import numpy as np
import jax
import jax.numpy as jnp
from jax import lax
from jax.experimental import pallas as pl
from jax.experimental.pallas import tpu as pltpu

EPS_BN = 1e-3  # ultralytics Conv uses BatchNorm2d(eps=1e-3)

# Matmul operand dtype.  Set to jnp.bfloat16 at production channel widths
# (feeds the bf16 MXU on v5e/v6e/v7x and halves HBM/VMEM bytes); f32 is kept
# here so the tight numerical check against the f32 reference passes at 2e-3.
MATMUL_DTYPE = jnp.float32


def _pick_row_tile(m, target=512):
    """Largest row-tile (multiple of 8, divisor of m) <= target; make sure the
    grid has >=2 steps when possible so megacore / pipelining kick in."""
    if m <= target:
        if m % 2 == 0 and (m // 2) % 8 == 0:
            return m // 2
        return m
    t = target
    while t >= 8:
        if m % t == 0:
            return t
        t -= 8
    return m


# ----------------------------- Pallas kernels -----------------------------

def _pw_bn_silu_kernel(x_ref, w_ref, b_ref, o_ref):
    """1x1 conv (+ folded BN) + SiLU on a row tile: (TM, cin) @ (cin, cout)."""
    y = jnp.dot(x_ref[...], w_ref[...], preferred_element_type=jnp.float32)
    y = y + b_ref[...]
    o_ref[...] = (y * jax.nn.sigmoid(y)).astype(o_ref.dtype)


def pw_conv_bn_silu(x2d, w, b, tm):
    m, cin = x2d.shape
    cout = w.shape[1]
    cost = pl.CostEstimate(
        flops=2 * m * cin * cout,
        transcendentals=m * cout,
        bytes_accessed=4 * (m * cin + m * cout + cin * cout + cout),
    )
    return pl.pallas_call(
        _pw_bn_silu_kernel,
        out_shape=jax.ShapeDtypeStruct((m, cout), MATMUL_DTYPE),
        grid=(m // tm,),
        in_specs=[
            pl.BlockSpec((tm, cin), lambda i: (i, 0)),
            pl.BlockSpec((cin, cout), lambda i: (0, 0)),
            pl.BlockSpec((1, cout), lambda i: (0, 0)),
        ],
        out_specs=pl.BlockSpec((tm, cout), lambda i: (i, 0)),
        compiler_params=pltpu.CompilerParams(dimension_semantics=("parallel",)),
        cost_estimate=cost,
    )(x2d, w, b.reshape(1, cout))


def _bottleneck_kernel(H, W, c_):
    """Fused Bottleneck(c_, c_, shortcut=True, k=((1,1),(3,3)), e=1.0):
       h = SiLU(BN(1x1 conv(x)))  (stays in VMEM)
       y = SiLU(BN(3x3 conv(h)))  via zero-halo scratch + one deep-K im2col dot
       out = x + y
    """
    def kernel(x_ref, w1_ref, b1_ref, w2_ref, b2_ref, o_ref, hpad_ref):
        x = x_ref[0]                                           # (H, W, c_)
        # --- 1x1 conv + SiLU, kept in VMEM ---
        h = jnp.dot(x.reshape(H * W, c_), w1_ref[...],
                    preferred_element_type=jnp.float32) + b1_ref[...]
        h = h * jax.nn.sigmoid(h)
        # --- build zero halo in VMEM scratch (no jnp.pad / HBM round trip) ---
        hpad_ref[...] = jnp.zeros_like(hpad_ref)
        hpad_ref[1:H + 1, 1:W + 1, :] = h.astype(hpad_ref.dtype).reshape(H, W, c_)
        # --- 3x3 conv as ONE deep-K matmul: im2col (H*W, 9*c_) @ (9*c_, c_) ---
        patches = [hpad_ref[dh:dh + H, dw:dw + W, :].reshape(H * W, c_)
                   for dh in range(3) for dw in range(3)]
        col = jnp.concatenate(patches, axis=-1)                # (H*W, 9*c_)
        y = jnp.dot(col, w2_ref[...],
                    preferred_element_type=jnp.float32) + b2_ref[...]
        y = y * jax.nn.sigmoid(y)
        # --- residual ---
        o_ref[0] = (y.reshape(H, W, c_) + x.astype(jnp.float32)).astype(o_ref.dtype)
    return kernel


def bottleneck_fused(t_nhwc, w1, b1, w2col, b2):
    N, H, W, c_ = t_nhwc.shape
    cost = pl.CostEstimate(
        flops=2 * N * H * W * c_ * c_ + 2 * N * H * W * 9 * c_ * c_,
        transcendentals=2 * N * H * W * c_,
        bytes_accessed=4 * (2 * N * H * W * c_ + 10 * c_ * c_ + 2 * c_),
    )
    return pl.pallas_call(
        _bottleneck_kernel(H, W, c_),
        out_shape=jax.ShapeDtypeStruct((N, H, W, c_), MATMUL_DTYPE),
        grid=(N,),
        in_specs=[
            pl.BlockSpec((1, H, W, c_), lambda n: (n, 0, 0, 0)),
            pl.BlockSpec((c_, c_), lambda n: (0, 0)),
            pl.BlockSpec((1, c_), lambda n: (0, 0)),
            pl.BlockSpec((9 * c_, c_), lambda n: (0, 0)),
            pl.BlockSpec((1, c_), lambda n: (0, 0)),
        ],
        out_specs=pl.BlockSpec((1, H, W, c_), lambda n: (n, 0, 0, 0)),
        scratch_shapes=[pltpu.VMEM((H + 2, W + 2, c_), MATMUL_DTYPE)],
        compiler_params=pltpu.CompilerParams(dimension_semantics=("parallel",)),
        cost_estimate=cost,
    )(t_nhwc, w1, b1.reshape(1, c_), w2col, b2.reshape(1, c_))


def _csp_final_kernel(t_ref, x_ref, w2_ref, b2_ref, w3_ref, b3_ref, o_ref):
    """Fused cv2 + cv3:  out = cv3(cat(y1, cv2(x)))  on a row tile.
    y2 never leaves VMEM; the concat feeds one deep-K (2*c_) matmul."""
    y2 = jnp.dot(x_ref[...], w2_ref[...],
                 preferred_element_type=jnp.float32) + b2_ref[...]
    y2 = y2 * jax.nn.sigmoid(y2)
    z = jnp.concatenate([t_ref[...].astype(jnp.float32), y2], axis=-1)
    y = jnp.dot(z.astype(w3_ref.dtype), w3_ref[...],
                preferred_element_type=jnp.float32) + b3_ref[...]
    o_ref[...] = (y * jax.nn.sigmoid(y)).astype(o_ref.dtype)


def csp_final(t2d, x2d, w2, b2, w3, b3, tm):
    m, c_ = t2d.shape
    c1 = x2d.shape[1]
    c2o = w3.shape[1]
    cost = pl.CostEstimate(
        flops=2 * m * c1 * c_ + 2 * m * 2 * c_ * c2o,
        transcendentals=m * (c_ + c2o),
        bytes_accessed=4 * (m * c_ + m * c1 + m * c2o
                            + c1 * c_ + 2 * c_ * c2o + c_ + c2o),
    )
    return pl.pallas_call(
        _csp_final_kernel,
        out_shape=jax.ShapeDtypeStruct((m, c2o), jnp.float32),
        grid=(m // tm,),
        in_specs=[
            pl.BlockSpec((tm, c_), lambda i: (i, 0)),
            pl.BlockSpec((tm, c1), lambda i: (i, 0)),
            pl.BlockSpec((c1, c_), lambda i: (0, 0)),
            pl.BlockSpec((1, c_), lambda i: (0, 0)),
            pl.BlockSpec((2 * c_, c2o), lambda i: (0, 0)),
            pl.BlockSpec((1, c2o), lambda i: (0, 0)),
        ],
        out_specs=pl.BlockSpec((tm, c2o), lambda i: (i, 0)),
        compiler_params=pltpu.CompilerParams(dimension_semantics=("parallel",)),
        cost_estimate=cost,
    )(t2d, x2d, w2, b2.reshape(1, c_), w3, b3.reshape(1, c2o))


# --------------------------- parameters (synthetic) ---------------------------

def init_bn(key, c):
    k1, k2, k3, k4 = jax.random.split(key, 4)
    return dict(
        gamma=jax.random.uniform(k1, (c,), jnp.float32, 0.5, 1.5),
        beta=0.1 * jax.random.normal(k2, (c,), jnp.float32),
        mean=0.1 * jax.random.normal(k3, (c,), jnp.float32),
        var=jax.random.uniform(k4, (c,), jnp.float32, 0.5, 1.5),
    )


def init_conv(key, cin, cout, k):
    return jax.random.normal(key, (k, k, cin, cout), jnp.float32) / np.sqrt(cin * k * k)


def init_conv_bn(key, cin, cout, k):
    kw, kb = jax.random.split(key)
    return dict(w=init_conv(kw, cin, cout, k), bn=init_bn(kb, cout))


def init_params(key, c1, c2, n, e=0.5):
    c_ = int(c2 * e)
    keys = jax.random.split(key, 3 + n)
    m = []
    for i in range(n):
        ka, kb = jax.random.split(keys[3 + i])
        m.append(dict(cv1=init_conv_bn(ka, c_, c_, 1),    # Bottleneck k=(1,1)
                      cv2=init_conv_bn(kb, c_, c_, 3)))   # Bottleneck k=(3,3)
    return dict(
        cv1=init_conv_bn(keys[0], c1, c_, 1),
        cv2=init_conv_bn(keys[1], c1, c_, 1),
        cv3=init_conv_bn(keys[2], 2 * c_, c2, 1),
        m=m,
    )


def fold_conv_bn(cb, eps=EPS_BN):
    bn = cb['bn']
    scale = bn['gamma'] / jnp.sqrt(bn['var'] + eps)
    return cb['w'] * scale, bn['beta'] - bn['mean'] * scale


# ------------------------------ forward passes ------------------------------

def c3_pallas(x_nchw, raw):
    x = jnp.transpose(x_nchw, (0, 2, 3, 1)).astype(jnp.float32)  # -> NHWC
    N, H, W, c1 = x.shape
    M = N * H * W
    tm = _pick_row_tile(M)

    # fold BN into conv weights; cast matmul operands
    w1, b1 = fold_conv_bn(raw['cv1'])     # (1,1,c1,c_)
    c_ = w1.shape[-1]
    w2, b2 = fold_conv_bn(raw['cv2'])     # (1,1,c1,c_)
    w3, b3 = fold_conv_bn(raw['cv3'])     # (1,1,2c_,c2)
    c2o = w3.shape[-1]

    x2d = x.reshape(M, c1).astype(MATMUL_DTYPE)

    # cv1: 1x1 Conv+BN+SiLU (row-tiled)
    t2d = pw_conv_bn_silu(x2d, w1.reshape(c1, c_).astype(MATMUL_DTYPE), b1, tm)
    t = t2d.reshape(N, H, W, c_)

    # m: n fused Bottlenecks (1x1 -> 3x3 -> residual), one pallas_call each
    for bp in raw['m']:
        wa, ba = fold_conv_bn(bp['cv1'])                  # (1,1,c_,c_)
        wb, bb = fold_conv_bn(bp['cv2'])                  # (3,3,c_,c_)
        t = bottleneck_fused(
            t,
            wa.reshape(c_, c_).astype(MATMUL_DTYPE), ba,
            wb.reshape(9 * c_, c_).astype(MATMUL_DTYPE), bb,
        )

    # fused cv2 + cv3: out = cv3(cat(y1, cv2(x)))   (concat never hits HBM)
    out2d = csp_final(
        t.reshape(M, c_), x2d,
        w2.reshape(c1, c_).astype(MATMUL_DTYPE), b2,
        w3.reshape(2 * c_, c2o).astype(MATMUL_DTYPE), b3, tm,
    )
    out = out2d.reshape(N, H, W, c2o)
    return jnp.transpose(out, (0, 3, 1, 2))               # -> NCHW


# Pure-JAX reference (unfolded BN) for correctness checking.
def _silu(x):
    return x * jax.nn.sigmoid(x)


def _conv_nhwc(x, w_hwio):
    return lax.conv_general_dilated(x, w_hwio, (1, 1), 'SAME',
                                    dimension_numbers=('NHWC', 'HWIO', 'NHWC'))


def _bn_apply(x, bn, eps=EPS_BN):
    return (x - bn['mean']) / jnp.sqrt(bn['var'] + eps) * bn['gamma'] + bn['beta']


def _conv_bn_silu_ref(x, cb):
    return _silu(_bn_apply(_conv_nhwc(x, cb['w']), cb['bn']))


def c3_ref(x_nchw, raw):
    x = jnp.transpose(x_nchw, (0, 2, 3, 1)).astype(jnp.float32)
    t = _conv_bn_silu_ref(x, raw['cv1'])
    for bp in raw['m']:
        t = t + _conv_bn_silu_ref(_conv_bn_silu_ref(t, bp['cv1']), bp['cv2'])
    y2 = _conv_bn_silu_ref(x, raw['cv2'])
    out = _conv_bn_silu_ref(jnp.concatenate([t, y2], axis=-1), raw['cv3'])
    return jnp.transpose(out, (0, 3, 1, 2))


# ----------------------------------- main -----------------------------------

if __name__ == "__main__":
    N, c1, c2, H, W = 2, 16, 32, 16, 16     # c_ = int(c2*0.5) = 16
    n_bottlenecks = 2

    key = jax.random.PRNGKey(0)
    kx, kp = jax.random.split(key)
    x = jax.random.normal(kx, (N, c1, H, W), jnp.float32)   # NCHW, like PyTorch
    raw = init_params(kp, c1, c2, n_bottlenecks)

    out = jax.block_until_ready(jax.jit(c3_pallas)(x, raw))
    ref = jax.block_until_ready(jax.jit(c3_ref)(x, raw))

    assert out.shape == (N, c2, H, W), out.shape
    np.testing.assert_allclose(np.asarray(out), np.asarray(ref),
                               atol=2e-3, rtol=2e-3)
    print("KERNEL_OK")
</pallas_src>

<mosaic_0001>
module attributes {stable_mosaic.version = 11 : i64} {
  func.func @_pw_bn_silu_kernel(%arg0: i32, %arg1: memref<256x16xf32, #tpu.memory_space<vmem>>, %arg2: memref<16x16xf32, #tpu.memory_space<vmem>>, %arg3: memref<1x16xf32, #tpu.memory_space<vmem>>, %arg4: memref<256x16xf32, #tpu.memory_space<vmem>>) attributes {dimension_semantics = [#tpu.dimension_semantics<parallel>], iteration_bounds = array<i64: 2>, scalar_prefetch = 0 : i64, scratch_operands = 0 : i64, tpu.core_type = #tpu.core_type<tc>, window_params = [{transform_indices = @transform_0, window_bounds = array<i64: 256, 16>}, {pipeline_mode = #tpu.pipeline_mode<synchronous>, transform_indices = @transform_1, window_bounds = array<i64: 16, 16>}, {pipeline_mode = #tpu.pipeline_mode<synchronous>, transform_indices = @transform_2, window_bounds = array<i64: 1, 16>}, {transform_indices = @transform_3, window_bounds = array<i64: 256, 16>}]} {
    %c0 = arith.constant 0 : index
    %c0_0 = arith.constant 0 : index
    %0 = vector.load %arg1[%c0, %c0_0] : memref<256x16xf32, #tpu.memory_space<vmem>>, vector<256x16xf32>
    %c0_1 = arith.constant 0 : index
    %c0_2 = arith.constant 0 : index
    %1 = vector.load %arg2[%c0_1, %c0_2] : memref<16x16xf32, #tpu.memory_space<vmem>>, vector<16x16xf32>
    %cst = arith.constant dense<0.000000e+00> : vector<256x16xf32>
    %2 = tpu.matmul %0, %1, %cst {dimension_numbers = #tpu.dot_dimension_numbers<[1], [0], [0], [1], [0, 0, 1, 1], [], []>} : vector<256x16xf32>, vector<16x16xf32>, vector<256x16xf32> -> vector<256x16xf32>
    %c0_3 = arith.constant 0 : index
    %c0_4 = arith.constant 0 : index
    %3 = vector.load %arg3[%c0_3, %c0_4] : memref<1x16xf32, #tpu.memory_space<vmem>>, vector<1x16xf32>
    %4 = vector.broadcast %3 : vector<1x16xf32> to vector<256x16xf32>
    %5 = arith.addf %2, %4 : vector<256x16xf32>
    %6 = arith.negf %5 : vector<256x16xf32>
    %7 = math.exp %6 : vector<256x16xf32>
    %cst_5 = arith.constant 1.000000e+00 : f32
    %8 = vector.broadcast %cst_5 : f32 to vector<256x16xf32>
    %9 = arith.addf %8, %7 : vector<256x16xf32>
    %10 = arith.divf %8, %9 : vector<256x16xf32>
    %11 = arith.mulf %5, %10 : vector<256x16xf32>
    %c0_6 = arith.constant 0 : index
    %c0_7 = arith.constant 0 : index
    %12 = vector.load %arg4[%c0_6, %c0_7] : memref<256x16xf32, #tpu.memory_space<vmem>>, vector<256x16xf32>
    tpu.vector_store %arg4[%c0_6, %c0_7], %11 {strides = array<i32>} : memref<256x16xf32, #tpu.memory_space<vmem>>, vector<256x16xf32>,
    return
  }
  func.func @transform_0(%arg0: i32) -> (i32, i32) {
    %c0_i32 = arith.constant 0 : i32
    %c0_i32_0 = arith.constant 0 : i32
    return %arg0, %c0_i32 : i32, i32
  }
  func.func @transform_1(%arg0: i32) -> (i32, i32) {
    %c0_i32 = arith.constant 0 : i32
    %c0_i32_0 = arith.constant 0 : i32
    %c0_i32_1 = arith.constant 0 : i32
    return %c0_i32, %c0_i32_0 : i32, i32
  }
  func.func @transform_2(%arg0: i32) -> (i32, i32) {
    %c0_i32 = arith.constant 0 : i32
    %c0_i32_0 = arith.constant 0 : i32
    %c0_i32_1 = arith.constant 0 : i32
    return %c0_i32, %c0_i32_0 : i32, i32
  }
  func.func @transform_3(%arg0: i32) -> (i32, i32) {
    %c0_i32 = arith.constant 0 : i32
    %c0_i32_0 = arith.constant 0 : i32
    return %arg0, %c0_i32 : i32, i32
  }
}

module attributes {stable_mosaic.version = 11 : i64} {
  func.func @_csp_final_kernel(%arg0: i32, %arg1: memref<256x16xf32, #tpu.memory_space<vmem>>, %arg2: memref<256x16xf32, #tpu.memory_space<vmem>>, %arg3: memref<16x16xf32, #tpu.memory_space<vmem>>, %arg4: memref<1x16xf32, #tpu.memory_space<vmem>>, %arg5: memref<32x32xf32, #tpu.memory_space<vmem>>, %arg6: memref<1x32xf32, #tpu.memory_space<vmem>>, %arg7: memref<256x32xf32, #tpu.memory_space<vmem>>) attributes {dimension_semantics = [#tpu.dimension_semantics<parallel>], iteration_bounds = array<i64: 2>, scalar_prefetch = 0 : i64, scratch_operands = 0 : i64, tpu.core_type = #tpu.core_type<tc>, window_params = [{transform_indices = @transform_0, window_bounds = array<i64: 256, 16>}, {transform_indices = @transform_1, window_bounds = array<i64: 256, 16>}, {pipeline_mode = #tpu.pipeline_mode<synchronous>, transform_indices = @transform_2, window_bounds = array<i64: 16, 16>}, {pipeline_mode = #tpu.pipeline_mode<synchronous>, transform_indices = @transform_3, window_bounds = array<i64: 1, 16>}, {pipeline_mode = #tpu.pipeline_mode<synchronous>, transform_indices = @transform_4, window_bounds = array<i64: 32, 32>}, {pipeline_mode = #tpu.pipeline_mode<synchronous>, transform_indices = @transform_5, window_bounds = array<i64: 1, 32>}, {transform_indices = @transform_6, window_bounds = array<i64: 256, 32>}]} {
    %c0 = arith.constant 0 : index
    %c0_0 = arith.constant 0 : index
    %0 = vector.load %arg2[%c0, %c0_0] : memref<256x16xf32, #tpu.memory_space<vmem>>, vector<256x16xf32>
    %c0_1 = arith.constant 0 : index
    %c0_2 = arith.constant 0 : index
    %1 = vector.load %arg3[%c0_1, %c0_2] : memref<16x16xf32, #tpu.memory_space<vmem>>, vector<16x16xf32>
    %cst = arith.constant dense<0.000000e+00> : vector<256x16xf32>
    %2 = tpu.matmul %0, %1, %cst {dimension_numbers = #tpu.dot_dimension_numbers<[1], [0], [0], [1], [0, 0, 1, 1], [], []>} : vector<256x16xf32>, vector<16x16xf32>, vector<256x16xf32> -> vector<256x16xf32>
    %c0_3 = arith.constant 0 : index
    %c0_4 = arith.constant 0 : index
    %3 = vector.load %arg4[%c0_3, %c0_4] : memref<1x16xf32, #tpu.memory_space<vmem>>, vector<1x16xf32>
    %4 = vector.broadcast %3 : vector<1x16xf32> to vector<256x16xf32>
    %5 = arith.addf %2, %4 : vector<256x16xf32>
    %6 = arith.negf %5 : vector<256x16xf32>
    %7 = math.exp %6 : vector<256x16xf32>
    %cst_5 = arith.constant 1.000000e+00 : f32
    %8 = vector.broadcast %cst_5 : f32 to vector<256x16xf32>
    %9 = arith.addf %8, %7 : vector<256x16xf32>
    %10 = arith.divf %8, %9 : vector<256x16xf32>
    %11 = arith.mulf %5, %10 : vector<256x16xf32>
    %c0_6 = arith.constant 0 : index
    %c0_7 = arith.constant 0 : index
    %12 = vector.load %arg1[%c0_6, %c0_7] : memref<256x16xf32, #tpu.memory_space<vmem>>, vector<256x16xf32>
    %13 = tpu.concatenate %12, %11 in 1 : vector<256x16xf32>, vector<256x16xf32> -> vector<256x32xf32>
    %c0_8 = arith.constant 0 : index
    %c0_9 = arith.constant 0 : index
    %14 = vector.load %arg5[%c0_8, %c0_9] : memref<32x32xf32, #tpu.memory_space<vmem>>, vector<32x32xf32>
    %cst_10 = arith.constant dense<0.000000e+00> : vector<256x32xf32>
    %15 = tpu.matmul %13, %14, %cst_10 {dimension_numbers = #tpu.dot_dimension_numbers<[1], [0], [0], [1], [0, 0, 1, 1], [], []>} : vector<256x32xf32>, vector<32x32xf32>, vector<256x32xf32> -> vector<256x32xf32>
    %c0_11 = arith.constant 0 : index
    %c0_12 = arith.constant 0 : index
    %16 = vector.load %arg6[%c0_11, %c0_12] : memref<1x32xf32, #tpu.memory_space<vmem>>, vector<1x32xf32>
    %17 = vector.broadcast %16 : vector<1x32xf32> to vector<256x32xf32>
    %18 = arith.addf %15, %17 : vector<256x32xf32>
    %19 = arith.negf %18 : vector<256x32xf32>
    %20 = math.exp %19 : vector<256x32xf32>
    %cst_13 = arith.constant 1.000000e+00 : f32
    %21 = vector.broadcast %cst_13 : f32 to vector<256x32xf32>
    %22 = arith.addf %21, %20 : vector<256x32xf32>
    %23 = arith.divf %21, %22 : vector<256x32xf32>
    %24 = arith.mulf %18, %23 : vector<256x32xf32>
    %c0_14 = arith.constant 0 : index
    %c0_15 = arith.constant 0 : index
    %25 = vector.load %arg7[%c0_14, %c0_15] : memref<256x32xf32, #tpu.memory_space<vmem>>, vector<256x32xf32>
    tpu.vector_store %arg7[%c0_14, %c0_15], %24 {strides = array<i32>} : memref<256x32xf32, #tpu.memory_space<vmem>>, vector<256x32xf32>,
    return
  }
  func.func @transform_0(%arg0: i32) -> (i32, i32) {
    %c0_i32 = arith.constant 0 : i32
    %c0_i32_0 = arith.constant 0 : i32
    return %arg0, %c0_i32 : i32, i32
  }
  func.func @transform_1(%arg0: i32) -> (i32, i32) {
    %c0_i32 = arith.constant 0 : i32
    %c0_i32_0 = arith.constant 0 : i32
    return %arg0, %c0_i32 : i32, i32
  }
  func.func @transform_2(%arg0: i32) -> (i32, i32) {
    %c0_i32 = arith.constant 0 : i32
    %c0_i32_0 = arith.constant 0 : i32
    %c0_i32_1 = arith.constant 0 : i32
    return %c0_i32, %c0_i32_0 : i32, i32
  }
  func.func @transform_3(%arg0: i32) -> (i32, i32) {
    %c0_i32 = arith.constant 0 : i32
    %c0_i32_0 = arith.constant 0 : i32
    %c0_i32_1 = arith.constant 0 : i32
    return %c0_i32, %c0_i32_0 : i32, i32
  }
  func.func @transform_4(%arg0: i32) -> (i32, i32) {
    %c0_i32 = arith.constant 0 : i32
    %c0_i32_0 = arith.constant 0 : i32
    %c0_i32_1 = arith.constant 0 : i32
    return %c0_i32, %c0_i32_0 : i32, i32
  }
  func.func @transform_5(%arg0: i32) -> (i32, i32) {
    %c0_i32 = arith.constant 0 : i32
    %c0_i32_0 = arith.constant 0 : i32
    %c0_i32_1 = arith.constant 0 : i32
    return %c0_i32, %c0_i32_0 : i32, i32
  }
  func.func @transform_6(%arg0: i32) -> (i32, i32) {
    %c0_i32 = arith.constant 0 : i32
    %c0_i32_0 = arith.constant 0 : i32
    return %arg0, %c0_i32 : i32, i32
  }
}

module attributes {stable_mosaic.version = 11 : i64} {
  func.func @kernel(%arg0: i32, %arg1: memref<1x16x16x16xf32, #tpu.memory_space<vmem>>, %arg2: memref<16x16xf32, #tpu.memory_space<vmem>>, %arg3: memref<1x16xf32, #tpu.memory_space<vmem>>, %arg4: memref<144x16xf32, #tpu.memory_space<vmem>>, %arg5: memref<1x16xf32, #tpu.memory_space<vmem>>, %arg6: memref<1x16x16x16xf32, #tpu.memory_space<vmem>>, %arg7: memref<18x18x16xf32, #tpu.memory_space<vmem>>) attributes {dimension_semantics = [#tpu.dimension_semantics<parallel>], iteration_bounds = array<i64: 2>, scalar_prefetch = 0 : i64, scratch_operands = 1 : i64, tpu.core_type = #tpu.core_type<tc>, window_params = [{transform_indices = @transform_0, window_bounds = array<i64: 1, 16, 16, 16>}, {pipeline_mode = #tpu.pipeline_mode<synchronous>, transform_indices = @transform_1, window_bounds = array<i64: 16, 16>}, {pipeline_mode = #tpu.pipeline_mode<synchronous>, transform_indices = @transform_2, window_bounds = array<i64: 1, 16>}, {pipeline_mode = #tpu.pipeline_mode<synchronous>, transform_indices = @transform_3, window_bounds = array<i64: 144, 16>}, {pipeline_mode = #tpu.pipeline_mode<synchronous>, transform_indices = @transform_4, window_bounds = array<i64: 1, 16>}, {transform_indices = @transform_5, window_bounds = array<i64: 1, 16, 16, 16>}]} {
    %c0 = arith.constant 0 : index
    %c0_0 = arith.constant 0 : index
    %c0_1 = arith.constant 0 : index
    %c0_2 = arith.constant 0 : index
    %0 = vector.load %arg1[%c0, %c0_0, %c0_1, %c0_2] : memref<1x16x16x16xf32, #tpu.memory_space<vmem>>, vector<1x16x16x16xf32>
    %1 = vector.shape_cast %0 : vector<1x16x16x16xf32> to vector<16x16x16xf32>
    %2 = vector.shape_cast %1 : vector<16x16x16xf32> to vector<256x16xf32>
    %c0_3 = arith.constant 0 : index
    %c0_4 = arith.constant 0 : index
    %3 = vector.load %arg2[%c0_3, %c0_4] : memref<16x16xf32, #tpu.memory_space<vmem>>, vector<16x16xf32>
    %cst = arith.constant dense<0.000000e+00> : vector<256x16xf32>
    %4 = tpu.matmul %2, %3, %cst {dimension_numbers = #tpu.dot_dimension_numbers<[1], [0], [0], [1], [0, 0, 1, 1], [], []>} : vector<256x16xf32>, vector<16x16xf32>, vector<256x16xf32> -> vector<256x16xf32>
    %c0_5 = arith.constant 0 : index
    %c0_6 = arith.constant 0 : index
    %5 = vector.load %arg3[%c0_5, %c0_6] : memref<1x16xf32, #tpu.memory_space<vmem>>, vector<1x16xf32>
    %6 = vector.broadcast %5 : vector<1x16xf32> to vector<256x16xf32>
    %7 = arith.addf %4, %6 : vector<256x16xf32>
    %8 = arith.negf %7 : vector<256x16xf32>
    %9 = math.exp %8 : vector<256x16xf32>
    %cst_7 = arith.constant 1.000000e+00 : f32
    %10 = vector.broadcast %cst_7 : f32 to vector<256x16xf32>
    %11 = arith.addf %10, %9 : vector<256x16xf32>
    %12 = arith.divf %10, %11 : vector<256x16xf32>
    %13 = arith.mulf %7, %12 : vector<256x16xf32>
    %cst_8 = arith.constant 0.000000e+00 : f32
    %14 = vector.broadcast %cst_8 : f32 to vector<18x18x16xf32>
    %c0_9 = arith.constant 0 : index
    %c0_10 = arith.constant 0 : index
    %c0_11 = arith.constant 0 : index
    %15 = vector.load %arg7[%c0_9, %c0_10, %c0_11] : memref<18x18x16xf32, #tpu.memory_space<vmem>>, vector<18x18x16xf32>
    tpu.vector_store %arg7[%c0_9, %c0_10, %c0_11], %14 {strides = array<i32>} : memref<18x18x16xf32, #tpu.memory_space<vmem>>, vector<18x18x16xf32>,
    %16 = vector.shape_cast %13 : vector<256x16xf32> to vector<16x16x16xf32>
    %c1 = arith.constant 1 : index
    %c1_12 = arith.constant 1 : index
    %c0_13 = arith.constant 0 : index
    %17 = vector.load %arg7[%c1, %c1_12, %c0_13] : memref<18x18x16xf32, #tpu.memory_space<vmem>>, vector<16x16x16xf32>
    tpu.vector_store %arg7[%c1, %c1_12, %c0_13], %16 {strides = array<i32>} : memref<18x18x16xf32, #tpu.memory_space<vmem>>, vector<16x16x16xf32>,
    %c0_14 = arith.constant 0 : index
    %c0_15 = arith.constant 0 : index
    %c0_16 = arith.constant 0 : index
    %18 = vector.load %arg7[%c0_14, %c0_15, %c0_16] : memref<18x18x16xf32, #tpu.memory_space<vmem>>, vector<16x16x16xf32>
    %19 = vector.shape_cast %18 : vector<16x16x16xf32> to vector<256x16xf32>
    %c0_17 = arith.constant 0 : index
    %c1_18 = arith.constant 1 : index
    %c0_19 = arith.constant 0 : index
    %20 = vector.load %arg7[%c0_17, %c1_18, %c0_19] : memref<18x18x16xf32, #tpu.memory_space<vmem>>, vector<16x16x16xf32>
    %21 = vector.shape_cast %20 : vector<16x16x16xf32> to vector<256x16xf32>
    %c0_20 = arith.constant 0 : index
    %c2 = arith.constant 2 : index
    %c0_21 = arith.constant 0 : index
    %22 = vector.load %arg7[%c0_20, %c2, %c0_21] : memref<18x18x16xf32, #tpu.memory_space<vmem>>, vector<16x16x16xf32>
    %23 = vector.shape_cast %22 : vector<16x16x16xf32> to vector<256x16xf32>
    %c1_22 = arith.constant 1 : index
    %c0_23 = arith.constant 0 : index
    %c0_24 = arith.constant 0 : index
    %24 = vector.load %arg7[%c1_22, %c0_23, %c0_24] : memref<18x18x16xf32, #tpu.memory_space<vmem>>, vector<16x16x16xf32>
    %25 = vector.shape_cast %24 : vector<16x16x16xf32> to vector<256x16xf32>
    %c1_25 = arith.constant 1 : index
    %c1_26 = arith.constant 1 : index
    %c0_27 = arith.constant 0 : index
    %26 = vector.load %arg7[%c1_25, %c1_26, %c0_27] : memref<18x18x16xf32, #tpu.memory_space<vmem>>, vector<16x16x16xf32>
    %27 = vector.shape_cast %26 : vector<16x16x16xf32> to vector<256x16xf32>
    %c1_28 = arith.constant 1 : index
    %c2_29 = arith.constant 2 : index
    %c0_30 = arith.constant 0 : index
    %28 = vector.load %arg7[%c1_28, %c2_29, %c0_30] : memref<18x18x16xf32, #tpu.memory_space<vmem>>, vector<16x16x16xf32>
    %29 = vector.shape_cast %28 : vector<16x16x16xf32> to vector<256x16xf32>
    %c2_31 = arith.constant 2 : index
    %c0_32 = arith.constant 0 : index
    %c0_33 = arith.constant 0 : index
    %30 = vector.load %arg7[%c2_31, %c0_32, %c0_33] : memref<18x18x16xf32, #tpu.memory_space<vmem>>, vector<16x16x16xf32>
    %31 = vector.shape_cast %30 : vector<16x16x16xf32> to vector<256x16xf32>
    %c2_34 = arith.constant 2 : index
    %c1_35 = arith.constant 1 : index
    %c0_36 = arith.constant 0 : index
    %32 = vector.load %arg7[%c2_34, %c1_35, %c0_36] : memref<18x18x16xf32, #tpu.memory_space<vmem>>, vector<16x16x16xf32>
    %33 = vector.shape_cast %32 : vector<16x16x16xf32> to vector<256x16xf32>
    %c2_37 = arith.constant 2 : index
    %c2_38 = arith.constant 2 : index
    %c0_39 = arith.constant 0 : index
    %34 = vector.load %arg7[%c2_37, %c2_38, %c0_39] : memref<18x18x16xf32, #tpu.memory_space<vmem>>, vector<16x16x16xf32>
    %35 = vector.shape_cast %34 : vector<16x16x16xf32> to vector<256x16xf32>
    %36 = tpu.concatenate %19, %21, %23, %25, %27, %29, %31, %33, %35 in 1 : vector<256x16xf32>, vector<256x16xf32>, vector<256x16xf32>, vector<256x16xf32>, vector<256x16xf32>, vector<256x16xf32>, vector<256x16xf32>, vector<256x16xf32>, vector<256x16xf32> -> vector<256x144xf32>
    %c0_40 = arith.constant 0 : index
    %c0_41 = arith.constant 0 : index
    %37 = vector.load %arg4[%c0_40, %c0_41] : memref<144x16xf32, #tpu.memory_space<vmem>>, vector<144x16xf32>
    %cst_42 = arith.constant dense<0.000000e+00> : vector<256x16xf32>
    %38 = tpu.matmul %36, %37, %cst_42 {dimension_numbers = #tpu.dot_dimension_numbers<[1], [0], [0], [1], [0, 0, 1, 1], [], []>} : vector<256x144xf32>, vector<144x16xf32>, vector<256x16xf32> -> vector<256x16xf32>
    %c0_43 = arith.constant 0 : index
    %c0_44 = arith.constant 0 : index
    %39 = vector.load %arg5[%c0_43, %c0_44] : memref<1x16xf32, #tpu.memory_space<vmem>>, vector<1x16xf32>
    %40 = vector.broadcast %39 : vector<1x16xf32> to vector<256x16xf32>
    %41 = arith.addf %38, %40 : vector<256x16xf32>
    %42 = arith.negf %41 : vector<256x16xf32>
    %43 = math.exp %42 : vector<256x16xf32>
    %cst_45 = arith.constant 1.000000e+00 : f32
    %44 = vector.broadcast %cst_45 : f32 to vector<256x16xf32>
    %45 = arith.addf %44, %43 : vector<256x16xf32>
    %46 = arith.divf %44, %45 : vector<256x16xf32>
    %47 = arith.mulf %41, %46 : vector<256x16xf32>
    %48 = vector.shape_cast %47 : vector<256x16xf32> to vector<16x16x16xf32>
    %49 = arith.addf %48, %1 : vector<16x16x16xf32>
    %c0_46 = arith.constant 0 : index
    %c0_47 = arith.constant 0 : index
    %c0_48 = arith.constant 0 : index
    %c0_49 = arith.constant 0 : index
    %50 = vector.load %arg6[%c0_46, %c0_47, %c0_48, %c0_49] : memref<1x16x16x16xf32, #tpu.memory_space<vmem>>, vector<1x16x16x16xf32>
    %51 = vector.shape_cast %50 : vector<1x16x16x16xf32> to vector<16x16x16xf32>
    %52 = vector.shape_cast %49 : vector<16x16x16xf32> to vector<1x16x16x16xf32>
    tpu.vector_store %arg6[%c0_46, %c0_47, %c0_48, %c0_49], %52 {strides = array<i32>} : memref<1x16x16x16xf32, #tpu.memory_space<vmem>>, vector<1x16x16x16xf32>,
    return
  }
  func.func @transform_0(%arg0: i32) -> (i32, i32, i32, i32) {
    %c0_i32 = arith.constant 0 : i32
    %c0_i32_0 = arith.constant 0 : i32
    %c0_i32_1 = arith.constant 0 : i32
    %c0_i32_2 = arith.constant 0 : i32
    return %arg0, %c0_i32, %c0_i32_0, %c0_i32_1 : i32, i32, i32, i32
  }
  func.func @transform_1(%arg0: i32) -> (i32, i32) {
    %c0_i32 = arith.constant 0 : i32
    %c0_i32_0 = arith.constant 0 : i32
    %c0_i32_1 = arith.constant 0 : i32
    return %c0_i32, %c0_i32_0 : i32, i32
  }
  func.func @transform_2(%arg0: i32) -> (i32, i32) {
    %c0_i32 = arith.constant 0 : i32
    %c0_i32_0 = arith.constant 0 : i32
    %c0_i32_1 = arith.constant 0 : i32
    return %c0_i32, %c0_i32_0 : i32, i32
  }
  func.func @transform_3(%arg0: i32) -> (i32, i32) {
    %c0_i32 = arith.constant 0 : i32
    %c0_i32_0 = arith.constant 0 : i32
    %c0_i32_1 = arith.constant 0 : i32
    return %c0_i32, %c0_i32_0 : i32, i32
  }
  func.func @transform_4(%arg0: i32) -> (i32, i32) {
    %c0_i32 = arith.constant 0 : i32
    %c0_i32_0 = arith.constant 0 : i32
    %c0_i32_1 = arith.constant 0 : i32
    return %c0_i32, %c0_i32_0 : i32, i32
  }
  func.func @transform_5(%arg0: i32) -> (i32, i32, i32, i32) {
    %c0_i32 = arith.constant 0 : i32
    %c0_i32_0 = arith.constant 0 : i32
    %c0_i32_1 = arith.constant 0 : i32
    %c0_i32_2 = arith.constant 0 : i32
    return %arg0, %c0_i32, %c0_i32_0, %c0_i32_1 : i32, i32, i32, i32
  }
}

</mosaic_0001>

<llo_original>
// kernel: c3_pallas.4
$region0: #{c3_pallas.4}
  #allocation0 [shape = 'u32[]', space=smem, size = 0x4, offset = 0x4, fixed_abs, tag = 'smem constant byte address 0x4 - core index']
  #allocation1 [shape = 'u32[72,128]{1,0:T(1,128)}', space=vmem, size = 0x9000, scoped, tag = 'internal scratch']
  %s0 = inlined_call_operand.vmem [shape: f32[512,16], index: 0, kind: input, shape index: {}]
  %s1 = inlined_call_operand.vmem [shape: f32[16,16], index: 1, kind: input, shape index: {}]
  %s2 = inlined_call_operand.vmem [shape: f32[1,16], index: 2, kind: input, shape index: {}]
  %s3 = inlined_call_operand.vmem [shape: f32[512,16], index: 3, kind: output, shape index: {}]
  %s4 = sld [smem:[#allocation0]]
  $region45: #{c3_pallas.4} parent=0
    _
  %s6 = ssub.s32 1, %s4
  %s7 = scalar_select 0, %s6, %s4
  loop: start=0, step=1, limit=4
  $region2: #{c3_pallas.4} parent=0 // loop_pre_header
    _
  $region3: #{c3_pallas.4} parent=0 // loop_header
    %s9 = sphi 0, %s13
    %p10 = scmp.ge.s32.totalorder %s9, 4
    %s19 = sphi 0, %s21
    %s22 = sphi 0, %s19
    %s23 = sphi 0, %s22
    %s39 = sphi 0, %s23
    %s43 = sphi 0, %s43
    %s45 = sphi 0, %s43
    %s46 = sphi 0, %s45
    %s60 = sphi 0, %s46
    %s64 = sphi 0, %s64
    %s66 = sphi 0, %s64
    %s67 = sphi 0, %s66
    %s81 = sphi 0, %s67
    %s87 = sphi 0, %s89
    %s90 = sphi 0, %s87
    %s91 = sphi 0, %s90
    %s107 = sphi 0, %s91
  $region4: #{c3_pallas.4} parent=0 // loop_header_branch
    %12 = sbr.rel (%p10) target = $region8
  $region5: #{c3_pallas.4} parent=0 // loop_body
    %s14 = ssub.s32 %s9, 1
    %s15 = ssub.s32 %s9, 2
    %s16 = sadd.s32 %s9, 1
    %s17 = ssub.s32 %s9, %s16
    %p18 = scmp.eq.s32.totalorder %s17, 0
    %s20 = sadd.s32 %s19, 1
    %s21 = scalar_select %p18, %s19, %s20
    %p24 = pneg %p18
    %p25 = scmp.eq.s32.totalorder %s9, 1
    %p26 = por %p24, %p25
    %p27 = scmp.ne.s32.totalorder %s19, %s22
    %p28 = scmp.eq.s32.totalorder %s9, 0
    %p29 = por %p27, %p28
    %p30 = scmp.ne.s32.totalorder %s19, %s22
    %p31 = scmp.eq.s32.totalorder %s14, 1
    %p32 = por %p30, %p31
    %p33 = scmp.ne.s32.totalorder %s22, %s23
    %p34 = scmp.eq.s32.totalorder %s14, 0
    %p35 = por %p33, %p34
    %p36 = scmp.ne.s32.totalorder %s22, %s23
    %p37 = scmp.eq.s32.totalorder %s15, 1
    %p38 = por %p36, %p37
    %p40 = scmp.ne.s32.totalorder %s23, %s39
    %p41 = scmp.eq.s32.totalorder %s15, 0
    %p42 = por %p40, %p41
    %s44 = sadd.s32 %s43, 1
    %p47 = scmp.eq.s32.totalorder %s9, 1
    %p48 = scmp.ne.s32.totalorder %s43, %s45
    %p49 = scmp.eq.s32.totalorder %s9, 0
    %p50 = por %p48, %p49
    %p51 = scmp.ne.s32.totalorder %s43, %s45
    %p52 = scmp.eq.s32.totalorder %s14, 1
    %p53 = por %p51, %p52
    %p54 = scmp.ne.s32.totalorder %s45, %s46
    %p55 = scmp.eq.s32.totalorder %s14, 0
    %p56 = por %p54, %p55
    %p57 = scmp.ne.s32.totalorder %s45, %s46
    %p58 = scmp.eq.s32.totalorder %s15, 1
    %p59 = por %p57, %p58
    %p61 = scmp.ne.s32.totalorder %s46, %s60
    %p62 = scmp.eq.s32.totalorder %s15, 0
    %p63 = por %p61, %p62
    %s65 = sadd.s32 %s64, 1
    %p68 = scmp.eq.s32.totalorder %s9, 1
    %p69 = scmp.ne.s32.totalorder %s64, %s66
    %p70 = scmp.eq.s32.totalorder %s9, 0
    %p71 = por %p69, %p70
    %p72 = scmp.ne.s32.totalorder %s64, %s66
    %p73 = scmp.eq.s32.totalorder %s14, 1
    %p74 = por %p72, %p73
    %p75 = scmp.ne.s32.totalorder %s66, %s67
    %p76 = scmp.eq.s32.totalorder %s14, 0
    %p77 = por %p75, %p76
    %p78 = scmp.ne.s32.totalorder %s66, %s67
    %p79 = scmp.eq.s32.totalorder %s15, 1
    %p80 = por %p78, %p79
    %p82 = scmp.ne.s32.totalorder %s67, %s81
    %p83 = scmp.eq.s32.totalorder %s15, 0
    %p84 = por %p82, %p83
    %s85 = ssub.s32 %s9, %s16
    %p86 = scmp.eq.s32.totalorder %s85, 0
    %s88 = sadd.s32 %s87, 1
    %s89 = scalar_select %p86, %s87, %s88
    %p92 = pneg %p86
    %p93 = scmp.eq.s32.totalorder %s9, 1
    %p94 = por %p92, %p93
    %p95 = scmp.ne.s32.totalorder %s87, %s90
    %p96 = scmp.eq.s32.totalorder %s9, 0
    %p97 = por %p95, %p96
    %p98 = scmp.ne.s32.totalorder %s87, %s90
    %p99 = scmp.eq.s32.totalorder %s14, 1
    %p100 = por %p98, %p99
    %p101 = scmp.ne.s32.totalorder %s90, %s91
    %p102 = scmp.eq.s32.totalorder %s14, 0
    %p103 = por %p101, %p102
    %p104 = scmp.ne.s32.totalorder %s90, %s91
    %p105 = scmp.eq.s32.totalorder %s15, 1
    %p106 = por %p104, %p105
    %p108 = scmp.ne.s32.totalorder %s91, %s107
    %p109 = scmp.eq.s32.totalorder %s15, 0
    %p110 = por %p108, %p109
    %p111 = scmp.le.s32.totalorder 1, %s9
    %p112 = scmp.lt.s32.totalorder %s9, 3
    %p113 = pnand %p111, %p112
    %p114 = pneg %p113
    // Predicated region
    $region9: #{c3_pallas.4} parent=5 // pred_check
      _
    $region10: #{c3_pallas.4} parent=5 // pred_check_branch
      %116 = sbr.rel (%p113) target = $region12
    $region11: #{c3_pallas.4} parent=5 // pred_region
      %s117 = ssub.s32 %s9, 1
      // Predicated region
      $region13: #{c3_pallas.4} parent=11 // pred_check
        %p118 = pneg %p56
      $region14: #{c3_pallas.4} parent=11 // pred_check_branch
        %120 = sbr.rel (%p118) target = $region16
      $region15: #{c3_pallas.4} parent=11 // pred_region
        _
      $region16: #{c3_pallas.4} parent=11 // pred_fallthru
        _
      // Predicated region
      $region17: #{c3_pallas.4} parent=11 // pred_check
        %p121 = pneg %p77
      $region18: #{c3_pallas.4} parent=11 // pred_check_branch
        %123 = sbr.rel (%p121) target = $region20
      $region19: #{c3_pallas.4} parent=11 // pred_region
        _
      $region20: #{c3_pallas.4} parent=11 // pred_fallthru
        _
    $region12: #{c3_pallas.4} parent=5 // pred_fallthru
      _
    %p124 = scmp.lt.s32.totalorder %s9, 2
    // Predicated region
    $region21: #{c3_pallas.4} parent=5 // pred_check
      %p125 = pneg %p124
    $region22: #{c3_pallas.4} parent=5 // pred_check_branch
      %127 = sbr.rel (%p125) target = $region24
    $region23: #{c3_pallas.4} parent=5 // pred_region
      // Predicated region
      $region25: #{c3_pallas.4} parent=23 // pred_check
        %p128 = pneg %p29
      $region26: #{c3_pallas.4} parent=23 // pred_check_branch
        %130 = sbr.rel (%p128) target = $region28
      $region27: #{c3_pallas.4} parent=23 // pred_region
        %s131 = smul.u32 32, %s9
        %p132 = scmp.lt.s32.totalorder %s131, 63
        %s133 = scalar_select %p132, %s131, 63
        %s134 = smul.addr %s133, 8
        %s135 = scalar_lea.vmem %s0, %s134
        %s136 = smul.u32 32, %s9
      $region28: #{c3_pallas.4} parent=23 // pred_fallthru
        _
    $region24: #{c3_pallas.4} parent=5 // pred_fallthru
      _
    %p137 = scmp.le.s32.totalorder 1, %s9
    %p138 = scmp.lt.s32.totalorder %s9, 3
    %p139 = pnand %p137, %p138
    %p140 = pneg %p139
    // Predicated region
    $region29: #{c3_pallas.4} parent=5 // pred_check
      _
    $region30: #{c3_pallas.4} parent=5 // pred_check_branch
      %142 = sbr.rel (%p139) target = $region32
    $region31: #{c3_pallas.4} parent=5 // pred_region
      %s143 = ssub.s32 %s9, 1
      %s144 = smul.u32 32, %s14
      %p145 = scmp.lt.s32.totalorder %s144, 63
      %s146 = scalar_select %p145, %s144, 63
      %s147 = smul.addr %s146, 8
      %s148 = scalar_lea.vmem %s0, %s147
      %p149 = pneg %p35
      %p150 = pneg %p32
      %p151 = pneg %p56
      %p152 = pneg %p53
      %p153 = pneg %p77
      %p154 = pneg %p74
      %p155 = pneg %p103
      %p156 = pneg %p100
      %s157 = smul.u32 32, %s14
      %p158 = scmp.lt.s32.totalorder %s157, 63
      %s159 = scalar_select %p158, %s157, 63
      %s160 = smul.addr %s159, 8
      %s161 = scalar_lea.vmem %s3, %s160
      %s162 = smul.u32 32, %s14
      %p163 = scmp.lt.s32.totalorder %s162, 63
      %s164 = scalar_select %p163, %s162, 63
      %s165 = smul.addr %s164, 8
      %s166 = scalar_lea.vmem %s0, %s165
      %s167 = smul.u32 32, %s14
      %s168 = smul.u32 32, %s14
      %p169 = scmp.lt.s32.totalorder %s168, 63
      %s170 = scalar_select %p169, %s168, 63
      %s171 = smul.addr %s170, 8
      %s172 = scalar_lea.vmem %s3, %s171
      %s173 = smul.u32 32, %s14
      %v174 = vld [vmem:[%s166] sm:$0xff]
      %v175 = vld [vmem:[%s166 + $0x8] sm:$0xff]
      %v176 = vld [vmem:[%s166 + $0x10] sm:$0xff]
      %v177 = vld [vmem:[%s166 + $0x18] sm:$0xff]
      %v178 = vld [vmem:[%s166 + $0x20] sm:$0xff]
      %v179 = vld [vmem:[%s166 + $0x28] sm:$0xff]
      %v180 = vld [vmem:[%s166 + $0x30] sm:$0xff]
      %v181 = vld [vmem:[%s166 + $0x38] sm:$0xff]
      %v182 = vld [vmem:[%s166 + $0x40] sm:$0xff]
      %v183 = vld [vmem:[%s166 + $0x48] sm:$0xff]
      %v184 = vld [vmem:[%s166 + $0x50] sm:$0xff]
      %v185 = vld [vmem:[%s166 + $0x58] sm:$0xff]
      %v186 = vld [vmem:[%s166 + $0x60] sm:$0xff]
      %v187 = vld [vmem:[%s166 + $0x68] sm:$0xff]
      %v188 = vld [vmem:[%s166 + $0x70] sm:$0xff]
      %v189 = vld [vmem:[%s166 + $0x78] sm:$0xff]
      %v190 = vld [vmem:[%s166 + $0x80] sm:$0xff]
      %v191 = vld [vmem:[%s166 + $0x88] sm:$0xff]
      %v192 = vld [vmem:[%s166 + $0x90] sm:$0xff]
      %v193 = vld [vmem:[%s166 + $0x98] sm:$0xff]
      %v194 = vld [vmem:[%s166 + $0xa0] sm:$0xff]
      %v195 = vld [vmem:[%s166 + $0xa8] sm:$0xff]
      %v196 = vld [vmem:[%s166 + $0xb0] sm:$0xff]
      %v197 = vld [vmem:[%s166 + $0xb8] sm:$0xff]
      %v198 = vld [vmem:[%s166 + $0xc0] sm:$0xff]
      %v199 = vld [vmem:[%s166 + $0xc8] sm:$0xff]
      %v200 = vld [vmem:[%s166 + $0xd0] sm:$0xff]
      %v201 = vld [vmem:[%s166 + $0xd8] sm:$0xff]
      %v202 = vld [vmem:[%s166 + $0xe0] sm:$0xff]
      %v203 = vld [vmem:[%s166 + $0xe8] sm:$0xff]
      %v204 = vld [vmem:[%s166 + $0xf0] sm:$0xff]
      %v205 = vld [vmem:[%s166 + $0xf8] sm:$0xff]
      %v206 = vld [vmem:[%s1] sm:$0xff]
      %v207 = vld [vmem:[%s1 + $0x8] sm:$0xff]
      %v208 = vld [vmem:[%s2] sm:$0x1]
      %v210 = vperm.slane %v208, 0
      %vm212 = vcmask 130048
      %v214 = vsel %vm212, %v174, 0
      %v217 = vsel %vm212, %v175, 0
      %v220 = vsel %vm212, %v176, 0
      %v223 = vsel %vm212, %v177, 0
      %v226 = vsel %vm212, %v178, 0
      %v229 = vsel %vm212, %v179, 0
      %v232 = vsel %vm212, %v180, 0
      %v235 = vsel %vm212, %v181, 0
      %v238 = vsel %vm212, %v182, 0
      %v241 = vsel %vm212, %v183, 0
      %v244 = vsel %vm212, %v184, 0
      %v247 = vsel %vm212, %v185, 0
      %v250 = vsel %vm212, %v186, 0
      %v253 = vsel %vm212, %v187, 0
      %v256 = vsel %vm212, %v188, 0
      %v259 = vsel %vm212, %v189, 0
      %v262 = vsel %vm212, %v190, 0
      %v265 = vsel %vm212, %v191, 0
      %v268 = vsel %vm212, %v192, 0
      %v271 = vsel %vm212, %v193, 0
      %v274 = vsel %vm212, %v194, 0
      %v277 = vsel %vm212, %v195, 0
      %v280 = vsel %vm212, %v196, 0
      %v283 = vsel %vm212, %v197, 0
      %v286 = vsel %vm212, %v198, 0
      %v289 = vsel %vm212, %v199, 0
      %v292 = vsel %vm212, %v200, 0
      %v295 = vsel %vm212, %v201, 0
      %v298 = vsel %vm212, %v202, 0
      %v301 = vsel %vm212, %v203, 0
      %v304 = vsel %vm212, %v204, 0
      %v307 = vsel %vm212, %v205, 0
      %309 = vmatpush.msra.mxu0 0.0
      %310 = vmatpush.msra.mxu0 0.0
      %311 = vmatpush.msra.mxu0 0.0
      %312 = vmatpush.msra.mxu0 0.0
      %313 = vmatpush.msra.mxu0 0.0
      %314 = vmatpush.msra.mxu0 0.0
      %315 = vmatpush.msra.mxu0 0.0
      %316 = vmatpush.msra.mxu0 0.0
      %317 = vmatpush.msra.mxu0 0.0
      %318 = vmatpush.msra.mxu0 0.0
      %319 = vmatpush.msra.mxu0 0.0
      %320 = vmatpush.msra.mxu0 0.0
      %321 = vmatpush.msra.mxu0 0.0
      %322 = vmatpush.msra.mxu0 0.0
      %323 = vmatpush.msra.mxu0 %v207
      %324 = vmatpush.msra.mxu0 %v206
      %325 = vmatmul.f32.gmra.mxu0 %v214
      %v326 = vpop.f32.mrf.mxu0
      %v327 = vadd.f32 %v210, %v326
      %328 = vmatmul.f32.gmra.mxu0 %v217
      %v329 = vpop.f32.mrf.mxu0
      %v330 = vadd.f32 %v210, %v329
      %331 = vmatmul.f32.gmra.mxu0 %v220
      %v332 = vpop.f32.mrf.mxu0
      %v333 = vadd.f32 %v210, %v332
      %334 = vmatmul.f32.gmra.mxu0 %v223
      %v335 = vpop.f32.mrf.mxu0
      %v336 = vadd.f32 %v210, %v335
      %337 = vmatmul.f32.gmra.mxu0 %v226
      %v338 = vpop.f32.mrf.mxu0
      %v339 = vadd.f32 %v210, %v338
      %340 = vmatmul.f32.gmra.mxu0 %v229
      %v341 = vpop.f32.mrf.mxu0
      %v342 = vadd.f32 %v210, %v341
      %343 = vmatmul.f32.gmra.mxu0 %v232
      %v344 = vpop.f32.mrf.mxu0
      %v345 = vadd.f32 %v210, %v344
      %346 = vmatmul.f32.gmra.mxu0 %v235
      %v347 = vpop.f32.mrf.mxu0
      %v348 = vadd.f32 %v210, %v347
      %349 = vmatmul.f32.gmra.mxu0 %v238
      %v350 = vpop.f32.mrf.mxu0
      %v351 = vadd.f32 %v210, %v350
      %352 = vmatmul.f32.gmra.mxu0 %v241
      %v353 = vpop.f32.mrf.mxu0
      %v354 = vadd.f32 %v210, %v353
      %355 = vmatmul.f32.gmra.mxu0 %v244
      %v356 = vpop.f32.mrf.mxu0
      %v357 = vadd.f32 %v210, %v356
      %358 = vmatmul.f32.gmra.mxu0 %v247
      %v359 = vpop.f32.mrf.mxu0
      %v360 = vadd.f32 %v210, %v359
      %361 = vmatmul.f32.gmra.mxu0 %v250
      %v362 = vpop.f32.mrf.mxu0
      %v363 = vadd.f32 %v210, %v362
      %364 = vmatmul.f32.gmra.mxu0 %v253
      %v365 = vpop.f32.mrf.mxu0
      %v366 = vadd.f32 %v210, %v365
      %367 = vmatmul.f32.gmra.mxu0 %v256
      %v368 = vpop.f32.mrf.mxu0
      %v369 = vadd.f32 %v210, %v368
      %370 = vmatmul.f32.gmra.mxu0 %v259
      %v371 = vpop.f32.mrf.mxu0
      %v372 = vadd.f32 %v210, %v371
      %373 = vmatmul.f32.gmra.mxu0 %v262
      %v374 = vpop.f32.mrf.mxu0
      %v375 = vadd.f32 %v210, %v374
      %376 = vmatmul.f32.gmra.mxu0 %v265
      %v377 = vpop.f32.mrf.mxu0
      %v378 = vadd.f32 %v210, %v377
      %379 = vmatmul.f32.gmra.mxu0 %v268
      %v380 = vpop.f32.mrf.mxu0
      %v381 = vadd.f32 %v210, %v380
      %382 = vmatmul.f32.gmra.mxu0 %v271
      %v383 = vpop.f32.mrf.mxu0
      %v384 = vadd.f32 %v210, %v383
      %385 = vmatmul.f32.gmra.mxu0 %v274
      %v386 = vpop.f32.mrf.mxu0
      %v387 = vadd.f32 %v210, %v386
      %388 = vmatmul.f32.gmra.mxu0 %v277
      %v389 = vpop.f32.mrf.mxu0
      %v390 = vadd.f32 %v210, %v389
      %391 = vmatmul.f32.gmra.mxu0 %v280
      %v392 = vpop.f32.mrf.mxu0
      %v393 = vadd.f32 %v210, %v392
      %394 = vmatmul.f32.gmra.mxu0 %v283
      %v395 = vpop.f32.mrf.mxu0
      %v396 = vadd.f32 %v210, %v395
      %397 = vmatmul.f32.gmra.mxu0 %v286
      %v398 = vpop.f32.mrf.mxu0
      %v399 = vadd.f32 %v210, %v398
      %400 = vmatmul.f32.gmra.mxu0 %v289
      %v401 = vpop.f32.mrf.mxu0
      %v402 = vadd.f32 %v210, %v401
      %403 = vmatmul.f32.gmra.mxu0 %v292
      %v404 = vpop.f32.mrf.mxu0
      %v405 = vadd.f32 %v210, %v404
      %406 = vmatmul.f32.gmra.mxu0 %v295
      %v407 = vpop.f32.mrf.mxu0
      %v408 = vadd.f32 %v210, %v407
      %409 = vmatmul.f32.gmra.mxu0 %v298
      %v410 = vpop.f32.mrf.mxu0
      %v411 = vadd.f32 %v210, %v410
      %412 = vmatmul.f32.gmra.mxu0 %v301
      %v413 = vpop.f32.mrf.mxu0
      %v414 = vadd.f32 %v210, %v413
      %415 = vmatmul.f32.gmra.mxu0 %v304
      %v416 = vpop.f32.mrf.mxu0
      %v417 = vadd.f32 %v210, %v416
      %418 = vmatmul.f32.gmra.mxu0 %v307
      %v419 = vpop.f32.mrf.mxu0
      %v420 = vadd.f32 %v210, %v419
      %421 = vdwg.mxu0
      %v422 = vxor.u32 %v327, 2147483648
      %v423 = vxor.u32 %v330, 2147483648
      %v424 = vxor.u32 %v333, 2147483648
      %v425 = vxor.u32 %v336, 2147483648
      %v426 = vxor.u32 %v339, 2147483648
      %v427 = vxor.u32 %v342, 2147483648
      %v428 = vxor.u32 %v345, 2147483648
      %v429 = vxor.u32 %v348, 2147483648
      %v430 = vxor.u32 %v351, 2147483648
      %v431 = vxor.u32 %v354, 2147483648
      %v432 = vxor.u32 %v357, 2147483648
      %v433 = vxor.u32 %v360, 2147483648
      %v434 = vxor.u32 %v363, 2147483648
      %v435 = vxor.u32 %v366, 2147483648
      %v436 = vxor.u32 %v369, 2147483648
      %v437 = vxor.u32 %v372, 2147483648
      %v438 = vxor.u32 %v375, 2147483648
      %v439 = vxor.u32 %v378, 2147483648
      %v440 = vxor.u32 %v381, 2147483648
      %v441 = vxor.u32 %v384, 2147483648
      %v442 = vxor.u32 %v387, 2147483648
      %v443 = vxor.u32 %v390, 2147483648
      %v444 = vxor.u32 %v393, 2147483648
      %v445 = vxor.u32 %v396, 2147483648
      %v446 = vxor.u32 %v399, 2147483648
      %v447 = vxor.u32 %v402, 2147483648
      %v448 = vxor.u32 %v405, 2147483648
      %v449 = vxor.u32 %v408, 2147483648
      %v450 = vxor.u32 %v411, 2147483648
      %v451 = vxor.u32 %v414, 2147483648
      %v452 = vxor.u32 %v417, 2147483648
      %v453 = vxor.u32 %v420, 2147483648
      %v454 = vmul.f32 %v422, 1.442695
      %v455 = vpow.pop %v454
      %v456 = vmul.f32 %v423, 1.442695
      %v457 = vpow.pop %v456
      %v458 = vmul.f32 %v424, 1.442695
      %v459 = vpow.pop %v458
      %v460 = vmul.f32 %v425, 1.442695
      %v461 = vpow.pop %v460
      %v462 = vmul.f32 %v426, 1.442695
      %v463 = vpow.pop %v462
      %v464 = vmul.f32 %v427, 1.442695
      %v465 = vpow.pop %v464
      %v466 = vmul.f32 %v428, 1.442695
      %v467 = vpow.pop %v466
      %v468 = vmul.f32 %v429, 1.442695
      %v469 = vpow.pop %v468
      %v470 = vmul.f32 %v430, 1.442695
      %v471 = vpow.pop %v470
      %v472 = vmul.f32 %v431, 1.442695
      %v473 = vpow.pop %v472
      %v474 = vmul.f32 %v432, 1.442695
      %v475 = vpow.pop %v474
      %v476 = vmul.f32 %v433, 1.442695
      %v477 = vpow.pop %v476
      %v478 = vmul.f32 %v434, 1.442695
      %v479 = vpow.pop %v478
      %v480 = vmul.f32 %v435, 1.442695
      %v481 = vpow.pop %v480
      %v482 = vmul.f32 %v436, 1.442695
      %v483 = vpow.pop %v482
      %v484 = vmul.f32 %v437, 1.442695
      %v485 = vpow.pop %v484
      %v486 = vmul.f32 %v438, 1.442695
      %v487 = vpow.pop %v486
      %v488 = vmul.f32 %v439, 1.442695
      %v489 = vpow.pop %v488
      %v490 = vmul.f32 %v440, 1.442695
      %v491 = vpow.pop %v490
      %v492 = vmul.f32 %v441, 1.442695
      %v493 = vpow.pop %v492
      %v494 = vmul.f32 %v442, 1.442695
      %v495 = vpow.pop %v494
      %v496 = vmul.f32 %v443, 1.442695
      %v497 = vpow.pop %v496
      %v498 = vmul.f32 %v444, 1.442695
      %v499 = vpow.pop %v498
      %v500 = vmul.f32 %v445, 1.442695
      %v501 = vpow.pop %v500
      %v502 = vmul.f32 %v446, 1.442695
      %v503 = vpow.pop %v502
      %v504 = vmul.f32 %v447, 1.442695
      %v505 = vpow.pop %v504
      %v506 = vmul.f32 %v448, 1.442695
      %v507 = vpow.pop %v506
      %v508 = vmul.f32 %v449, 1.442695
      %v509 = vpow.pop %v508
      %v510 = vmul.f32 %v450, 1.442695
      %v511 = vpow.pop %v510
      %v512 = vmul.f32 %v451, 1.442695
      %v513 = vpow.pop %v512
      %v514 = vmul.f32 %v452, 1.442695
      %v515 = vpow.pop %v514
      %v516 = vmul.f32 %v453, 1.442695
      %v517 = vpow.pop %v516
      %v518 = vadd.f32 %v455, 1.0
      %v519 = vadd.f32 %v457, 1.0
      %v520 = vadd.f32 %v459, 1.0
      %v521 = vadd.f32 %v461, 1.0
      %v522 = vadd.f32 %v463, 1.0
      %v523 = vadd.f32 %v465, 1.0
      %v524 = vadd.f32 %v467, 1.0
      %v525 = vadd.f32 %v469, 1.0
      %v526 = vadd.f32 %v471, 1.0
      %v527 = vadd.f32 %v473, 1.0
      %v528 = vadd.f32 %v475, 1.0
      %v529 = vadd.f32 %v477, 1.0
      %v530 = vadd.f32 %v479, 1.0
      %v531 = vadd.f32 %v481, 1.0
      %v532 = vadd.f32 %v483, 1.0
      %v533 = vadd.f32 %v485, 1.0
      %v534 = vadd.f32 %v487, 1.0
      %v535 = vadd.f32 %v489, 1.0
      %v536 = vadd.f32 %v491, 1.0
      %v537 = vadd.f32 %v493, 1.0
      %v538 = vadd.f32 %v495, 1.0
      %v539 = vadd.f32 %v497, 1.0
      %v540 = vadd.f32 %v499, 1.0
      %v541 = vadd.f32 %v501, 1.0
      %v542 = vadd.f32 %v503, 1.0
      %v543 = vadd.f32 %v505, 1.0
      %v544 = vadd.f32 %v507, 1.0
      %v545 = vadd.f32 %v509, 1.0
      %v546 = vadd.f32 %v511, 1.0
      %v547 = vadd.f32 %v513, 1.0
      %v548 = vadd.f32 %v515, 1.0
      %v549 = vadd.f32 %v517, 1.0
      %v550 = vrcp.pop %v518
      %v551 = vmul.f32 %v518, %v550
      %v552 = vsub.f32 1.0, %v551
      %v553 = vmul.f32 %v550, %v552
      %v554 = vadd.f32 %v550, %v553
      %vm555 = vweird.f32 %v518
      %vm556 = vweird.f32 %v550
      %vm557 = vmor %vm555, %vm556
      %v558 = vsel %vm557, %v550, %v554
      %v559 = vand.u32 2147483647, %v518
      %vm560 = vcmp.eq.f32.partialorder %v559, 8.507059e+37
      %v561 = vand.u32 %v518, 2147483648
      %v562 = vor.u32 1.1754944e-38, %v561
      %v563 = vsel %vm560, %v562, %v558
      %v564 = vmul.f32 1.0, %v563
      %v565 = vrcp.pop %v519
      %v566 = vmul.f32 %v519, %v565
      %v567 = vsub.f32 1.0, %v566
      %v568 = vmul.f32 %v565, %v567
      %v569 = vadd.f32 %v565, %v568
      %vm570 = vweird.f32 %v519
      %vm571 = vweird.f32 %v565
      %vm572 = vmor %vm570, %vm571
      %v573 = vsel %vm572, %v565, %v569
      %v574 = vand.u32 2147483647, %v519
      %vm575 = vcmp.eq.f32.partialorder %v574, 8.507059e+37
      %v576 = vand.u32 %v519, 2147483648
      %v577 = vor.u32 1.1754944e-38, %v576
      %v578 = vsel %vm575, %v577, %v573
      %v579 = vmul.f32 1.0, %v578
      %v580 = vrcp.pop %v520
      %v581 = vmul.f32 %v520, %v580
      %v582 = vsub.f32 1.0, %v581
      %v583 = vmul.f32 %v580, %v582
      %v584 = vadd.f32 %v580, %v583
      %vm585 = vweird.f32 %v520
      %vm586 = vweird.f32 %v580
      %vm587 = vmor %vm585, %vm586
      %v588 = vsel %vm587, %v580, %v584
      %v589 = vand.u32 2147483647, %v520
      %vm590 = vcmp.eq.f32.partialorder %v589, 8.507059e+37
      %v591 = vand.u32 %v520, 2147483648
      %v592 = vor.u32 1.1754944e-38, %v591
      %v593 = vsel %vm590, %v592, %v588
      %v594 = vmul.f32 1.0, %v593
      %v595 = vrcp.pop %v521
      %v596 = vmul.f32 %v521, %v595
      %v597 = vsub.f32 1.0, %v596
      %v598 = vmul.f32 %v595, %v597
      %v599 = vadd.f32 %v595, %v598
      %vm600 = vweird.f32 %v521
      %vm601 = vweird.f32 %v595
      %vm602 = vmor %vm600, %vm601
      %v603 = vsel %vm602, %v595, %v599
      %v604 = vand.u32 2147483647, %v521
      %vm605 = vcmp.eq.f32.partialorder %v604, 8.507059e+37
      %v606 = vand.u32 %v521, 2147483648
      %v607 = vor.u32 1.1754944e-38, %v606
      %v608 = vsel %vm605, %v607, %v603
      %v609 = vmul.f32 1.0, %v608
      %v610 = vrcp.pop %v522
      %v611 = vmul.f32 %v522, %v610
      %v612 = vsub.f32 1.0, %v611
      %v613 = vmul.f32 %v610, %v612
      %v614 = vadd.f32 %v610, %v613
      %vm615 = vweird.f32 %v522
      %vm616 = vweird.f32 %v610
      %vm617 = vmor %vm615, %vm616
      %v618 = vsel %vm617, %v610, %v614
      %v619 = vand.u32 2147483647, %v522
      %vm620 = vcmp.eq.f32.partialorder %v619, 8.507059e+37
      %v621 = vand.u32 %v522, 2147483648
      %v622 = vor.u32 1.1754944e-38, %v621
      %v623 = vsel %vm620, %v622, %v618
      %v624 = vmul.f32 1.0, %v623
      %v625 = vrcp.pop %v523
      %v626 = vmul.f32 %v523, %v625
      %v627 = vsub.f32 1.0, %v626
      %v628 = vmul.f32 %v625, %v627
      %v629 = vadd.f32 %v625, %v628
      %vm630 = vweird.f32 %v523
      %vm631 = vweird.f32 %v625
      %vm632 = vmor %vm630, %vm631
      %v633 = vsel %vm632, %v625, %v629
      %v634 = vand.u32 2147483647, %v523
      %vm635 = vcmp.eq.f32.partialorder %v634, 8.507059e+37
      %v636 = vand.u32 %v523, 2147483648
      %v637 = vor.u32 1.1754944e-38, %v636
      %v638 = vsel %vm635, %v637, %v633
      %v639 = vmul.f32 1.0, %v638
      %v640 = vrcp.pop %v524
      %v641 = vmul.f32 %v524, %v640
      %v642 = vsub.f32 1.0, %v641
      %v643 = vmul.f32 %v640, %v642
      %v644 = vadd.f32 %v640, %v643
      %vm645 = vweird.f32 %v524
      %vm646 = vweird.f32 %v640
      %vm647 = vmor %vm645, %vm646
      %v648 = vsel %vm647, %v640, %v644
      %v649 = vand.u32 2147483647, %v524
      %vm650 = vcmp.eq.f32.partialorder %v649, 8.507059e+37
      %v651 = vand.u32 %v524, 2147483648
      %v652 = vor.u32 1.1754944e-38, %v651
      %v653 = vsel %vm650, %v652, %v648
      %v654 = vmul.f32 1.0, %v653
      %v655 = vrcp.pop %v525
      %v656 = vmul.f32 %v525, %v655
      %v657 = vsub.f32 1.0, %v656
      %v658 = vmul.f32 %v655, %v657
      %v659 = vadd.f32 %v655, %v658
      %vm660 = vweird.f32 %v525
      %vm661 = vweird.f32 %v655
      %vm662 = vmor %vm660, %vm661
      %v663 = vsel %vm662, %v655, %v659
      %v664 = vand.u32 2147483647, %v525
      %vm665 = vcmp.eq.f32.partialorder %v664, 8.507059e+37
      %v666 = vand.u32 %v525, 2147483648
      %v667 = vor.u32 1.1754944e-38, %v666
      %v668 = vsel %vm665, %v667, %v663
      %v669 = vmul.f32 1.0, %v668
      %v670 = vrcp.pop %v526
      %v671 = vmul.f32 %v526, %v670
      %v672 = vsub.f32 1.0, %v671
      %v673 = vmul.f32 %v670, %v672
      %v674 = vadd.f32 %v670, %v673
      %vm675 = vweird.f32 %v526
      %vm676 = vweird.f32 %v670
      %vm677 = vmor %vm675, %vm676
      %v678 = vsel %vm677, %v670, %v674
      %v679 = vand.u32 2147483647, %v526
      %vm680 = vcmp.eq.f32.partialorder %v679, 8.507059e+37
      %v681 = vand.u32 %v526, 2147483648
      %v682 = vor.u32 1.1754944e-38, %v681
      %v683 = vsel %vm680, %v682, %v678
      %v684 = vmul.f32 1.0, %v683
      %v685 = vrcp.pop %v527
      %v686 = vmul.f32 %v527, %v685
      %v687 = vsub.f32 1.0, %v686
      %v688 = vmul.f32 %v685, %v687
      %v689 = vadd.f32 %v685, %v688
      %vm690 = vweird.f32 %v527
      %vm691 = vweird.f32 %v685
      %vm692 = vmor %vm690, %vm691
      %v693 = vsel %vm692, %v685, %v689
      %v694 = vand.u32 2147483647, %v527
      %vm695 = vcmp.eq.f32.partialorder %v694, 8.507059e+37
      %v696 = vand.u32 %v527, 2147483648
      %v697 = vor.u32 1.1754944e-38, %v696
      %v698 = vsel %vm695, %v697, %v693
      %v699 = vmul.f32 1.0, %v698
      %v700 = vrcp.pop %v528
      %v701 = vmul.f32 %v528, %v700
      %v702 = vsub.f32 1.0, %v701
      %v703 = vmul.f32 %v700, %v702
      %v704 = vadd.f32 %v700, %v703
      %vm705 = vweird.f32 %v528
      %vm706 = vweird.f32 %v700
      %vm707 = vmor %vm705, %vm706
      %v708 = vsel %vm707, %v700, %v704
      %v709 = vand.u32 2147483647, %v528
      %vm710 = vcmp.eq.f32.partialorder %v709, 8.507059e+37
      %v711 = vand.u32 %v528, 2147483648
      %v712 = vor.u32 1.1754944e-38, %v711
      %v713 = vsel %vm710, %v712, %v708
      %v714 = vmul.f32 1.0, %v713
      %v715 = vrcp.pop %v529
      %v716 = vmul.f32 %v529, %v715
      %v717 = vsub.f32 1.0, %v716
      %v718 = vmul.f32 %v715, %v717
      %v719 = vadd.f32 %v715, %v718
      %vm720 = vweird.f32 %v529
      %vm721 = vweird.f32 %v715
      %vm722 = vmor %vm720, %vm721
      %v723 = vsel %vm722, %v715, %v719
      %v724 = vand.u32 2147483647, %v529
      %vm725 = vcmp.eq.f32.partialorder %v724, 8.507059e+37
      %v726 = vand.u32 %v529, 2147483648
      %v727 = vor.u32 1.1754944e-38, %v726
      %v728 = vsel %vm725, %v727, %v723
      %v729 = vmul.f32 1.0, %v728
      %v730 = vrcp.pop %v530
      %v731 = vmul.f32 %v530, %v730
      %v732 = vsub.f32 1.0, %v731
      %v733 = vmul.f32 %v730, %v732
      %v734 = vadd.f32 %v730, %v733
      %vm735 = vweird.f32 %v530
      %vm736 = vweird.f32 %v730
      %vm737 = vmor %vm735, %vm736
      %v738 = vsel %vm737, %v730, %v734
      %v739 = vand.u32 2147483647, %v530
      %vm740 = vcmp.eq.f32.partialorder %v739, 8.507059e+37
      %v741 = vand.u32 %v530, 2147483648
      %v742 = vor.u32 1.1754944e-38, %v741
      %v743 = vsel %vm740, %v742, %v738
      %v744 = vmul.f32 1.0, %v743
      %v745 = vrcp.pop %v531
      %v746 = vmul.f32 %v531, %v745
      %v747 = vsub.f32 1.0, %v746
      %v748 = vmul.f32 %v745, %v747
      %v749 = vadd.f32 %v745, %v748
      %vm750 = vweird.f32 %v531
      %vm751 = vweird.f32 %v745
      %vm752 = vmor %vm750, %vm751
      %v753 = vsel %vm752, %v745, %v749
      %v754 = vand.u32 2147483647, %v531
      %vm755 = vcmp.eq.f32.partialorder %v754, 8.507059e+37
      %v756 = vand.u32 %v531, 2147483648
      %v757 = vor.u32 1.1754944e-38, %v756
      %v758 = vsel %vm755, %v757, %v753
      %v759 = vmul.f32 1.0, %v758
      %v760 = vrcp.pop %v532
      %v761 = vmul.f32 %v532, %v760
      %v762 = vsub.f32 1.0, %v761
      %v763 = vmul.f32 %v760, %v762
      %v764 = vadd.f32 %v760, %v763
      %vm765 = vweird.f32 %v532
      %vm766 = vweird.f32 %v760
      %vm767 = vmor %vm765, %vm766
      %v768 = vsel %vm767, %v760, %v764
      %v769 = vand.u32 2147483647, %v532
      %vm770 = vcmp.eq.f32.partialorder %v769, 8.507059e+37
      %v771 = vand.u32 %v532, 2147483648
      %v772 = vor.u32 1.1754944e-38, %v771
      %v773 = vsel %vm770, %v772, %v768
      %v774 = vmul.f32 1.0, %v773
      %v775 = vrcp.pop %v533
      %v776 = vmul.f32 %v533, %v775
      %v777 = vsub.f32 1.0, %v776
      %v778 = vmul.f32 %v775, %v777
      %v779 = vadd.f32 %v775, %v778
      %vm780 = vweird.f32 %v533
      %vm781 = vweird.f32 %v775
      %vm782 = vmor %vm780, %vm781
      %v783 = vsel %vm782, %v775, %v779
      %v784 = vand.u32 2147483647, %v533
      %vm785 = vcmp.eq.f32.partialorder %v784, 8.507059e+37
      %v786 = vand.u32 %v533, 2147483648
      %v787 = vor.u32 1.1754944e-38, %v786
      %v788 = vsel %vm785, %v787, %v783
      %v789 = vmul.f32 1.0, %v788
      %v790 = vrcp.pop %v534
      %v791 = vmul.f32 %v534, %v790
      %v792 = vsub.f32 1.0, %v791
      %v793 = vmul.f32 %v790, %v792
      %v794 = vadd.f32 %v790, %v793
      %vm795 = vweird.f32 %v534
      %vm796 = vweird.f32 %v790
      %vm797 = vmor %vm795, %vm796
      %v798 = vsel %vm797, %v790, %v794
      %v799 = vand.u32 2147483647, %v534
      %vm800 = vcmp.eq.f32.partialorder %v799, 8.507059e+37
      %v801 = vand.u32 %v534, 2147483648
      %v802 = vor.u32 1.1754944e-38, %v801
      %v803 = vsel %vm800, %v802, %v798
      %v804 = vmul.f32 1.0, %v803
      %v805 = vrcp.pop %v535
      %v806 = vmul.f32 %v535, %v805
      %v807 = vsub.f32 1.0, %v806
      %v808 = vmul.f32 %v805, %v807
      %v809 = vadd.f32 %v805, %v808
      %vm810 = vweird.f32 %v535
      %vm811 = vweird.f32 %v805
      %vm812 = vmor %vm810, %vm811
      %v813 = vsel %vm812, %v805, %v809
      %v814 = vand.u32 2147483647, %v535
      %vm815 = vcmp.eq.f32.partialorder %v814, 8.507059e+37
      %v816 = vand.u32 %v535, 2147483648
      %v817 = vor.u32 1.1754944e-38, %v816
      %v818 = vsel %vm815, %v817, %v813
      %v819 = vmul.f32 1.0, %v818
      %v820 = vrcp.pop %v536
      %v821 = vmul.f32 %v536, %v820
      %v822 = vsub.f32 1.0, %v821
      %v823 = vmul.f32 %v820, %v822
      %v824 = vadd.f32 %v820, %v823
      %vm825 = vweird.f32 %v536
      %vm826 = vweird.f32 %v820
      %vm827 = vmor %vm825, %vm826
      %v828 = vsel %vm827, %v820, %v824
      %v829 = vand.u32 2147483647, %v536
      %vm830 = vcmp.eq.f32.partialorder %v829, 8.507059e+37
      %v831 = vand.u32 %v536, 2147483648
      %v832 = vor.u32 1.1754944e-38, %v831
      %v833 = vsel %vm830, %v832, %v828
      %v834 = vmul.f32 1.0, %v833
      %v835 = vrcp.pop %v537
      %v836 = vmul.f32 %v537, %v835
      %v837 = vsub.f32 1.0, %v836
      %v838 = vmul.f32 %v835, %v837
      %v839 = vadd.f32 %v835, %v838
      %vm840 = vweird.f32 %v537
      %vm841 = vweird.f32 %v835
      %vm842 = vmor %vm840, %vm841
      %v843 = vsel %vm842, %v835, %v839
      %v844 = vand.u32 2147483647, %v537
      %vm845 = vcmp.eq.f32.partialorder %v844, 8.507059e+37
      %v846 = vand.u32 %v537, 2147483648
      %v847 = vor.u32 1.1754944e-38, %v846
      %v848 = vsel %vm845, %v847, %v843
      %v849 = vmul.f32 1.0, %v848
      %v850 = vrcp.pop %v538
      %v851 = vmul.f32 %v538, %v850
      %v852 = vsub.f32 1.0, %v851
      %v853 = vmul.f32 %v850, %v852
      %v854 = vadd.f32 %v850, %v853
      %vm855 = vweird.f32 %v538
      %vm856 = vweird.f32 %v850
      %vm857 = vmor %vm855, %vm856
      %v858 = vsel %vm857, %v850, %v854
      %v859 = vand.u32 2147483647, %v538
      %vm860 = vcmp.eq.f32.partialorder %v859, 8.507059e+37
      %v861 = vand.u32 %v538, 2147483648
      %v862 = vor.u32 1.1754944e-38, %v861
      %v863 = vsel %vm860, %v862, %v858
      %v864 = vmul.f32 1.0, %v863
      %v865 = vrcp.pop %v539
      %v866 = vmul.f32 %v539, %v865
      %v867 = vsub.f32 1.0, %v866
      %v868 = vmul.f32 %v865, %v867
      %v869 = vadd.f32 %v865, %v868
      %vm870 = vweird.f32 %v539
      %vm871 = vweird.f32 %v865
      %vm872 = vmor %vm870, %vm871
      %v873 = vsel %vm872, %v865, %v869
      %v874 = vand.u32 2147483647, %v539
      %vm875 = vcmp.eq.f32.partialorder %v874, 8.507059e+37
      %v876 = vand.u32 %v539, 2147483648
      %v877 = vor.u32 1.1754944e-38, %v876
      %v878 = vsel %vm875, %v877, %v873
      %v879 = vmul.f32 1.0, %v878
      %v880 = vrcp.pop %v540
      %v881 = vmul.f32 %v540, %v880
      %v882 = vsub.f32 1.0, %v881
      %v883 = vmul.f32 %v880, %v882
      %v884 = vadd.f32 %v880, %v883
      %vm885 = vweird.f32 %v540
      %vm886 = vweird.f32 %v880
      %vm887 = vmor %vm885, %vm886
      %v888 = vsel %vm887, %v880, %v884
      %v889 = vand.u32 2147483647, %v540
      %vm890 = vcmp.eq.f32.partialorder %v889, 8.507059e+37
      %v891 = vand.u32 %v540, 2147483648
      %v892 = vor.u32 1.1754944e-38, %v891
      %v893 = vsel %vm890, %v892, %v888
      %v894 = vmul.f32 1.0, %v893
      %v895 = vrcp.pop %v541
      %v896 = vmul.f32 %v541, %v895
      %v897 = vsub.f32 1.0, %v896
      %v898 = vmul.f32 %v895, %v897
      %v899 = vadd.f32 %v895, %v898
      %vm900 = vweird.f32 %v541
      %vm901 = vweird.f32 %v895
      %vm902 = vmor %vm900, %vm901
      %v903 = vsel %vm902, %v895, %v899
      %v904 = vand.u32 2147483647, %v541
      %vm905 = vcmp.eq.f32.partialorder %v904, 8.507059e+37
      %v906 = vand.u32 %v541, 2147483648
      %v907 = vor.u32 1.1754944e-38, %v906
      %v908 = vsel %vm905, %v907, %v903
      %v909 = vmul.f32 1.0, %v908
      %v910 = vrcp.pop %v542
      %v911 = vmul.f32 %v542, %v910
      %v912 = vsub.f32 1.0, %v911
      %v913 = vmul.f32 %v910, %v912
      %v914 = vadd.f32 %v910, %v913
      %vm915 = vweird.f32 %v542
      %vm916 = vweird.f32 %v910
      %vm917 = vmor %vm915, %vm916
      %v918 = vsel %vm917, %v910, %v914
      %v919 = vand.u32 2147483647, %v542
      %vm920 = vcmp.eq.f32.partialorder %v919, 8.507059e+37
      %v921 = vand.u32 %v542, 2147483648
      %v922 = vor.u32 1.1754944e-38, %v921
      %v923 = vsel %vm920, %v922, %v918
      %v924 = vmul.f32 1.0, %v923
      %v925 = vrcp.pop %v543
      %v926 = vmul.f32 %v543, %v925
      %v927 = vsub.f32 1.0, %v926
      %v928 = vmul.f32 %v925, %v927
      %v929 = vadd.f32 %v925, %v928
      %vm930 = vweird.f32 %v543
      %vm931 = vweird.f32 %v925
      %vm932 = vmor %vm930, %vm931
      %v933 = vsel %vm932, %v925, %v929
      %v934 = vand.u32 2147483647, %v543
      %vm935 = vcmp.eq.f32.partialorder %v934, 8.507059e+37
      %v936 = vand.u32 %v543, 2147483648
      %v937 = vor.u32 1.1754944e-38, %v936
      %v938 = vsel %vm935, %v937, %v933
      %v939 = vmul.f32 1.0, %v938
      %v940 = vrcp.pop %v544
      %v941 = vmul.f32 %v544, %v940
      %v942 = vsub.f32 1.0, %v941
      %v943 = vmul.f32 %v940, %v942
      %v944 = vadd.f32 %v940, %v943
      %vm945 = vweird.f32 %v544
      %vm946 = vweird.f32 %v940
      %vm947 = vmor %vm945, %vm946
      %v948 = vsel %vm947, %v940, %v944
      %v949 = vand.u32 2147483647, %v544
      %vm950 = vcmp.eq.f32.partialorder %v949, 8.507059e+37
      %v951 = vand.u32 %v544, 2147483648
      %v952 = vor.u32 1.1754944e-38, %v951
      %v953 = vsel %vm950, %v952, %v948
      %v954 = vmul.f32 1.0, %v953
      %v955 = vrcp.pop %v545
      %v956 = vmul.f32 %v545, %v955
      %v957 = vsub.f32 1.0, %v956
      %v958 = vmul.f32 %v955, %v957
      %v959 = vadd.f32 %v955, %v958
      %vm960 = vweird.f32 %v545
      %vm961 = vweird.f32 %v955
      %vm962 = vmor %vm960, %vm961
      %v963 = vsel %vm962, %v955, %v959
      %v964 = vand.u32 2147483647, %v545
      %vm965 = vcmp.eq.f32.partialorder %v964, 8.507059e+37
      %v966 = vand.u32 %v545, 2147483648
      %v967 = vor.u32 1.1754944e-38, %v966
      %v968 = vsel %vm965, %v967, %v963
      %v969 = vmul.f32 1.0, %v968
      %v970 = vrcp.pop %v546
      %v971 = vmul.f32 %v546, %v970
      %v972 = vsub.f32 1.0, %v971
      %v973 = vmul.f32 %v970, %v972
      %v974 = vadd.f32 %v970, %v973
      %vm975 = vweird.f32 %v546
      %vm976 = vweird.f32 %v970
      %vm977 = vmor %vm975, %vm976
      %v978 = vsel %vm977, %v970, %v974
      %v979 = vand.u32 2147483647, %v546
      %vm980 = vcmp.eq.f32.partialorder %v979, 8.507059e+37
      %v981 = vand.u32 %v546, 2147483648
      %v982 = vor.u32 1.1754944e-38, %v981
      %v983 = vsel %vm980, %v982, %v978
      %v984 = vmul.f32 1.0, %v983
      %v985 = vrcp.pop %v547
      %v986 = vmul.f32 %v547, %v985
      %v987 = vsub.f32 1.0, %v986
      %v988 = vmul.f32 %v985, %v987
      %v989 = vadd.f32 %v985, %v988
      %vm990 = vweird.f32 %v547
      %vm991 = vweird.f32 %v985
      %vm992 = vmor %vm990, %vm991
      %v993 = vsel %vm992, %v985, %v989
      %v994 = vand.u32 2147483647, %v547
      %vm995 = vcmp.eq.f32.partialorder %v994, 8.507059e+37
      %v996 = vand.u32 %v547, 2147483648
      %v997 = vor.u32 1.1754944e-38, %v996
      %v998 = vsel %vm995, %v997, %v993
      %v999 = vmul.f32 1.0, %v998
      %v1000 = vrcp.pop %v548
      %v1001 = vmul.f32 %v548, %v1000
      %v1002 = vsub.f32 1.0, %v1001
      %v1003 = vmul.f32 %v1000, %v1002
      %v1004 = vadd.f32 %v1000, %v1003
      %vm1005 = vweird.f32 %v548
      %vm1006 = vweird.f32 %v1000
      %vm1007 = vmor %vm1005, %vm1006
      %v1008 = vsel %vm1007, %v1000, %v1004
      %v1009 = vand.u32 2147483647, %v548
      %vm1010 = vcmp.eq.f32.partialorder %v1009, 8.507059e+37
      %v1011 = vand.u32 %v548, 2147483648
      %v1012 = vor.u32 1.1754944e-38, %v1011
      %v1013 = vsel %vm1010, %v1012, %v1008
      %v1014 = vmul.f32 1.0, %v1013
      %v1015 = vrcp.pop %v549
      %v1016 = vmul.f32 %v549, %v1015
      %v1017 = vsub.f32 1.0, %v1016
      %v1018 = vmul.f32 %v1015, %v1017
      %v1019 = vadd.f32 %v1015, %v1018
      %vm1020 = vweird.f32 %v549
      %vm1021 = vweird.f32 %v1015
      %vm1022 = vmor %vm1020, %vm1021
      %v1023 = vsel %vm1022, %v1015, %v1019
      %v1024 = vand.u32 2147483647, %v549
      %vm1025 = vcmp.eq.f32.partialorder %v1024, 8.507059e+37
      %v1026 = vand.u32 %v549, 2147483648
      %v1027 = vor.u32 1.1754944e-38, %v1026
      %v1028 = vsel %vm1025, %v1027, %v1023
      %v1029 = vmul.f32 1.0, %v1028
      %v1030 = vmul.f32 %v327, %v564
      %v1031 = vmul.f32 %v330, %v579
      %v1032 = vmul.f32 %v333, %v594
      %v1033 = vmul.f32 %v336, %v609
      %v1034 = vmul.f32 %v339, %v624
      %v1035 = vmul.f32 %v342, %v639
      %v1036 = vmul.f32 %v345, %v654
      %v1037 = vmul.f32 %v348, %v669
      %v1038 = vmul.f32 %v351, %v684
      %v1039 = vmul.f32 %v354, %v699
      %v1040 = vmul.f32 %v357, %v714
      %v1041 = vmul.f32 %v360, %v729
      %v1042 = vmul.f32 %v363, %v744
      %v1043 = vmul.f32 %v366, %v759
      %v1044 = vmul.f32 %v369, %v774
      %v1045 = vmul.f32 %v372, %v789
      %v1046 = vmul.f32 %v375, %v804
      %v1047 = vmul.f32 %v378, %v819
      %v1048 = vmul.f32 %v381, %v834
      %v1049 = vmul.f32 %v384, %v849
      %v1050 = vmul.f32 %v387, %v864
      %v1051 = vmul.f32 %v390, %v879
      %v1052 = vmul.f32 %v393, %v894
      %v1053 = vmul.f32 %v396, %v909
      %v1054 = vmul.f32 %v399, %v924
      %v1055 = vmul.f32 %v402, %v939
      %v1056 = vmul.f32 %v405, %v954
      %v1057 = vmul.f32 %v408, %v969
      %v1058 = vmul.f32 %v411, %v984
      %v1059 = vmul.f32 %v414, %v999
      %v1060 = vmul.f32 %v417, %v1014
      %v1061 = vmul.f32 %v420, %v1029
      %1062 = vst.msk [vmem:[%s172] sm:$0xff] %vm212, %v1030
      %1063 = vst.msk [vmem:[%s172 + $0x8] sm:$0xff] %vm212, %v1031
      %1064 = vst.msk [vmem:[%s172 + $0x10] sm:$0xff] %vm212, %v1032
      %1065 = vst.msk [vmem:[%s172 + $0x18] sm:$0xff] %vm212, %v1033
      %1066 = vst.msk [vmem:[%s172 + $0x20] sm:$0xff] %vm212, %v1034
      %1067 = vst.msk [vmem:[%s172 + $0x28] sm:$0xff] %vm212, %v1035
      %1068 = vst.msk [vmem:[%s172 + $0x30] sm:$0xff] %vm212, %v1036
      %1069 = vst.msk [vmem:[%s172 + $0x38] sm:$0xff] %vm212, %v1037
      %1070 = vst.msk [vmem:[%s172 + $0x40] sm:$0xff] %vm212, %v1038
      %1071 = vst.msk [vmem:[%s172 + $0x48] sm:$0xff] %vm212, %v1039
      %1072 = vst.msk [vmem:[%s172 + $0x50] sm:$0xff] %vm212, %v1040
      %1073 = vst.msk [vmem:[%s172 + $0x58] sm:$0xff] %vm212, %v1041
      %1074 = vst.msk [vmem:[%s172 + $0x60] sm:$0xff] %vm212, %v1042
      %1075 = vst.msk [vmem:[%s172 + $0x68] sm:$0xff] %vm212, %v1043
      %1076 = vst.msk [vmem:[%s172 + $0x70] sm:$0xff] %vm212, %v1044
      %1077 = vst.msk [vmem:[%s172 + $0x78] sm:$0xff] %vm212, %v1045
      %1078 = vst.msk [vmem:[%s172 + $0x80] sm:$0xff] %vm212, %v1046
      %1079 = vst.msk [vmem:[%s172 + $0x88] sm:$0xff] %vm212, %v1047
      %1080 = vst.msk [vmem:[%s172 + $0x90] sm:$0xff] %vm212, %v1048
      %1081 = vst.msk [vmem:[%s172 + $0x98] sm:$0xff] %vm212, %v1049
      %1082 = vst.msk [vmem:[%s172 + $0xa0] sm:$0xff] %vm212, %v1050
      %1083 = vst.msk [vmem:[%s172 + $0xa8] sm:$0xff] %vm212, %v1051
      %1084 = vst.msk [vmem:[%s172 + $0xb0] sm:$0xff] %vm212, %v1052
      %1085 = vst.msk [vmem:[%s172 + $0xb8] sm:$0xff] %vm212, %v1053
      %1086 = vst.msk [vmem:[%s172 + $0xc0] sm:$0xff] %vm212, %v1054
      %1087 = vst.msk [vmem:[%s172 + $0xc8] sm:$0xff] %vm212, %v1055
      %1088 = vst.msk [vmem:[%s172 + $0xd0] sm:$0xff] %vm212, %v1056
      %1089 = vst.msk [vmem:[%s172 + $0xd8] sm:$0xff] %vm212, %v1057
      %1090 = vst.msk [vmem:[%s172 + $0xe0] sm:$0xff] %vm212, %v1058
      %1091 = vst.msk [vmem:[%s172 + $0xe8] sm:$0xff] %vm212, %v1059
      %1092 = vst.msk [vmem:[%s172 + $0xf0] sm:$0xff] %vm212, %v1060
      %1093 = vst.msk [vmem:[%s172 + $0xf8] sm:$0xff] %vm212, %v1061
      %s1094 = smul.u32 32, %s14
      %p1095 = scmp.lt.s32.totalorder %s1094, 63
      %s1096 = scalar_select %p1095, %s1094, 63
      %s1097 = smul.addr %s1096, 8
      %s1098 = scalar_lea.vmem %s3, %s1097
      // Predicated region
      $region33: #{c3_pallas.4} parent=31 // pred_check
        %p1099 = pneg %p100
      $region34: #{c3_pallas.4} parent=31 // pred_check_branch
        %1101 = sbr.rel (%p1099) target = $region36
      $region35: #{c3_pallas.4} parent=31 // pred_region
        %s1102 = smul.u32 32, %s14
      $region36: #{c3_pallas.4} parent=31 // pred_fallthru
        _
    $region32: #{c3_pallas.4} parent=5 // pred_fallthru
      _
    %p1103 = scmp.le.s32.totalorder 2, %s9
    // Predicated region
    $region37: #{c3_pallas.4} parent=5 // pred_check
      %p1104 = pneg %p1103
    $region38: #{c3_pallas.4} parent=5 // pred_check_branch
      %1106 = sbr.rel (%p1104) target = $region40
    $region39: #{c3_pallas.4} parent=5 // pred_region
      %s1107 = ssub.s32 %s9, 2
      // Predicated region
      $region41: #{c3_pallas.4} parent=39 // pred_check
        %p1108 = pneg %p106
      $region42: #{c3_pallas.4} parent=39 // pred_check_branch
        %1110 = sbr.rel (%p1108) target = $region44
      $region43: #{c3_pallas.4} parent=39 // pred_region
        %s1111 = smul.u32 32, %s15
        %p1112 = scmp.lt.s32.totalorder %s1111, 63
        %s1113 = scalar_select %p1112, %s1111, 63
        %s1114 = smul.addr %s1113, 8
        %s1115 = scalar_lea.vmem %s3, %s1114
      $region44: #{c3_pallas.4} parent=39 // pred_fallthru
        _
    $region40: #{c3_pallas.4} parent=5 // pred_fallthru
      _
  $region6: #{c3_pallas.4} parent=0 // loop_footer
    %s13 = sadd.s32 1, %s9
  $region7: #{c3_pallas.4} parent=0 // loop_footer_branch
    %8 = sbr.rel target = $region3
  $region8: #{c3_pallas.4} parent=0 // loop_exit
    _

// kernel: c3_pallas.7
$region0: #{c3_pallas.7}
  #allocation0 [shape = 'u32[]', space=smem, size = 0x4, offset = 0x4, fixed_abs, tag = 'smem constant byte address 0x4 - core index']
  #allocation1 [shape = 'u32[72,128]{1,0:T(1,128)}', space=vmem, size = 0x9000, scoped, tag = 'internal scratch']
  %s0 = inlined_call_operand.vmem [shape: f32[512,16], index: 0, kind: input, shape index: {}]
  %s1 = inlined_call_operand.vmem [shape: f32[512,16], index: 1, kind: input, shape index: {}]
  %s2 = inlined_call_operand.vmem [shape: f32[16,16], index: 2, kind: input, shape index: {}]
  %s3 = inlined_call_operand.vmem [shape: f32[1,16], index: 3, kind: input, shape index: {}]
  %s4 = inlined_call_operand.vmem [shape: f32[32,32], index: 4, kind: input, shape index: {}]
  %s5 = inlined_call_operand.vmem [shape: f32[1,32], index: 5, kind: input, shape index: {}]
  %s6 = inlined_call_operand.hbm [shape: f32[512,32], index: 6, kind: output, shape index: {}]
  %s7 = sld [smem:[#allocation0]]
  $region57: #{c3_pallas.7} parent=0
    _
  %s9 = ssub.s32 1, %s7
  %s10 = scalar_select 0, %s9, %s7
  $region1: #{c3_pallas.7} parent=0
    #allocation2 [shape = 'u8[262144]{0}', space=vmem, size = 0x40000, scoped, tag = 'output window, operand 0']
    #allocation3 [shape = 's32[2]{0}', space=sflag, size = 0x8, scoped, tag = 'scoped memory for c3_pallas.7']
    %11 = vsyncpa [#allocation3], 0
    %s12 = scalar_lea.sflag [#allocation3], 1
    %13 = vsyncpa %s12, 0
    loop: start=0, step=1, limit=4
    $region2: #{c3_pallas.7} parent=1 // loop_pre_header
      _
    $region3: #{c3_pallas.7} parent=1 // loop_header
      %s15 = sphi 0, %s19
      %p16 = scmp.ge.s32.totalorder %s15, 4
      %s25 = sphi 0, %s27
      %s28 = sphi 0, %s25
      %s29 = sphi 0, %s28
      %s45 = sphi 0, %s29
      %s51 = sphi 0, %s53
      %s54 = sphi 0, %s51
      %s55 = sphi 0, %s54
      %s71 = sphi 0, %s55
      %s75 = sphi 0, %s75
      %s77 = sphi 0, %s75
      %s78 = sphi 0, %s77
      %s92 = sphi 0, %s78
      %s96 = sphi 0, %s96
      %s98 = sphi 0, %s96
      %s99 = sphi 0, %s98
      %s113 = sphi 0, %s99
      %s117 = sphi 0, %s117
      %s119 = sphi 0, %s117
      %s120 = sphi 0, %s119
      %s134 = sphi 0, %s120
      %s138 = sphi 0, %s138
      %s140 = sphi 0, %s138
      %s141 = sphi 0, %s140
      %s155 = sphi 0, %s141
      %s161 = sphi 0, %s163
      %s164 = sphi 0, %s161
      %s165 = sphi 0, %s164
      %s181 = sphi 0, %s165
    $region4: #{c3_pallas.7} parent=1 // loop_header_branch
      %18 = sbr.rel (%p16) target = $region8
    $region5: #{c3_pallas.7} parent=1 // loop_body
      %s20 = ssub.s32 %s15, 1
      %s21 = ssub.s32 %s15, 2
      %s22 = sadd.s32 %s15, 1
      %s23 = ssub.s32 %s15, %s22
      %p24 = scmp.eq.s32.totalorder %s23, 0
      %s26 = sadd.s32 %s25, 1
      %s27 = scalar_select %p24, %s25, %s26
      %p30 = pneg %p24
      %p31 = scmp.eq.s32.totalorder %s15, 1
      %p32 = por %p30, %p31
      %p33 = scmp.ne.s32.totalorder %s25, %s28
      %p34 = scmp.eq.s32.totalorder %s15, 0
      %p35 = por %p33, %p34
      %p36 = scmp.ne.s32.totalorder %s25, %s28
      %p37 = scmp.eq.s32.totalorder %s20, 1
      %p38 = por %p36, %p37
      %p39 = scmp.ne.s32.totalorder %s28, %s29
      %p40 = scmp.eq.s32.totalorder %s20, 0
      %p41 = por %p39, %p40
      %p42 = scmp.ne.s32.totalorder %s28, %s29
      %p43 = scmp.eq.s32.totalorder %s21, 1
      %p44 = por %p42, %p43
      %p46 = scmp.ne.s32.totalorder %s29, %s45
      %p47 = scmp.eq.s32.totalorder %s21, 0
      %p48 = por %p46, %p47
      %s49 = ssub.s32 %s15, %s22
      %p50 = scmp.eq.s32.totalorder %s49, 0
      %s52 = sadd.s32 %s51, 1
      %s53 = scalar_select %p50, %s51, %s52
      %p56 = pneg %p50
      %p57 = scmp.eq.s32.totalorder %s15, 1
      %p58 = por %p56, %p57
      %p59 = scmp.ne.s32.totalorder %s51, %s54
      %p60 = scmp.eq.s32.totalorder %s15, 0
      %p61 = por %p59, %p60
      %p62 = scmp.ne.s32.totalorder %s51, %s54
      %p63 = scmp.eq.s32.totalorder %s20, 1
      %p64 = por %p62, %p63
      %p65 = scmp.ne.s32.totalorder %s54, %s55
      %p66 = scmp.eq.s32.totalorder %s20, 0
      %p67 = por %p65, %p66
      %p68 = scmp.ne.s32.totalorder %s54, %s55
      %p69 = scmp.eq.s32.totalorder %s21, 1
      %p70 = por %p68, %p69
      %p72 = scmp.ne.s32.totalorder %s55, %s71
      %p73 = scmp.eq.s32.totalorder %s21, 0
      %p74 = por %p72, %p73
      %s76 = sadd.s32 %s75, 1
      %p79 = scmp.eq.s32.totalorder %s15, 1
      %p80 = scmp.ne.s32.totalorder %s75, %s77
      %p81 = scmp.eq.s32.totalorder %s15, 0
      %p82 = por %p80, %p81
      %p83 = scmp.ne.s32.totalorder %s75, %s77
      %p84 = scmp.eq.s32.totalorder %s20, 1
      %p85 = por %p83, %p84
      %p86 = scmp.ne.s32.totalorder %s77, %s78
      %p87 = scmp.eq.s32.totalorder %s20, 0
      %p88 = por %p86, %p87
      %p89 = scmp.ne.s32.totalorder %s77, %s78
      %p90 = scmp.eq.s32.totalorder %s21, 1
      %p91 = por %p89, %p90
      %p93 = scmp.ne.s32.totalorder %s78, %s92
      %p94 = scmp.eq.s32.totalorder %s21, 0
      %p95 = por %p93, %p94
      %s97 = sadd.s32 %s96, 1
      %p100 = scmp.eq.s32.totalorder %s15, 1
      %p101 = scmp.ne.s32.totalorder %s96, %s98
      %p102 = scmp.eq.s32.totalorder %s15, 0
      %p103 = por %p101, %p102
      %p104 = scmp.ne.s32.totalorder %s96, %s98
      %p105 = scmp.eq.s32.totalorder %s20, 1
      %p106 = por %p104, %p105
      %p107 = scmp.ne.s32.totalorder %s98, %s99
      %p108 = scmp.eq.s32.totalorder %s20, 0
      %p109 = por %p107, %p108
      %p110 = scmp.ne.s32.totalorder %s98, %s99
      %p111 = scmp.eq.s32.totalorder %s21, 1
      %p112 = por %p110, %p111
      %p114 = scmp.ne.s32.totalorder %s99, %s113
      %p115 = scmp.eq.s32.totalorder %s21, 0
      %p116 = por %p114, %p115
      %s118 = sadd.s32 %s117, 1
      %p121 = scmp.eq.s32.totalorder %s15, 1
      %p122 = scmp.ne.s32.totalorder %s117, %s119
      %p123 = scmp.eq.s32.totalorder %s15, 0
      %p124 = por %p122, %p123
      %p125 = scmp.ne.s32.totalorder %s117, %s119
      %p126 = scmp.eq.s32.totalorder %s20, 1
      %p127 = por %p125, %p126
      %p128 = scmp.ne.s32.totalorder %s119, %s120
      %p129 = scmp.eq.s32.totalorder %s20, 0
      %p130 = por %p128, %p129
      %p131 = scmp.ne.s32.totalorder %s119, %s120
      %p132 = scmp.eq.s32.totalorder %s21, 1
      %p133 = por %p131, %p132
      %p135 = scmp.ne.s32.totalorder %s120, %s134
      %p136 = scmp.eq.s32.totalorder %s21, 0
      %p137 = por %p135, %p136
      %s139 = sadd.s32 %s138, 1
      %p142 = scmp.eq.s32.totalorder %s15, 1
      %p143 = scmp.ne.s32.totalorder %s138, %s140
      %p144 = scmp.eq.s32.totalorder %s15, 0
      %p145 = por %p143, %p144
      %p146 = scmp.ne.s32.totalorder %s138, %s140
      %p147 = scmp.eq.s32.totalorder %s20, 1
      %p148 = por %p146, %p147
      %p149 = scmp.ne.s32.totalorder %s140, %s141
      %p150 = scmp.eq.s32.totalorder %s20, 0
      %p151 = por %p149, %p150
      %p152 = scmp.ne.s32.totalorder %s140, %s141
      %p153 = scmp.eq.s32.totalorder %s21, 1
      %p154 = por %p152, %p153
      %p156 = scmp.ne.s32.totalorder %s141, %s155
      %p157 = scmp.eq.s32.totalorder %s21, 0
      %p158 = por %p156, %p157
      %s159 = ssub.s32 %s15, %s22
      %p160 = scmp.eq.s32.totalorder %s159, 0
      %s162 = sadd.s32 %s161, 1
      %s163 = scalar_select %p160, %s161, %s162
      %p166 = pneg %p160
      %p167 = scmp.eq.s32.totalorder %s15, 1
      %p168 = por %p166, %p167
      %p169 = scmp.ne.s32.totalorder %s161, %s164
      %p170 = scmp.eq.s32.totalorder %s15, 0
      %p171 = por %p169, %p170
      %p172 = scmp.ne.s32.totalorder %s161, %s164
      %p173 = scmp.eq.s32.totalorder %s20, 1
      %p174 = por %p172, %p173
      %p175 = scmp.ne.s32.totalorder %s164, %s165
      %p176 = scmp.eq.s32.totalorder %s20, 0
      %p177 = por %p175, %p176
      %p178 = scmp.ne.s32.totalorder %s164, %s165
      %p179 = scmp.eq.s32.totalorder %s21, 1
      %p180 = por %p178, %p179
      %p182 = scmp.ne.s32.totalorder %s165, %s181
      %p183 = scmp.eq.s32.totalorder %s21, 0
      %p184 = por %p182, %p183
      %p185 = scmp.le.s32.totalorder 1, %s15
      %p186 = scmp.lt.s32.totalorder %s15, 3
      %p187 = pnand %p185, %p186
      %p188 = pneg %p187
      // Predicated region
      $region9: #{c3_pallas.7} parent=5 // pred_check
        _
      $region10: #{c3_pallas.7} parent=5 // pred_check_branch
        %190 = sbr.rel (%p187) target = $region12
      $region11: #{c3_pallas.7} parent=5 // pred_region
        %s191 = ssub.s32 %s15, 1
        // Predicated region
        $region13: #{c3_pallas.7} parent=11 // pred_check
          %p192 = pneg %p88
        $region14: #{c3_pallas.7} parent=11 // pred_check_branch
          %194 = sbr.rel (%p192) target = $region16
        $region15: #{c3_pallas.7} parent=11 // pred_region
          _
        $region16: #{c3_pallas.7} parent=11 // pred_fallthru
          _
        // Predicated region
        $region17: #{c3_pallas.7} parent=11 // pred_check
          %p195 = pneg %p109
        $region18: #{c3_pallas.7} parent=11 // pred_check_branch
          %197 = sbr.rel (%p195) target = $region20
        $region19: #{c3_pallas.7} parent=11 // pred_region
          _
        $region20: #{c3_pallas.7} parent=11 // pred_fallthru
          _
        // Predicated region
        $region21: #{c3_pallas.7} parent=11 // pred_check
          %p198 = pneg %p130
        $region22: #{c3_pallas.7} parent=11 // pred_check_branch
          %200 = sbr.rel (%p198) target = $region24
        $region23: #{c3_pallas.7} parent=11 // pred_region
          _
        $region24: #{c3_pallas.7} parent=11 // pred_fallthru
          _
        // Predicated region
        $region25: #{c3_pallas.7} parent=11 // pred_check
          %p201 = pneg %p151
        $region26: #{c3_pallas.7} parent=11 // pred_check_branch
          %203 = sbr.rel (%p201) target = $region28
        $region27: #{c3_pallas.7} parent=11 // pred_region
          _
        $region28: #{c3_pallas.7} parent=11 // pred_fallthru
          _
      $region12: #{c3_pallas.7} parent=5 // pred_fallthru
        _
      %p204 = scmp.lt.s32.totalorder %s15, 2
      // Predicated region
      $region29: #{c3_pallas.7} parent=5 // pred_check
        %p205 = pneg %p204
      $region30: #{c3_pallas.7} parent=5 // pred_check_branch
        %207 = sbr.rel (%p205) target = $region32
      $region31: #{c3_pallas.7} parent=5 // pred_region
        // Predicated region
        $region33: #{c3_pallas.7} parent=31 // pred_check
          %p208 = pneg %p35
        $region34: #{c3_pallas.7} parent=31 // pred_check_branch
          %210 = sbr.rel (%p208) target = $region36
        $region35: #{c3_pallas.7} parent=31 // pred_region
          %s211 = smul.u32 32, %s15
          %p212 = scmp.lt.s32.totalorder %s211, 63
          %s213 = scalar_select %p212, %s211, 63
          %s214 = smul.addr %s213, 8
          %s215 = scalar_lea.vmem %s0, %s214
          %s216 = smul.u32 32, %s15
        $region36: #{c3_pallas.7} parent=31 // pred_fallthru
          _
        // Predicated region
        $region37: #{c3_pallas.7} parent=31 // pred_check
          %p217 = pneg %p61
        $region38: #{c3_pallas.7} parent=31 // pred_check_branch
          %219 = sbr.rel (%p217) target = $region40
        $region39: #{c3_pallas.7} parent=31 // pred_region
          %s220 = smul.u32 32, %s15
          %p221 = scmp.lt.s32.totalorder %s220, 63
          %s222 = scalar_select %p221, %s220, 63
          %s223 = smul.addr %s222, 8
          %s224 = scalar_lea.vmem %s1, %s223
          %s225 = smul.u32 32, %s15
        $region40: #{c3_pallas.7} parent=31 // pred_fallthru
          _
      $region32: #{c3_pallas.7} parent=5 // pred_fallthru
        _
      %p226 = scmp.le.s32.totalorder 1, %s15
      %p227 = scmp.lt.s32.totalorder %s15, 3
      %p228 = pnand %p226, %p227
      %p229 = pneg %p228
      // Predicated region
      $region41: #{c3_pallas.7} parent=5 // pred_check
        _
      $region42: #{c3_pallas.7} parent=5 // pred_check_branch
        %231 = sbr.rel (%p228) target = $region44
      $region43: #{c3_pallas.7} parent=5 // pred_region
        %s232 = ssub.s32 %s15, 1
        %s233 = smul.u32 32, %s20
        %p234 = scmp.lt.s32.totalorder %s233, 63
        %s235 = scalar_select %p234, %s233, 63
        %s236 = smul.addr %s235, 8
        %s237 = scalar_lea.vmem %s0, %s236
        %p238 = pneg %p41
        %p239 = pneg %p38
        %s240 = smul.u32 32, %s20
        %p241 = scmp.lt.s32.totalorder %s240, 63
        %s242 = scalar_select %p241, %s240, 63
        %s243 = smul.addr %s242, 8
        %s244 = scalar_lea.vmem %s1, %s243
        %p245 = pneg %p67
        %p246 = pneg %p64
        %p247 = pneg %p88
        %p248 = pneg %p85
        %p249 = pneg %p109
        %p250 = pneg %p106
        %p251 = pneg %p130
        %p252 = pneg %p127
        %p253 = pneg %p151
        %p254 = pneg %p148
        %p255 = pneg %p177
        %p256 = pneg %p174
        %s257 = sand.u32 %s164, 1
        %s258 = scalar_lea.sflag [#allocation3], %s257
        %s259 = sand.u32 %s164, 1
        %s260 = smul.addr %s259, 256
        %s261 = scalar_lea.vmem [#allocation2], %s260
        %s262 = smul.u32 32, %s20
        %p263 = scmp.lt.s32.totalorder %s262, 63
        %s264 = scalar_select %p263, %s262, 63
        %s265 = smul.addr %s264, 8
        %s266 = scalar_lea.vmem %s0, %s265
        %s267 = smul.u32 32, %s20
        %s268 = smul.u32 32, %s20
        %p269 = scmp.lt.s32.totalorder %s268, 63
        %s270 = scalar_select %p269, %s268, 63
        %s271 = smul.addr %s270, 8
        %s272 = scalar_lea.vmem %s1, %s271
        %s273 = smul.u32 32, %s20
        %s274 = smul.u32 32, %s20
        %v275 = vld [vmem:[%s272] sm:$0xff]
        %v276 = vld [vmem:[%s272 + $0x8] sm:$0xff]
        %v277 = vld [vmem:[%s272 + $0x10] sm:$0xff]
        %v278 = vld [vmem:[%s272 + $0x18] sm:$0xff]
        %v279 = vld [vmem:[%s272 + $0x20] sm:$0xff]
        %v280 = vld [vmem:[%s272 + $0x28] sm:$0xff]
        %v281 = vld [vmem:[%s272 + $0x30] sm:$0xff]
        %v282 = vld [vmem:[%s272 + $0x38] sm:$0xff]
        %v283 = vld [vmem:[%s272 + $0x40] sm:$0xff]
        %v284 = vld [vmem:[%s272 + $0x48] sm:$0xff]
        %v285 = vld [vmem:[%s272 + $0x50] sm:$0xff]
        %v286 = vld [vmem:[%s272 + $0x58] sm:$0xff]
        %v287 = vld [vmem:[%s272 + $0x60] sm:$0xff]
        %v288 = vld [vmem:[%s272 + $0x68] sm:$0xff]
        %v289 = vld [vmem:[%s272 + $0x70] sm:$0xff]
        %v290 = vld [vmem:[%s272 + $0x78] sm:$0xff]
        %v291 = vld [vmem:[%s272 + $0x80] sm:$0xff]
        %v292 = vld [vmem:[%s272 + $0x88] sm:$0xff]
        %v293 = vld [vmem:[%s272 + $0x90] sm:$0xff]
        %v294 = vld [vmem:[%s272 + $0x98] sm:$0xff]
        %v295 = vld [vmem:[%s272 + $0xa0] sm:$0xff]
        %v296 = vld [vmem:[%s272 + $0xa8] sm:$0xff]
        %v297 = vld [vmem:[%s272 + $0xb0] sm:$0xff]
        %v298 = vld [vmem:[%s272 + $0xb8] sm:$0xff]
        %v299 = vld [vmem:[%s272 + $0xc0] sm:$0xff]
        %v300 = vld [vmem:[%s272 + $0xc8] sm:$0xff]
        %v301 = vld [vmem:[%s272 + $0xd0] sm:$0xff]
        %v302 = vld [vmem:[%s272 + $0xd8] sm:$0xff]
        %v303 = vld [vmem:[%s272 + $0xe0] sm:$0xff]
        %v304 = vld [vmem:[%s272 + $0xe8] sm:$0xff]
        %v305 = vld [vmem:[%s272 + $0xf0] sm:$0xff]
        %v306 = vld [vmem:[%s272 + $0xf8] sm:$0xff]
        %v307 = vld [vmem:[%s2] sm:$0xff]
        %v308 = vld [vmem:[%s2 + $0x8] sm:$0xff]
        %v309 = vld [vmem:[%s3] sm:$0x1]
        %v311 = vperm.slane %v309, 0
        %vm313 = vcmask 130048
        %v315 = vsel %vm313, %v275, 0
        %v318 = vsel %vm313, %v276, 0
        %v321 = vsel %vm313, %v277, 0
        %v324 = vsel %vm313, %v278, 0
        %v327 = vsel %vm313, %v279, 0
        %v330 = vsel %vm313, %v280, 0
        %v333 = vsel %vm313, %v281, 0
        %v336 = vsel %vm313, %v282, 0
        %v339 = vsel %vm313, %v283, 0
        %v342 = vsel %vm313, %v284, 0
        %v345 = vsel %vm313, %v285, 0
        %v348 = vsel %vm313, %v286, 0
        %v351 = vsel %vm313, %v287, 0
        %v354 = vsel %vm313, %v288, 0
        %v357 = vsel %vm313, %v289, 0
        %v360 = vsel %vm313, %v290, 0
        %v363 = vsel %vm313, %v291, 0
        %v366 = vsel %vm313, %v292, 0
        %v369 = vsel %vm313, %v293, 0
        %v372 = vsel %vm313, %v294, 0
        %v375 = vsel %vm313, %v295, 0
        %v378 = vsel %vm313, %v296, 0
        %v381 = vsel %vm313, %v297, 0
        %v384 = vsel %vm313, %v298, 0
        %v387 = vsel %vm313, %v299, 0
        %v390 = vsel %vm313, %v300, 0
        %v393 = vsel %vm313, %v301, 0
        %v396 = vsel %vm313, %v302, 0
        %v399 = vsel %vm313, %v303, 0
        %v402 = vsel %vm313, %v304, 0
        %v405 = vsel %vm313, %v305, 0
        %v408 = vsel %vm313, %v306, 0
        %410 = vmatpush.msra.mxu0 0.0
        %411 = vmatpush.msra.mxu0 0.0
        %412 = vmatpush.msra.mxu0 0.0
        %413 = vmatpush.msra.mxu0 0.0
        %414 = vmatpush.msra.mxu0 0.0
        %415 = vmatpush.msra.mxu0 0.0
        %416 = vmatpush.msra.mxu0 0.0
        %417 = vmatpush.msra.mxu0 0.0
        %418 = vmatpush.msra.mxu0 0.0
        %419 = vmatpush.msra.mxu0 0.0
        %420 = vmatpush.msra.mxu0 0.0
        %421 = vmatpush.msra.mxu0 0.0
        %422 = vmatpush.msra.mxu0 0.0
        %423 = vmatpush.msra.mxu0 0.0
        %424 = vmatpush.msra.mxu0 %v308
        %425 = vmatpush.msra.mxu0 %v307
        %426 = vmatmul.f32.gmra.mxu0 %v315
        %v427 = vpop.f32.mrf.mxu0
        %v428 = vadd.f32 %v311, %v427
        %429 = vmatmul.f32.gmra.mxu0 %v318
        %v430 = vpop.f32.mrf.mxu0
        %v431 = vadd.f32 %v311, %v430
        %432 = vmatmul.f32.gmra.mxu0 %v321
        %v433 = vpop.f32.mrf.mxu0
        %v434 = vadd.f32 %v311, %v433
        %435 = vmatmul.f32.gmra.mxu0 %v324
        %v436 = vpop.f32.mrf.mxu0
        %v437 = vadd.f32 %v311, %v436
        %438 = vmatmul.f32.gmra.mxu0 %v327
        %v439 = vpop.f32.mrf.mxu0
        %v440 = vadd.f32 %v311, %v439
        %441 = vmatmul.f32.gmra.mxu0 %v330
        %v442 = vpop.f32.mrf.mxu0
        %v443 = vadd.f32 %v311, %v442
        %444 = vmatmul.f32.gmra.mxu0 %v333
        %v445 = vpop.f32.mrf.mxu0
        %v446 = vadd.f32 %v311, %v445
        %447 = vmatmul.f32.gmra.mxu0 %v336
        %v448 = vpop.f32.mrf.mxu0
        %v449 = vadd.f32 %v311, %v448
        %450 = vmatmul.f32.gmra.mxu0 %v339
        %v451 = vpop.f32.mrf.mxu0
        %v452 = vadd.f32 %v311, %v451
        %453 = vmatmul.f32.gmra.mxu0 %v342
        %v454 = vpop.f32.mrf.mxu0
        %v455 = vadd.f32 %v311, %v454
        %456 = vmatmul.f32.gmra.mxu0 %v345
        %v457 = vpop.f32.mrf.mxu0
        %v458 = vadd.f32 %v311, %v457
        %459 = vmatmul.f32.gmra.mxu0 %v348
        %v460 = vpop.f32.mrf.mxu0
        %v461 = vadd.f32 %v311, %v460
        %462 = vmatmul.f32.gmra.mxu0 %v351
        %v463 = vpop.f32.mrf.mxu0
        %v464 = vadd.f32 %v311, %v463
        %465 = vmatmul.f32.gmra.mxu0 %v354
        %v466 = vpop.f32.mrf.mxu0
        %v467 = vadd.f32 %v311, %v466
        %468 = vmatmul.f32.gmra.mxu0 %v357
        %v469 = vpop.f32.mrf.mxu0
        %v470 = vadd.f32 %v311, %v469
        %471 = vmatmul.f32.gmra.mxu0 %v360
        %v472 = vpop.f32.mrf.mxu0
        %v473 = vadd.f32 %v311, %v472
        %474 = vmatmul.f32.gmra.mxu0 %v363
        %v475 = vpop.f32.mrf.mxu0
        %v476 = vadd.f32 %v311, %v475
        %477 = vmatmul.f32.gmra.mxu0 %v366
        %v478 = vpop.f32.mrf.mxu0
        %v479 = vadd.f32 %v311, %v478
        %480 = vmatmul.f32.gmra.mxu0 %v369
        %v481 = vpop.f32.mrf.mxu0
        %v482 = vadd.f32 %v311, %v481
        %483 = vmatmul.f32.gmra.mxu0 %v372
        %v484 = vpop.f32.mrf.mxu0
        %v485 = vadd.f32 %v311, %v484
        %486 = vmatmul.f32.gmra.mxu0 %v375
        %v487 = vpop.f32.mrf.mxu0
        %v488 = vadd.f32 %v311, %v487
        %489 = vmatmul.f32.gmra.mxu0 %v378
        %v490 = vpop.f32.mrf.mxu0
        %v491 = vadd.f32 %v311, %v490
        %492 = vmatmul.f32.gmra.mxu0 %v381
        %v493 = vpop.f32.mrf.mxu0
        %v494 = vadd.f32 %v311, %v493
        %495 = vmatmul.f32.gmra.mxu0 %v384
        %v496 = vpop.f32.mrf.mxu0
        %v497 = vadd.f32 %v311, %v496
        %498 = vmatmul.f32.gmra.mxu0 %v387
        %v499 = vpop.f32.mrf.mxu0
        %v500 = vadd.f32 %v311, %v499
        %501 = vmatmul.f32.gmra.mxu0 %v390
        %v502 = vpop.f32.mrf.mxu0
        %v503 = vadd.f32 %v311, %v502
        %504 = vmatmul.f32.gmra.mxu0 %v393
        %v505 = vpop.f32.mrf.mxu0
        %v506 = vadd.f32 %v311, %v505
        %507 = vmatmul.f32.gmra.mxu0 %v396
        %v508 = vpop.f32.mrf.mxu0
        %v509 = vadd.f32 %v311, %v508
        %510 = vmatmul.f32.gmra.mxu0 %v399
        %v511 = vpop.f32.mrf.mxu0
        %v512 = vadd.f32 %v311, %v511
        %513 = vmatmul.f32.gmra.mxu0 %v402
        %v514 = vpop.f32.mrf.mxu0
        %v515 = vadd.f32 %v311, %v514
        %516 = vmatmul.f32.gmra.mxu0 %v405
        %v517 = vpop.f32.mrf.mxu0
        %v518 = vadd.f32 %v311, %v517
        %519 = vmatmul.f32.gmra.mxu0 %v408
        %v520 = vpop.f32.mrf.mxu0
        %v521 = vadd.f32 %v311, %v520
        %522 = vdwg.mxu0
        %v523 = vxor.u32 %v428, 2147483648
        %v524 = vxor.u32 %v431, 2147483648
        %v525 = vxor.u32 %v434, 2147483648
        %v526 = vxor.u32 %v437, 2147483648
        %v527 = vxor.u32 %v440, 2147483648
        %v528 = vxor.u32 %v443, 2147483648
        %v529 = vxor.u32 %v446, 2147483648
        %v530 = vxor.u32 %v449, 2147483648
        %v531 = vxor.u32 %v452, 2147483648
        %v532 = vxor.u32 %v455, 2147483648
        %v533 = vxor.u32 %v458, 2147483648
        %v534 = vxor.u32 %v461, 2147483648
        %v535 = vxor.u32 %v464, 2147483648
        %v536 = vxor.u32 %v467, 2147483648
        %v537 = vxor.u32 %v470, 2147483648
        %v538 = vxor.u32 %v473, 2147483648
        %v539 = vxor.u32 %v476, 2147483648
        %v540 = vxor.u32 %v479, 2147483648
        %v541 = vxor.u32 %v482, 2147483648
        %v542 = vxor.u32 %v485, 2147483648
        %v543 = vxor.u32 %v488, 2147483648
        %v544 = vxor.u32 %v491, 2147483648
        %v545 = vxor.u32 %v494, 2147483648
        %v546 = vxor.u32 %v497, 2147483648
        %v547 = vxor.u32 %v500, 2147483648
        %v548 = vxor.u32 %v503, 2147483648
        %v549 = vxor.u32 %v506, 2147483648
        %v550 = vxor.u32 %v509, 2147483648
        %v551 = vxor.u32 %v512, 2147483648
        %v552 = vxor.u32 %v515, 2147483648
        %v553 = vxor.u32 %v518, 2147483648
        %v554 = vxor.u32 %v521, 2147483648
        %v555 = vmul.f32 %v523, 1.442695
        %v556 = vpow.pop %v555
        %v557 = vmul.f32 %v524, 1.442695
        %v558 = vpow.pop %v557
        %v559 = vmul.f32 %v525, 1.442695
        %v560 = vpow.pop %v559
        %v561 = vmul.f32 %v526, 1.442695
        %v562 = vpow.pop %v561
        %v563 = vmul.f32 %v527, 1.442695
        %v564 = vpow.pop %v563
        %v565 = vmul.f32 %v528, 1.442695
        %v566 = vpow.pop %v565
        %v567 = vmul.f32 %v529, 1.442695
        %v568 = vpow.pop %v567
        %v569 = vmul.f32 %v530, 1.442695
        %v570 = vpow.pop %v569
        %v571 = vmul.f32 %v531, 1.442695
        %v572 = vpow.pop %v571
        %v573 = vmul.f32 %v532, 1.442695
        %v574 = vpow.pop %v573
        %v575 = vmul.f32 %v533, 1.442695
        %v576 = vpow.pop %v575
        %v577 = vmul.f32 %v534, 1.442695
        %v578 = vpow.pop %v577
        %v579 = vmul.f32 %v535, 1.442695
        %v580 = vpow.pop %v579
        %v581 = vmul.f32 %v536, 1.442695
        %v582 = vpow.pop %v581
        %v583 = vmul.f32 %v537, 1.442695
        %v584 = vpow.pop %v583
        %v585 = vmul.f32 %v538, 1.442695
        %v586 = vpow.pop %v585
        %v587 = vmul.f32 %v539, 1.442695
        %v588 = vpow.pop %v587
        %v589 = vmul.f32 %v540, 1.442695
        %v590 = vpow.pop %v589
        %v591 = vmul.f32 %v541, 1.442695
        %v592 = vpow.pop %v591
        %v593 = vmul.f32 %v542, 1.442695
        %v594 = vpow.pop %v593
        %v595 = vmul.f32 %v543, 1.442695
        %v596 = vpow.pop %v595
        %v597 = vmul.f32 %v544, 1.442695
        %v598 = vpow.pop %v597
        %v599 = vmul.f32 %v545, 1.442695
        %v600 = vpow.pop %v599
        %v601 = vmul.f32 %v546, 1.442695
        %v602 = vpow.pop %v601
        %v603 = vmul.f32 %v547, 1.442695
        %v604 = vpow.pop %v603
        %v605 = vmul.f32 %v548, 1.442695
        %v606 = vpow.pop %v605
        %v607 = vmul.f32 %v549, 1.442695
        %v608 = vpow.pop %v607
        %v609 = vmul.f32 %v550, 1.442695
        %v610 = vpow.pop %v609
        %v611 = vmul.f32 %v551, 1.442695
        %v612 = vpow.pop %v611
        %v613 = vmul.f32 %v552, 1.442695
        %v614 = vpow.pop %v613
        %v615 = vmul.f32 %v553, 1.442695
        %v616 = vpow.pop %v615
        %v617 = vmul.f32 %v554, 1.442695
        %v618 = vpow.pop %v617
        %v619 = vadd.f32 %v556, 1.0
        %v620 = vadd.f32 %v558, 1.0
        %v621 = vadd.f32 %v560, 1.0
        %v622 = vadd.f32 %v562, 1.0
        %v623 = vadd.f32 %v564, 1.0
        %v624 = vadd.f32 %v566, 1.0
        %v625 = vadd.f32 %v568, 1.0
        %v626 = vadd.f32 %v570, 1.0
        %v627 = vadd.f32 %v572, 1.0
        %v628 = vadd.f32 %v574, 1.0
        %v629 = vadd.f32 %v576, 1.0
        %v630 = vadd.f32 %v578, 1.0
        %v631 = vadd.f32 %v580, 1.0
        %v632 = vadd.f32 %v582, 1.0
        %v633 = vadd.f32 %v584, 1.0
        %v634 = vadd.f32 %v586, 1.0
        %v635 = vadd.f32 %v588, 1.0
        %v636 = vadd.f32 %v590, 1.0
        %v637 = vadd.f32 %v592, 1.0
        %v638 = vadd.f32 %v594, 1.0
        %v639 = vadd.f32 %v596, 1.0
        %v640 = vadd.f32 %v598, 1.0
        %v641 = vadd.f32 %v600, 1.0
        %v642 = vadd.f32 %v602, 1.0
        %v643 = vadd.f32 %v604, 1.0
        %v644 = vadd.f32 %v606, 1.0
        %v645 = vadd.f32 %v608, 1.0
        %v646 = vadd.f32 %v610, 1.0
        %v647 = vadd.f32 %v612, 1.0
        %v648 = vadd.f32 %v614, 1.0
        %v649 = vadd.f32 %v616, 1.0
        %v650 = vadd.f32 %v618, 1.0
        %v651 = vrcp.pop %v619
        %v652 = vmul.f32 %v619, %v651
        %v653 = vsub.f32 1.0, %v652
        %v654 = vmul.f32 %v651, %v653
        %v655 = vadd.f32 %v651, %v654
        %vm656 = vweird.f32 %v619
        %vm657 = vweird.f32 %v651
        %vm658 = vmor %vm656, %vm657
        %v659 = vsel %vm658, %v651, %v655
        %v660 = vand.u32 2147483647, %v619
        %vm661 = vcmp.eq.f32.partialorder %v660, 8.507059e+37
        %v662 = vand.u32 %v619, 2147483648
        %v663 = vor.u32 1.1754944e-38, %v662
        %v664 = vsel %vm661, %v663, %v659
        %v665 = vmul.f32 1.0, %v664
        %v666 = vrcp.pop %v620
        %v667 = vmul.f32 %v620, %v666
        %v668 = vsub.f32 1.0, %v667
        %v669 = vmul.f32 %v666, %v668
        %v670 = vadd.f32 %v666, %v669
        %vm671 = vweird.f32 %v620
        %vm672 = vweird.f32 %v666
        %vm673 = vmor %vm671, %vm672
        %v674 = vsel %vm673, %v666, %v670
        %v675 = vand.u32 2147483647, %v620
        %vm676 = vcmp.eq.f32.partialorder %v675, 8.507059e+37
        %v677 = vand.u32 %v620, 2147483648
        %v678 = vor.u32 1.1754944e-38, %v677
        %v679 = vsel %vm676, %v678, %v674
        %v680 = vmul.f32 1.0, %v679
        %v681 = vrcp.pop %v621
        %v682 = vmul.f32 %v621, %v681
        %v683 = vsub.f32 1.0, %v682
        %v684 = vmul.f32 %v681, %v683
        %v685 = vadd.f32 %v681, %v684
        %vm686 = vweird.f32 %v621
        %vm687 = vweird.f32 %v681
        %vm688 = vmor %vm686, %vm687
        %v689 = vsel %vm688, %v681, %v685
        %v690 = vand.u32 2147483647, %v621
        %vm691 = vcmp.eq.f32.partialorder %v690, 8.507059e+37
        %v692 = vand.u32 %v621, 2147483648
        %v693 = vor.u32 1.1754944e-38, %v692
        %v694 = vsel %vm691, %v693, %v689
        %v695 = vmul.f32 1.0, %v694
        %v696 = vrcp.pop %v622
        %v697 = vmul.f32 %v622, %v696
        %v698 = vsub.f32 1.0, %v697
        %v699 = vmul.f32 %v696, %v698
        %v700 = vadd.f32 %v696, %v699
        %vm701 = vweird.f32 %v622
        %vm702 = vweird.f32 %v696
        %vm703 = vmor %vm701, %vm702
        %v704 = vsel %vm703, %v696, %v700
        %v705 = vand.u32 2147483647, %v622
        %vm706 = vcmp.eq.f32.partialorder %v705, 8.507059e+37
        %v707 = vand.u32 %v622, 2147483648
        %v708 = vor.u32 1.1754944e-38, %v707
        %v709 = vsel %vm706, %v708, %v704
        %v710 = vmul.f32 1.0, %v709
        %v711 = vrcp.pop %v623
        %v712 = vmul.f32 %v623, %v711
        %v713 = vsub.f32 1.0, %v712
        %v714 = vmul.f32 %v711, %v713
        %v715 = vadd.f32 %v711, %v714
        %vm716 = vweird.f32 %v623
        %vm717 = vweird.f32 %v711
        %vm718 = vmor %vm716, %vm717
        %v719 = vsel %vm718, %v711, %v715
        %v720 = vand.u32 2147483647, %v623
        %vm721 = vcmp.eq.f32.partialorder %v720, 8.507059e+37
        %v722 = vand.u32 %v623, 2147483648
        %v723 = vor.u32 1.1754944e-38, %v722
        %v724 = vsel %vm721, %v723, %v719
        %v725 = vmul.f32 1.0, %v724
        %v726 = vrcp.pop %v624
        %v727 = vmul.f32 %v624, %v726
        %v728 = vsub.f32 1.0, %v727
        %v729 = vmul.f32 %v726, %v728
        %v730 = vadd.f32 %v726, %v729
        %vm731 = vweird.f32 %v624
        %vm732 = vweird.f32 %v726
        %vm733 = vmor %vm731, %vm732
        %v734 = vsel %vm733, %v726, %v730
        %v735 = vand.u32 2147483647, %v624
        %vm736 = vcmp.eq.f32.partialorder %v735, 8.507059e+37
        %v737 = vand.u32 %v624, 2147483648
        %v738 = vor.u32 1.1754944e-38, %v737
        %v739 = vsel %vm736, %v738, %v734
        %v740 = vmul.f32 1.0, %v739
        %v741 = vrcp.pop %v625
        %v742 = vmul.f32 %v625, %v741
        %v743 = vsub.f32 1.0, %v742
        %v744 = vmul.f32 %v741, %v743
        %v745 = vadd.f32 %v741, %v744
        %vm746 = vweird.f32 %v625
        %vm747 = vweird.f32 %v741
        %vm748 = vmor %vm746, %vm747
        %v749 = vsel %vm748, %v741, %v745
        %v750 = vand.u32 2147483647, %v625
        %vm751 = vcmp.eq.f32.partialorder %v750, 8.507059e+37
        %v752 = vand.u32 %v625, 2147483648
        %v753 = vor.u32 1.1754944e-38, %v752
        %v754 = vsel %vm751, %v753, %v749
        %v755 = vmul.f32 1.0, %v754
        %v756 = vrcp.pop %v626
        %v757 = vmul.f32 %v626, %v756
        %v758 = vsub.f32 1.0, %v757
        %v759 = vmul.f32 %v756, %v758
        %v760 = vadd.f32 %v756, %v759
        %vm761 = vweird.f32 %v626
        %vm762 = vweird.f32 %v756
        %vm763 = vmor %vm761, %vm762
        %v764 = vsel %vm763, %v756, %v760
        %v765 = vand.u32 2147483647, %v626
        %vm766 = vcmp.eq.f32.partialorder %v765, 8.507059e+37
        %v767 = vand.u32 %v626, 2147483648
        %v768 = vor.u32 1.1754944e-38, %v767
        %v769 = vsel %vm766, %v768, %v764
        %v770 = vmul.f32 1.0, %v769
        %v771 = vrcp.pop %v627
        %v772 = vmul.f32 %v627, %v771
        %v773 = vsub.f32 1.0, %v772
        %v774 = vmul.f32 %v771, %v773
        %v775 = vadd.f32 %v771, %v774
        %vm776 = vweird.f32 %v627
        %vm777 = vweird.f32 %v771
        %vm778 = vmor %vm776, %vm777
        %v779 = vsel %vm778, %v771, %v775
        %v780 = vand.u32 2147483647, %v627
        %vm781 = vcmp.eq.f32.partialorder %v780, 8.507059e+37
        %v782 = vand.u32 %v627, 2147483648
        %v783 = vor.u32 1.1754944e-38, %v782
        %v784 = vsel %vm781, %v783, %v779
        %v785 = vmul.f32 1.0, %v784
        %v786 = vrcp.pop %v628
        %v787 = vmul.f32 %v628, %v786
        %v788 = vsub.f32 1.0, %v787
        %v789 = vmul.f32 %v786, %v788
        %v790 = vadd.f32 %v786, %v789
        %vm791 = vweird.f32 %v628
        %vm792 = vweird.f32 %v786
        %vm793 = vmor %vm791, %vm792
        %v794 = vsel %vm793, %v786, %v790
        %v795 = vand.u32 2147483647, %v628
        %vm796 = vcmp.eq.f32.partialorder %v795, 8.507059e+37
        %v797 = vand.u32 %v628, 2147483648
        %v798 = vor.u32 1.1754944e-38, %v797
        %v799 = vsel %vm796, %v798, %v794
        %v800 = vmul.f32 1.0, %v799
        %v801 = vrcp.pop %v629
        %v802 = vmul.f32 %v629, %v801
        %v803 = vsub.f32 1.0, %v802
        %v804 = vmul.f32 %v801, %v803
        %v805 = vadd.f32 %v801, %v804
        %vm806 = vweird.f32 %v629
        %vm807 = vweird.f32 %v801
        %vm808 = vmor %vm806, %vm807
        %v809 = vsel %vm808, %v801, %v805
        %v810 = vand.u32 2147483647, %v629
        %vm811 = vcmp.eq.f32.partialorder %v810, 8.507059e+37
        %v812 = vand.u32 %v629, 2147483648
        %v813 = vor.u32 1.1754944e-38, %v812
        %v814 = vsel %vm811, %v813, %v809
        %v815 = vmul.f32 1.0, %v814
        %v816 = vrcp.pop %v630
        %v817 = vmul.f32 %v630, %v816
        %v818 = vsub.f32 1.0, %v817
        %v819 = vmul.f32 %v816, %v818
        %v820 = vadd.f32 %v816, %v819
        %vm821 = vweird.f32 %v630
        %vm822 = vweird.f32 %v816
        %vm823 = vmor %vm821, %vm822
        %v824 = vsel %vm823, %v816, %v820
        %v825 = vand.u32 2147483647, %v630
        %vm826 = vcmp.eq.f32.partialorder %v825, 8.507059e+37
        %v827 = vand.u32 %v630, 2147483648
        %v828 = vor.u32 1.1754944e-38, %v827
        %v829 = vsel %vm826, %v828, %v824
        %v830 = vmul.f32 1.0, %v829
        %v831 = vrcp.pop %v631
        %v832 = vmul.f32 %v631, %v831
        %v833 = vsub.f32 1.0, %v832
        %v834 = vmul.f32 %v831, %v833
        %v835 = vadd.f32 %v831, %v834
        %vm836 = vweird.f32 %v631
        %vm837 = vweird.f32 %v831
        %vm838 = vmor %vm836, %vm837
        %v839 = vsel %vm838, %v831, %v835
        %v840 = vand.u32 2147483647, %v631
        %vm841 = vcmp.eq.f32.partialorder %v840, 8.507059e+37
        %v842 = vand.u32 %v631, 2147483648
        %v843 = vor.u32 1.1754944e-38, %v842
        %v844 = vsel %vm841, %v843, %v839
        %v845 = vmul.f32 1.0, %v844
        %v846 = vrcp.pop %v632
        %v847 = vmul.f32 %v632, %v846
        %v848 = vsub.f32 1.0, %v847
        %v849 = vmul.f32 %v846, %v848
        %v850 = vadd.f32 %v846, %v849
        %vm851 = vweird.f32 %v632
        %vm852 = vweird.f32 %v846
        %vm853 = vmor %vm851, %vm852
        %v854 = vsel %vm853, %v846, %v850
        %v855 = vand.u32 2147483647, %v632
        %vm856 = vcmp.eq.f32.partialorder %v855, 8.507059e+37
        %v857 = vand.u32 %v632, 2147483648
        %v858 = vor.u32 1.1754944e-38, %v857
        %v859 = vsel %vm856, %v858, %v854
        %v860 = vmul.f32 1.0, %v859
        %v861 = vrcp.pop %v633
        %v862 = vmul.f32 %v633, %v861
        %v863 = vsub.f32 1.0, %v862
        %v864 = vmul.f32 %v861, %v863
        %v865 = vadd.f32 %v861, %v864
        %vm866 = vweird.f32 %v633
        %vm867 = vweird.f32 %v861
        %vm868 = vmor %vm866, %vm867
        %v869 = vsel %vm868, %v861, %v865
        %v870 = vand.u32 2147483647, %v633
        %vm871 = vcmp.eq.f32.partialorder %v870, 8.507059e+37
        %v872 = vand.u32 %v633, 2147483648
        %v873 = vor.u32 1.1754944e-38, %v872
        %v874 = vsel %vm871, %v873, %v869
        %v875 = vmul.f32 1.0, %v874
        %v876 = vrcp.pop %v634
        %v877 = vmul.f32 %v634, %v876
        %v878 = vsub.f32 1.0, %v877
        %v879 = vmul.f32 %v876, %v878
        %v880 = vadd.f32 %v876, %v879
        %vm881 = vweird.f32 %v634
        %vm882 = vweird.f32 %v876
        %vm883 = vmor %vm881, %vm882
        %v884 = vsel %vm883, %v876, %v880
        %v885 = vand.u32 2147483647, %v634
        %vm886 = vcmp.eq.f32.partialorder %v885, 8.507059e+37
        %v887 = vand.u32 %v634, 2147483648
        %v888 = vor.u32 1.1754944e-38, %v887
        %v889 = vsel %vm886, %v888, %v884
        %v890 = vmul.f32 1.0, %v889
        %v891 = vrcp.pop %v635
        %v892 = vmul.f32 %v635, %v891
        %v893 = vsub.f32 1.0, %v892
        %v894 = vmul.f32 %v891, %v893
        %v895 = vadd.f32 %v891, %v894
        %vm896 = vweird.f32 %v635
        %vm897 = vweird.f32 %v891
        %vm898 = vmor %vm896, %vm897
        %v899 = vsel %vm898, %v891, %v895
        %v900 = vand.u32 2147483647, %v635
        %vm901 = vcmp.eq.f32.partialorder %v900, 8.507059e+37
        %v902 = vand.u32 %v635, 2147483648
        %v903 = vor.u32 1.1754944e-38, %v902
        %v904 = vsel %vm901, %v903, %v899
        %v905 = vmul.f32 1.0, %v904
        %v906 = vrcp.pop %v636
        %v907 = vmul.f32 %v636, %v906
        %v908 = vsub.f32 1.0, %v907
        %v909 = vmul.f32 %v906, %v908
        %v910 = vadd.f32 %v906, %v909
        %vm911 = vweird.f32 %v636
        %vm912 = vweird.f32 %v906
        %vm913 = vmor %vm911, %vm912
        %v914 = vsel %vm913, %v906, %v910
        %v915 = vand.u32 2147483647, %v636
        %vm916 = vcmp.eq.f32.partialorder %v915, 8.507059e+37
        %v917 = vand.u32 %v636, 2147483648
        %v918 = vor.u32 1.1754944e-38, %v917
        %v919 = vsel %vm916, %v918, %v914
        %v920 = vmul.f32 1.0, %v919
        %v921 = vrcp.pop %v637
        %v922 = vmul.f32 %v637, %v921
        %v923 = vsub.f32 1.0, %v922
        %v924 = vmul.f32 %v921, %v923
        %v925 = vadd.f32 %v921, %v924
        %vm926 = vweird.f32 %v637
        %vm927 = vweird.f32 %v921
        %vm928 = vmor %vm926, %vm927
        %v929 = vsel %vm928, %v921, %v925
        %v930 = vand.u32 2147483647, %v637
        %vm931 = vcmp.eq.f32.partialorder %v930, 8.507059e+37
        %v932 = vand.u32 %v637, 2147483648
        %v933 = vor.u32 1.1754944e-38, %v932
        %v934 = vsel %vm931, %v933, %v929
        %v935 = vmul.f32 1.0, %v934
        %v936 = vrcp.pop %v638
        %v937 = vmul.f32 %v638, %v936
        %v938 = vsub.f32 1.0, %v937
        %v939 = vmul.f32 %v936, %v938
        %v940 = vadd.f32 %v936, %v939
        %vm941 = vweird.f32 %v638
        %vm942 = vweird.f32 %v936
        %vm943 = vmor %vm941, %vm942
        %v944 = vsel %vm943, %v936, %v940
        %v945 = vand.u32 2147483647, %v638
        %vm946 = vcmp.eq.f32.partialorder %v945, 8.507059e+37
        %v947 = vand.u32 %v638, 2147483648
        %v948 = vor.u32 1.1754944e-38, %v947
        %v949 = vsel %vm946, %v948, %v944
        %v950 = vmul.f32 1.0, %v949
        %v951 = vrcp.pop %v639
        %v952 = vmul.f32 %v639, %v951
        %v953 = vsub.f32 1.0, %v952
        %v954 = vmul.f32 %v951, %v953
        %v955 = vadd.f32 %v951, %v954
        %vm956 = vweird.f32 %v639
        %vm957 = vweird.f32 %v951
        %vm958 = vmor %vm956, %vm957
        %v959 = vsel %vm958, %v951, %v955
        %v960 = vand.u32 2147483647, %v639
        %vm961 = vcmp.eq.f32.partialorder %v960, 8.507059e+37
        %v962 = vand.u32 %v639, 2147483648
        %v963 = vor.u32 1.1754944e-38, %v962
        %v964 = vsel %vm961, %v963, %v959
        %v965 = vmul.f32 1.0, %v964
        %v966 = vrcp.pop %v640
        %v967 = vmul.f32 %v640, %v966
        %v968 = vsub.f32 1.0, %v967
        %v969 = vmul.f32 %v966, %v968
        %v970 = vadd.f32 %v966, %v969
        %vm971 = vweird.f32 %v640
        %vm972 = vweird.f32 %v966
        %vm973 = vmor %vm971, %vm972
        %v974 = vsel %vm973, %v966, %v970
        %v975 = vand.u32 2147483647, %v640
        %vm976 = vcmp.eq.f32.partialorder %v975, 8.507059e+37
        %v977 = vand.u32 %v640, 2147483648
        %v978 = vor.u32 1.1754944e-38, %v977
        %v979 = vsel %vm976, %v978, %v974
        %v980 = vmul.f32 1.0, %v979
        %v981 = vrcp.pop %v641
        %v982 = vmul.f32 %v641, %v981
        %v983 = vsub.f32 1.0, %v982
        %v984 = vmul.f32 %v981, %v983
        %v985 = vadd.f32 %v981, %v984
        %vm986 = vweird.f32 %v641
        %vm987 = vweird.f32 %v981
        %vm988 = vmor %vm986, %vm987
        %v989 = vsel %vm988, %v981, %v985
        %v990 = vand.u32 2147483647, %v641
        %vm991 = vcmp.eq.f32.partialorder %v990, 8.507059e+37
        %v992 = vand.u32 %v641, 2147483648
        %v993 = vor.u32 1.1754944e-38, %v992
        %v994 = vsel %vm991, %v993, %v989
        %v995 = vmul.f32 1.0, %v994
        %v996 = vrcp.pop %v642
        %v997 = vmul.f32 %v642, %v996
        %v998 = vsub.f32 1.0, %v997
        %v999 = vmul.f32 %v996, %v998
        %v1000 = vadd.f32 %v996, %v999
        %vm1001 = vweird.f32 %v642
        %vm1002 = vweird.f32 %v996
        %vm1003 = vmor %vm1001, %vm1002
        %v1004 = vsel %vm1003, %v996, %v1000
        %v1005 = vand.u32 2147483647, %v642
        %vm1006 = vcmp.eq.f32.partialorder %v1005, 8.507059e+37
        %v1007 = vand.u32 %v642, 2147483648
        %v1008 = vor.u32 1.1754944e-38, %v1007
        %v1009 = vsel %vm1006, %v1008, %v1004
        %v1010 = vmul.f32 1.0, %v1009
        %v1011 = vrcp.pop %v643
        %v1012 = vmul.f32 %v643, %v1011
        %v1013 = vsub.f32 1.0, %v1012
        %v1014 = vmul.f32 %v1011, %v1013
        %v1015 = vadd.f32 %v1011, %v1014
        %vm1016 = vweird.f32 %v643
        %vm1017 = vweird.f32 %v1011
        %vm1018 = vmor %vm1016, %vm1017
        %v1019 = vsel %vm1018, %v1011, %v1015
        %v1020 = vand.u32 2147483647, %v643
        %vm1021 = vcmp.eq.f32.partialorder %v1020, 8.507059e+37
        %v1022 = vand.u32 %v643, 2147483648
        %v1023 = vor.u32 1.1754944e-38, %v1022
        %v1024 = vsel %vm1021, %v1023, %v1019
        %v1025 = vmul.f32 1.0, %v1024
        %v1026 = vrcp.pop %v644
        %v1027 = vmul.f32 %v644, %v1026
        %v1028 = vsub.f32 1.0, %v1027
        %v1029 = vmul.f32 %v1026, %v1028
        %v1030 = vadd.f32 %v1026, %v1029
        %vm1031 = vweird.f32 %v644
        %vm1032 = vweird.f32 %v1026
        %vm1033 = vmor %vm1031, %vm1032
        %v1034 = vsel %vm1033, %v1026, %v1030
        %v1035 = vand.u32 2147483647, %v644
        %vm1036 = vcmp.eq.f32.partialorder %v1035, 8.507059e+37
        %v1037 = vand.u32 %v644, 2147483648
        %v1038 = vor.u32 1.1754944e-38, %v1037
        %v1039 = vsel %vm1036, %v1038, %v1034
        %v1040 = vmul.f32 1.0, %v1039
        %v1041 = vrcp.pop %v645
        %v1042 = vmul.f32 %v645, %v1041
        %v1043 = vsub.f32 1.0, %v1042
        %v1044 = vmul.f32 %v1041, %v1043
        %v1045 = vadd.f32 %v1041, %v1044
        %vm1046 = vweird.f32 %v645
        %vm1047 = vweird.f32 %v1041
        %vm1048 = vmor %vm1046, %vm1047
        %v1049 = vsel %vm1048, %v1041, %v1045
        %v1050 = vand.u32 2147483647, %v645
        %vm1051 = vcmp.eq.f32.partialorder %v1050, 8.507059e+37
        %v1052 = vand.u32 %v645, 2147483648
        %v1053 = vor.u32 1.1754944e-38, %v1052
        %v1054 = vsel %vm1051, %v1053, %v1049
        %v1055 = vmul.f32 1.0, %v1054
        %v1056 = vrcp.pop %v646
        %v1057 = vmul.f32 %v646, %v1056
        %v1058 = vsub.f32 1.0, %v1057
        %v1059 = vmul.f32 %v1056, %v1058
        %v1060 = vadd.f32 %v1056, %v1059
        %vm1061 = vweird.f32 %v646
        %vm1062 = vweird.f32 %v1056
        %vm1063 = vmor %vm1061, %vm1062
        %v1064 = vsel %vm1063, %v1056, %v1060
        %v1065 = vand.u32 2147483647, %v646
        %vm1066 = vcmp.eq.f32.partialorder %v1065, 8.507059e+37
        %v1067 = vand.u32 %v646, 2147483648
        %v1068 = vor.u32 1.1754944e-38, %v1067
        %v1069 = vsel %vm1066, %v1068, %v1064
        %v1070 = vmul.f32 1.0, %v1069
        %v1071 = vrcp.pop %v647
        %v1072 = vmul.f32 %v647, %v1071
        %v1073 = vsub.f32 1.0, %v1072
        %v1074 = vmul.f32 %v1071, %v1073
        %v1075 = vadd.f32 %v1071, %v1074
        %vm1076 = vweird.f32 %v647
        %vm1077 = vweird.f32 %v1071
        %vm1078 = vmor %vm1076, %vm1077
        %v1079 = vsel %vm1078, %v1071, %v1075
        %v1080 = vand.u32 2147483647, %v647
        %vm1081 = vcmp.eq.f32.partialorder %v1080, 8.507059e+37
        %v1082 = vand.u32 %v647, 2147483648
        %v1083 = vor.u32 1.1754944e-38, %v1082
        %v1084 = vsel %vm1081, %v1083, %v1079
        %v1085 = vmul.f32 1.0, %v1084
        %v1086 = vrcp.pop %v648
        %v1087 = vmul.f32 %v648, %v1086
        %v1088 = vsub.f32 1.0, %v1087
        %v1089 = vmul.f32 %v1086, %v1088
        %v1090 = vadd.f32 %v1086, %v1089
        %vm1091 = vweird.f32 %v648
        %vm1092 = vweird.f32 %v1086
        %vm1093 = vmor %vm1091, %vm1092
        %v1094 = vsel %vm1093, %v1086, %v1090
        %v1095 = vand.u32 2147483647, %v648
        %vm1096 = vcmp.eq.f32.partialorder %v1095, 8.507059e+37
        %v1097 = vand.u32 %v648, 2147483648
        %v1098 = vor.u32 1.1754944e-38, %v1097
        %v1099 = vsel %vm1096, %v1098, %v1094
        %v1100 = vmul.f32 1.0, %v1099
        %v1101 = vrcp.pop %v649
        %v1102 = vmul.f32 %v649, %v1101
        %v1103 = vsub.f32 1.0, %v1102
        %v1104 = vmul.f32 %v1101, %v1103
        %v1105 = vadd.f32 %v1101, %v1104
        %vm1106 = vweird.f32 %v649
        %vm1107 = vweird.f32 %v1101
        %vm1108 = vmor %vm1106, %vm1107
        %v1109 = vsel %vm1108, %v1101, %v1105
        %v1110 = vand.u32 2147483647, %v649
        %vm1111 = vcmp.eq.f32.partialorder %v1110, 8.507059e+37
        %v1112 = vand.u32 %v649, 2147483648
        %v1113 = vor.u32 1.1754944e-38, %v1112
        %v1114 = vsel %vm1111, %v1113, %v1109
        %v1115 = vmul.f32 1.0, %v1114
        %v1116 = vrcp.pop %v650
        %v1117 = vmul.f32 %v650, %v1116
        %v1118 = vsub.f32 1.0, %v1117
        %v1119 = vmul.f32 %v1116, %v1118
        %v1120 = vadd.f32 %v1116, %v1119
        %vm1121 = vweird.f32 %v650
        %vm1122 = vweird.f32 %v1116
        %vm1123 = vmor %vm1121, %vm1122
        %v1124 = vsel %vm1123, %v1116, %v1120
        %v1125 = vand.u32 2147483647, %v650
        %vm1126 = vcmp.eq.f32.partialorder %v1125, 8.507059e+37
        %v1127 = vand.u32 %v650, 2147483648
        %v1128 = vor.u32 1.1754944e-38, %v1127
        %v1129 = vsel %vm1126, %v1128, %v1124
        %v1130 = vmul.f32 1.0, %v1129
        %v1131 = vmul.f32 %v428, %v665
        %v1132 = vmul.f32 %v431, %v680
        %v1133 = vmul.f32 %v434, %v695
        %v1134 = vmul.f32 %v437, %v710
        %v1135 = vmul.f32 %v440, %v725
        %v1136 = vmul.f32 %v443, %v740
        %v1137 = vmul.f32 %v446, %v755
        %v1138 = vmul.f32 %v449, %v770
        %v1139 = vmul.f32 %v452, %v785
        %v1140 = vmul.f32 %v455, %v800
        %v1141 = vmul.f32 %v458, %v815
        %v1142 = vmul.f32 %v461, %v830
        %v1143 = vmul.f32 %v464, %v845
        %v1144 = vmul.f32 %v467, %v860
        %v1145 = vmul.f32 %v470, %v875
        %v1146 = vmul.f32 %v473, %v890
        %v1147 = vmul.f32 %v476, %v905
        %v1148 = vmul.f32 %v479, %v920
        %v1149 = vmul.f32 %v482, %v935
        %v1150 = vmul.f32 %v485, %v950
        %v1151 = vmul.f32 %v488, %v965
        %v1152 = vmul.f32 %v491, %v980
        %v1153 = vmul.f32 %v494, %v995
        %v1154 = vmul.f32 %v497, %v1010
        %v1155 = vmul.f32 %v500, %v1025
        %v1156 = vmul.f32 %v503, %v1040
        %v1157 = vmul.f32 %v506, %v1055
        %v1158 = vmul.f32 %v509, %v1070
        %v1159 = vmul.f32 %v512, %v1085
        %v1160 = vmul.f32 %v515, %v1100
        %v1161 = vmul.f32 %v518, %v1115
        %v1162 = vmul.f32 %v521, %v1130
        %v1163 = vld [vmem:[%s266] sm:$0xff]
        %v1164 = vld [vmem:[%s266 + $0x8] sm:$0xff]
        %v1165 = vld [vmem:[%s266 + $0x10] sm:$0xff]
        %v1166 = vld [vmem:[%s266 + $0x18] sm:$0xff]
        %v1167 = vld [vmem:[%s266 + $0x20] sm:$0xff]
        %v1168 = vld [vmem:[%s266 + $0x28] sm:$0xff]
        %v1169 = vld [vmem:[%s266 + $0x30] sm:$0xff]
        %v1170 = vld [vmem:[%s266 + $0x38] sm:$0xff]
        %v1171 = vld [vmem:[%s266 + $0x40] sm:$0xff]
        %v1172 = vld [vmem:[%s266 + $0x48] sm:$0xff]
        %v1173 = vld [vmem:[%s266 + $0x50] sm:$0xff]
        %v1174 = vld [vmem:[%s266 + $0x58] sm:$0xff]
        %v1175 = vld [vmem:[%s266 + $0x60] sm:$0xff]
        %v1176 = vld [vmem:[%s266 + $0x68] sm:$0xff]
        %v1177 = vld [vmem:[%s266 + $0x70] sm:$0xff]
        %v1178 = vld [vmem:[%s266 + $0x78] sm:$0xff]
        %v1179 = vld [vmem:[%s266 + $0x80] sm:$0xff]
        %v1180 = vld [vmem:[%s266 + $0x88] sm:$0xff]
        %v1181 = vld [vmem:[%s266 + $0x90] sm:$0xff]
        %v1182 = vld [vmem:[%s266 + $0x98] sm:$0xff]
        %v1183 = vld [vmem:[%s266 + $0xa0] sm:$0xff]
        %v1184 = vld [vmem:[%s266 + $0xa8] sm:$0xff]
        %v1185 = vld [vmem:[%s266 + $0xb0] sm:$0xff]
        %v1186 = vld [vmem:[%s266 + $0xb8] sm:$0xff]
        %v1187 = vld [vmem:[%s266 + $0xc0] sm:$0xff]
        %v1188 = vld [vmem:[%s266 + $0xc8] sm:$0xff]
        %v1189 = vld [vmem:[%s266 + $0xd0] sm:$0xff]
        %v1190 = vld [vmem:[%s266 + $0xd8] sm:$0xff]
        %v1191 = vld [vmem:[%s266 + $0xe0] sm:$0xff]
        %v1192 = vld [vmem:[%s266 + $0xe8] sm:$0xff]
        %v1193 = vld [vmem:[%s266 + $0xf0] sm:$0xff]
        %v1194 = vld [vmem:[%s266 + $0xf8] sm:$0xff]
        %1227 = vrot.lane.b32.xlu0 %v1131, 16
        %v1228 = vpop.permute.xlu0 %1227
        %1229 = vrot.lane.b32.xlu0 %v1132, 16
        %v1230 = vpop.permute.xlu0 %1229
        %1231 = vrot.lane.b32.xlu0 %v1133, 16
        %v1232 = vpop.permute.xlu0 %1231
        %1233 = vrot.lane.b32.xlu0 %v1134, 16
        %v1234 = vpop.permute.xlu0 %1233
        %1235 = vrot.lane.b32.xlu0 %v1135, 16
        %v1236 = vpop.permute.xlu0 %1235
        %1237 = vrot.lane.b32.xlu0 %v1136, 16
        %v1238 = vpop.permute.xlu0 %1237
        %1239 = vrot.lane.b32.xlu0 %v1137, 16
        %v1240 = vpop.permute.xlu0 %1239
        %1241 = vrot.lane.b32.xlu0 %v1138, 16
        %v1242 = vpop.permute.xlu0 %1241
        %1243 = vrot.lane.b32.xlu0 %v1139, 16
        %v1244 = vpop.permute.xlu0 %1243
        %1245 = vrot.lane.b32.xlu0 %v1140, 16
        %v1246 = vpop.permute.xlu0 %1245
        %1247 = vrot.lane.b32.xlu0 %v1141, 16
        %v1248 = vpop.permute.xlu0 %1247
        %1249 = vrot.lane.b32.xlu0 %v1142, 16
        %v1250 = vpop.permute.xlu0 %1249
        %1251 = vrot.lane.b32.xlu0 %v1143, 16
        %v1252 = vpop.permute.xlu0 %1251
        %1253 = vrot.lane.b32.xlu0 %v1144, 16
        %v1254 = vpop.permute.xlu0 %1253
        %1255 = vrot.lane.b32.xlu0 %v1145, 16
        %v1256 = vpop.permute.xlu0 %1255
        %1257 = vrot.lane.b32.xlu0 %v1146, 16
        %v1258 = vpop.permute.xlu0 %1257
        %1259 = vrot.lane.b32.xlu0 %v1147, 16
        %v1260 = vpop.permute.xlu0 %1259
        %1261 = vrot.lane.b32.xlu0 %v1148, 16
        %v1262 = vpop.permute.xlu0 %1261
        %1263 = vrot.lane.b32.xlu0 %v1149, 16
        %v1264 = vpop.permute.xlu0 %1263
        %1265 = vrot.lane.b32.xlu0 %v1150, 16
        %v1266 = vpop.permute.xlu0 %1265
        %1267 = vrot.lane.b32.xlu0 %v1151, 16
        %v1268 = vpop.permute.xlu0 %1267
        %1269 = vrot.lane.b32.xlu0 %v1152, 16
        %v1270 = vpop.permute.xlu0 %1269
        %1271 = vrot.lane.b32.xlu0 %v1153, 16
        %v1272 = vpop.permute.xlu0 %1271
        %1273 = vrot.lane.b32.xlu0 %v1154, 16
        %v1274 = vpop.permute.xlu0 %1273
        %1275 = vrot.lane.b32.xlu0 %v1155, 16
        %v1276 = vpop.permute.xlu0 %1275
        %1277 = vrot.lane.b32.xlu0 %v1156, 16
        %v1278 = vpop.permute.xlu0 %1277
        %1279 = vrot.lane.b32.xlu0 %v1157, 16
        %v1280 = vpop.permute.xlu0 %1279
        %1281 = vrot.lane.b32.xlu0 %v1158, 16
        %v1282 = vpop.permute.xlu0 %1281
        %1283 = vrot.lane.b32.xlu0 %v1159, 16
        %v1284 = vpop.permute.xlu0 %1283
        %1285 = vrot.lane.b32.xlu0 %v1160, 16
        %v1286 = vpop.permute.xlu0 %1285
        %1287 = vrot.lane.b32.xlu0 %v1161, 16
        %v1288 = vpop.permute.xlu0 %1287
        %1289 = vrot.lane.b32.xlu0 %v1162, 16
        %v1290 = vpop.permute.xlu0 %1289
        %v1323 = vsel %vm313, %v1163, %v1228
        %v1324 = vsel %vm313, %v1164, %v1230
        %v1325 = vsel %vm313, %v1165, %v1232
        %v1326 = vsel %vm313, %v1166, %v1234
        %v1327 = vsel %vm313, %v1167, %v1236
        %v1328 = vsel %vm313, %v1168, %v1238
        %v1329 = vsel %vm313, %v1169, %v1240
        %v1330 = vsel %vm313, %v1170, %v1242
        %v1331 = vsel %vm313, %v1171, %v1244
        %v1332 = vsel %vm313, %v1172, %v1246
        %v1333 = vsel %vm313, %v1173, %v1248
        %v1334 = vsel %vm313, %v1174, %v1250
        %v1335 = vsel %vm313, %v1175, %v1252
        %v1336 = vsel %vm313, %v1176, %v1254
        %v1337 = vsel %vm313, %v1177, %v1256
        %v1338 = vsel %vm313, %v1178, %v1258
        %v1339 = vsel %vm313, %v1179, %v1260
        %v1340 = vsel %vm313, %v1180, %v1262
        %v1341 = vsel %vm313, %v1181, %v1264
        %v1342 = vsel %vm313, %v1182, %v1266
        %v1343 = vsel %vm313, %v1183, %v1268
        %v1344 = vsel %vm313, %v1184, %v1270
        %v1345 = vsel %vm313, %v1185, %v1272
        %v1346 = vsel %vm313, %v1186, %v1274
        %v1347 = vsel %vm313, %v1187, %v1276
        %v1348 = vsel %vm313, %v1188, %v1278
        %v1349 = vsel %vm313, %v1189, %v1280
        %v1350 = vsel %vm313, %v1190, %v1282
        %v1351 = vsel %vm313, %v1191, %v1284
        %v1352 = vsel %vm313, %v1192, %v1286
        %v1353 = vsel %vm313, %v1193, %v1288
        %v1354 = vsel %vm313, %v1194, %v1290
        %v1355 = vld [vmem:[%s4] sm:$0xff]
        %v1356 = vld [vmem:[%s4 + $0x8] sm:$0xff]
        %v1357 = vld [vmem:[%s4 + $0x10] sm:$0xff]
        %v1358 = vld [vmem:[%s4 + $0x18] sm:$0xff]
        %v1359 = vld [vmem:[%s5] sm:$0x1]
        %v1361 = vperm.slane %v1359, 0
        %vm1363 = vcmask 261120
        %v1365 = vsel %vm1363, %v1323, 0
        %v1368 = vsel %vm1363, %v1324, 0
        %v1371 = vsel %vm1363, %v1325, 0
        %v1374 = vsel %vm1363, %v1326, 0
        %v1377 = vsel %vm1363, %v1327, 0
        %v1380 = vsel %vm1363, %v1328, 0
        %v1383 = vsel %vm1363, %v1329, 0
        %v1386 = vsel %vm1363, %v1330, 0
        %v1389 = vsel %vm1363, %v1331, 0
        %v1392 = vsel %vm1363, %v1332, 0
        %v1395 = vsel %vm1363, %v1333, 0
        %v1398 = vsel %vm1363, %v1334, 0
        %v1401 = vsel %vm1363, %v1335, 0
        %v1404 = vsel %vm1363, %v1336, 0
        %v1407 = vsel %vm1363, %v1337, 0
        %v1410 = vsel %vm1363, %v1338, 0
        %v1413 = vsel %vm1363, %v1339, 0
        %v1416 = vsel %vm1363, %v1340, 0
        %v1419 = vsel %vm1363, %v1341, 0
        %v1422 = vsel %vm1363, %v1342, 0
        %v1425 = vsel %vm1363, %v1343, 0
        %v1428 = vsel %vm1363, %v1344, 0
        %v1431 = vsel %vm1363, %v1345, 0
        %v1434 = vsel %vm1363, %v1346, 0
        %v1437 = vsel %vm1363, %v1347, 0
        %v1440 = vsel %vm1363, %v1348, 0
        %v1443 = vsel %vm1363, %v1349, 0
        %v1446 = vsel %vm1363, %v1350, 0
        %v1449 = vsel %vm1363, %v1351, 0
        %v1452 = vsel %vm1363, %v1352, 0
        %v1455 = vsel %vm1363, %v1353, 0
        %v1458 = vsel %vm1363, %v1354, 0
        %1460 = vmatpush.msra.mxu0 0.0
        %1461 = vmatpush.msra.mxu0 0.0
        %1462 = vmatpush.msra.mxu0 0.0
        %1463 = vmatpush.msra.mxu0 0.0
        %1464 = vmatpush.msra.mxu0 0.0
        %1465 = vmatpush.msra.mxu0 0.0
        %1466 = vmatpush.msra.mxu0 0.0
        %1467 = vmatpush.msra.mxu0 0.0
        %1468 = vmatpush.msra.mxu0 0.0
        %1469 = vmatpush.msra.mxu0 0.0
        %1470 = vmatpush.msra.mxu0 0.0
        %1471 = vmatpush.msra.mxu0 0.0
        %1472 = vmatpush.msra.mxu0 %v1358
        %1473 = vmatpush.msra.mxu0 %v1357
        %1474 = vmatpush.msra.mxu0 %v1356
        %1475 = vmatpush.msra.mxu0 %v1355
        %1476 = vmatmul.f32.gmra.mxu0 %v1365
        %v1477 = vpop.f32.mrf.mxu0
        %v1478 = vadd.f32 %v1361, %v1477
        %1479 = vmatmul.f32.gmra.mxu0 %v1368
        %v1480 = vpop.f32.mrf.mxu0
        %v1481 = vadd.f32 %v1361, %v1480
        %1482 = vmatmul.f32.gmra.mxu0 %v1371
        %v1483 = vpop.f32.mrf.mxu0
        %v1484 = vadd.f32 %v1361, %v1483
        %1485 = vmatmul.f32.gmra.mxu0 %v1374
        %v1486 = vpop.f32.mrf.mxu0
        %v1487 = vadd.f32 %v1361, %v1486
        %1488 = vmatmul.f32.gmra.mxu0 %v1377
        %v1489 = vpop.f32.mrf.mxu0
        %v1490 = vadd.f32 %v1361, %v1489
        %1491 = vmatmul.f32.gmra.mxu0 %v1380
        %v1492 = vpop.f32.mrf.mxu0
        %v1493 = vadd.f32 %v1361, %v1492
        %1494 = vmatmul.f32.gmra.mxu0 %v1383
        %v1495 = vpop.f32.mrf.mxu0
        %v1496 = vadd.f32 %v1361, %v1495
        %1497 = vmatmul.f32.gmra.mxu0 %v1386
        %v1498 = vpop.f32.mrf.mxu0
        %v1499 = vadd.f32 %v1361, %v1498
        %1500 = vmatmul.f32.gmra.mxu0 %v1389
        %v1501 = vpop.f32.mrf.mxu0
        %v1502 = vadd.f32 %v1361, %v1501
        %1503 = vmatmul.f32.gmra.mxu0 %v1392
        %v1504 = vpop.f32.mrf.mxu0
        %v1505 = vadd.f32 %v1361, %v1504
        %1506 = vmatmul.f32.gmra.mxu0 %v1395
        %v1507 = vpop.f32.mrf.mxu0
        %v1508 = vadd.f32 %v1361, %v1507
        %1509 = vmatmul.f32.gmra.mxu0 %v1398
        %v1510 = vpop.f32.mrf.mxu0
        %v1511 = vadd.f32 %v1361, %v1510
        %1512 = vmatmul.f32.gmra.mxu0 %v1401
        %v1513 = vpop.f32.mrf.mxu0
        %v1514 = vadd.f32 %v1361, %v1513
        %1515 = vmatmul.f32.gmra.mxu0 %v1404
        %v1516 = vpop.f32.mrf.mxu0
        %v1517 = vadd.f32 %v1361, %v1516
        %1518 = vmatmul.f32.gmra.mxu0 %v1407
        %v1519 = vpop.f32.mrf.mxu0
        %v1520 = vadd.f32 %v1361, %v1519
        %1521 = vmatmul.f32.gmra.mxu0 %v1410
        %v1522 = vpop.f32.mrf.mxu0
        %v1523 = vadd.f32 %v1361, %v1522
        %1524 = vmatmul.f32.gmra.mxu0 %v1413
        %v1525 = vpop.f32.mrf.mxu0
        %v1526 = vadd.f32 %v1361, %v1525
        %1527 = vmatmul.f32.gmra.mxu0 %v1416
        %v1528 = vpop.f32.mrf.mxu0
        %v1529 = vadd.f32 %v1361, %v1528
        %1530 = vmatmul.f32.gmra.mxu0 %v1419
        %v1531 = vpop.f32.mrf.mxu0
        %v1532 = vadd.f32 %v1361, %v1531
        %1533 = vmatmul.f32.gmra.mxu0 %v1422
        %v1534 = vpop.f32.mrf.mxu0
        %v1535 = vadd.f32 %v1361, %v1534
        %1536 = vmatmul.f32.gmra.mxu0 %v1425
        %v1537 = vpop.f32.mrf.mxu0
        %v1538 = vadd.f32 %v1361, %v1537
        %1539 = vmatmul.f32.gmra.mxu0 %v1428
        %v1540 = vpop.f32.mrf.mxu0
        %v1541 = vadd.f32 %v1361, %v1540
        %1542 = vmatmul.f32.gmra.mxu0 %v1431
        %v1543 = vpop.f32.mrf.mxu0
        %v1544 = vadd.f32 %v1361, %v1543
        %1545 = vmatmul.f32.gmra.mxu0 %v1434
        %v1546 = vpop.f32.mrf.mxu0
        %v1547 = vadd.f32 %v1361, %v1546
        %1548 = vmatmul.f32.gmra.mxu0 %v1437
        %v1549 = vpop.f32.mrf.mxu0
        %v1550 = vadd.f32 %v1361, %v1549
        %1551 = vmatmul.f32.gmra.mxu0 %v1440
        %v1552 = vpop.f32.mrf.mxu0
        %v1553 = vadd.f32 %v1361, %v1552
        %1554 = vmatmul.f32.gmra.mxu0 %v1443
        %v1555 = vpop.f32.mrf.mxu0
        %v1556 = vadd.f32 %v1361, %v1555
        %1557 = vmatmul.f32.gmra.mxu0 %v1446
        %v1558 = vpop.f32.mrf.mxu0
        %v1559 = vadd.f32 %v1361, %v1558
        %1560 = vmatmul.f32.gmra.mxu0 %v1449
        %v1561 = vpop.f32.mrf.mxu0
        %v1562 = vadd.f32 %v1361, %v1561
        %1563 = vmatmul.f32.gmra.mxu0 %v1452
        %v1564 = vpop.f32.mrf.mxu0
        %v1565 = vadd.f32 %v1361, %v1564
        %1566 = vmatmul.f32.gmra.mxu0 %v1455
        %v1567 = vpop.f32.mrf.mxu0
        %v1568 = vadd.f32 %v1361, %v1567
        %1569 = vmatmul.f32.gmra.mxu0 %v1458
        %v1570 = vpop.f32.mrf.mxu0
        %v1571 = vadd.f32 %v1361, %v1570
        %1572 = vdwg.mxu0
        %v1573 = vxor.u32 %v1478, 2147483648
        %v1574 = vxor.u32 %v1481, 2147483648
        %v1575 = vxor.u32 %v1484, 2147483648
        %v1576 = vxor.u32 %v1487, 2147483648
        %v1577 = vxor.u32 %v1490, 2147483648
        %v1578 = vxor.u32 %v1493, 2147483648
        %v1579 = vxor.u32 %v1496, 2147483648
        %v1580 = vxor.u32 %v1499, 2147483648
        %v1581 = vxor.u32 %v1502, 2147483648
        %v1582 = vxor.u32 %v1505, 2147483648
        %v1583 = vxor.u32 %v1508, 2147483648
        %v1584 = vxor.u32 %v1511, 2147483648
        %v1585 = vxor.u32 %v1514, 2147483648
        %v1586 = vxor.u32 %v1517, 2147483648
        %v1587 = vxor.u32 %v1520, 2147483648
        %v1588 = vxor.u32 %v1523, 2147483648
        %v1589 = vxor.u32 %v1526, 2147483648
        %v1590 = vxor.u32 %v1529, 2147483648
        %v1591 = vxor.u32 %v1532, 2147483648
        %v1592 = vxor.u32 %v1535, 2147483648
        %v1593 = vxor.u32 %v1538, 2147483648
        %v1594 = vxor.u32 %v1541, 2147483648
        %v1595 = vxor.u32 %v1544, 2147483648
        %v1596 = vxor.u32 %v1547, 2147483648
        %v1597 = vxor.u32 %v1550, 2147483648
        %v1598 = vxor.u32 %v1553, 2147483648
        %v1599 = vxor.u32 %v1556, 2147483648
        %v1600 = vxor.u32 %v1559, 2147483648
        %v1601 = vxor.u32 %v1562, 2147483648
        %v1602 = vxor.u32 %v1565, 2147483648
        %v1603 = vxor.u32 %v1568, 2147483648
        %v1604 = vxor.u32 %v1571, 2147483648
        %v1605 = vmul.f32 %v1573, 1.442695
        %v1606 = vpow.pop %v1605
        %v1607 = vmul.f32 %v1574, 1.442695
        %v1608 = vpow.pop %v1607
        %v1609 = vmul.f32 %v1575, 1.442695
        %v1610 = vpow.pop %v1609
        %v1611 = vmul.f32 %v1576, 1.442695
        %v1612 = vpow.pop %v1611
        %v1613 = vmul.f32 %v1577, 1.442695
        %v1614 = vpow.pop %v1613
        %v1615 = vmul.f32 %v1578, 1.442695
        %v1616 = vpow.pop %v1615
        %v1617 = vmul.f32 %v1579, 1.442695
        %v1618 = vpow.pop %v1617
        %v1619 = vmul.f32 %v1580, 1.442695
        %v1620 = vpow.pop %v1619
        %v1621 = vmul.f32 %v1581, 1.442695
        %v1622 = vpow.pop %v1621
        %v1623 = vmul.f32 %v1582, 1.442695
        %v1624 = vpow.pop %v1623
        %v1625 = vmul.f32 %v1583, 1.442695
        %v1626 = vpow.pop %v1625
        %v1627 = vmul.f32 %v1584, 1.442695
        %v1628 = vpow.pop %v1627
        %v1629 = vmul.f32 %v1585, 1.442695
        %v1630 = vpow.pop %v1629
        %v1631 = vmul.f32 %v1586, 1.442695
        %v1632 = vpow.pop %v1631
        %v1633 = vmul.f32 %v1587, 1.442695
        %v1634 = vpow.pop %v1633
        %v1635 = vmul.f32 %v1588, 1.442695
        %v1636 = vpow.pop %v1635
        %v1637 = vmul.f32 %v1589, 1.442695
        %v1638 = vpow.pop %v1637
        %v1639 = vmul.f32 %v1590, 1.442695
        %v1640 = vpow.pop %v1639
        %v1641 = vmul.f32 %v1591, 1.442695
        %v1642 = vpow.pop %v1641
        %v1643 = vmul.f32 %v1592, 1.442695
        %v1644 = vpow.pop %v1643
        %v1645 = vmul.f32 %v1593, 1.442695
        %v1646 = vpow.pop %v1645
        %v1647 = vmul.f32 %v1594, 1.442695
        %v1648 = vpow.pop %v1647
        %v1649 = vmul.f32 %v1595, 1.442695
        %v1650 = vpow.pop %v1649
        %v1651 = vmul.f32 %v1596, 1.442695
        %v1652 = vpow.pop %v1651
        %v1653 = vmul.f32 %v1597, 1.442695
        %v1654 = vpow.pop %v1653
        %v1655 = vmul.f32 %v1598, 1.442695
        %v1656 = vpow.pop %v1655
        %v1657 = vmul.f32 %v1599, 1.442695
        %v1658 = vpow.pop %v1657
        %v1659 = vmul.f32 %v1600, 1.442695
        %v1660 = vpow.pop %v1659
        %v1661 = vmul.f32 %v1601, 1.442695
        %v1662 = vpow.pop %v1661
        %v1663 = vmul.f32 %v1602, 1.442695
        %v1664 = vpow.pop %v1663
        %v1665 = vmul.f32 %v1603, 1.442695
        %v1666 = vpow.pop %v1665
        %v1667 = vmul.f32 %v1604, 1.442695
        %v1668 = vpow.pop %v1667
        %v1669 = vadd.f32 %v1606, 1.0
        %v1670 = vadd.f32 %v1608, 1.0
        %v1671 = vadd.f32 %v1610, 1.0
        %v1672 = vadd.f32 %v1612, 1.0
        %v1673 = vadd.f32 %v1614, 1.0
        %v1674 = vadd.f32 %v1616, 1.0
        %v1675 = vadd.f32 %v1618, 1.0
        %v1676 = vadd.f32 %v1620, 1.0
        %v1677 = vadd.f32 %v1622, 1.0
        %v1678 = vadd.f32 %v1624, 1.0
        %v1679 = vadd.f32 %v1626, 1.0
        %v1680 = vadd.f32 %v1628, 1.0
        %v1681 = vadd.f32 %v1630, 1.0
        %v1682 = vadd.f32 %v1632, 1.0
        %v1683 = vadd.f32 %v1634, 1.0
        %v1684 = vadd.f32 %v1636, 1.0
        %v1685 = vadd.f32 %v1638, 1.0
        %v1686 = vadd.f32 %v1640, 1.0
        %v1687 = vadd.f32 %v1642, 1.0
        %v1688 = vadd.f32 %v1644, 1.0
        %v1689 = vadd.f32 %v1646, 1.0
        %v1690 = vadd.f32 %v1648, 1.0
        %v1691 = vadd.f32 %v1650, 1.0
        %v1692 = vadd.f32 %v1652, 1.0
        %v1693 = vadd.f32 %v1654, 1.0
        %v1694 = vadd.f32 %v1656, 1.0
        %v1695 = vadd.f32 %v1658, 1.0
        %v1696 = vadd.f32 %v1660, 1.0
        %v1697 = vadd.f32 %v1662, 1.0
        %v1698 = vadd.f32 %v1664, 1.0
        %v1699 = vadd.f32 %v1666, 1.0
        %v1700 = vadd.f32 %v1668, 1.0
        %v1701 = vrcp.pop %v1669
        %v1702 = vmul.f32 %v1669, %v1701
        %v1703 = vsub.f32 1.0, %v1702
        %v1704 = vmul.f32 %v1701, %v1703
        %v1705 = vadd.f32 %v1701, %v1704
        %vm1706 = vweird.f32 %v1669
        %vm1707 = vweird.f32 %v1701
        %vm1708 = vmor %vm1706, %vm1707
        %v1709 = vsel %vm1708, %v1701, %v1705
        %v1710 = vand.u32 2147483647, %v1669
        %vm1711 = vcmp.eq.f32.partialorder %v1710, 8.507059e+37
        %v1712 = vand.u32 %v1669, 2147483648
        %v1713 = vor.u32 1.1754944e-38, %v1712
        %v1714 = vsel %vm1711, %v1713, %v1709
        %v1715 = vmul.f32 1.0, %v1714
        %v1716 = vrcp.pop %v1670
        %v1717 = vmul.f32 %v1670, %v1716
        %v1718 = vsub.f32 1.0, %v1717
        %v1719 = vmul.f32 %v1716, %v1718
        %v1720 = vadd.f32 %v1716, %v1719
        %vm1721 = vweird.f32 %v1670
        %vm1722 = vweird.f32 %v1716
        %vm1723 = vmor %vm1721, %vm1722
        %v1724 = vsel %vm1723, %v1716, %v1720
        %v1725 = vand.u32 2147483647, %v1670
        %vm1726 = vcmp.eq.f32.partialorder %v1725, 8.507059e+37
        %v1727 = vand.u32 %v1670, 2147483648
        %v1728 = vor.u32 1.1754944e-38, %v1727
        %v1729 = vsel %vm1726, %v1728, %v1724
        %v1730 = vmul.f32 1.0, %v1729
        %v1731 = vrcp.pop %v1671
        %v1732 = vmul.f32 %v1671, %v1731
        %v1733 = vsub.f32 1.0, %v1732
        %v1734 = vmul.f32 %v1731, %v1733
        %v1735 = vadd.f32 %v1731, %v1734
        %vm1736 = vweird.f32 %v1671
        %vm1737 = vweird.f32 %v1731
        %vm1738 = vmor %vm1736, %vm1737
        %v1739 = vsel %vm1738, %v1731, %v1735
        %v1740 = vand.u32 2147483647, %v1671
        %vm1741 = vcmp.eq.f32.partialorder %v1740, 8.507059e+37
        %v1742 = vand.u32 %v1671, 2147483648
        %v1743 = vor.u32 1.1754944e-38, %v1742
        %v1744 = vsel %vm1741, %v1743, %v1739
        %v1745 = vmul.f32 1.0, %v1744
        %v1746 = vrcp.pop %v1672
        %v1747 = vmul.f32 %v1672, %v1746
        %v1748 = vsub.f32 1.0, %v1747
        %v1749 = vmul.f32 %v1746, %v1748
        %v1750 = vadd.f32 %v1746, %v1749
        %vm1751 = vweird.f32 %v1672
        %vm1752 = vweird.f32 %v1746
        %vm1753 = vmor %vm1751, %vm1752
        %v1754 = vsel %vm1753, %v1746, %v1750
        %v1755 = vand.u32 2147483647, %v1672
        %vm1756 = vcmp.eq.f32.partialorder %v1755, 8.507059e+37
        %v1757 = vand.u32 %v1672, 2147483648
        %v1758 = vor.u32 1.1754944e-38, %v1757
        %v1759 = vsel %vm1756, %v1758, %v1754
        %v1760 = vmul.f32 1.0, %v1759
        %v1761 = vrcp.pop %v1673
        %v1762 = vmul.f32 %v1673, %v1761
        %v1763 = vsub.f32 1.0, %v1762
        %v1764 = vmul.f32 %v1761, %v1763
        %v1765 = vadd.f32 %v1761, %v1764
        %vm1766 = vweird.f32 %v1673
        %vm1767 = vweird.f32 %v1761
        %vm1768 = vmor %vm1766, %vm1767
        %v1769 = vsel %vm1768, %v1761, %v1765
        %v1770 = vand.u32 2147483647, %v1673
        %vm1771 = vcmp.eq.f32.partialorder %v1770, 8.507059e+37
        %v1772 = vand.u32 %v1673, 2147483648
        %v1773 = vor.u32 1.1754944e-38, %v1772
        %v1774 = vsel %vm1771, %v1773, %v1769
        %v1775 = vmul.f32 1.0, %v1774
        %v1776 = vrcp.pop %v1674
        %v1777 = vmul.f32 %v1674, %v1776
        %v1778 = vsub.f32 1.0, %v1777
        %v1779 = vmul.f32 %v1776, %v1778
        %v1780 = vadd.f32 %v1776, %v1779
        %vm1781 = vweird.f32 %v1674
        %vm1782 = vweird.f32 %v1776
        %vm1783 = vmor %vm1781, %vm1782
        %v1784 = vsel %vm1783, %v1776, %v1780
        %v1785 = vand.u32 2147483647, %v1674
        %vm1786 = vcmp.eq.f32.partialorder %v1785, 8.507059e+37
        %v1787 = vand.u32 %v1674, 2147483648
        %v1788 = vor.u32 1.1754944e-38, %v1787
        %v1789 = vsel %vm1786, %v1788, %v1784
        %v1790 = vmul.f32 1.0, %v1789
        %v1791 = vrcp.pop %v1675
        %v1792 = vmul.f32 %v1675, %v1791
        %v1793 = vsub.f32 1.0, %v1792
        %v1794 = vmul.f32 %v1791, %v1793
        %v1795 = vadd.f32 %v1791, %v1794
        %vm1796 = vweird.f32 %v1675
        %vm1797 = vweird.f32 %v1791
        %vm1798 = vmor %vm1796, %vm1797
        %v1799 = vsel %vm1798, %v1791, %v1795
        %v1800 = vand.u32 2147483647, %v1675
        %vm1801 = vcmp.eq.f32.partialorder %v1800, 8.507059e+37
        %v1802 = vand.u32 %v1675, 2147483648
        %v1803 = vor.u32 1.1754944e-38, %v1802
        %v1804 = vsel %vm1801, %v1803, %v1799
        %v1805 = vmul.f32 1.0, %v1804
        %v1806 = vrcp.pop %v1676
        %v1807 = vmul.f32 %v1676, %v1806
        %v1808 = vsub.f32 1.0, %v1807
        %v1809 = vmul.f32 %v1806, %v1808
        %v1810 = vadd.f32 %v1806, %v1809
        %vm1811 = vweird.f32 %v1676
        %vm1812 = vweird.f32 %v1806
        %vm1813 = vmor %vm1811, %vm1812
        %v1814 = vsel %vm1813, %v1806, %v1810
        %v1815 = vand.u32 2147483647, %v1676
        %vm1816 = vcmp.eq.f32.partialorder %v1815, 8.507059e+37
        %v1817 = vand.u32 %v1676, 2147483648
        %v1818 = vor.u32 1.1754944e-38, %v1817
        %v1819 = vsel %vm1816, %v1818, %v1814
        %v1820 = vmul.f32 1.0, %v1819
        %v1821 = vrcp.pop %v1677
        %v1822 = vmul.f32 %v1677, %v1821
        %v1823 = vsub.f32 1.0, %v1822
        %v1824 = vmul.f32 %v1821, %v1823
        %v1825 = vadd.f32 %v1821, %v1824
        %vm1826 = vweird.f32 %v1677
        %vm1827 = vweird.f32 %v1821
        %vm1828 = vmor %vm1826, %vm1827
        %v1829 = vsel %vm1828, %v1821, %v1825
        %v1830 = vand.u32 2147483647, %v1677
        %vm1831 = vcmp.eq.f32.partialorder %v1830, 8.507059e+37
        %v1832 = vand.u32 %v1677, 2147483648
        %v1833 = vor.u32 1.1754944e-38, %v1832
        %v1834 = vsel %vm1831, %v1833, %v1829
        %v1835 = vmul.f32 1.0, %v1834
        %v1836 = vrcp.pop %v1678
        %v1837 = vmul.f32 %v1678, %v1836
        %v1838 = vsub.f32 1.0, %v1837
        %v1839 = vmul.f32 %v1836, %v1838
        %v1840 = vadd.f32 %v1836, %v1839
        %vm1841 = vweird.f32 %v1678
        %vm1842 = vweird.f32 %v1836
        %vm1843 = vmor %vm1841, %vm1842
        %v1844 = vsel %vm1843, %v1836, %v1840
        %v1845 = vand.u32 2147483647, %v1678
        %vm1846 = vcmp.eq.f32.partialorder %v1845, 8.507059e+37
        %v1847 = vand.u32 %v1678, 2147483648
        %v1848 = vor.u32 1.1754944e-38, %v1847
        %v1849 = vsel %vm1846, %v1848, %v1844
        %v1850 = vmul.f32 1.0, %v1849
        %v1851 = vrcp.pop %v1679
        %v1852 = vmul.f32 %v1679, %v1851
        %v1853 = vsub.f32 1.0, %v1852
        %v1854 = vmul.f32 %v1851, %v1853
        %v1855 = vadd.f32 %v1851, %v1854
        %vm1856 = vweird.f32 %v1679
        %vm1857 = vweird.f32 %v1851
        %vm1858 = vmor %vm1856, %vm1857
        %v1859 = vsel %vm1858, %v1851, %v1855
        %v1860 = vand.u32 2147483647, %v1679
        %vm1861 = vcmp.eq.f32.partialorder %v1860, 8.507059e+37
        %v1862 = vand.u32 %v1679, 2147483648
        %v1863 = vor.u32 1.1754944e-38, %v1862
        %v1864 = vsel %vm1861, %v1863, %v1859
        %v1865 = vmul.f32 1.0, %v1864
        %v1866 = vrcp.pop %v1680
        %v1867 = vmul.f32 %v1680, %v1866
        %v1868 = vsub.f32 1.0, %v1867
        %v1869 = vmul.f32 %v1866, %v1868
        %v1870 = vadd.f32 %v1866, %v1869
        %vm1871 = vweird.f32 %v1680
        %vm1872 = vweird.f32 %v1866
        %vm1873 = vmor %vm1871, %vm1872
        %v1874 = vsel %vm1873, %v1866, %v1870
        %v1875 = vand.u32 2147483647, %v1680
        %vm1876 = vcmp.eq.f32.partialorder %v1875, 8.507059e+37
        %v1877 = vand.u32 %v1680, 2147483648
        %v1878 = vor.u32 1.1754944e-38, %v1877
        %v1879 = vsel %vm1876, %v1878, %v1874
        %v1880 = vmul.f32 1.0, %v1879
        %v1881 = vrcp.pop %v1681
        %v1882 = vmul.f32 %v1681, %v1881
        %v1883 = vsub.f32 1.0, %v1882
        %v1884 = vmul.f32 %v1881, %v1883
        %v1885 = vadd.f32 %v1881, %v1884
        %vm1886 = vweird.f32 %v1681
        %vm1887 = vweird.f32 %v1881
        %vm1888 = vmor %vm1886, %vm1887
        %v1889 = vsel %vm1888, %v1881, %v1885
        %v1890 = vand.u32 2147483647, %v1681
        %vm1891 = vcmp.eq.f32.partialorder %v1890, 8.507059e+37
        %v1892 = vand.u32 %v1681, 2147483648
        %v1893 = vor.u32 1.1754944e-38, %v1892
        %v1894 = vsel %vm1891, %v1893, %v1889
        %v1895 = vmul.f32 1.0, %v1894
        %v1896 = vrcp.pop %v1682
        %v1897 = vmul.f32 %v1682, %v1896
        %v1898 = vsub.f32 1.0, %v1897
        %v1899 = vmul.f32 %v1896, %v1898
        %v1900 = vadd.f32 %v1896, %v1899
        %vm1901 = vweird.f32 %v1682
        %vm1902 = vweird.f32 %v1896
        %vm1903 = vmor %vm1901, %vm1902
        %v1904 = vsel %vm1903, %v1896, %v1900
        %v1905 = vand.u32 2147483647, %v1682
        %vm1906 = vcmp.eq.f32.partialorder %v1905, 8.507059e+37
        %v1907 = vand.u32 %v1682, 2147483648
        %v1908 = vor.u32 1.1754944e-38, %v1907
        %v1909 = vsel %vm1906, %v1908, %v1904
        %v1910 = vmul.f32 1.0, %v1909
        %v1911 = vrcp.pop %v1683
        %v1912 = vmul.f32 %v1683, %v1911
        %v1913 = vsub.f32 1.0, %v1912
        %v1914 = vmul.f32 %v1911, %v1913
        %v1915 = vadd.f32 %v1911, %v1914
        %vm1916 = vweird.f32 %v1683
        %vm1917 = vweird.f32 %v1911
        %vm1918 = vmor %vm1916, %vm1917
        %v1919 = vsel %vm1918, %v1911, %v1915
        %v1920 = vand.u32 2147483647, %v1683
        %vm1921 = vcmp.eq.f32.partialorder %v1920, 8.507059e+37
        %v1922 = vand.u32 %v1683, 2147483648
        %v1923 = vor.u32 1.1754944e-38, %v1922
        %v1924 = vsel %vm1921, %v1923, %v1919
        %v1925 = vmul.f32 1.0, %v1924
        %v1926 = vrcp.pop %v1684
        %v1927 = vmul.f32 %v1684, %v1926
        %v1928 = vsub.f32 1.0, %v1927
        %v1929 = vmul.f32 %v1926, %v1928
        %v1930 = vadd.f32 %v1926, %v1929
        %vm1931 = vweird.f32 %v1684
        %vm1932 = vweird.f32 %v1926
        %vm1933 = vmor %vm1931, %vm1932
        %v1934 = vsel %vm1933, %v1926, %v1930
        %v1935 = vand.u32 2147483647, %v1684
        %vm1936 = vcmp.eq.f32.partialorder %v1935, 8.507059e+37
        %v1937 = vand.u32 %v1684, 2147483648
        %v1938 = vor.u32 1.1754944e-38, %v1937
        %v1939 = vsel %vm1936, %v1938, %v1934
        %v1940 = vmul.f32 1.0, %v1939
        %v1941 = vrcp.pop %v1685
        %v1942 = vmul.f32 %v1685, %v1941
        %v1943 = vsub.f32 1.0, %v1942
        %v1944 = vmul.f32 %v1941, %v1943
        %v1945 = vadd.f32 %v1941, %v1944
        %vm1946 = vweird.f32 %v1685
        %vm1947 = vweird.f32 %v1941
        %vm1948 = vmor %vm1946, %vm1947
        %v1949 = vsel %vm1948, %v1941, %v1945
        %v1950 = vand.u32 2147483647, %v1685
        %vm1951 = vcmp.eq.f32.partialorder %v1950, 8.507059e+37
        %v1952 = vand.u32 %v1685, 2147483648
        %v1953 = vor.u32 1.1754944e-38, %v1952
        %v1954 = vsel %vm1951, %v1953, %v1949
        %v1955 = vmul.f32 1.0, %v1954
        %v1956 = vrcp.pop %v1686
        %v1957 = vmul.f32 %v1686, %v1956
        %v1958 = vsub.f32 1.0, %v1957
        %v1959 = vmul.f32 %v1956, %v1958
        %v1960 = vadd.f32 %v1956, %v1959
        %vm1961 = vweird.f32 %v1686
        %vm1962 = vweird.f32 %v1956
        %vm1963 = vmor %vm1961, %vm1962
        %v1964 = vsel %vm1963, %v1956, %v1960
        %v1965 = vand.u32 2147483647, %v1686
        %vm1966 = vcmp.eq.f32.partialorder %v1965, 8.507059e+37
        %v1967 = vand.u32 %v1686, 2147483648
        %v1968 = vor.u32 1.1754944e-38, %v1967
        %v1969 = vsel %vm1966, %v1968, %v1964
        %v1970 = vmul.f32 1.0, %v1969
        %v1971 = vrcp.pop %v1687
        %v1972 = vmul.f32 %v1687, %v1971
        %v1973 = vsub.f32 1.0, %v1972
        %v1974 = vmul.f32 %v1971, %v1973
        %v1975 = vadd.f32 %v1971, %v1974
        %vm1976 = vweird.f32 %v1687
        %vm1977 = vweird.f32 %v1971
        %vm1978 = vmor %vm1976, %vm1977
        %v1979 = vsel %vm1978, %v1971, %v1975
        %v1980 = vand.u32 2147483647, %v1687
        %vm1981 = vcmp.eq.f32.partialorder %v1980, 8.507059e+37
        %v1982 = vand.u32 %v1687, 2147483648
        %v1983 = vor.u32 1.1754944e-38, %v1982
        %v1984 = vsel %vm1981, %v1983, %v1979
        %v1985 = vmul.f32 1.0, %v1984
        %v1986 = vrcp.pop %v1688
        %v1987 = vmul.f32 %v1688, %v1986
        %v1988 = vsub.f32 1.0, %v1987
        %v1989 = vmul.f32 %v1986, %v1988
        %v1990 = vadd.f32 %v1986, %v1989
        %vm1991 = vweird.f32 %v1688
        %vm1992 = vweird.f32 %v1986
        %vm1993 = vmor %vm1991, %vm1992
        %v1994 = vsel %vm1993, %v1986, %v1990
        %v1995 = vand.u32 2147483647, %v1688
        %vm1996 = vcmp.eq.f32.partialorder %v1995, 8.507059e+37
        %v1997 = vand.u32 %v1688, 2147483648
        %v1998 = vor.u32 1.1754944e-38, %v1997
        %v1999 = vsel %vm1996, %v1998, %v1994
        %v2000 = vmul.f32 1.0, %v1999
        %v2001 = vrcp.pop %v1689
        %v2002 = vmul.f32 %v1689, %v2001
        %v2003 = vsub.f32 1.0, %v2002
        %v2004 = vmul.f32 %v2001, %v2003
        %v2005 = vadd.f32 %v2001, %v2004
        %vm2006 = vweird.f32 %v1689
        %vm2007 = vweird.f32 %v2001
        %vm2008 = vmor %vm2006, %vm2007
        %v2009 = vsel %vm2008, %v2001, %v2005
        %v2010 = vand.u32 2147483647, %v1689
        %vm2011 = vcmp.eq.f32.partialorder %v2010, 8.507059e+37
        %v2012 = vand.u32 %v1689, 2147483648
        %v2013 = vor.u32 1.1754944e-38, %v2012
        %v2014 = vsel %vm2011, %v2013, %v2009
        %v2015 = vmul.f32 1.0, %v2014
        %v2016 = vrcp.pop %v1690
        %v2017 = vmul.f32 %v1690, %v2016
        %v2018 = vsub.f32 1.0, %v2017
        %v2019 = vmul.f32 %v2016, %v2018
        %v2020 = vadd.f32 %v2016, %v2019
        %vm2021 = vweird.f32 %v1690
        %vm2022 = vweird.f32 %v2016
        %vm2023 = vmor %vm2021, %vm2022
        %v2024 = vsel %vm2023, %v2016, %v2020
        %v2025 = vand.u32 2147483647, %v1690
        %vm2026 = vcmp.eq.f32.partialorder %v2025, 8.507059e+37
        %v2027 = vand.u32 %v1690, 2147483648
        %v2028 = vor.u32 1.1754944e-38, %v2027
        %v2029 = vsel %vm2026, %v2028, %v2024
        %v2030 = vmul.f32 1.0, %v2029
        %v2031 = vrcp.pop %v1691
        %v2032 = vmul.f32 %v1691, %v2031
        %v2033 = vsub.f32 1.0, %v2032
        %v2034 = vmul.f32 %v2031, %v2033
        %v2035 = vadd.f32 %v2031, %v2034
        %vm2036 = vweird.f32 %v1691
        %vm2037 = vweird.f32 %v2031
        %vm2038 = vmor %vm2036, %vm2037
        %v2039 = vsel %vm2038, %v2031, %v2035
        %v2040 = vand.u32 2147483647, %v1691
        %vm2041 = vcmp.eq.f32.partialorder %v2040, 8.507059e+37
        %v2042 = vand.u32 %v1691, 2147483648
        %v2043 = vor.u32 1.1754944e-38, %v2042
        %v2044 = vsel %vm2041, %v2043, %v2039
        %v2045 = vmul.f32 1.0, %v2044
        %v2046 = vrcp.pop %v1692
        %v2047 = vmul.f32 %v1692, %v2046
        %v2048 = vsub.f32 1.0, %v2047
        %v2049 = vmul.f32 %v2046, %v2048
        %v2050 = vadd.f32 %v2046, %v2049
        %vm2051 = vweird.f32 %v1692
        %vm2052 = vweird.f32 %v2046
        %vm2053 = vmor %vm2051, %vm2052
        %v2054 = vsel %vm2053, %v2046, %v2050
        %v2055 = vand.u32 2147483647, %v1692
        %vm2056 = vcmp.eq.f32.partialorder %v2055, 8.507059e+37
        %v2057 = vand.u32 %v1692, 2147483648
        %v2058 = vor.u32 1.1754944e-38, %v2057
        %v2059 = vsel %vm2056, %v2058, %v2054
        %v2060 = vmul.f32 1.0, %v2059
        %v2061 = vrcp.pop %v1693
        %v2062 = vmul.f32 %v1693, %v2061
        %v2063 = vsub.f32 1.0, %v2062
        %v2064 = vmul.f32 %v2061, %v2063
        %v2065 = vadd.f32 %v2061, %v2064
        %vm2066 = vweird.f32 %v1693
        %vm2067 = vweird.f32 %v2061
        %vm2068 = vmor %vm2066, %vm2067
        %v2069 = vsel %vm2068, %v2061, %v2065
        %v2070 = vand.u32 2147483647, %v1693
        %vm2071 = vcmp.eq.f32.partialorder %v2070, 8.507059e+37
        %v2072 = vand.u32 %v1693, 2147483648
        %v2073 = vor.u32 1.1754944e-38, %v2072
        %v2074 = vsel %vm2071, %v2073, %v2069
        %v2075 = vmul.f32 1.0, %v2074
        %v2076 = vrcp.pop %v1694
        %v2077 = vmul.f32 %v1694, %v2076
        %v2078 = vsub.f32 1.0, %v2077
        %v2079 = vmul.f32 %v2076, %v2078
        %v2080 = vadd.f32 %v2076, %v2079
        %vm2081 = vweird.f32 %v1694
        %vm2082 = vweird.f32 %v2076
        %vm2083 = vmor %vm2081, %vm2082
        %v2084 = vsel %vm2083, %v2076, %v2080
        %v2085 = vand.u32 2147483647, %v1694
        %vm2086 = vcmp.eq.f32.partialorder %v2085, 8.507059e+37
        %v2087 = vand.u32 %v1694, 2147483648
        %v2088 = vor.u32 1.1754944e-38, %v2087
        %v2089 = vsel %vm2086, %v2088, %v2084
        %v2090 = vmul.f32 1.0, %v2089
        %v2091 = vrcp.pop %v1695
        %v2092 = vmul.f32 %v1695, %v2091
        %v2093 = vsub.f32 1.0, %v2092
        %v2094 = vmul.f32 %v2091, %v2093
        %v2095 = vadd.f32 %v2091, %v2094
        %vm2096 = vweird.f32 %v1695
        %vm2097 = vweird.f32 %v2091
        %vm2098 = vmor %vm2096, %vm2097
        %v2099 = vsel %vm2098, %v2091, %v2095
        %v2100 = vand.u32 2147483647, %v1695
        %vm2101 = vcmp.eq.f32.partialorder %v2100, 8.507059e+37
        %v2102 = vand.u32 %v1695, 2147483648
        %v2103 = vor.u32 1.1754944e-38, %v2102
        %v2104 = vsel %vm2101, %v2103, %v2099
        %v2105 = vmul.f32 1.0, %v2104
        %v2106 = vrcp.pop %v1696
        %v2107 = vmul.f32 %v1696, %v2106
        %v2108 = vsub.f32 1.0, %v2107
        %v2109 = vmul.f32 %v2106, %v2108
        %v2110 = vadd.f32 %v2106, %v2109
        %vm2111 = vweird.f32 %v1696
        %vm2112 = vweird.f32 %v2106
        %vm2113 = vmor %vm2111, %vm2112
        %v2114 = vsel %vm2113, %v2106, %v2110
        %v2115 = vand.u32 2147483647, %v1696
        %vm2116 = vcmp.eq.f32.partialorder %v2115, 8.507059e+37
        %v2117 = vand.u32 %v1696, 2147483648
        %v2118 = vor.u32 1.1754944e-38, %v2117
        %v2119 = vsel %vm2116, %v2118, %v2114
        %v2120 = vmul.f32 1.0, %v2119
        %v2121 = vrcp.pop %v1697
        %v2122 = vmul.f32 %v1697, %v2121
        %v2123 = vsub.f32 1.0, %v2122
        %v2124 = vmul.f32 %v2121, %v2123
        %v2125 = vadd.f32 %v2121, %v2124
        %vm2126 = vweird.f32 %v1697
        %vm2127 = vweird.f32 %v2121
        %vm2128 = vmor %vm2126, %vm2127
        %v2129 = vsel %vm2128, %v2121, %v2125
        %v2130 = vand.u32 2147483647, %v1697
        %vm2131 = vcmp.eq.f32.partialorder %v2130, 8.507059e+37
        %v2132 = vand.u32 %v1697, 2147483648
        %v2133 = vor.u32 1.1754944e-38, %v2132
        %v2134 = vsel %vm2131, %v2133, %v2129
        %v2135 = vmul.f32 1.0, %v2134
        %v2136 = vrcp.pop %v1698
        %v2137 = vmul.f32 %v1698, %v2136
        %v2138 = vsub.f32 1.0, %v2137
        %v2139 = vmul.f32 %v2136, %v2138
        %v2140 = vadd.f32 %v2136, %v2139
        %vm2141 = vweird.f32 %v1698
        %vm2142 = vweird.f32 %v2136
        %vm2143 = vmor %vm2141, %vm2142
        %v2144 = vsel %vm2143, %v2136, %v2140
        %v2145 = vand.u32 2147483647, %v1698
        %vm2146 = vcmp.eq.f32.partialorder %v2145, 8.507059e+37
        %v2147 = vand.u32 %v1698, 2147483648
        %v2148 = vor.u32 1.1754944e-38, %v2147
        %v2149 = vsel %vm2146, %v2148, %v2144
        %v2150 = vmul.f32 1.0, %v2149
        %v2151 = vrcp.pop %v1699
        %v2152 = vmul.f32 %v1699, %v2151
        %v2153 = vsub.f32 1.0, %v2152
        %v2154 = vmul.f32 %v2151, %v2153
        %v2155 = vadd.f32 %v2151, %v2154
        %vm2156 = vweird.f32 %v1699
        %vm2157 = vweird.f32 %v2151
        %vm2158 = vmor %vm2156, %vm2157
        %v2159 = vsel %vm2158, %v2151, %v2155
        %v2160 = vand.u32 2147483647, %v1699
        %vm2161 = vcmp.eq.f32.partialorder %v2160, 8.507059e+37
        %v2162 = vand.u32 %v1699, 2147483648
        %v2163 = vor.u32 1.1754944e-38, %v2162
        %v2164 = vsel %vm2161, %v2163, %v2159
        %v2165 = vmul.f32 1.0, %v2164
        %v2166 = vrcp.pop %v1700
        %v2167 = vmul.f32 %v1700, %v2166
        %v2168 = vsub.f32 1.0, %v2167
        %v2169 = vmul.f32 %v2166, %v2168
        %v2170 = vadd.f32 %v2166, %v2169
        %vm2171 = vweird.f32 %v1700
        %vm2172 = vweird.f32 %v2166
        %vm2173 = vmor %vm2171, %vm2172
        %v2174 = vsel %vm2173, %v2166, %v2170
        %v2175 = vand.u32 2147483647, %v1700
        %vm2176 = vcmp.eq.f32.partialorder %v2175, 8.507059e+37
        %v2177 = vand.u32 %v1700, 2147483648
        %v2178 = vor.u32 1.1754944e-38, %v2177
        %v2179 = vsel %vm2176, %v2178, %v2174
        %v2180 = vmul.f32 1.0, %v2179
        %v2181 = vmul.f32 %v1478, %v1715
        %v2182 = vmul.f32 %v1481, %v1730
        %v2183 = vmul.f32 %v1484, %v1745
        %v2184 = vmul.f32 %v1487, %v1760
        %v2185 = vmul.f32 %v1490, %v1775
        %v2186 = vmul.f32 %v1493, %v1790
        %v2187 = vmul.f32 %v1496, %v1805
        %v2188 = vmul.f32 %v1499, %v1820
        %v2189 = vmul.f32 %v1502, %v1835
        %v2190 = vmul.f32 %v1505, %v1850
        %v2191 = vmul.f32 %v1508, %v1865
        %v2192 = vmul.f32 %v1511, %v1880
        %v2193 = vmul.f32 %v1514, %v1895
        %v2194 = vmul.f32 %v1517, %v1910
        %v2195 = vmul.f32 %v1520, %v1925
        %v2196 = vmul.f32 %v1523, %v1940
        %v2197 = vmul.f32 %v1526, %v1955
        %v2198 = vmul.f32 %v1529, %v1970
        %v2199 = vmul.f32 %v1532, %v1985
        %v2200 = vmul.f32 %v1535, %v2000
        %v2201 = vmul.f32 %v1538, %v2015
        %v2202 = vmul.f32 %v1541, %v2030
        %v2203 = vmul.f32 %v1544, %v2045
        %v2204 = vmul.f32 %v1547, %v2060
        %v2205 = vmul.f32 %v1550, %v2075
        %v2206 = vmul.f32 %v1553, %v2090
        %v2207 = vmul.f32 %v1556, %v2105
        %v2208 = vmul.f32 %v1559, %v2120
        %v2209 = vmul.f32 %v1562, %v2135
        %v2210 = vmul.f32 %v1565, %v2150
        %v2211 = vmul.f32 %v1568, %v2165
        %v2212 = vmul.f32 %v1571, %v2180
        %2213 = vst.msk [vmem:[%s261] sm:$0xff] %vm1363, %v2181
        %2214 = vst.msk [vmem:[%s261 + $0x8] sm:$0xff] %vm1363, %v2182
        %2215 = vst.msk [vmem:[%s261 + $0x10] sm:$0xff] %vm1363, %v2183
        %2216 = vst.msk [vmem:[%s261 + $0x18] sm:$0xff] %vm1363, %v2184
        %2217 = vst.msk [vmem:[%s261 + $0x20] sm:$0xff] %vm1363, %v2185
        %2218 = vst.msk [vmem:[%s261 + $0x28] sm:$0xff] %vm1363, %v2186
        %2219 = vst.msk [vmem:[%s261 + $0x30] sm:$0xff] %vm1363, %v2187
        %2220 = vst.msk [vmem:[%s261 + $0x38] sm:$0xff] %vm1363, %v2188
        %2221 = vst.msk [vmem:[%s261 + $0x40] sm:$0xff] %vm1363, %v2189
        %2222 = vst.msk [vmem:[%s261 + $0x48] sm:$0xff] %vm1363, %v2190
        %2223 = vst.msk [vmem:[%s261 + $0x50] sm:$0xff] %vm1363, %v2191
        %2224 = vst.msk [vmem:[%s261 + $0x58] sm:$0xff] %vm1363, %v2192
        %2225 = vst.msk [vmem:[%s261 + $0x60] sm:$0xff] %vm1363, %v2193
        %2226 = vst.msk [vmem:[%s261 + $0x68] sm:$0xff] %vm1363, %v2194
        %2227 = vst.msk [vmem:[%s261 + $0x70] sm:$0xff] %vm1363, %v2195
        %2228 = vst.msk [vmem:[%s261 + $0x78] sm:$0xff] %vm1363, %v2196
        %2229 = vst.msk [vmem:[%s261 + $0x80] sm:$0xff] %vm1363, %v2197
        %2230 = vst.msk [vmem:[%s261 + $0x88] sm:$0xff] %vm1363, %v2198
        %2231 = vst.msk [vmem:[%s261 + $0x90] sm:$0xff] %vm1363, %v2199
        %2232 = vst.msk [vmem:[%s261 + $0x98] sm:$0xff] %vm1363, %v2200
        %2233 = vst.msk [vmem:[%s261 + $0xa0] sm:$0xff] %vm1363, %v2201
        %2234 = vst.msk [vmem:[%s261 + $0xa8] sm:$0xff] %vm1363, %v2202
        %2235 = vst.msk [vmem:[%s261 + $0xb0] sm:$0xff] %vm1363, %v2203
        %2236 = vst.msk [vmem:[%s261 + $0xb8] sm:$0xff] %vm1363, %v2204
        %2237 = vst.msk [vmem:[%s261 + $0xc0] sm:$0xff] %vm1363, %v2205
        %2238 = vst.msk [vmem:[%s261 + $0xc8] sm:$0xff] %vm1363, %v2206
        %2239 = vst.msk [vmem:[%s261 + $0xd0] sm:$0xff] %vm1363, %v2207
        %2240 = vst.msk [vmem:[%s261 + $0xd8] sm:$0xff] %vm1363, %v2208
        %2241 = vst.msk [vmem:[%s261 + $0xe0] sm:$0xff] %vm1363, %v2209
        %2242 = vst.msk [vmem:[%s261 + $0xe8] sm:$0xff] %vm1363, %v2210
        %2243 = vst.msk [vmem:[%s261 + $0xf0] sm:$0xff] %vm1363, %v2211
        %2244 = vst.msk [vmem:[%s261 + $0xf8] sm:$0xff] %vm1363, %v2212
        %s2245 = sand.u32 %s164, 1
        %s2246 = scalar_lea.sflag [#allocation3], %s2245
        %s2247 = sand.u32 %s164, 1
        %s2248 = smul.addr %s2247, 256
        %s2249 = scalar_lea.vmem [#allocation2], %s2248
        // Predicated region
        $region45: #{c3_pallas.7} parent=43 // pred_check
          %p2250 = pneg %p174
        $region46: #{c3_pallas.7} parent=43 // pred_check_branch
          %2252 = sbr.rel (%p2250) target = $region48
        $region47: #{c3_pallas.7} parent=43 // pred_region
          %s2253 = smul.u32 32, %s20
          %2255 = vsyncadd %s2246, 0
          %s2256 = smul.addr %s2253, 8
          %s2257 = scalar_lea.hbm %s6, %s2256
          %s2258 = sshll.u32 %s2249, 4
          %s2259 = int_to_ptr.vmem [resolvable:$true] %s2258
          %s2260 = sshll.u32 %s2257, 4
          %s2261 = int_to_ptr.hbm [resolvable:$true] %s2260
          %2266 = dma.vmem_to_hbm [thread:$0]  %s2259, 4096, %s2261, %s2246, 128, 128, 8
        $region48: #{c3_pallas.7} parent=43 // pred_fallthru
          _
      $region44: #{c3_pallas.7} parent=5 // pred_fallthru
        _
      %p2267 = scmp.le.s32.totalorder 2, %s15
      // Predicated region
      $region49: #{c3_pallas.7} parent=5 // pred_check
        %p2268 = pneg %p2267
      $region50: #{c3_pallas.7} parent=5 // pred_check_branch
        %2270 = sbr.rel (%p2268) target = $region52
      $region51: #{c3_pallas.7} parent=5 // pred_region
        %s2271 = ssub.s32 %s15, 2
        // Predicated region
        $region53: #{c3_pallas.7} parent=51 // pred_check
          %p2272 = pneg %p180
        $region54: #{c3_pallas.7} parent=51 // pred_check_branch
          %2274 = sbr.rel (%p2272) target = $region56
        $region55: #{c3_pallas.7} parent=51 // pred_region
          %s2275 = sand.u32 %s165, 1
          %s2276 = scalar_lea.sflag [#allocation3], %s2275
          %s2277 = sand.u32 %s165, 1
          %s2278 = smul.addr %s2277, 256
          %s2279 = scalar_lea.vmem [#allocation2], %s2278
          %2281 = dma.done %s2276, 4096
        $region56: #{c3_pallas.7} parent=51 // pred_fallthru
          _
      $region52: #{c3_pallas.7} parent=5 // pred_fallthru
        _
    $region6: #{c3_pallas.7} parent=1 // loop_footer
      %s19 = sadd.s32 1, %s15
    $region7: #{c3_pallas.7} parent=1 // loop_footer_branch
      %14 = sbr.rel target = $region3
    $region8: #{c3_pallas.7} parent=1 // loop_exit
      _
    %2282 = vsyncpa [#allocation3], 1
    %s2283 = scalar_lea.sflag [#allocation3], 1
    %2284 = vsyncpa %s2283, 1

// kernel: c3_pallas.5
$region0: #{c3_pallas.5}
  #allocation0 [shape = 'u32[]', space=smem, size = 0x4, offset = 0x4, fixed_abs, tag = 'smem constant byte address 0x4 - core index']
  #allocation1 [shape = 'u32[72,128]{1,0:T(1,128)}', space=vmem, size = 0x9000, scoped, tag = 'internal scratch']
  #allocation2 [shape = 'f32[18,18,16]{2,1,0:T(8,128)}', space=vmem, size = 0x36000, scoped, tag = 'scratch operand']
  %s0 = inlined_call_operand.vmem [shape: f32[2,16,16,16], index: 0, kind: input, shape index: {}]
  %s1 = inlined_call_operand.vmem [shape: f32[16,16], index: 1, kind: input, shape index: {}]
  %s2 = inlined_call_operand.vmem [shape: f32[1,16], index: 2, kind: input, shape index: {}]
  %s3 = inlined_call_operand.vmem [shape: f32[144,16], index: 3, kind: input, shape index: {}]
  %s4 = inlined_call_operand.vmem [shape: f32[1,16], index: 4, kind: input, shape index: {}]
  %s5 = inlined_call_operand.vmem [shape: f32[2,16,16,16], index: 5, kind: output, shape index: {}]
  %s6 = sld [smem:[#allocation0]]
  $region53: #{c3_pallas.5} parent=0
    _
  %s8 = ssub.s32 1, %s6
  %s9 = scalar_select 0, %s8, %s6
  loop: start=0, step=1, limit=4
  $region2: #{c3_pallas.5} parent=0 // loop_pre_header
    _
  $region3: #{c3_pallas.5} parent=0 // loop_header
    %s11 = sphi 0, %s15
    %p12 = scmp.ge.s32.totalorder %s11, 4
    %s21 = sphi 0, %s23
    %s24 = sphi 0, %s21
    %s25 = sphi 0, %s24
    %s41 = sphi 0, %s25
    %s45 = sphi 0, %s45
    %s47 = sphi 0, %s45
    %s48 = sphi 0, %s47
    %s62 = sphi 0, %s48
    %s66 = sphi 0, %s66
    %s68 = sphi 0, %s66
    %s69 = sphi 0, %s68
    %s83 = sphi 0, %s69
    %s87 = sphi 0, %s87
    %s89 = sphi 0, %s87
    %s90 = sphi 0, %s89
    %s104 = sphi 0, %s90
    %s108 = sphi 0, %s108
    %s110 = sphi 0, %s108
    %s111 = sphi 0, %s110
    %s125 = sphi 0, %s111
    %s131 = sphi 0, %s133
    %s134 = sphi 0, %s131
    %s135 = sphi 0, %s134
    %s151 = sphi 0, %s135
  $region4: #{c3_pallas.5} parent=0 // loop_header_branch
    %14 = sbr.rel (%p12) target = $region8
  $region5: #{c3_pallas.5} parent=0 // loop_body
    %s16 = ssub.s32 %s11, 1
    %s17 = ssub.s32 %s11, 2
    %s18 = sadd.s32 %s11, 1
    %s19 = ssub.s32 %s11, %s18
    %p20 = scmp.eq.s32.totalorder %s19, 0
    %s22 = sadd.s32 %s21, 1
    %s23 = scalar_select %p20, %s21, %s22
    %p26 = pneg %p20
    %p27 = scmp.eq.s32.totalorder %s11, 1
    %p28 = por %p26, %p27
    %p29 = scmp.ne.s32.totalorder %s21, %s24
    %p30 = scmp.eq.s32.totalorder %s11, 0
    %p31 = por %p29, %p30
    %p32 = scmp.ne.s32.totalorder %s21, %s24
    %p33 = scmp.eq.s32.totalorder %s16, 1
    %p34 = por %p32, %p33
    %p35 = scmp.ne.s32.totalorder %s24, %s25
    %p36 = scmp.eq.s32.totalorder %s16, 0
    %p37 = por %p35, %p36
    %p38 = scmp.ne.s32.totalorder %s24, %s25
    %p39 = scmp.eq.s32.totalorder %s17, 1
    %p40 = por %p38, %p39
    %p42 = scmp.ne.s32.totalorder %s25, %s41
    %p43 = scmp.eq.s32.totalorder %s17, 0
    %p44 = por %p42, %p43
    %s46 = sadd.s32 %s45, 1
    %p49 = scmp.eq.s32.totalorder %s11, 1
    %p50 = scmp.ne.s32.totalorder %s45, %s47
    %p51 = scmp.eq.s32.totalorder %s11, 0
    %p52 = por %p50, %p51
    %p53 = scmp.ne.s32.totalorder %s45, %s47
    %p54 = scmp.eq.s32.totalorder %s16, 1
    %p55 = por %p53, %p54
    %p56 = scmp.ne.s32.totalorder %s47, %s48
    %p57 = scmp.eq.s32.totalorder %s16, 0
    %p58 = por %p56, %p57
    %p59 = scmp.ne.s32.totalorder %s47, %s48
    %p60 = scmp.eq.s32.totalorder %s17, 1
    %p61 = por %p59, %p60
    %p63 = scmp.ne.s32.totalorder %s48, %s62
    %p64 = scmp.eq.s32.totalorder %s17, 0
    %p65 = por %p63, %p64
    %s67 = sadd.s32 %s66, 1
    %p70 = scmp.eq.s32.totalorder %s11, 1
    %p71 = scmp.ne.s32.totalorder %s66, %s68
    %p72 = scmp.eq.s32.totalorder %s11, 0
    %p73 = por %p71, %p72
    %p74 = scmp.ne.s32.totalorder %s66, %s68
    %p75 = scmp.eq.s32.totalorder %s16, 1
    %p76 = por %p74, %p75
    %p77 = scmp.ne.s32.totalorder %s68, %s69
    %p78 = scmp.eq.s32.totalorder %s16, 0
    %p79 = por %p77, %p78
    %p80 = scmp.ne.s32.totalorder %s68, %s69
    %p81 = scmp.eq.s32.totalorder %s17, 1
    %p82 = por %p80, %p81
    %p84 = scmp.ne.s32.totalorder %s69, %s83
    %p85 = scmp.eq.s32.totalorder %s17, 0
    %p86 = por %p84, %p85
    %s88 = sadd.s32 %s87, 1
    %p91 = scmp.eq.s32.totalorder %s11, 1
    %p92 = scmp.ne.s32.totalorder %s87, %s89
    %p93 = scmp.eq.s32.totalorder %s11, 0
    %p94 = por %p92, %p93
    %p95 = scmp.ne.s32.totalorder %s87, %s89
    %p96 = scmp.eq.s32.totalorder %s16, 1
    %p97 = por %p95, %p96
    %p98 = scmp.ne.s32.totalorder %s89, %s90
    %p99 = scmp.eq.s32.totalorder %s16, 0
    %p100 = por %p98, %p99
    %p101 = scmp.ne.s32.totalorder %s89, %s90
    %p102 = scmp.eq.s32.totalorder %s17, 1
    %p103 = por %p101, %p102
    %p105 = scmp.ne.s32.totalorder %s90, %s104
    %p106 = scmp.eq.s32.totalorder %s17, 0
    %p107 = por %p105, %p106
    %s109 = sadd.s32 %s108, 1
    %p112 = scmp.eq.s32.totalorder %s11, 1
    %p113 = scmp.ne.s32.totalorder %s108, %s110
    %p114 = scmp.eq.s32.totalorder %s11, 0
    %p115 = por %p113, %p114
    %p116 = scmp.ne.s32.totalorder %s108, %s110
    %p117 = scmp.eq.s32.totalorder %s16, 1
    %p118 = por %p116, %p117
    %p119 = scmp.ne.s32.totalorder %s110, %s111
    %p120 = scmp.eq.s32.totalorder %s16, 0
    %p121 = por %p119, %p120
    %p122 = scmp.ne.s32.totalorder %s110, %s111
    %p123 = scmp.eq.s32.totalorder %s17, 1
    %p124 = por %p122, %p123
    %p126 = scmp.ne.s32.totalorder %s111, %s125
    %p127 = scmp.eq.s32.totalorder %s17, 0
    %p128 = por %p126, %p127
    %s129 = ssub.s32 %s11, %s18
    %p130 = scmp.eq.s32.totalorder %s129, 0
    %s132 = sadd.s32 %s131, 1
    %s133 = scalar_select %p130, %s131, %s132
    %p136 = pneg %p130
    %p137 = scmp.eq.s32.totalorder %s11, 1
    %p138 = por %p136, %p137
    %p139 = scmp.ne.s32.totalorder %s131, %s134
    %p140 = scmp.eq.s32.totalorder %s11, 0
    %p141 = por %p139, %p140
    %p142 = scmp.ne.s32.totalorder %s131, %s134
    %p143 = scmp.eq.s32.totalorder %s16, 1
    %p144 = por %p142, %p143
    %p145 = scmp.ne.s32.totalorder %s134, %s135
    %p146 = scmp.eq.s32.totalorder %s16, 0
    %p147 = por %p145, %p146
    %p148 = scmp.ne.s32.totalorder %s134, %s135
    %p149 = scmp.eq.s32.totalorder %s17, 1
    %p150 = por %p148, %p149
    %p152 = scmp.ne.s32.totalorder %s135, %s151
    %p153 = scmp.eq.s32.totalorder %s17, 0
    %p154 = por %p152, %p153
    %p155 = scmp.le.s32.totalorder 1, %s11
    %p156 = scmp.lt.s32.totalorder %s11, 3
    %p157 = pnand %p155, %p156
    %p158 = pneg %p157
    // Predicated region
    $region9: #{c3_pallas.5} parent=5 // pred_check
      _
    $region10: #{c3_pallas.5} parent=5 // pred_check_branch
      %160 = sbr.rel (%p157) target = $region12
    $region11: #{c3_pallas.5} parent=5 // pred_region
      %s161 = ssub.s32 %s11, 1
      // Predicated region
      $region13: #{c3_pallas.5} parent=11 // pred_check
        %p162 = pneg %p58
      $region14: #{c3_pallas.5} parent=11 // pred_check_branch
        %164 = sbr.rel (%p162) target = $region16
      $region15: #{c3_pallas.5} parent=11 // pred_region
        _
      $region16: #{c3_pallas.5} parent=11 // pred_fallthru
        _
      // Predicated region
      $region17: #{c3_pallas.5} parent=11 // pred_check
        %p165 = pneg %p79
      $region18: #{c3_pallas.5} parent=11 // pred_check_branch
        %167 = sbr.rel (%p165) target = $region20
      $region19: #{c3_pallas.5} parent=11 // pred_region
        _
      $region20: #{c3_pallas.5} parent=11 // pred_fallthru
        _
      // Predicated region
      $region21: #{c3_pallas.5} parent=11 // pred_check
        %p168 = pneg %p100
      $region22: #{c3_pallas.5} parent=11 // pred_check_branch
        %170 = sbr.rel (%p168) target = $region24
      $region23: #{c3_pallas.5} parent=11 // pred_region
        _
      $region24: #{c3_pallas.5} parent=11 // pred_fallthru
        _
      // Predicated region
      $region25: #{c3_pallas.5} parent=11 // pred_check
        %p171 = pneg %p121
      $region26: #{c3_pallas.5} parent=11 // pred_check_branch
        %173 = sbr.rel (%p171) target = $region28
      $region27: #{c3_pallas.5} parent=11 // pred_region
        _
      $region28: #{c3_pallas.5} parent=11 // pred_fallthru
        _
    $region12: #{c3_pallas.5} parent=5 // pred_fallthru
      _
    %p174 = scmp.lt.s32.totalorder %s11, 2
    // Predicated region
    $region29: #{c3_pallas.5} parent=5 // pred_check
      %p175 = pneg %p174
    $region30: #{c3_pallas.5} parent=5 // pred_check_branch
      %177 = sbr.rel (%p175) target = $region32
    $region31: #{c3_pallas.5} parent=5 // pred_region
      // Predicated region
      $region33: #{c3_pallas.5} parent=31 // pred_check
        %p178 = pneg %p31
      $region34: #{c3_pallas.5} parent=31 // pred_check_branch
        %180 = sbr.rel (%p178) target = $region36
      $region35: #{c3_pallas.5} parent=31 // pred_region
        %p181 = scmp.lt.s32.totalorder %s11, 1
        %s182 = scalar_select %p181, %s11, 1
        %s183 = smul.addr %s182, 32
        %s184 = smul.addr %s183, 8
        %s185 = scalar_lea.vmem %s0, %s184
      $region36: #{c3_pallas.5} parent=31 // pred_fallthru
        _
    $region32: #{c3_pallas.5} parent=5 // pred_fallthru
      _
    %p186 = scmp.le.s32.totalorder 1, %s11
    %p187 = scmp.lt.s32.totalorder %s11, 3
    %p188 = pnand %p186, %p187
    %p189 = pneg %p188
    // Predicated region
    $region37: #{c3_pallas.5} parent=5 // pred_check
      _
    $region38: #{c3_pallas.5} parent=5 // pred_check_branch
      %191 = sbr.rel (%p188) target = $region40
    $region39: #{c3_pallas.5} parent=5 // pred_region
      %s192 = ssub.s32 %s11, 1
      %p193 = scmp.lt.s32.totalorder %s16, 1
      %s194 = scalar_select %p193, %s16, 1
      %s195 = smul.addr %s194, 32
      %s196 = smul.addr %s195, 8
      %s197 = scalar_lea.vmem %s0, %s196
      %p198 = pneg %p37
      %p199 = pneg %p34
      %p200 = pneg %p58
      %p201 = pneg %p55
      %p202 = pneg %p79
      %p203 = pneg %p76
      %p204 = pneg %p100
      %p205 = pneg %p97
      %p206 = pneg %p121
      %p207 = pneg %p118
      %p208 = pneg %p147
      %p209 = pneg %p144
      %p210 = scmp.lt.s32.totalorder %s16, 1
      %s211 = scalar_select %p210, %s16, 1
      %s212 = smul.addr %s211, 32
      %s213 = smul.addr %s212, 8
      %s214 = scalar_lea.vmem %s5, %s213
      %p215 = scmp.lt.s32.totalorder %s16, 1
      %s216 = scalar_select %p215, %s16, 1
      %s217 = smul.addr %s216, 32
      %s218 = smul.addr %s217, 8
      %s219 = scalar_lea.vmem %s0, %s218
      %p220 = scmp.lt.s32.totalorder %s16, 1
      %s221 = scalar_select %p220, %s16, 1
      %s222 = smul.addr %s221, 32
      %s223 = smul.addr %s222, 8
      %s224 = scalar_lea.vmem %s5, %s223
      %v225 = vld [vmem:[%s219] sm:$0xff]
      %v226 = vld [vmem:[%s219 + $0x8] sm:$0xff]
      %v227 = vld [vmem:[%s219 + $0x10] sm:$0xff]
      %v228 = vld [vmem:[%s219 + $0x18] sm:$0xff]
      %v229 = vld [vmem:[%s219 + $0x20] sm:$0xff]
      %v230 = vld [vmem:[%s219 + $0x28] sm:$0xff]
      %v231 = vld [vmem:[%s219 + $0x30] sm:$0xff]
      %v232 = vld [vmem:[%s219 + $0x38] sm:$0xff]
      %v233 = vld [vmem:[%s219 + $0x40] sm:$0xff]
      %v234 = vld [vmem:[%s219 + $0x48] sm:$0xff]
      %v235 = vld [vmem:[%s219 + $0x50] sm:$0xff]
      %v236 = vld [vmem:[%s219 + $0x58] sm:$0xff]
      %v237 = vld [vmem:[%s219 + $0x60] sm:$0xff]
      %v238 = vld [vmem:[%s219 + $0x68] sm:$0xff]
      %v239 = vld [vmem:[%s219 + $0x70] sm:$0xff]
      %v240 = vld [vmem:[%s219 + $0x78] sm:$0xff]
      %v241 = vld [vmem:[%s219 + $0x80] sm:$0xff]
      %v242 = vld [vmem:[%s219 + $0x88] sm:$0xff]
      %v243 = vld [vmem:[%s219 + $0x90] sm:$0xff]
      %v244 = vld [vmem:[%s219 + $0x98] sm:$0xff]
      %v245 = vld [vmem:[%s219 + $0xa0] sm:$0xff]
      %v246 = vld [vmem:[%s219 + $0xa8] sm:$0xff]
      %v247 = vld [vmem:[%s219 + $0xb0] sm:$0xff]
      %v248 = vld [vmem:[%s219 + $0xb8] sm:$0xff]
      %v249 = vld [vmem:[%s219 + $0xc0] sm:$0xff]
      %v250 = vld [vmem:[%s219 + $0xc8] sm:$0xff]
      %v251 = vld [vmem:[%s219 + $0xd0] sm:$0xff]
      %v252 = vld [vmem:[%s219 + $0xd8] sm:$0xff]
      %v253 = vld [vmem:[%s219 + $0xe0] sm:$0xff]
      %v254 = vld [vmem:[%s219 + $0xe8] sm:$0xff]
      %v255 = vld [vmem:[%s219 + $0xf0] sm:$0xff]
      %v256 = vld [vmem:[%s219 + $0xf8] sm:$0xff]
      %v257 = vld [vmem:[%s1] sm:$0xff]
      %v258 = vld [vmem:[%s1 + $0x8] sm:$0xff]
      %v259 = vld [vmem:[%s2] sm:$0x1]
      %v261 = vperm.slane %v259, 0
      %vm263 = vcmask 130048
      %v265 = vsel %vm263, %v225, 0
      %v268 = vsel %vm263, %v226, 0
      %v271 = vsel %vm263, %v227, 0
      %v274 = vsel %vm263, %v228, 0
      %v277 = vsel %vm263, %v229, 0
      %v280 = vsel %vm263, %v230, 0
      %v283 = vsel %vm263, %v231, 0
      %v286 = vsel %vm263, %v232, 0
      %v289 = vsel %vm263, %v233, 0
      %v292 = vsel %vm263, %v234, 0
      %v295 = vsel %vm263, %v235, 0
      %v298 = vsel %vm263, %v236, 0
      %v301 = vsel %vm263, %v237, 0
      %v304 = vsel %vm263, %v238, 0
      %v307 = vsel %vm263, %v239, 0
      %v310 = vsel %vm263, %v240, 0
      %v313 = vsel %vm263, %v241, 0
      %v316 = vsel %vm263, %v242, 0
      %v319 = vsel %vm263, %v243, 0
      %v322 = vsel %vm263, %v244, 0
      %v325 = vsel %vm263, %v245, 0
      %v328 = vsel %vm263, %v246, 0
      %v331 = vsel %vm263, %v247, 0
      %v334 = vsel %vm263, %v248, 0
      %v337 = vsel %vm263, %v249, 0
      %v340 = vsel %vm263, %v250, 0
      %v343 = vsel %vm263, %v251, 0
      %v346 = vsel %vm263, %v252, 0
      %v349 = vsel %vm263, %v253, 0
      %v352 = vsel %vm263, %v254, 0
      %v355 = vsel %vm263, %v255, 0
      %v358 = vsel %vm263, %v256, 0
      %360 = vmatpush.msra.mxu0 0.0
      %361 = vmatpush.msra.mxu0 0.0
      %362 = vmatpush.msra.mxu0 0.0
      %363 = vmatpush.msra.mxu0 0.0
      %364 = vmatpush.msra.mxu0 0.0
      %365 = vmatpush.msra.mxu0 0.0
      %366 = vmatpush.msra.mxu0 0.0
      %367 = vmatpush.msra.mxu0 0.0
      %368 = vmatpush.msra.mxu0 0.0
      %369 = vmatpush.msra.mxu0 0.0
      %370 = vmatpush.msra.mxu0 0.0
      %371 = vmatpush.msra.mxu0 0.0
      %372 = vmatpush.msra.mxu0 0.0
      %373 = vmatpush.msra.mxu0 0.0
      %374 = vmatpush.msra.mxu0 %v258
      %375 = vmatpush.msra.mxu0 %v257
      %376 = vmatmul.f32.gmra.mxu0 %v265
      %v377 = vpop.f32.mrf.mxu0
      %v378 = vadd.f32 %v261, %v377
      %379 = vmatmul.f32.gmra.mxu0 %v268
      %v380 = vpop.f32.mrf.mxu0
      %v381 = vadd.f32 %v261, %v380
      %382 = vmatmul.f32.gmra.mxu0 %v271
      %v383 = vpop.f32.mrf.mxu0
      %v384 = vadd.f32 %v261, %v383
      %385 = vmatmul.f32.gmra.mxu0 %v274
      %v386 = vpop.f32.mrf.mxu0
      %v387 = vadd.f32 %v261, %v386
      %388 = vmatmul.f32.gmra.mxu0 %v277
      %v389 = vpop.f32.mrf.mxu0
      %v390 = vadd.f32 %v261, %v389
      %391 = vmatmul.f32.gmra.mxu0 %v280
      %v392 = vpop.f32.mrf.mxu0
      %v393 = vadd.f32 %v261, %v392
      %394 = vmatmul.f32.gmra.mxu0 %v283
      %v395 = vpop.f32.mrf.mxu0
      %v396 = vadd.f32 %v261, %v395
      %397 = vmatmul.f32.gmra.mxu0 %v286
      %v398 = vpop.f32.mrf.mxu0
      %v399 = vadd.f32 %v261, %v398
      %400 = vmatmul.f32.gmra.mxu0 %v289
      %v401 = vpop.f32.mrf.mxu0
      %v402 = vadd.f32 %v261, %v401
      %403 = vmatmul.f32.gmra.mxu0 %v292
      %v404 = vpop.f32.mrf.mxu0
      %v405 = vadd.f32 %v261, %v404
      %406 = vmatmul.f32.gmra.mxu0 %v295
      %v407 = vpop.f32.mrf.mxu0
      %v408 = vadd.f32 %v261, %v407
      %409 = vmatmul.f32.gmra.mxu0 %v298
      %v410 = vpop.f32.mrf.mxu0
      %v411 = vadd.f32 %v261, %v410
      %412 = vmatmul.f32.gmra.mxu0 %v301
      %v413 = vpop.f32.mrf.mxu0
      %v414 = vadd.f32 %v261, %v413
      %415 = vmatmul.f32.gmra.mxu0 %v304
      %v416 = vpop.f32.mrf.mxu0
      %v417 = vadd.f32 %v261, %v416
      %418 = vmatmul.f32.gmra.mxu0 %v307
      %v419 = vpop.f32.mrf.mxu0
      %v420 = vadd.f32 %v261, %v419
      %421 = vmatmul.f32.gmra.mxu0 %v310
      %v422 = vpop.f32.mrf.mxu0
      %v423 = vadd.f32 %v261, %v422
      %424 = vmatmul.f32.gmra.mxu0 %v313
      %v425 = vpop.f32.mrf.mxu0
      %v426 = vadd.f32 %v261, %v425
      %427 = vmatmul.f32.gmra.mxu0 %v316
      %v428 = vpop.f32.mrf.mxu0
      %v429 = vadd.f32 %v261, %v428
      %430 = vmatmul.f32.gmra.mxu0 %v319
      %v431 = vpop.f32.mrf.mxu0
      %v432 = vadd.f32 %v261, %v431
      %433 = vmatmul.f32.gmra.mxu0 %v322
      %v434 = vpop.f32.mrf.mxu0
      %v435 = vadd.f32 %v261, %v434
      %436 = vmatmul.f32.gmra.mxu0 %v325
      %v437 = vpop.f32.mrf.mxu0
      %v438 = vadd.f32 %v261, %v437
      %439 = vmatmul.f32.gmra.mxu0 %v328
      %v440 = vpop.f32.mrf.mxu0
      %v441 = vadd.f32 %v261, %v440
      %442 = vmatmul.f32.gmra.mxu0 %v331
      %v443 = vpop.f32.mrf.mxu0
      %v444 = vadd.f32 %v261, %v443
      %445 = vmatmul.f32.gmra.mxu0 %v334
      %v446 = vpop.f32.mrf.mxu0
      %v447 = vadd.f32 %v261, %v446
      %448 = vmatmul.f32.gmra.mxu0 %v337
      %v449 = vpop.f32.mrf.mxu0
      %v450 = vadd.f32 %v261, %v449
      %451 = vmatmul.f32.gmra.mxu0 %v340
      %v452 = vpop.f32.mrf.mxu0
      %v453 = vadd.f32 %v261, %v452
      %454 = vmatmul.f32.gmra.mxu0 %v343
      %v455 = vpop.f32.mrf.mxu0
      %v456 = vadd.f32 %v261, %v455
      %457 = vmatmul.f32.gmra.mxu0 %v346
      %v458 = vpop.f32.mrf.mxu0
      %v459 = vadd.f32 %v261, %v458
      %460 = vmatmul.f32.gmra.mxu0 %v349
      %v461 = vpop.f32.mrf.mxu0
      %v462 = vadd.f32 %v261, %v461
      %463 = vmatmul.f32.gmra.mxu0 %v352
      %v464 = vpop.f32.mrf.mxu0
      %v465 = vadd.f32 %v261, %v464
      %466 = vmatmul.f32.gmra.mxu0 %v355
      %v467 = vpop.f32.mrf.mxu0
      %v468 = vadd.f32 %v261, %v467
      %469 = vmatmul.f32.gmra.mxu0 %v358
      %v470 = vpop.f32.mrf.mxu0
      %v471 = vadd.f32 %v261, %v470
      %472 = vdwg.mxu0
      %v473 = vxor.u32 %v378, 2147483648
      %v474 = vxor.u32 %v381, 2147483648
      %v475 = vxor.u32 %v384, 2147483648
      %v476 = vxor.u32 %v387, 2147483648
      %v477 = vxor.u32 %v390, 2147483648
      %v478 = vxor.u32 %v393, 2147483648
      %v479 = vxor.u32 %v396, 2147483648
      %v480 = vxor.u32 %v399, 2147483648
      %v481 = vxor.u32 %v402, 2147483648
      %v482 = vxor.u32 %v405, 2147483648
      %v483 = vxor.u32 %v408, 2147483648
      %v484 = vxor.u32 %v411, 2147483648
      %v485 = vxor.u32 %v414, 2147483648
      %v486 = vxor.u32 %v417, 2147483648
      %v487 = vxor.u32 %v420, 2147483648
      %v488 = vxor.u32 %v423, 2147483648
      %v489 = vxor.u32 %v426, 2147483648
      %v490 = vxor.u32 %v429, 2147483648
      %v491 = vxor.u32 %v432, 2147483648
      %v492 = vxor.u32 %v435, 2147483648
      %v493 = vxor.u32 %v438, 2147483648
      %v494 = vxor.u32 %v441, 2147483648
      %v495 = vxor.u32 %v444, 2147483648
      %v496 = vxor.u32 %v447, 2147483648
      %v497 = vxor.u32 %v450, 2147483648
      %v498 = vxor.u32 %v453, 2147483648
      %v499 = vxor.u32 %v456, 2147483648
      %v500 = vxor.u32 %v459, 2147483648
      %v501 = vxor.u32 %v462, 2147483648
      %v502 = vxor.u32 %v465, 2147483648
      %v503 = vxor.u32 %v468, 2147483648
      %v504 = vxor.u32 %v471, 2147483648
      %v505 = vmul.f32 %v473, 1.442695
      %v506 = vpow.pop %v505
      %v507 = vmul.f32 %v474, 1.442695
      %v508 = vpow.pop %v507
      %v509 = vmul.f32 %v475, 1.442695
      %v510 = vpow.pop %v509
      %v511 = vmul.f32 %v476, 1.442695
      %v512 = vpow.pop %v511
      %v513 = vmul.f32 %v477, 1.442695
      %v514 = vpow.pop %v513
      %v515 = vmul.f32 %v478, 1.442695
      %v516 = vpow.pop %v515
      %v517 = vmul.f32 %v479, 1.442695
      %v518 = vpow.pop %v517
      %v519 = vmul.f32 %v480, 1.442695
      %v520 = vpow.pop %v519
      %v521 = vmul.f32 %v481, 1.442695
      %v522 = vpow.pop %v521
      %v523 = vmul.f32 %v482, 1.442695
      %v524 = vpow.pop %v523
      %v525 = vmul.f32 %v483, 1.442695
      %v526 = vpow.pop %v525
      %v527 = vmul.f32 %v484, 1.442695
      %v528 = vpow.pop %v527
      %v529 = vmul.f32 %v485, 1.442695
      %v530 = vpow.pop %v529
      %v531 = vmul.f32 %v486, 1.442695
      %v532 = vpow.pop %v531
      %v533 = vmul.f32 %v487, 1.442695
      %v534 = vpow.pop %v533
      %v535 = vmul.f32 %v488, 1.442695
      %v536 = vpow.pop %v535
      %v537 = vmul.f32 %v489, 1.442695
      %v538 = vpow.pop %v537
      %v539 = vmul.f32 %v490, 1.442695
      %v540 = vpow.pop %v539
      %v541 = vmul.f32 %v491, 1.442695
      %v542 = vpow.pop %v541
      %v543 = vmul.f32 %v492, 1.442695
      %v544 = vpow.pop %v543
      %v545 = vmul.f32 %v493, 1.442695
      %v546 = vpow.pop %v545
      %v547 = vmul.f32 %v494, 1.442695
      %v548 = vpow.pop %v547
      %v549 = vmul.f32 %v495, 1.442695
      %v550 = vpow.pop %v549
      %v551 = vmul.f32 %v496, 1.442695
      %v552 = vpow.pop %v551
      %v553 = vmul.f32 %v497, 1.442695
      %v554 = vpow.pop %v553
      %v555 = vmul.f32 %v498, 1.442695
      %v556 = vpow.pop %v555
      %v557 = vmul.f32 %v499, 1.442695
      %v558 = vpow.pop %v557
      %v559 = vmul.f32 %v500, 1.442695
      %v560 = vpow.pop %v559
      %v561 = vmul.f32 %v501, 1.442695
      %v562 = vpow.pop %v561
      %v563 = vmul.f32 %v502, 1.442695
      %v564 = vpow.pop %v563
      %v565 = vmul.f32 %v503, 1.442695
      %v566 = vpow.pop %v565
      %v567 = vmul.f32 %v504, 1.442695
      %v568 = vpow.pop %v567
      %v569 = vadd.f32 %v506, 1.0
      %v570 = vadd.f32 %v508, 1.0
      %v571 = vadd.f32 %v510, 1.0
      %v572 = vadd.f32 %v512, 1.0
      %v573 = vadd.f32 %v514, 1.0
      %v574 = vadd.f32 %v516, 1.0
      %v575 = vadd.f32 %v518, 1.0
      %v576 = vadd.f32 %v520, 1.0
      %v577 = vadd.f32 %v522, 1.0
      %v578 = vadd.f32 %v524, 1.0
      %v579 = vadd.f32 %v526, 1.0
      %v580 = vadd.f32 %v528, 1.0
      %v581 = vadd.f32 %v530, 1.0
      %v582 = vadd.f32 %v532, 1.0
      %v583 = vadd.f32 %v534, 1.0
      %v584 = vadd.f32 %v536, 1.0
      %v585 = vadd.f32 %v538, 1.0
      %v586 = vadd.f32 %v540, 1.0
      %v587 = vadd.f32 %v542, 1.0
      %v588 = vadd.f32 %v544, 1.0
      %v589 = vadd.f32 %v546, 1.0
      %v590 = vadd.f32 %v548, 1.0
      %v591 = vadd.f32 %v550, 1.0
      %v592 = vadd.f32 %v552, 1.0
      %v593 = vadd.f32 %v554, 1.0
      %v594 = vadd.f32 %v556, 1.0
      %v595 = vadd.f32 %v558, 1.0
      %v596 = vadd.f32 %v560, 1.0
      %v597 = vadd.f32 %v562, 1.0
      %v598 = vadd.f32 %v564, 1.0
      %v599 = vadd.f32 %v566, 1.0
      %v600 = vadd.f32 %v568, 1.0
      %v601 = vrcp.pop %v569
      %v602 = vmul.f32 %v569, %v601
      %v603 = vsub.f32 1.0, %v602
      %v604 = vmul.f32 %v601, %v603
      %v605 = vadd.f32 %v601, %v604
      %vm606 = vweird.f32 %v569
      %vm607 = vweird.f32 %v601
      %vm608 = vmor %vm606, %vm607
      %v609 = vsel %vm608, %v601, %v605
      %v610 = vand.u32 2147483647, %v569
      %vm611 = vcmp.eq.f32.partialorder %v610, 8.507059e+37
      %v612 = vand.u32 %v569, 2147483648
      %v613 = vor.u32 1.1754944e-38, %v612
      %v614 = vsel %vm611, %v613, %v609
      %v615 = vmul.f32 1.0, %v614
      %v616 = vrcp.pop %v570
      %v617 = vmul.f32 %v570, %v616
      %v618 = vsub.f32 1.0, %v617
      %v619 = vmul.f32 %v616, %v618
      %v620 = vadd.f32 %v616, %v619
      %vm621 = vweird.f32 %v570
      %vm622 = vweird.f32 %v616
      %vm623 = vmor %vm621, %vm622
      %v624 = vsel %vm623, %v616, %v620
      %v625 = vand.u32 2147483647, %v570
      %vm626 = vcmp.eq.f32.partialorder %v625, 8.507059e+37
      %v627 = vand.u32 %v570, 2147483648
      %v628 = vor.u32 1.1754944e-38, %v627
      %v629 = vsel %vm626, %v628, %v624
      %v630 = vmul.f32 1.0, %v629
      %v631 = vrcp.pop %v571
      %v632 = vmul.f32 %v571, %v631
      %v633 = vsub.f32 1.0, %v632
      %v634 = vmul.f32 %v631, %v633
      %v635 = vadd.f32 %v631, %v634
      %vm636 = vweird.f32 %v571
      %vm637 = vweird.f32 %v631
      %vm638 = vmor %vm636, %vm637
      %v639 = vsel %vm638, %v631, %v635
      %v640 = vand.u32 2147483647, %v571
      %vm641 = vcmp.eq.f32.partialorder %v640, 8.507059e+37
      %v642 = vand.u32 %v571, 2147483648
      %v643 = vor.u32 1.1754944e-38, %v642
      %v644 = vsel %vm641, %v643, %v639
      %v645 = vmul.f32 1.0, %v644
      %v646 = vrcp.pop %v572
      %v647 = vmul.f32 %v572, %v646
      %v648 = vsub.f32 1.0, %v647
      %v649 = vmul.f32 %v646, %v648
      %v650 = vadd.f32 %v646, %v649
      %vm651 = vweird.f32 %v572
      %vm652 = vweird.f32 %v646
      %vm653 = vmor %vm651, %vm652
      %v654 = vsel %vm653, %v646, %v650
      %v655 = vand.u32 2147483647, %v572
      %vm656 = vcmp.eq.f32.partialorder %v655, 8.507059e+37
      %v657 = vand.u32 %v572, 2147483648
      %v658 = vor.u32 1.1754944e-38, %v657
      %v659 = vsel %vm656, %v658, %v654
      %v660 = vmul.f32 1.0, %v659
      %v661 = vrcp.pop %v573
      %v662 = vmul.f32 %v573, %v661
      %v663 = vsub.f32 1.0, %v662
      %v664 = vmul.f32 %v661, %v663
      %v665 = vadd.f32 %v661, %v664
      %vm666 = vweird.f32 %v573
      %vm667 = vweird.f32 %v661
      %vm668 = vmor %vm666, %vm667
      %v669 = vsel %vm668, %v661, %v665
      %v670 = vand.u32 2147483647, %v573
      %vm671 = vcmp.eq.f32.partialorder %v670, 8.507059e+37
      %v672 = vand.u32 %v573, 2147483648
      %v673 = vor.u32 1.1754944e-38, %v672
      %v674 = vsel %vm671, %v673, %v669
      %v675 = vmul.f32 1.0, %v674
      %v676 = vrcp.pop %v574
      %v677 = vmul.f32 %v574, %v676
      %v678 = vsub.f32 1.0, %v677
      %v679 = vmul.f32 %v676, %v678
      %v680 = vadd.f32 %v676, %v679
      %vm681 = vweird.f32 %v574
      %vm682 = vweird.f32 %v676
      %vm683 = vmor %vm681, %vm682
      %v684 = vsel %vm683, %v676, %v680
      %v685 = vand.u32 2147483647, %v574
      %vm686 = vcmp.eq.f32.partialorder %v685, 8.507059e+37
      %v687 = vand.u32 %v574, 2147483648
      %v688 = vor.u32 1.1754944e-38, %v687
      %v689 = vsel %vm686, %v688, %v684
      %v690 = vmul.f32 1.0, %v689
      %v691 = vrcp.pop %v575
      %v692 = vmul.f32 %v575, %v691
      %v693 = vsub.f32 1.0, %v692
      %v694 = vmul.f32 %v691, %v693
      %v695 = vadd.f32 %v691, %v694
      %vm696 = vweird.f32 %v575
      %vm697 = vweird.f32 %v691
      %vm698 = vmor %vm696, %vm697
      %v699 = vsel %vm698, %v691, %v695
      %v700 = vand.u32 2147483647, %v575
      %vm701 = vcmp.eq.f32.partialorder %v700, 8.507059e+37
      %v702 = vand.u32 %v575, 2147483648
      %v703 = vor.u32 1.1754944e-38, %v702
      %v704 = vsel %vm701, %v703, %v699
      %v705 = vmul.f32 1.0, %v704
      %v706 = vrcp.pop %v576
      %v707 = vmul.f32 %v576, %v706
      %v708 = vsub.f32 1.0, %v707
      %v709 = vmul.f32 %v706, %v708
      %v710 = vadd.f32 %v706, %v709
      %vm711 = vweird.f32 %v576
      %vm712 = vweird.f32 %v706
      %vm713 = vmor %vm711, %vm712
      %v714 = vsel %vm713, %v706, %v710
      %v715 = vand.u32 2147483647, %v576
      %vm716 = vcmp.eq.f32.partialorder %v715, 8.507059e+37
      %v717 = vand.u32 %v576, 2147483648
      %v718 = vor.u32 1.1754944e-38, %v717
      %v719 = vsel %vm716, %v718, %v714
      %v720 = vmul.f32 1.0, %v719
      %v721 = vrcp.pop %v577
      %v722 = vmul.f32 %v577, %v721
      %v723 = vsub.f32 1.0, %v722
      %v724 = vmul.f32 %v721, %v723
      %v725 = vadd.f32 %v721, %v724
      %vm726 = vweird.f32 %v577
      %vm727 = vweird.f32 %v721
      %vm728 = vmor %vm726, %vm727
      %v729 = vsel %vm728, %v721, %v725
      %v730 = vand.u32 2147483647, %v577
      %vm731 = vcmp.eq.f32.partialorder %v730, 8.507059e+37
      %v732 = vand.u32 %v577, 2147483648
      %v733 = vor.u32 1.1754944e-38, %v732
      %v734 = vsel %vm731, %v733, %v729
      %v735 = vmul.f32 1.0, %v734
      %v736 = vrcp.pop %v578
      %v737 = vmul.f32 %v578, %v736
      %v738 = vsub.f32 1.0, %v737
      %v739 = vmul.f32 %v736, %v738
      %v740 = vadd.f32 %v736, %v739
      %vm741 = vweird.f32 %v578
      %vm742 = vweird.f32 %v736
      %vm743 = vmor %vm741, %vm742
      %v744 = vsel %vm743, %v736, %v740
      %v745 = vand.u32 2147483647, %v578
      %vm746 = vcmp.eq.f32.partialorder %v745, 8.507059e+37
      %v747 = vand.u32 %v578, 2147483648
      %v748 = vor.u32 1.1754944e-38, %v747
      %v749 = vsel %vm746, %v748, %v744
      %v750 = vmul.f32 1.0, %v749
      %v751 = vrcp.pop %v579
      %v752 = vmul.f32 %v579, %v751
      %v753 = vsub.f32 1.0, %v752
      %v754 = vmul.f32 %v751, %v753
      %v755 = vadd.f32 %v751, %v754
      %vm756 = vweird.f32 %v579
      %vm757 = vweird.f32 %v751
      %vm758 = vmor %vm756, %vm757
      %v759 = vsel %vm758, %v751, %v755
      %v760 = vand.u32 2147483647, %v579
      %vm761 = vcmp.eq.f32.partialorder %v760, 8.507059e+37
      %v762 = vand.u32 %v579, 2147483648
      %v763 = vor.u32 1.1754944e-38, %v762
      %v764 = vsel %vm761, %v763, %v759
      %v765 = vmul.f32 1.0, %v764
      %v766 = vrcp.pop %v580
      %v767 = vmul.f32 %v580, %v766
      %v768 = vsub.f32 1.0, %v767
      %v769 = vmul.f32 %v766, %v768
      %v770 = vadd.f32 %v766, %v769
      %vm771 = vweird.f32 %v580
      %vm772 = vweird.f32 %v766
      %vm773 = vmor %vm771, %vm772
      %v774 = vsel %vm773, %v766, %v770
      %v775 = vand.u32 2147483647, %v580
      %vm776 = vcmp.eq.f32.partialorder %v775, 8.507059e+37
      %v777 = vand.u32 %v580, 2147483648
      %v778 = vor.u32 1.1754944e-38, %v777
      %v779 = vsel %vm776, %v778, %v774
      %v780 = vmul.f32 1.0, %v779
      %v781 = vrcp.pop %v581
      %v782 = vmul.f32 %v581, %v781
      %v783 = vsub.f32 1.0, %v782
      %v784 = vmul.f32 %v781, %v783
      %v785 = vadd.f32 %v781, %v784
      %vm786 = vweird.f32 %v581
      %vm787 = vweird.f32 %v781
      %vm788 = vmor %vm786, %vm787
      %v789 = vsel %vm788, %v781, %v785
      %v790 = vand.u32 2147483647, %v581
      %vm791 = vcmp.eq.f32.partialorder %v790, 8.507059e+37
      %v792 = vand.u32 %v581, 2147483648
      %v793 = vor.u32 1.1754944e-38, %v792
      %v794 = vsel %vm791, %v793, %v789
      %v795 = vmul.f32 1.0, %v794
      %v796 = vrcp.pop %v582
      %v797 = vmul.f32 %v582, %v796
      %v798 = vsub.f32 1.0, %v797
      %v799 = vmul.f32 %v796, %v798
      %v800 = vadd.f32 %v796, %v799
      %vm801 = vweird.f32 %v582
      %vm802 = vweird.f32 %v796
      %vm803 = vmor %vm801, %vm802
      %v804 = vsel %vm803, %v796, %v800
      %v805 = vand.u32 2147483647, %v582
      %vm806 = vcmp.eq.f32.partialorder %v805, 8.507059e+37
      %v807 = vand.u32 %v582, 2147483648
      %v808 = vor.u32 1.1754944e-38, %v807
      %v809 = vsel %vm806, %v808, %v804
      %v810 = vmul.f32 1.0, %v809
      %v811 = vrcp.pop %v583
      %v812 = vmul.f32 %v583, %v811
      %v813 = vsub.f32 1.0, %v812
      %v814 = vmul.f32 %v811, %v813
      %v815 = vadd.f32 %v811, %v814
      %vm816 = vweird.f32 %v583
      %vm817 = vweird.f32 %v811
      %vm818 = vmor %vm816, %vm817
      %v819 = vsel %vm818, %v811, %v815
      %v820 = vand.u32 2147483647, %v583
      %vm821 = vcmp.eq.f32.partialorder %v820, 8.507059e+37
      %v822 = vand.u32 %v583, 2147483648
      %v823 = vor.u32 1.1754944e-38, %v822
      %v824 = vsel %vm821, %v823, %v819
      %v825 = vmul.f32 1.0, %v824
      %v826 = vrcp.pop %v584
      %v827 = vmul.f32 %v584, %v826
      %v828 = vsub.f32 1.0, %v827
      %v829 = vmul.f32 %v826, %v828
      %v830 = vadd.f32 %v826, %v829
      %vm831 = vweird.f32 %v584
      %vm832 = vweird.f32 %v826
      %vm833 = vmor %vm831, %vm832
      %v834 = vsel %vm833, %v826, %v830
      %v835 = vand.u32 2147483647, %v584
      %vm836 = vcmp.eq.f32.partialorder %v835, 8.507059e+37
      %v837 = vand.u32 %v584, 2147483648
      %v838 = vor.u32 1.1754944e-38, %v837
      %v839 = vsel %vm836, %v838, %v834
      %v840 = vmul.f32 1.0, %v839
      %v841 = vrcp.pop %v585
      %v842 = vmul.f32 %v585, %v841
      %v843 = vsub.f32 1.0, %v842
      %v844 = vmul.f32 %v841, %v843
      %v845 = vadd.f32 %v841, %v844
      %vm846 = vweird.f32 %v585
      %vm847 = vweird.f32 %v841
      %vm848 = vmor %vm846, %vm847
      %v849 = vsel %vm848, %v841, %v845
      %v850 = vand.u32 2147483647, %v585
      %vm851 = vcmp.eq.f32.partialorder %v850, 8.507059e+37
      %v852 = vand.u32 %v585, 2147483648
      %v853 = vor.u32 1.1754944e-38, %v852
      %v854 = vsel %vm851, %v853, %v849
      %v855 = vmul.f32 1.0, %v854
      %v856 = vrcp.pop %v586
      %v857 = vmul.f32 %v586, %v856
      %v858 = vsub.f32 1.0, %v857
      %v859 = vmul.f32 %v856, %v858
      %v860 = vadd.f32 %v856, %v859
      %vm861 = vweird.f32 %v586
      %vm862 = vweird.f32 %v856
      %vm863 = vmor %vm861, %vm862
      %v864 = vsel %vm863, %v856, %v860
      %v865 = vand.u32 2147483647, %v586
      %vm866 = vcmp.eq.f32.partialorder %v865, 8.507059e+37
      %v867 = vand.u32 %v586, 2147483648
      %v868 = vor.u32 1.1754944e-38, %v867
      %v869 = vsel %vm866, %v868, %v864
      %v870 = vmul.f32 1.0, %v869
      %v871 = vrcp.pop %v587
      %v872 = vmul.f32 %v587, %v871
      %v873 = vsub.f32 1.0, %v872
      %v874 = vmul.f32 %v871, %v873
      %v875 = vadd.f32 %v871, %v874
      %vm876 = vweird.f32 %v587
      %vm877 = vweird.f32 %v871
      %vm878 = vmor %vm876, %vm877
      %v879 = vsel %vm878, %v871, %v875
      %v880 = vand.u32 2147483647, %v587
      %vm881 = vcmp.eq.f32.partialorder %v880, 8.507059e+37
      %v882 = vand.u32 %v587, 2147483648
      %v883 = vor.u32 1.1754944e-38, %v882
      %v884 = vsel %vm881, %v883, %v879
      %v885 = vmul.f32 1.0, %v884
      %v886 = vrcp.pop %v588
      %v887 = vmul.f32 %v588, %v886
      %v888 = vsub.f32 1.0, %v887
      %v889 = vmul.f32 %v886, %v888
      %v890 = vadd.f32 %v886, %v889
      %vm891 = vweird.f32 %v588
      %vm892 = vweird.f32 %v886
      %vm893 = vmor %vm891, %vm892
      %v894 = vsel %vm893, %v886, %v890
      %v895 = vand.u32 2147483647, %v588
      %vm896 = vcmp.eq.f32.partialorder %v895, 8.507059e+37
      %v897 = vand.u32 %v588, 2147483648
      %v898 = vor.u32 1.1754944e-38, %v897
      %v899 = vsel %vm896, %v898, %v894
      %v900 = vmul.f32 1.0, %v899
      %v901 = vrcp.pop %v589
      %v902 = vmul.f32 %v589, %v901
      %v903 = vsub.f32 1.0, %v902
      %v904 = vmul.f32 %v901, %v903
      %v905 = vadd.f32 %v901, %v904
      %vm906 = vweird.f32 %v589
      %vm907 = vweird.f32 %v901
      %vm908 = vmor %vm906, %vm907
      %v909 = vsel %vm908, %v901, %v905
      %v910 = vand.u32 2147483647, %v589
      %vm911 = vcmp.eq.f32.partialorder %v910, 8.507059e+37
      %v912 = vand.u32 %v589, 2147483648
      %v913 = vor.u32 1.1754944e-38, %v912
      %v914 = vsel %vm911, %v913, %v909
      %v915 = vmul.f32 1.0, %v914
      %v916 = vrcp.pop %v590
      %v917 = vmul.f32 %v590, %v916
      %v918 = vsub.f32 1.0, %v917
      %v919 = vmul.f32 %v916, %v918
      %v920 = vadd.f32 %v916, %v919
      %vm921 = vweird.f32 %v590
      %vm922 = vweird.f32 %v916
      %vm923 = vmor %vm921, %vm922
      %v924 = vsel %vm923, %v916, %v920
      %v925 = vand.u32 2147483647, %v590
      %vm926 = vcmp.eq.f32.partialorder %v925, 8.507059e+37
      %v927 = vand.u32 %v590, 2147483648
      %v928 = vor.u32 1.1754944e-38, %v927
      %v929 = vsel %vm926, %v928, %v924
      %v930 = vmul.f32 1.0, %v929
      %v931 = vrcp.pop %v591
      %v932 = vmul.f32 %v591, %v931
      %v933 = vsub.f32 1.0, %v932
      %v934 = vmul.f32 %v931, %v933
      %v935 = vadd.f32 %v931, %v934
      %vm936 = vweird.f32 %v591
      %vm937 = vweird.f32 %v931
      %vm938 = vmor %vm936, %vm937
      %v939 = vsel %vm938, %v931, %v935
      %v940 = vand.u32 2147483647, %v591
      %vm941 = vcmp.eq.f32.partialorder %v940, 8.507059e+37
      %v942 = vand.u32 %v591, 2147483648
      %v943 = vor.u32 1.1754944e-38, %v942
      %v944 = vsel %vm941, %v943, %v939
      %v945 = vmul.f32 1.0, %v944
      %v946 = vrcp.pop %v592
      %v947 = vmul.f32 %v592, %v946
      %v948 = vsub.f32 1.0, %v947
      %v949 = vmul.f32 %v946, %v948
      %v950 = vadd.f32 %v946, %v949
      %vm951 = vweird.f32 %v592
      %vm952 = vweird.f32 %v946
      %vm953 = vmor %vm951, %vm952
      %v954 = vsel %vm953, %v946, %v950
      %v955 = vand.u32 2147483647, %v592
      %vm956 = vcmp.eq.f32.partialorder %v955, 8.507059e+37
      %v957 = vand.u32 %v592, 2147483648
      %v958 = vor.u32 1.1754944e-38, %v957
      %v959 = vsel %vm956, %v958, %v954
      %v960 = vmul.f32 1.0, %v959
      %v961 = vrcp.pop %v593
      %v962 = vmul.f32 %v593, %v961
      %v963 = vsub.f32 1.0, %v962
      %v964 = vmul.f32 %v961, %v963
      %v965 = vadd.f32 %v961, %v964
      %vm966 = vweird.f32 %v593
      %vm967 = vweird.f32 %v961
      %vm968 = vmor %vm966, %vm967
      %v969 = vsel %vm968, %v961, %v965
      %v970 = vand.u32 2147483647, %v593
      %vm971 = vcmp.eq.f32.partialorder %v970, 8.507059e+37
      %v972 = vand.u32 %v593, 2147483648
      %v973 = vor.u32 1.1754944e-38, %v972
      %v974 = vsel %vm971, %v973, %v969
      %v975 = vmul.f32 1.0, %v974
      %v976 = vrcp.pop %v594
      %v977 = vmul.f32 %v594, %v976
      %v978 = vsub.f32 1.0, %v977
      %v979 = vmul.f32 %v976, %v978
      %v980 = vadd.f32 %v976, %v979
      %vm981 = vweird.f32 %v594
      %vm982 = vweird.f32 %v976
      %vm983 = vmor %vm981, %vm982
      %v984 = vsel %vm983, %v976, %v980
      %v985 = vand.u32 2147483647, %v594
      %vm986 = vcmp.eq.f32.partialorder %v985, 8.507059e+37
      %v987 = vand.u32 %v594, 2147483648
      %v988 = vor.u32 1.1754944e-38, %v987
      %v989 = vsel %vm986, %v988, %v984
      %v990 = vmul.f32 1.0, %v989
      %v991 = vrcp.pop %v595
      %v992 = vmul.f32 %v595, %v991
      %v993 = vsub.f32 1.0, %v992
      %v994 = vmul.f32 %v991, %v993
      %v995 = vadd.f32 %v991, %v994
      %vm996 = vweird.f32 %v595
      %vm997 = vweird.f32 %v991
      %vm998 = vmor %vm996, %vm997
      %v999 = vsel %vm998, %v991, %v995
      %v1000 = vand.u32 2147483647, %v595
      %vm1001 = vcmp.eq.f32.partialorder %v1000, 8.507059e+37
      %v1002 = vand.u32 %v595, 2147483648
      %v1003 = vor.u32 1.1754944e-38, %v1002
      %v1004 = vsel %vm1001, %v1003, %v999
      %v1005 = vmul.f32 1.0, %v1004
      %v1006 = vrcp.pop %v596
      %v1007 = vmul.f32 %v596, %v1006
      %v1008 = vsub.f32 1.0, %v1007
      %v1009 = vmul.f32 %v1006, %v1008
      %v1010 = vadd.f32 %v1006, %v1009
      %vm1011 = vweird.f32 %v596
      %vm1012 = vweird.f32 %v1006
      %vm1013 = vmor %vm1011, %vm1012
      %v1014 = vsel %vm1013, %v1006, %v1010
      %v1015 = vand.u32 2147483647, %v596
      %vm1016 = vcmp.eq.f32.partialorder %v1015, 8.507059e+37
      %v1017 = vand.u32 %v596, 2147483648
      %v1018 = vor.u32 1.1754944e-38, %v1017
      %v1019 = vsel %vm1016, %v1018, %v1014
      %v1020 = vmul.f32 1.0, %v1019
      %v1021 = vrcp.pop %v597
      %v1022 = vmul.f32 %v597, %v1021
      %v1023 = vsub.f32 1.0, %v1022
      %v1024 = vmul.f32 %v1021, %v1023
      %v1025 = vadd.f32 %v1021, %v1024
      %vm1026 = vweird.f32 %v597
      %vm1027 = vweird.f32 %v1021
      %vm1028 = vmor %vm1026, %vm1027
      %v1029 = vsel %vm1028, %v1021, %v1025
      %v1030 = vand.u32 2147483647, %v597
      %vm1031 = vcmp.eq.f32.partialorder %v1030, 8.507059e+37
      %v1032 = vand.u32 %v597, 2147483648
      %v1033 = vor.u32 1.1754944e-38, %v1032
      %v1034 = vsel %vm1031, %v1033, %v1029
      %v1035 = vmul.f32 1.0, %v1034
      %v1036 = vrcp.pop %v598
      %v1037 = vmul.f32 %v598, %v1036
      %v1038 = vsub.f32 1.0, %v1037
      %v1039 = vmul.f32 %v1036, %v1038
      %v1040 = vadd.f32 %v1036, %v1039
      %vm1041 = vweird.f32 %v598
      %vm1042 = vweird.f32 %v1036
      %vm1043 = vmor %vm1041, %vm1042
      %v1044 = vsel %vm1043, %v1036, %v1040
      %v1045 = vand.u32 2147483647, %v598
      %vm1046 = vcmp.eq.f32.partialorder %v1045, 8.507059e+37
      %v1047 = vand.u32 %v598, 2147483648
      %v1048 = vor.u32 1.1754944e-38, %v1047
      %v1049 = vsel %vm1046, %v1048, %v1044
      %v1050 = vmul.f32 1.0, %v1049
      %v1051 = vrcp.pop %v599
      %v1052 = vmul.f32 %v599, %v1051
      %v1053 = vsub.f32 1.0, %v1052
      %v1054 = vmul.f32 %v1051, %v1053
      %v1055 = vadd.f32 %v1051, %v1054
      %vm1056 = vweird.f32 %v599
      %vm1057 = vweird.f32 %v1051
      %vm1058 = vmor %vm1056, %vm1057
      %v1059 = vsel %vm1058, %v1051, %v1055
      %v1060 = vand.u32 2147483647, %v599
      %vm1061 = vcmp.eq.f32.partialorder %v1060, 8.507059e+37
      %v1062 = vand.u32 %v599, 2147483648
      %v1063 = vor.u32 1.1754944e-38, %v1062
      %v1064 = vsel %vm1061, %v1063, %v1059
      %v1065 = vmul.f32 1.0, %v1064
      %v1066 = vrcp.pop %v600
      %v1067 = vmul.f32 %v600, %v1066
      %v1068 = vsub.f32 1.0, %v1067
      %v1069 = vmul.f32 %v1066, %v1068
      %v1070 = vadd.f32 %v1066, %v1069
      %vm1071 = vweird.f32 %v600
      %vm1072 = vweird.f32 %v1066
      %vm1073 = vmor %vm1071, %vm1072
      %v1074 = vsel %vm1073, %v1066, %v1070
      %v1075 = vand.u32 2147483647, %v600
      %vm1076 = vcmp.eq.f32.partialorder %v1075, 8.507059e+37
      %v1077 = vand.u32 %v600, 2147483648
      %v1078 = vor.u32 1.1754944e-38, %v1077
      %v1079 = vsel %vm1076, %v1078, %v1074
      %v1080 = vmul.f32 1.0, %v1079
      %v1081 = vmul.f32 %v378, %v615
      %v1082 = vmul.f32 %v381, %v630
      %v1083 = vmul.f32 %v384, %v645
      %v1084 = vmul.f32 %v387, %v660
      %v1085 = vmul.f32 %v390, %v675
      %v1086 = vmul.f32 %v393, %v690
      %v1087 = vmul.f32 %v396, %v705
      %v1088 = vmul.f32 %v399, %v720
      %v1089 = vmul.f32 %v402, %v735
      %v1090 = vmul.f32 %v405, %v750
      %v1091 = vmul.f32 %v408, %v765
      %v1092 = vmul.f32 %v411, %v780
      %v1093 = vmul.f32 %v414, %v795
      %v1094 = vmul.f32 %v417, %v810
      %v1095 = vmul.f32 %v420, %v825
      %v1096 = vmul.f32 %v423, %v840
      %v1097 = vmul.f32 %v426, %v855
      %v1098 = vmul.f32 %v429, %v870
      %v1099 = vmul.f32 %v432, %v885
      %v1100 = vmul.f32 %v435, %v900
      %v1101 = vmul.f32 %v438, %v915
      %v1102 = vmul.f32 %v441, %v930
      %v1103 = vmul.f32 %v444, %v945
      %v1104 = vmul.f32 %v447, %v960
      %v1105 = vmul.f32 %v450, %v975
      %v1106 = vmul.f32 %v453, %v990
      %v1107 = vmul.f32 %v456, %v1005
      %v1108 = vmul.f32 %v459, %v1020
      %v1109 = vmul.f32 %v462, %v1035
      %v1110 = vmul.f32 %v465, %v1050
      %v1111 = vmul.f32 %v468, %v1065
      %v1112 = vmul.f32 %v471, %v1080
      %1113 = vst.msk [vmem:[#allocation2] sm:$0xff] %vm263, 0.0
      %1114 = vst.msk [vmem:[#allocation2 + $0x8] sm:$0xff] %vm263, 0.0
      %vm1115 = vcmask 123904
      %1116 = vst.msk [vmem:[#allocation2 + $0x10] sm:$0x3] %vm1115, 0.0
      %1117 = vst.msk [vmem:[#allocation2 + $0x18] sm:$0xff] %vm263, 0.0
      %1118 = vst.msk [vmem:[#allocation2 + $0x20] sm:$0xff] %vm263, 0.0
      %1119 = vst.msk [vmem:[#allocation2 + $0x28] sm:$0x3] %vm1115, 0.0
      %1120 = vst.msk [vmem:[#allocation2 + $0x30] sm:$0xff] %vm263, 0.0
      %1121 = vst.msk [vmem:[#allocation2 + $0x38] sm:$0xff] %vm263, 0.0
      %1122 = vst.msk [vmem:[#allocation2 + $0x40] sm:$0x3] %vm1115, 0.0
      %1123 = vst.msk [vmem:[#allocation2 + $0x48] sm:$0xff] %vm263, 0.0
      %1124 = vst.msk [vmem:[#allocation2 + $0x50] sm:$0xff] %vm263, 0.0
      %1125 = vst.msk [vmem:[#allocation2 + $0x58] sm:$0x3] %vm1115, 0.0
      %1126 = vst.msk [vmem:[#allocation2 + $0x60] sm:$0xff] %vm263, 0.0
      %1127 = vst.msk [vmem:[#allocation2 + $0x68] sm:$0xff] %vm263, 0.0
      %1128 = vst.msk [vmem:[#allocation2 + $0x70] sm:$0x3] %vm1115, 0.0
      %1129 = vst.msk [vmem:[#allocation2 + $0x78] sm:$0xff] %vm263, 0.0
      %1130 = vst.msk [vmem:[#allocation2 + $0x80] sm:$0xff] %vm263, 0.0
      %1131 = vst.msk [vmem:[#allocation2 + $0x88] sm:$0x3] %vm1115, 0.0
      %1132 = vst.msk [vmem:[#allocation2 + $0x90] sm:$0xff] %vm263, 0.0
      %1133 = vst.msk [vmem:[#allocation2 + $0x98] sm:$0xff] %vm263, 0.0
      %1134 = vst.msk [vmem:[#allocation2 + $0xa0] sm:$0x3] %vm1115, 0.0
      %1135 = vst.msk [vmem:[#allocation2 + $0xa8] sm:$0xff] %vm263, 0.0
      %1136 = vst.msk [vmem:[#allocation2 + $0xb0] sm:$0xff] %vm263, 0.0
      %1137 = vst.msk [vmem:[#allocation2 + $0xb8] sm:$0x3] %vm1115, 0.0
      %1138 = vst.msk [vmem:[#allocation2 + $0xc0] sm:$0xff] %vm263, 0.0
      %1139 = vst.msk [vmem:[#allocation2 + $0xc8] sm:$0xff] %vm263, 0.0
      %1140 = vst.msk [vmem:[#allocation2 + $0xd0] sm:$0x3] %vm1115, 0.0
      %1141 = vst.msk [vmem:[#allocation2 + $0xd8] sm:$0xff] %vm263, 0.0
      %1142 = vst.msk [vmem:[#allocation2 + $0xe0] sm:$0xff] %vm263, 0.0
      %1143 = vst.msk [vmem:[#allocation2 + $0xe8] sm:$0x3] %vm1115, 0.0
      %1144 = vst.msk [vmem:[#allocation2 + $0xf0] sm:$0xff] %vm263, 0.0
      %1145 = vst.msk [vmem:[#allocation2 + $0xf8] sm:$0xff] %vm263, 0.0
      %1146 = vst.msk [vmem:[#allocation2 + $0x100] sm:$0x3] %vm1115, 0.0
      %1147 = vst.msk [vmem:[#allocation2 + $0x108] sm:$0xff] %vm263, 0.0
      %1148 = vst.msk [vmem:[#allocation2 + $0x110] sm:$0xff] %vm263, 0.0
      %1149 = vst.msk [vmem:[#allocation2 + $0x118] sm:$0x3] %vm1115, 0.0
      %1150 = vst.msk [vmem:[#allocation2 + $0x120] sm:$0xff] %vm263, 0.0
      %1151 = vst.msk [vmem:[#allocation2 + $0x128] sm:$0xff] %vm263, 0.0
      %1152 = vst.msk [vmem:[#allocation2 + $0x130] sm:$0x3] %vm1115, 0.0
      %1153 = vst.msk [vmem:[#allocation2 + $0x138] sm:$0xff] %vm263, 0.0
      %1154 = vst.msk [vmem:[#allocation2 + $0x140] sm:$0xff] %vm263, 0.0
      %1155 = vst.msk [vmem:[#allocation2 + $0x148] sm:$0x3] %vm1115, 0.0
      %1156 = vst.msk [vmem:[#allocation2 + $0x150] sm:$0xff] %vm263, 0.0
      %1157 = vst.msk [vmem:[#allocation2 + $0x158] sm:$0xff] %vm263, 0.0
      %1158 = vst.msk [vmem:[#allocation2 + $0x160] sm:$0x3] %vm1115, 0.0
      %1159 = vst.msk [vmem:[#allocation2 + $0x168] sm:$0xff] %vm263, 0.0
      %1160 = vst.msk [vmem:[#allocation2 + $0x170] sm:$0xff] %vm263, 0.0
      %1161 = vst.msk [vmem:[#allocation2 + $0x178] sm:$0x3] %vm1115, 0.0
      %1162 = vst.msk [vmem:[#allocation2 + $0x180] sm:$0xff] %vm263, 0.0
      %1163 = vst.msk [vmem:[#allocation2 + $0x188] sm:$0xff] %vm263, 0.0
      %1164 = vst.msk [vmem:[#allocation2 + $0x190] sm:$0x3] %vm1115, 0.0
      %1165 = vst.msk [vmem:[#allocation2 + $0x198] sm:$0xff] %vm263, 0.0
      %1166 = vst.msk [vmem:[#allocation2 + $0x1a0] sm:$0xff] %vm263, 0.0
      %1167 = vst.msk [vmem:[#allocation2 + $0x1a8] sm:$0x3] %vm1115, 0.0
      %s1168 = scalar_lea.vmem [#allocation2], 24
      %1169 = vst.msk [vmem:[%s1168 + $0x1] sm:$0xff] %vm263, %v1081
      %1170 = vst.msk [vmem:[%s1168 + $0x9] sm:$0xff] %vm263, %v1082
      %1171 = vst.msk [vmem:[%s1168 + $0x19] sm:$0xff] %vm263, %v1083
      %1172 = vst.msk [vmem:[%s1168 + $0x21] sm:$0xff] %vm263, %v1084
      %1173 = vst.msk [vmem:[%s1168 + $0x31] sm:$0xff] %vm263, %v1085
      %1174 = vst.msk [vmem:[%s1168 + $0x39] sm:$0xff] %vm263, %v1086
      %1175 = vst.msk [vmem:[%s1168 + $0x49] sm:$0xff] %vm263, %v1087
      %1176 = vst.msk [vmem:[%s1168 + $0x51] sm:$0xff] %vm263, %v1088
      %1177 = vst.msk [vmem:[%s1168 + $0x61] sm:$0xff] %vm263, %v1089
      %1178 = vst.msk [vmem:[%s1168 + $0x69] sm:$0xff] %vm263, %v1090
      %1179 = vst.msk [vmem:[%s1168 + $0x79] sm:$0xff] %vm263, %v1091
      %1180 = vst.msk [vmem:[%s1168 + $0x81] sm:$0xff] %vm263, %v1092
      %1181 = vst.msk [vmem:[%s1168 + $0x91] sm:$0xff] %vm263, %v1093
      %1182 = vst.msk [vmem:[%s1168 + $0x99] sm:$0xff] %vm263, %v1094
      %1183 = vst.msk [vmem:[%s1168 + $0xa9] sm:$0xff] %vm263, %v1095
      %1184 = vst.msk [vmem:[%s1168 + $0xb1] sm:$0xff] %vm263, %v1096
      %1185 = vst.msk [vmem:[%s1168 + $0xc1] sm:$0xff] %vm263, %v1097
      %1186 = vst.msk [vmem:[%s1168 + $0xc9] sm:$0xff] %vm263, %v1098
      %1187 = vst.msk [vmem:[%s1168 + $0xd9] sm:$0xff] %vm263, %v1099
      %1188 = vst.msk [vmem:[%s1168 + $0xe1] sm:$0xff] %vm263, %v1100
      %1189 = vst.msk [vmem:[%s1168 + $0xf1] sm:$0xff] %vm263, %v1101
      %1190 = vst.msk [vmem:[%s1168 + $0xf9] sm:$0xff] %vm263, %v1102
      %1191 = vst.msk [vmem:[%s1168 + $0x109] sm:$0xff] %vm263, %v1103
      %1192 = vst.msk [vmem:[%s1168 + $0x111] sm:$0xff] %vm263, %v1104
      %1193 = vst.msk [vmem:[%s1168 + $0x121] sm:$0xff] %vm263, %v1105
      %1194 = vst.msk [vmem:[%s1168 + $0x129] sm:$0xff] %vm263, %v1106
      %1195 = vst.msk [vmem:[%s1168 + $0x139] sm:$0xff] %vm263, %v1107
      %1196 = vst.msk [vmem:[%s1168 + $0x141] sm:$0xff] %vm263, %v1108
      %1197 = vst.msk [vmem:[%s1168 + $0x151] sm:$0xff] %vm263, %v1109
      %1198 = vst.msk [vmem:[%s1168 + $0x159] sm:$0xff] %vm263, %v1110
      %1199 = vst.msk [vmem:[%s1168 + $0x169] sm:$0xff] %vm263, %v1111
      %1200 = vst.msk [vmem:[%s1168 + $0x171] sm:$0xff] %vm263, %v1112
      %v1201 = vld [vmem:[#allocation2] sm:$0xff]
      %v1202 = vld [vmem:[#allocation2 + $0x8] sm:$0xff]
      %v1203 = vld [vmem:[#allocation2 + $0x18] sm:$0xff]
      %v1204 = vld [vmem:[#allocation2 + $0x20] sm:$0xff]
      %v1205 = vld [vmem:[#allocation2 + $0x30] sm:$0xff]
      %v1206 = vld [vmem:[#allocation2 + $0x38] sm:$0xff]
      %v1207 = vld [vmem:[#allocation2 + $0x48] sm:$0xff]
      %v1208 = vld [vmem:[#allocation2 + $0x50] sm:$0xff]
      %v1209 = vld [vmem:[#allocation2 + $0x60] sm:$0xff]
      %v1210 = vld [vmem:[#allocation2 + $0x68] sm:$0xff]
      %v1211 = vld [vmem:[#allocation2 + $0x78] sm:$0xff]
      %v1212 = vld [vmem:[#allocation2 + $0x80] sm:$0xff]
      %v1213 = vld [vmem:[#allocation2 + $0x90] sm:$0xff]
      %v1214 = vld [vmem:[#allocation2 + $0x98] sm:$0xff]
      %v1215 = vld [vmem:[#allocation2 + $0xa8] sm:$0xff]
      %v1216 = vld [vmem:[#allocation2 + $0xb0] sm:$0xff]
      %v1217 = vld [vmem:[#allocation2 + $0xc0] sm:$0xff]
      %v1218 = vld [vmem:[#allocation2 + $0xc8] sm:$0xff]
      %v1219 = vld [vmem:[#allocation2 + $0xd8] sm:$0xff]
      %v1220 = vld [vmem:[#allocation2 + $0xe0] sm:$0xff]
      %v1221 = vld [vmem:[#allocation2 + $0xf0] sm:$0xff]
      %v1222 = vld [vmem:[#allocation2 + $0xf8] sm:$0xff]
      %v1223 = vld [vmem:[#allocation2 + $0x108] sm:$0xff]
      %v1224 = vld [vmem:[#allocation2 + $0x110] sm:$0xff]
      %v1225 = vld [vmem:[#allocation2 + $0x120] sm:$0xff]
      %v1226 = vld [vmem:[#allocation2 + $0x128] sm:$0xff]
      %v1227 = vld [vmem:[#allocation2 + $0x138] sm:$0xff]
      %v1228 = vld [vmem:[#allocation2 + $0x140] sm:$0xff]
      %v1229 = vld [vmem:[#allocation2 + $0x150] sm:$0xff]
      %v1230 = vld [vmem:[#allocation2 + $0x158] sm:$0xff]
      %v1231 = vld [vmem:[#allocation2 + $0x168] sm:$0xff]
      %v1232 = vld [vmem:[#allocation2 + $0x170] sm:$0xff]
      %v1233 = vld [vmem:[#allocation2 + $0x1] sm:$0xff]
      %v1234 = vld [vmem:[#allocation2 + $0x9] sm:$0xff]
      %v1235 = vld [vmem:[#allocation2 + $0x19] sm:$0xff]
      %v1236 = vld [vmem:[#allocation2 + $0x21] sm:$0xff]
      %v1237 = vld [vmem:[#allocation2 + $0x31] sm:$0xff]
      %v1238 = vld [vmem:[#allocation2 + $0x39] sm:$0xff]
      %v1239 = vld [vmem:[#allocation2 + $0x49] sm:$0xff]
      %v1240 = vld [vmem:[#allocation2 + $0x51] sm:$0xff]
      %v1241 = vld [vmem:[#allocation2 + $0x61] sm:$0xff]
      %v1242 = vld [vmem:[#allocation2 + $0x69] sm:$0xff]
      %v1243 = vld [vmem:[#allocation2 + $0x79] sm:$0xff]
      %v1244 = vld [vmem:[#allocation2 + $0x81] sm:$0xff]
      %v1245 = vld [vmem:[#allocation2 + $0x91] sm:$0xff]
      %v1246 = vld [vmem:[#allocation2 + $0x99] sm:$0xff]
      %v1247 = vld [vmem:[#allocation2 + $0xa9] sm:$0xff]
      %v1248 = vld [vmem:[#allocation2 + $0xb1] sm:$0xff]
      %v1249 = vld [vmem:[#allocation2 + $0xc1] sm:$0xff]
      %v1250 = vld [vmem:[#allocation2 + $0xc9] sm:$0xff]
      %v1251 = vld [vmem:[#allocation2 + $0xd9] sm:$0xff]
      %v1252 = vld [vmem:[#allocation2 + $0xe1] sm:$0xff]
      %v1253 = vld [vmem:[#allocation2 + $0xf1] sm:$0xff]
      %v1254 = vld [vmem:[#allocation2 + $0xf9] sm:$0xff]
      %v1255 = vld [vmem:[#allocation2 + $0x109] sm:$0xff]
      %v1256 = vld [vmem:[#allocation2 + $0x111] sm:$0xff]
      %v1257 = vld [vmem:[#allocation2 + $0x121] sm:$0xff]
      %v1258 = vld [vmem:[#allocation2 + $0x129] sm:$0xff]
      %v1259 = vld [vmem:[#allocation2 + $0x139] sm:$0xff]
      %v1260 = vld [vmem:[#allocation2 + $0x141] sm:$0xff]
      %v1261 = vld [vmem:[#allocation2 + $0x151] sm:$0xff]
      %v1262 = vld [vmem:[#allocation2 + $0x159] sm:$0xff]
      %v1263 = vld [vmem:[#allocation2 + $0x169] sm:$0xff]
      %v1264 = vld [vmem:[#allocation2 + $0x171] sm:$0xff]
      %v1265 = vld [vmem:[#allocation2 + $0x2] sm:$0xff]
      %v1266 = vld [vmem:[#allocation2 + $0xa] sm:$0xff]
      %v1267 = vld [vmem:[#allocation2 + $0x1a] sm:$0xff]
      %v1268 = vld [vmem:[#allocation2 + $0x22] sm:$0xff]
      %v1269 = vld [vmem:[#allocation2 + $0x32] sm:$0xff]
      %v1270 = vld [vmem:[#allocation2 + $0x3a] sm:$0xff]
      %v1271 = vld [vmem:[#allocation2 + $0x4a] sm:$0xff]
      %v1272 = vld [vmem:[#allocation2 + $0x52] sm:$0xff]
      %v1273 = vld [vmem:[#allocation2 + $0x62] sm:$0xff]
      %v1274 = vld [vmem:[#allocation2 + $0x6a] sm:$0xff]
      %v1275 = vld [vmem:[#allocation2 + $0x7a] sm:$0xff]
      %v1276 = vld [vmem:[#allocation2 + $0x82] sm:$0xff]
      %v1277 = vld [vmem:[#allocation2 + $0x92] sm:$0xff]
      %v1278 = vld [vmem:[#allocation2 + $0x9a] sm:$0xff]
      %v1279 = vld [vmem:[#allocation2 + $0xaa] sm:$0xff]
      %v1280 = vld [vmem:[#allocation2 + $0xb2] sm:$0xff]
      %v1281 = vld [vmem:[#allocation2 + $0xc2] sm:$0xff]
      %v1282 = vld [vmem:[#allocation2 + $0xca] sm:$0xff]
      %v1283 = vld [vmem:[#allocation2 + $0xda] sm:$0xff]
      %v1284 = vld [vmem:[#allocation2 + $0xe2] sm:$0xff]
      %v1285 = vld [vmem:[#allocation2 + $0xf2] sm:$0xff]
      %v1286 = vld [vmem:[#allocation2 + $0xfa] sm:$0xff]
      %v1287 = vld [vmem:[#allocation2 + $0x10a] sm:$0xff]
      %v1288 = vld [vmem:[#allocation2 + $0x112] sm:$0xff]
      %v1289 = vld [vmem:[#allocation2 + $0x122] sm:$0xff]
      %v1290 = vld [vmem:[#allocation2 + $0x12a] sm:$0xff]
      %v1291 = vld [vmem:[#allocation2 + $0x13a] sm:$0xff]
      %v1292 = vld [vmem:[#allocation2 + $0x142] sm:$0xff]
      %v1293 = vld [vmem:[#allocation2 + $0x152] sm:$0xff]
      %v1294 = vld [vmem:[#allocation2 + $0x15a] sm:$0xff]
      %v1295 = vld [vmem:[#allocation2 + $0x16a] sm:$0xff]
      %v1296 = vld [vmem:[#allocation2 + $0x172] sm:$0xff]
      %v1297 = vld [vmem:[%s1168] sm:$0xff]
      %v1298 = vld [vmem:[%s1168 + $0x8] sm:$0xff]
      %v1299 = vld [vmem:[%s1168 + $0x18] sm:$0xff]
      %v1300 = vld [vmem:[%s1168 + $0x20] sm:$0xff]
      %v1301 = vld [vmem:[%s1168 + $0x30] sm:$0xff]
      %v1302 = vld [vmem:[%s1168 + $0x38] sm:$0xff]
      %v1303 = vld [vmem:[%s1168 + $0x48] sm:$0xff]
      %v1304 = vld [vmem:[%s1168 + $0x50] sm:$0xff]
      %v1305 = vld [vmem:[%s1168 + $0x60] sm:$0xff]
      %v1306 = vld [vmem:[%s1168 + $0x68] sm:$0xff]
      %v1307 = vld [vmem:[%s1168 + $0x78] sm:$0xff]
      %v1308 = vld [vmem:[%s1168 + $0x80] sm:$0xff]
      %v1309 = vld [vmem:[%s1168 + $0x90] sm:$0xff]
      %v1310 = vld [vmem:[%s1168 + $0x98] sm:$0xff]
      %v1311 = vld [vmem:[%s1168 + $0xa8] sm:$0xff]
      %v1312 = vld [vmem:[%s1168 + $0xb0] sm:$0xff]
      %v1313 = vld [vmem:[%s1168 + $0xc0] sm:$0xff]
      %v1314 = vld [vmem:[%s1168 + $0xc8] sm:$0xff]
      %v1315 = vld [vmem:[%s1168 + $0xd8] sm:$0xff]
      %v1316 = vld [vmem:[%s1168 + $0xe0] sm:$0xff]
      %v1317 = vld [vmem:[%s1168 + $0xf0] sm:$0xff]
      %v1318 = vld [vmem:[%s1168 + $0xf8] sm:$0xff]
      %v1319 = vld [vmem:[%s1168 + $0x108] sm:$0xff]
      %v1320 = vld [vmem:[%s1168 + $0x110] sm:$0xff]
      %v1321 = vld [vmem:[%s1168 + $0x120] sm:$0xff]
      %v1322 = vld [vmem:[%s1168 + $0x128] sm:$0xff]
      %v1323 = vld [vmem:[%s1168 + $0x138] sm:$0xff]
      %v1324 = vld [vmem:[%s1168 + $0x140] sm:$0xff]
      %v1325 = vld [vmem:[%s1168 + $0x150] sm:$0xff]
      %v1326 = vld [vmem:[%s1168 + $0x158] sm:$0xff]
      %v1327 = vld [vmem:[%s1168 + $0x168] sm:$0xff]
      %v1328 = vld [vmem:[%s1168 + $0x170] sm:$0xff]
      %v1329 = vld [vmem:[%s1168 + $0x1] sm:$0xff]
      %v1330 = vld [vmem:[%s1168 + $0x9] sm:$0xff]
      %v1331 = vld [vmem:[%s1168 + $0x19] sm:$0xff]
      %v1332 = vld [vmem:[%s1168 + $0x21] sm:$0xff]
      %v1333 = vld [vmem:[%s1168 + $0x31] sm:$0xff]
      %v1334 = vld [vmem:[%s1168 + $0x39] sm:$0xff]
      %v1335 = vld [vmem:[%s1168 + $0x49] sm:$0xff]
      %v1336 = vld [vmem:[%s1168 + $0x51] sm:$0xff]
      %v1337 = vld [vmem:[%s1168 + $0x61] sm:$0xff]
      %v1338 = vld [vmem:[%s1168 + $0x69] sm:$0xff]
      %v1339 = vld [vmem:[%s1168 + $0x79] sm:$0xff]
      %v1340 = vld [vmem:[%s1168 + $0x81] sm:$0xff]
      %v1341 = vld [vmem:[%s1168 + $0x91] sm:$0xff]
      %v1342 = vld [vmem:[%s1168 + $0x99] sm:$0xff]
      %v1343 = vld [vmem:[%s1168 + $0xa9] sm:$0xff]
      %v1344 = vld [vmem:[%s1168 + $0xb1] sm:$0xff]
      %v1345 = vld [vmem:[%s1168 + $0xc1] sm:$0xff]
      %v1346 = vld [vmem:[%s1168 + $0xc9] sm:$0xff]
      %v1347 = vld [vmem:[%s1168 + $0xd9] sm:$0xff]
      %v1348 = vld [vmem:[%s1168 + $0xe1] sm:$0xff]
      %v1349 = vld [vmem:[%s1168 + $0xf1] sm:$0xff]
      %v1350 = vld [vmem:[%s1168 + $0xf9] sm:$0xff]
      %v1351 = vld [vmem:[%s1168 + $0x109] sm:$0xff]
      %v1352 = vld [vmem:[%s1168 + $0x111] sm:$0xff]
      %v1353 = vld [vmem:[%s1168 + $0x121] sm:$0xff]
      %v1354 = vld [vmem:[%s1168 + $0x129] sm:$0xff]
      %v1355 = vld [vmem:[%s1168 + $0x139] sm:$0xff]
      %v1356 = vld [vmem:[%s1168 + $0x141] sm:$0xff]
      %v1357 = vld [vmem:[%s1168 + $0x151] sm:$0xff]
      %v1358 = vld [vmem:[%s1168 + $0x159] sm:$0xff]
      %v1359 = vld [vmem:[%s1168 + $0x169] sm:$0xff]
      %v1360 = vld [vmem:[%s1168 + $0x171] sm:$0xff]
      %v1361 = vld [vmem:[%s1168 + $0x2] sm:$0xff]
      %v1362 = vld [vmem:[%s1168 + $0xa] sm:$0xff]
      %v1363 = vld [vmem:[%s1168 + $0x1a] sm:$0xff]
      %v1364 = vld [vmem:[%s1168 + $0x22] sm:$0xff]
      %v1365 = vld [vmem:[%s1168 + $0x32] sm:$0xff]
      %v1366 = vld [vmem:[%s1168 + $0x3a] sm:$0xff]
      %v1367 = vld [vmem:[%s1168 + $0x4a] sm:$0xff]
      %v1368 = vld [vmem:[%s1168 + $0x52] sm:$0xff]
      %v1369 = vld [vmem:[%s1168 + $0x62] sm:$0xff]
      %v1370 = vld [vmem:[%s1168 + $0x6a] sm:$0xff]
      %v1371 = vld [vmem:[%s1168 + $0x7a] sm:$0xff]
      %v1372 = vld [vmem:[%s1168 + $0x82] sm:$0xff]
      %v1373 = vld [vmem:[%s1168 + $0x92] sm:$0xff]
      %v1374 = vld [vmem:[%s1168 + $0x9a] sm:$0xff]
      %v1375 = vld [vmem:[%s1168 + $0xaa] sm:$0xff]
      %v1376 = vld [vmem:[%s1168 + $0xb2] sm:$0xff]
      %v1377 = vld [vmem:[%s1168 + $0xc2] sm:$0xff]
      %v1378 = vld [vmem:[%s1168 + $0xca] sm:$0xff]
      %v1379 = vld [vmem:[%s1168 + $0xda] sm:$0xff]
      %v1380 = vld [vmem:[%s1168 + $0xe2] sm:$0xff]
      %v1381 = vld [vmem:[%s1168 + $0xf2] sm:$0xff]
      %v1382 = vld [vmem:[%s1168 + $0xfa] sm:$0xff]
      %v1383 = vld [vmem:[%s1168 + $0x10a] sm:$0xff]
      %v1384 = vld [vmem:[%s1168 + $0x112] sm:$0xff]
      %v1385 = vld [vmem:[%s1168 + $0x122] sm:$0xff]
      %v1386 = vld [vmem:[%s1168 + $0x12a] sm:$0xff]
      %v1387 = vld [vmem:[%s1168 + $0x13a] sm:$0xff]
      %v1388 = vld [vmem:[%s1168 + $0x142] sm:$0xff]
      %v1389 = vld [vmem:[%s1168 + $0x152] sm:$0xff]
      %v1390 = vld [vmem:[%s1168 + $0x15a] sm:$0xff]
      %v1391 = vld [vmem:[%s1168 + $0x16a] sm:$0xff]
      %v1392 = vld [vmem:[%s1168 + $0x172] sm:$0xff]
      %s1393 = scalar_lea.vmem [#allocation2], 48
      %v1394 = vld [vmem:[%s1393] sm:$0xff]
      %v1395 = vld [vmem:[%s1393 + $0x8] sm:$0xff]
      %v1396 = vld [vmem:[%s1393 + $0x18] sm:$0xff]
      %v1397 = vld [vmem:[%s1393 + $0x20] sm:$0xff]
      %v1398 = vld [vmem:[%s1393 + $0x30] sm:$0xff]
      %v1399 = vld [vmem:[%s1393 + $0x38] sm:$0xff]
      %v1400 = vld [vmem:[%s1393 + $0x48] sm:$0xff]
      %v1401 = vld [vmem:[%s1393 + $0x50] sm:$0xff]
      %v1402 = vld [vmem:[%s1393 + $0x60] sm:$0xff]
      %v1403 = vld [vmem:[%s1393 + $0x68] sm:$0xff]
      %v1404 = vld [vmem:[%s1393 + $0x78] sm:$0xff]
      %v1405 = vld [vmem:[%s1393 + $0x80] sm:$0xff]
      %v1406 = vld [vmem:[%s1393 + $0x90] sm:$0xff]
      %v1407 = vld [vmem:[%s1393 + $0x98] sm:$0xff]
      %v1408 = vld [vmem:[%s1393 + $0xa8] sm:$0xff]
      %v1409 = vld [vmem:[%s1393 + $0xb0] sm:$0xff]
      %v1410 = vld [vmem:[%s1393 + $0xc0] sm:$0xff]
      %v1411 = vld [vmem:[%s1393 + $0xc8] sm:$0xff]
      %v1412 = vld [vmem:[%s1393 + $0xd8] sm:$0xff]
      %v1413 = vld [vmem:[%s1393 + $0xe0] sm:$0xff]
      %v1414 = vld [vmem:[%s1393 + $0xf0] sm:$0xff]
      %v1415 = vld [vmem:[%s1393 + $0xf8] sm:$0xff]
      %v1416 = vld [vmem:[%s1393 + $0x108] sm:$0xff]
      %v1417 = vld [vmem:[%s1393 + $0x110] sm:$0xff]
      %v1418 = vld [vmem:[%s1393 + $0x120] sm:$0xff]
      %v1419 = vld [vmem:[%s1393 + $0x128] sm:$0xff]
      %v1420 = vld [vmem:[%s1393 + $0x138] sm:$0xff]
      %v1421 = vld [vmem:[%s1393 + $0x140] sm:$0xff]
      %v1422 = vld [vmem:[%s1393 + $0x150] sm:$0xff]
      %v1423 = vld [vmem:[%s1393 + $0x158] sm:$0xff]
      %v1424 = vld [vmem:[%s1393 + $0x168] sm:$0xff]
      %v1425 = vld [vmem:[%s1393 + $0x170] sm:$0xff]
      %v1426 = vld [vmem:[%s1393 + $0x1] sm:$0xff]
      %v1427 = vld [vmem:[%s1393 + $0x9] sm:$0xff]
      %v1428 = vld [vmem:[%s1393 + $0x19] sm:$0xff]
      %v1429 = vld [vmem:[%s1393 + $0x21] sm:$0xff]
      %v1430 = vld [vmem:[%s1393 + $0x31] sm:$0xff]
      %v1431 = vld [vmem:[%s1393 + $0x39] sm:$0xff]
      %v1432 = vld [vmem:[%s1393 + $0x49] sm:$0xff]
      %v1433 = vld [vmem:[%s1393 + $0x51] sm:$0xff]
      %v1434 = vld [vmem:[%s1393 + $0x61] sm:$0xff]
      %v1435 = vld [vmem:[%s1393 + $0x69] sm:$0xff]
      %v1436 = vld [vmem:[%s1393 + $0x79] sm:$0xff]
      %v1437 = vld [vmem:[%s1393 + $0x81] sm:$0xff]
      %v1438 = vld [vmem:[%s1393 + $0x91] sm:$0xff]
      %v1439 = vld [vmem:[%s1393 + $0x99] sm:$0xff]
      %v1440 = vld [vmem:[%s1393 + $0xa9] sm:$0xff]
      %v1441 = vld [vmem:[%s1393 + $0xb1] sm:$0xff]
      %v1442 = vld [vmem:[%s1393 + $0xc1] sm:$0xff]
      %v1443 = vld [vmem:[%s1393 + $0xc9] sm:$0xff]
      %v1444 = vld [vmem:[%s1393 + $0xd9] sm:$0xff]
      %v1445 = vld [vmem:[%s1393 + $0xe1] sm:$0xff]
      %v1446 = vld [vmem:[%s1393 + $0xf1] sm:$0xff]
      %v1447 = vld [vmem:[%s1393 + $0xf9] sm:$0xff]
      %v1448 = vld [vmem:[%s1393 + $0x109] sm:$0xff]
      %v1449 = vld [vmem:[%s1393 + $0x111] sm:$0xff]
      %v1450 = vld [vmem:[%s1393 + $0x121] sm:$0xff]
      %v1451 = vld [vmem:[%s1393 + $0x129] sm:$0xff]
      %v1452 = vld [vmem:[%s1393 + $0x139] sm:$0xff]
      %v1453 = vld [vmem:[%s1393 + $0x141] sm:$0xff]
      %v1454 = vld [vmem:[%s1393 + $0x151] sm:$0xff]
      %v1455 = vld [vmem:[%s1393 + $0x159] sm:$0xff]
      %v1456 = vld [vmem:[%s1393 + $0x169] sm:$0xff]
      %v1457 = vld [vmem:[%s1393 + $0x171] sm:$0xff]
      %v1458 = vld [vmem:[%s1393 + $0x2] sm:$0xff]
      %v1459 = vld [vmem:[%s1393 + $0xa] sm:$0xff]
      %v1460 = vld [vmem:[%s1393 + $0x1a] sm:$0xff]
      %v1461 = vld [vmem:[%s1393 + $0x22] sm:$0xff]
      %v1462 = vld [vmem:[%s1393 + $0x32] sm:$0xff]
      %v1463 = vld [vmem:[%s1393 + $0x3a] sm:$0xff]
      %v1464 = vld [vmem:[%s1393 + $0x4a] sm:$0xff]
      %v1465 = vld [vmem:[%s1393 + $0x52] sm:$0xff]
      %v1466 = vld [vmem:[%s1393 + $0x62] sm:$0xff]
      %v1467 = vld [vmem:[%s1393 + $0x6a] sm:$0xff]
      %v1468 = vld [vmem:[%s1393 + $0x7a] sm:$0xff]
      %v1469 = vld [vmem:[%s1393 + $0x82] sm:$0xff]
      %v1470 = vld [vmem:[%s1393 + $0x92] sm:$0xff]
      %v1471 = vld [vmem:[%s1393 + $0x9a] sm:$0xff]
      %v1472 = vld [vmem:[%s1393 + $0xaa] sm:$0xff]
      %v1473 = vld [vmem:[%s1393 + $0xb2] sm:$0xff]
      %v1474 = vld [vmem:[%s1393 + $0xc2] sm:$0xff]
      %v1475 = vld [vmem:[%s1393 + $0xca] sm:$0xff]
      %v1476 = vld [vmem:[%s1393 + $0xda] sm:$0xff]
      %v1477 = vld [vmem:[%s1393 + $0xe2] sm:$0xff]
      %v1478 = vld [vmem:[%s1393 + $0xf2] sm:$0xff]
      %v1479 = vld [vmem:[%s1393 + $0xfa] sm:$0xff]
      %v1480 = vld [vmem:[%s1393 + $0x10a] sm:$0xff]
      %v1481 = vld [vmem:[%s1393 + $0x112] sm:$0xff]
      %v1482 = vld [vmem:[%s1393 + $0x122] sm:$0xff]
      %v1483 = vld [vmem:[%s1393 + $0x12a] sm:$0xff]
      %v1484 = vld [vmem:[%s1393 + $0x13a] sm:$0xff]
      %v1485 = vld [vmem:[%s1393 + $0x142] sm:$0xff]
      %v1486 = vld [vmem:[%s1393 + $0x152] sm:$0xff]
      %v1487 = vld [vmem:[%s1393 + $0x15a] sm:$0xff]
      %v1488 = vld [vmem:[%s1393 + $0x16a] sm:$0xff]
      %v1489 = vld [vmem:[%s1393 + $0x172] sm:$0xff]
      %1522 = vrot.lane.b32.xlu0 %v1233, 16
      %v1523 = vpop.permute.xlu0 %1522
      %1524 = vrot.lane.b32.xlu0 %v1234, 16
      %v1525 = vpop.permute.xlu0 %1524
      %1526 = vrot.lane.b32.xlu0 %v1235, 16
      %v1527 = vpop.permute.xlu0 %1526
      %1528 = vrot.lane.b32.xlu0 %v1236, 16
      %v1529 = vpop.permute.xlu0 %1528
      %1530 = vrot.lane.b32.xlu0 %v1237, 16
      %v1531 = vpop.permute.xlu0 %1530
      %1532 = vrot.lane.b32.xlu0 %v1238, 16
      %v1533 = vpop.permute.xlu0 %1532
      %1534 = vrot.lane.b32.xlu0 %v1239, 16
      %v1535 = vpop.permute.xlu0 %1534
      %1536 = vrot.lane.b32.xlu0 %v1240, 16
      %v1537 = vpop.permute.xlu0 %1536
      %1538 = vrot.lane.b32.xlu0 %v1241, 16
      %v1539 = vpop.permute.xlu0 %1538
      %1540 = vrot.lane.b32.xlu0 %v1242, 16
      %v1541 = vpop.permute.xlu0 %1540
      %1542 = vrot.lane.b32.xlu0 %v1243, 16
      %v1543 = vpop.permute.xlu0 %1542
      %1544 = vrot.lane.b32.xlu0 %v1244, 16
      %v1545 = vpop.permute.xlu0 %1544
      %1546 = vrot.lane.b32.xlu0 %v1245, 16
      %v1547 = vpop.permute.xlu0 %1546
      %1548 = vrot.lane.b32.xlu0 %v1246, 16
      %v1549 = vpop.permute.xlu0 %1548
      %1550 = vrot.lane.b32.xlu0 %v1247, 16
      %v1551 = vpop.permute.xlu0 %1550
      %1552 = vrot.lane.b32.xlu0 %v1248, 16
      %v1553 = vpop.permute.xlu0 %1552
      %1554 = vrot.lane.b32.xlu0 %v1249, 16
      %v1555 = vpop.permute.xlu0 %1554
      %1556 = vrot.lane.b32.xlu0 %v1250, 16
      %v1557 = vpop.permute.xlu0 %1556
      %1558 = vrot.lane.b32.xlu0 %v1251, 16
      %v1559 = vpop.permute.xlu0 %1558
      %1560 = vrot.lane.b32.xlu0 %v1252, 16
      %v1561 = vpop.permute.xlu0 %1560
      %1562 = vrot.lane.b32.xlu0 %v1253, 16
      %v1563 = vpop.permute.xlu0 %1562
      %1564 = vrot.lane.b32.xlu0 %v1254, 16
      %v1565 = vpop.permute.xlu0 %1564
      %1566 = vrot.lane.b32.xlu0 %v1255, 16
      %v1567 = vpop.permute.xlu0 %1566
      %1568 = vrot.lane.b32.xlu0 %v1256, 16
      %v1569 = vpop.permute.xlu0 %1568
      %1570 = vrot.lane.b32.xlu0 %v1257, 16
      %v1571 = vpop.permute.xlu0 %1570
      %1572 = vrot.lane.b32.xlu0 %v1258, 16
      %v1573 = vpop.permute.xlu0 %1572
      %1574 = vrot.lane.b32.xlu0 %v1259, 16
      %v1575 = vpop.permute.xlu0 %1574
      %1576 = vrot.lane.b32.xlu0 %v1260, 16
      %v1577 = vpop.permute.xlu0 %1576
      %1578 = vrot.lane.b32.xlu0 %v1261, 16
      %v1579 = vpop.permute.xlu0 %1578
      %1580 = vrot.lane.b32.xlu0 %v1262, 16
      %v1581 = vpop.permute.xlu0 %1580
      %1582 = vrot.lane.b32.xlu0 %v1263, 16
      %v1583 = vpop.permute.xlu0 %1582
      %1584 = vrot.lane.b32.xlu0 %v1264, 16
      %v1585 = vpop.permute.xlu0 %1584
      %1650 = vrot.lane.b32.xlu0 %v1265, 32
      %v1651 = vpop.permute.xlu0 %1650
      %1652 = vrot.lane.b32.xlu0 %v1266, 32
      %v1653 = vpop.permute.xlu0 %1652
      %1654 = vrot.lane.b32.xlu0 %v1267, 32
      %v1655 = vpop.permute.xlu0 %1654
      %1656 = vrot.lane.b32.xlu0 %v1268, 32
      %v1657 = vpop.permute.xlu0 %1656
      %1658 = vrot.lane.b32.xlu0 %v1269, 32
      %v1659 = vpop.permute.xlu0 %1658
      %1660 = vrot.lane.b32.xlu0 %v1270, 32
      %v1661 = vpop.permute.xlu0 %1660
      %1662 = vrot.lane.b32.xlu0 %v1271, 32
      %v1663 = vpop.permute.xlu0 %1662
      %1664 = vrot.lane.b32.xlu0 %v1272, 32
      %v1665 = vpop.permute.xlu0 %1664
      %1666 = vrot.lane.b32.xlu0 %v1273, 32
      %v1667 = vpop.permute.xlu0 %1666
      %1668 = vrot.lane.b32.xlu0 %v1274, 32
      %v1669 = vpop.permute.xlu0 %1668
      %1670 = vrot.lane.b32.xlu0 %v1275, 32
      %v1671 = vpop.permute.xlu0 %1670
      %1672 = vrot.lane.b32.xlu0 %v1276, 32
      %v1673 = vpop.permute.xlu0 %1672
      %1674 = vrot.lane.b32.xlu0 %v1277, 32
      %v1675 = vpop.permute.xlu0 %1674
      %1676 = vrot.lane.b32.xlu0 %v1278, 32
      %v1677 = vpop.permute.xlu0 %1676
      %1678 = vrot.lane.b32.xlu0 %v1279, 32
      %v1679 = vpop.permute.xlu0 %1678
      %1680 = vrot.lane.b32.xlu0 %v1280, 32
      %v1681 = vpop.permute.xlu0 %1680
      %1682 = vrot.lane.b32.xlu0 %v1281, 32
      %v1683 = vpop.permute.xlu0 %1682
      %1684 = vrot.lane.b32.xlu0 %v1282, 32
      %v1685 = vpop.permute.xlu0 %1684
      %1686 = vrot.lane.b32.xlu0 %v1283, 32
      %v1687 = vpop.permute.xlu0 %1686
      %1688 = vrot.lane.b32.xlu0 %v1284, 32
      %v1689 = vpop.permute.xlu0 %1688
      %1690 = vrot.lane.b32.xlu0 %v1285, 32
      %v1691 = vpop.permute.xlu0 %1690
      %1692 = vrot.lane.b32.xlu0 %v1286, 32
      %v1693 = vpop.permute.xlu0 %1692
      %1694 = vrot.lane.b32.xlu0 %v1287, 32
      %v1695 = vpop.permute.xlu0 %1694
      %1696 = vrot.lane.b32.xlu0 %v1288, 32
      %v1697 = vpop.permute.xlu0 %1696
      %1698 = vrot.lane.b32.xlu0 %v1289, 32
      %v1699 = vpop.permute.xlu0 %1698
      %1700 = vrot.lane.b32.xlu0 %v1290, 32
      %v1701 = vpop.permute.xlu0 %1700
      %1702 = vrot.lane.b32.xlu0 %v1291, 32
      %v1703 = vpop.permute.xlu0 %1702
      %1704 = vrot.lane.b32.xlu0 %v1292, 32
      %v1705 = vpop.permute.xlu0 %1704
      %1706 = vrot.lane.b32.xlu0 %v1293, 32
      %v1707 = vpop.permute.xlu0 %1706
      %1708 = vrot.lane.b32.xlu0 %v1294, 32
      %v1709 = vpop.permute.xlu0 %1708
      %1710 = vrot.lane.b32.xlu0 %v1295, 32
      %v1711 = vpop.permute.xlu0 %1710
      %1712 = vrot.lane.b32.xlu0 %v1296, 32
      %v1713 = vpop.permute.xlu0 %1712
      %1778 = vrot.lane.b32.xlu0 %v1297, 48
      %v1779 = vpop.permute.xlu0 %1778
      %1780 = vrot.lane.b32.xlu0 %v1298, 48
      %v1781 = vpop.permute.xlu0 %1780
      %1782 = vrot.lane.b32.xlu0 %v1299, 48
      %v1783 = vpop.permute.xlu0 %1782
      %1784 = vrot.lane.b32.xlu0 %v1300, 48
      %v1785 = vpop.permute.xlu0 %1784
      %1786 = vrot.lane.b32.xlu0 %v1301, 48
      %v1787 = vpop.permute.xlu0 %1786
      %1788 = vrot.lane.b32.xlu0 %v1302, 48
      %v1789 = vpop.permute.xlu0 %1788
      %1790 = vrot.lane.b32.xlu0 %v1303, 48
      %v1791 = vpop.permute.xlu0 %1790
      %1792 = vrot.lane.b32.xlu0 %v1304, 48
      %v1793 = vpop.permute.xlu0 %1792
      %1794 = vrot.lane.b32.xlu0 %v1305, 48
      %v1795 = vpop.permute.xlu0 %1794
      %1796 = vrot.lane.b32.xlu0 %v1306, 48
      %v1797 = vpop.permute.xlu0 %1796
      %1798 = vrot.lane.b32.xlu0 %v1307, 48
      %v1799 = vpop.permute.xlu0 %1798
      %1800 = vrot.lane.b32.xlu0 %v1308, 48
      %v1801 = vpop.permute.xlu0 %1800
      %1802 = vrot.lane.b32.xlu0 %v1309, 48
      %v1803 = vpop.permute.xlu0 %1802
      %1804 = vrot.lane.b32.xlu0 %v1310, 48
      %v1805 = vpop.permute.xlu0 %1804
      %1806 = vrot.lane.b32.xlu0 %v1311, 48
      %v1807 = vpop.permute.xlu0 %1806
      %1808 = vrot.lane.b32.xlu0 %v1312, 48
      %v1809 = vpop.permute.xlu0 %1808
      %1810 = vrot.lane.b32.xlu0 %v1313, 48
      %v1811 = vpop.permute.xlu0 %1810
      %1812 = vrot.lane.b32.xlu0 %v1314, 48
      %v1813 = vpop.permute.xlu0 %1812
      %1814 = vrot.lane.b32.xlu0 %v1315, 48
      %v1815 = vpop.permute.xlu0 %1814
      %1816 = vrot.lane.b32.xlu0 %v1316, 48
      %v1817 = vpop.permute.xlu0 %1816
      %1818 = vrot.lane.b32.xlu0 %v1317, 48
      %v1819 = vpop.permute.xlu0 %1818
      %1820 = vrot.lane.b32.xlu0 %v1318, 48
      %v1821 = vpop.permute.xlu0 %1820
      %1822 = vrot.lane.b32.xlu0 %v1319, 48
      %v1823 = vpop.permute.xlu0 %1822
      %1824 = vrot.lane.b32.xlu0 %v1320, 48
      %v1825 = vpop.permute.xlu0 %1824
      %1826 = vrot.lane.b32.xlu0 %v1321, 48
      %v1827 = vpop.permute.xlu0 %1826
      %1828 = vrot.lane.b32.xlu0 %v1322, 48
      %v1829 = vpop.permute.xlu0 %1828
      %1830 = vrot.lane.b32.xlu0 %v1323, 48
      %v1831 = vpop.permute.xlu0 %1830
      %1832 = vrot.lane.b32.xlu0 %v1324, 48
      %v1833 = vpop.permute.xlu0 %1832
      %1834 = vrot.lane.b32.xlu0 %v1325, 48
      %v1835 = vpop.permute.xlu0 %1834
      %1836 = vrot.lane.b32.xlu0 %v1326, 48
      %v1837 = vpop.permute.xlu0 %1836
      %1838 = vrot.lane.b32.xlu0 %v1327, 48
      %v1839 = vpop.permute.xlu0 %1838
      %1840 = vrot.lane.b32.xlu0 %v1328, 48
      %v1841 = vpop.permute.xlu0 %1840
      %1906 = vrot.lane.b32.xlu0 %v1329, 64
      %v1907 = vpop.permute.xlu0 %1906
      %1908 = vrot.lane.b32.xlu0 %v1330, 64
      %v1909 = vpop.permute.xlu0 %1908
      %1910 = vrot.lane.b32.xlu0 %v1331, 64
      %v1911 = vpop.permute.xlu0 %1910
      %1912 = vrot.lane.b32.xlu0 %v1332, 64
      %v1913 = vpop.permute.xlu0 %1912
      %1914 = vrot.lane.b32.xlu0 %v1333, 64
      %v1915 = vpop.permute.xlu0 %1914
      %1916 = vrot.lane.b32.xlu0 %v1334, 64
      %v1917 = vpop.permute.xlu0 %1916
      %1918 = vrot.lane.b32.xlu0 %v1335, 64
      %v1919 = vpop.permute.xlu0 %1918
      %1920 = vrot.lane.b32.xlu0 %v1336, 64
      %v1921 = vpop.permute.xlu0 %1920
      %1922 = vrot.lane.b32.xlu0 %v1337, 64
      %v1923 = vpop.permute.xlu0 %1922
      %1924 = vrot.lane.b32.xlu0 %v1338, 64
      %v1925 = vpop.permute.xlu0 %1924
      %1926 = vrot.lane.b32.xlu0 %v1339, 64
      %v1927 = vpop.permute.xlu0 %1926
      %1928 = vrot.lane.b32.xlu0 %v1340, 64
      %v1929 = vpop.permute.xlu0 %1928
      %1930 = vrot.lane.b32.xlu0 %v1341, 64
      %v1931 = vpop.permute.xlu0 %1930
      %1932 = vrot.lane.b32.xlu0 %v1342, 64
      %v1933 = vpop.permute.xlu0 %1932
      %1934 = vrot.lane.b32.xlu0 %v1343, 64
      %v1935 = vpop.permute.xlu0 %1934
      %1936 = vrot.lane.b32.xlu0 %v1344, 64
      %v1937 = vpop.permute.xlu0 %1936
      %1938 = vrot.lane.b32.xlu0 %v1345, 64
      %v1939 = vpop.permute.xlu0 %1938
      %1940 = vrot.lane.b32.xlu0 %v1346, 64
      %v1941 = vpop.permute.xlu0 %1940
      %1942 = vrot.lane.b32.xlu0 %v1347, 64
      %v1943 = vpop.permute.xlu0 %1942
      %1944 = vrot.lane.b32.xlu0 %v1348, 64
      %v1945 = vpop.permute.xlu0 %1944
      %1946 = vrot.lane.b32.xlu0 %v1349, 64
      %v1947 = vpop.permute.xlu0 %1946
      %1948 = vrot.lane.b32.xlu0 %v1350, 64
      %v1949 = vpop.permute.xlu0 %1948
      %1950 = vrot.lane.b32.xlu0 %v1351, 64
      %v1951 = vpop.permute.xlu0 %1950
      %1952 = vrot.lane.b32.xlu0 %v1352, 64
      %v1953 = vpop.permute.xlu0 %1952
      %1954 = vrot.lane.b32.xlu0 %v1353, 64
      %v1955 = vpop.permute.xlu0 %1954
      %1956 = vrot.lane.b32.xlu0 %v1354, 64
      %v1957 = vpop.permute.xlu0 %1956
      %1958 = vrot.lane.b32.xlu0 %v1355, 64
      %v1959 = vpop.permute.xlu0 %1958
      %1960 = vrot.lane.b32.xlu0 %v1356, 64
      %v1961 = vpop.permute.xlu0 %1960
      %1962 = vrot.lane.b32.xlu0 %v1357, 64
      %v1963 = vpop.permute.xlu0 %1962
      %1964 = vrot.lane.b32.xlu0 %v1358, 64
      %v1965 = vpop.permute.xlu0 %1964
      %1966 = vrot.lane.b32.xlu0 %v1359, 64
      %v1967 = vpop.permute.xlu0 %1966
      %1968 = vrot.lane.b32.xlu0 %v1360, 64
      %v1969 = vpop.permute.xlu0 %1968
      %2034 = vrot.lane.b32.xlu0 %v1361, 80
      %v2035 = vpop.permute.xlu0 %2034
      %2036 = vrot.lane.b32.xlu0 %v1362, 80
      %v2037 = vpop.permute.xlu0 %2036
      %2038 = vrot.lane.b32.xlu0 %v1363, 80
      %v2039 = vpop.permute.xlu0 %2038
      %2040 = vrot.lane.b32.xlu0 %v1364, 80
      %v2041 = vpop.permute.xlu0 %2040
      %2042 = vrot.lane.b32.xlu0 %v1365, 80
      %v2043 = vpop.permute.xlu0 %2042
      %2044 = vrot.lane.b32.xlu0 %v1366, 80
      %v2045 = vpop.permute.xlu0 %2044
      %2046 = vrot.lane.b32.xlu0 %v1367, 80
      %v2047 = vpop.permute.xlu0 %2046
      %2048 = vrot.lane.b32.xlu0 %v1368, 80
      %v2049 = vpop.permute.xlu0 %2048
      %2050 = vrot.lane.b32.xlu0 %v1369, 80
      %v2051 = vpop.permute.xlu0 %2050
      %2052 = vrot.lane.b32.xlu0 %v1370, 80
      %v2053 = vpop.permute.xlu0 %2052
      %2054 = vrot.lane.b32.xlu0 %v1371, 80
      %v2055 = vpop.permute.xlu0 %2054
      %2056 = vrot.lane.b32.xlu0 %v1372, 80
      %v2057 = vpop.permute.xlu0 %2056
      %2058 = vrot.lane.b32.xlu0 %v1373, 80
      %v2059 = vpop.permute.xlu0 %2058
      %2060 = vrot.lane.b32.xlu0 %v1374, 80
      %v2061 = vpop.permute.xlu0 %2060
      %2062 = vrot.lane.b32.xlu0 %v1375, 80
      %v2063 = vpop.permute.xlu0 %2062
      %2064 = vrot.lane.b32.xlu0 %v1376, 80
      %v2065 = vpop.permute.xlu0 %2064
      %2066 = vrot.lane.b32.xlu0 %v1377, 80
      %v2067 = vpop.permute.xlu0 %2066
      %2068 = vrot.lane.b32.xlu0 %v1378, 80
      %v2069 = vpop.permute.xlu0 %2068
      %2070 = vrot.lane.b32.xlu0 %v1379, 80
      %v2071 = vpop.permute.xlu0 %2070
      %2072 = vrot.lane.b32.xlu0 %v1380, 80
      %v2073 = vpop.permute.xlu0 %2072
      %2074 = vrot.lane.b32.xlu0 %v1381, 80
      %v2075 = vpop.permute.xlu0 %2074
      %2076 = vrot.lane.b32.xlu0 %v1382, 80
      %v2077 = vpop.permute.xlu0 %2076
      %2078 = vrot.lane.b32.xlu0 %v1383, 80
      %v2079 = vpop.permute.xlu0 %2078
      %2080 = vrot.lane.b32.xlu0 %v1384, 80
      %v2081 = vpop.permute.xlu0 %2080
      %2082 = vrot.lane.b32.xlu0 %v1385, 80
      %v2083 = vpop.permute.xlu0 %2082
      %2084 = vrot.lane.b32.xlu0 %v1386, 80
      %v2085 = vpop.permute.xlu0 %2084
      %2086 = vrot.lane.b32.xlu0 %v1387, 80
      %v2087 = vpop.permute.xlu0 %2086
      %2088 = vrot.lane.b32.xlu0 %v1388, 80
      %v2089 = vpop.permute.xlu0 %2088
      %2090 = vrot.lane.b32.xlu0 %v1389, 80
      %v2091 = vpop.permute.xlu0 %2090
      %2092 = vrot.lane.b32.xlu0 %v1390, 80
      %v2093 = vpop.permute.xlu0 %2092
      %2094 = vrot.lane.b32.xlu0 %v1391, 80
      %v2095 = vpop.permute.xlu0 %2094
      %2096 = vrot.lane.b32.xlu0 %v1392, 80
      %v2097 = vpop.permute.xlu0 %2096
      %2162 = vrot.lane.b32.xlu0 %v1394, 96
      %v2163 = vpop.permute.xlu0 %2162
      %2164 = vrot.lane.b32.xlu0 %v1395, 96
      %v2165 = vpop.permute.xlu0 %2164
      %2166 = vrot.lane.b32.xlu0 %v1396, 96
      %v2167 = vpop.permute.xlu0 %2166
      %2168 = vrot.lane.b32.xlu0 %v1397, 96
      %v2169 = vpop.permute.xlu0 %2168
      %2170 = vrot.lane.b32.xlu0 %v1398, 96
      %v2171 = vpop.permute.xlu0 %2170
      %2172 = vrot.lane.b32.xlu0 %v1399, 96
      %v2173 = vpop.permute.xlu0 %2172
      %2174 = vrot.lane.b32.xlu0 %v1400, 96
      %v2175 = vpop.permute.xlu0 %2174
      %2176 = vrot.lane.b32.xlu0 %v1401, 96
      %v2177 = vpop.permute.xlu0 %2176
      %2178 = vrot.lane.b32.xlu0 %v1402, 96
      %v2179 = vpop.permute.xlu0 %2178
      %2180 = vrot.lane.b32.xlu0 %v1403, 96
      %v2181 = vpop.permute.xlu0 %2180
      %2182 = vrot.lane.b32.xlu0 %v1404, 96
      %v2183 = vpop.permute.xlu0 %2182
      %2184 = vrot.lane.b32.xlu0 %v1405, 96
      %v2185 = vpop.permute.xlu0 %2184
      %2186 = vrot.lane.b32.xlu0 %v1406, 96
      %v2187 = vpop.permute.xlu0 %2186
      %2188 = vrot.lane.b32.xlu0 %v1407, 96
      %v2189 = vpop.permute.xlu0 %2188
      %2190 = vrot.lane.b32.xlu0 %v1408, 96
      %v2191 = vpop.permute.xlu0 %2190
      %2192 = vrot.lane.b32.xlu0 %v1409, 96
      %v2193 = vpop.permute.xlu0 %2192
      %2194 = vrot.lane.b32.xlu0 %v1410, 96
      %v2195 = vpop.permute.xlu0 %2194
      %2196 = vrot.lane.b32.xlu0 %v1411, 96
      %v2197 = vpop.permute.xlu0 %2196
      %2198 = vrot.lane.b32.xlu0 %v1412, 96
      %v2199 = vpop.permute.xlu0 %2198
      %2200 = vrot.lane.b32.xlu0 %v1413, 96
      %v2201 = vpop.permute.xlu0 %2200
      %2202 = vrot.lane.b32.xlu0 %v1414, 96
      %v2203 = vpop.permute.xlu0 %2202
      %2204 = vrot.lane.b32.xlu0 %v1415, 96
      %v2205 = vpop.permute.xlu0 %2204
      %2206 = vrot.lane.b32.xlu0 %v1416, 96
      %v2207 = vpop.permute.xlu0 %2206
      %2208 = vrot.lane.b32.xlu0 %v1417, 96
      %v2209 = vpop.permute.xlu0 %2208
      %2210 = vrot.lane.b32.xlu0 %v1418, 96
      %v2211 = vpop.permute.xlu0 %2210
      %2212 = vrot.lane.b32.xlu0 %v1419, 96
      %v2213 = vpop.permute.xlu0 %2212
      %2214 = vrot.lane.b32.xlu0 %v1420, 96
      %v2215 = vpop.permute.xlu0 %2214
      %2216 = vrot.lane.b32.xlu0 %v1421, 96
      %v2217 = vpop.permute.xlu0 %2216
      %2218 = vrot.lane.b32.xlu0 %v1422, 96
      %v2219 = vpop.permute.xlu0 %2218
      %2220 = vrot.lane.b32.xlu0 %v1423, 96
      %v2221 = vpop.permute.xlu0 %2220
      %2222 = vrot.lane.b32.xlu0 %v1424, 96
      %v2223 = vpop.permute.xlu0 %2222
      %2224 = vrot.lane.b32.xlu0 %v1425, 96
      %v2225 = vpop.permute.xlu0 %2224
      %2290 = vrot.lane.b32.xlu0 %v1426, 112
      %v2291 = vpop.permute.xlu0 %2290
      %2292 = vrot.lane.b32.xlu0 %v1427, 112
      %v2293 = vpop.permute.xlu0 %2292
      %2294 = vrot.lane.b32.xlu0 %v1428, 112
      %v2295 = vpop.permute.xlu0 %2294
      %2296 = vrot.lane.b32.xlu0 %v1429, 112
      %v2297 = vpop.permute.xlu0 %2296
      %2298 = vrot.lane.b32.xlu0 %v1430, 112
      %v2299 = vpop.permute.xlu0 %2298
      %2300 = vrot.lane.b32.xlu0 %v1431, 112
      %v2301 = vpop.permute.xlu0 %2300
      %2302 = vrot.lane.b32.xlu0 %v1432, 112
      %v2303 = vpop.permute.xlu0 %2302
      %2304 = vrot.lane.b32.xlu0 %v1433, 112
      %v2305 = vpop.permute.xlu0 %2304
      %2306 = vrot.lane.b32.xlu0 %v1434, 112
      %v2307 = vpop.permute.xlu0 %2306
      %2308 = vrot.lane.b32.xlu0 %v1435, 112
      %v2309 = vpop.permute.xlu0 %2308
      %2310 = vrot.lane.b32.xlu0 %v1436, 112
      %v2311 = vpop.permute.xlu0 %2310
      %2312 = vrot.lane.b32.xlu0 %v1437, 112
      %v2313 = vpop.permute.xlu0 %2312
      %2314 = vrot.lane.b32.xlu0 %v1438, 112
      %v2315 = vpop.permute.xlu0 %2314
      %2316 = vrot.lane.b32.xlu0 %v1439, 112
      %v2317 = vpop.permute.xlu0 %2316
      %2318 = vrot.lane.b32.xlu0 %v1440, 112
      %v2319 = vpop.permute.xlu0 %2318
      %2320 = vrot.lane.b32.xlu0 %v1441, 112
      %v2321 = vpop.permute.xlu0 %2320
      %2322 = vrot.lane.b32.xlu0 %v1442, 112
      %v2323 = vpop.permute.xlu0 %2322
      %2324 = vrot.lane.b32.xlu0 %v1443, 112
      %v2325 = vpop.permute.xlu0 %2324
      %2326 = vrot.lane.b32.xlu0 %v1444, 112
      %v2327 = vpop.permute.xlu0 %2326
      %2328 = vrot.lane.b32.xlu0 %v1445, 112
      %v2329 = vpop.permute.xlu0 %2328
      %2330 = vrot.lane.b32.xlu0 %v1446, 112
      %v2331 = vpop.permute.xlu0 %2330
      %2332 = vrot.lane.b32.xlu0 %v1447, 112
      %v2333 = vpop.permute.xlu0 %2332
      %2334 = vrot.lane.b32.xlu0 %v1448, 112
      %v2335 = vpop.permute.xlu0 %2334
      %2336 = vrot.lane.b32.xlu0 %v1449, 112
      %v2337 = vpop.permute.xlu0 %2336
      %2338 = vrot.lane.b32.xlu0 %v1450, 112
      %v2339 = vpop.permute.xlu0 %2338
      %2340 = vrot.lane.b32.xlu0 %v1451, 112
      %v2341 = vpop.permute.xlu0 %2340
      %2342 = vrot.lane.b32.xlu0 %v1452, 112
      %v2343 = vpop.permute.xlu0 %2342
      %2344 = vrot.lane.b32.xlu0 %v1453, 112
      %v2345 = vpop.permute.xlu0 %2344
      %2346 = vrot.lane.b32.xlu0 %v1454, 112
      %v2347 = vpop.permute.xlu0 %2346
      %2348 = vrot.lane.b32.xlu0 %v1455, 112
      %v2349 = vpop.permute.xlu0 %2348
      %2350 = vrot.lane.b32.xlu0 %v1456, 112
      %v2351 = vpop.permute.xlu0 %2350
      %2352 = vrot.lane.b32.xlu0 %v1457, 112
      %v2353 = vpop.permute.xlu0 %2352
      %v2386 = vsel %vm263, %v1201, %v1523
      %v2387 = vsel %vm263, %v1202, %v1525
      %v2388 = vsel %vm263, %v1203, %v1527
      %v2389 = vsel %vm263, %v1204, %v1529
      %v2390 = vsel %vm263, %v1205, %v1531
      %v2391 = vsel %vm263, %v1206, %v1533
      %v2392 = vsel %vm263, %v1207, %v1535
      %v2393 = vsel %vm263, %v1208, %v1537
      %v2394 = vsel %vm263, %v1209, %v1539
      %v2395 = vsel %vm263, %v1210, %v1541
      %v2396 = vsel %vm263, %v1211, %v1543
      %v2397 = vsel %vm263, %v1212, %v1545
      %v2398 = vsel %vm263, %v1213, %v1547
      %v2399 = vsel %vm263, %v1214, %v1549
      %v2400 = vsel %vm263, %v1215, %v1551
      %v2401 = vsel %vm263, %v1216, %v1553
      %v2402 = vsel %vm263, %v1217, %v1555
      %v2403 = vsel %vm263, %v1218, %v1557
      %v2404 = vsel %vm263, %v1219, %v1559
      %v2405 = vsel %vm263, %v1220, %v1561
      %v2406 = vsel %vm263, %v1221, %v1563
      %v2407 = vsel %vm263, %v1222, %v1565
      %v2408 = vsel %vm263, %v1223, %v1567
      %v2409 = vsel %vm263, %v1224, %v1569
      %v2410 = vsel %vm263, %v1225, %v1571
      %v2411 = vsel %vm263, %v1226, %v1573
      %v2412 = vsel %vm263, %v1227, %v1575
      %v2413 = vsel %vm263, %v1228, %v1577
      %v2414 = vsel %vm263, %v1229, %v1579
      %v2415 = vsel %vm263, %v1230, %v1581
      %v2416 = vsel %vm263, %v1231, %v1583
      %v2417 = vsel %vm263, %v1232, %v1585
      %vm2418 = vcmask 261120
      %v2419 = vsel %vm2418, %v2386, %v1651
      %v2420 = vsel %vm2418, %v2387, %v1653
      %v2421 = vsel %vm2418, %v2388, %v1655
      %v2422 = vsel %vm2418, %v2389, %v1657
      %v2423 = vsel %vm2418, %v2390, %v1659
      %v2424 = vsel %vm2418, %v2391, %v1661
      %v2425 = vsel %vm2418, %v2392, %v1663
      %v2426 = vsel %vm2418, %v2393, %v1665
      %v2427 = vsel %vm2418, %v2394, %v1667
      %v2428 = vsel %vm2418, %v2395, %v1669
      %v2429 = vsel %vm2418, %v2396, %v1671
      %v2430 = vsel %vm2418, %v2397, %v1673
      %v2431 = vsel %vm2418, %v2398, %v1675
      %v2432 = vsel %vm2418, %v2399, %v1677
      %v2433 = vsel %vm2418, %v2400, %v1679
      %v2434 = vsel %vm2418, %v2401, %v1681
      %v2435 = vsel %vm2418, %v2402, %v1683
      %v2436 = vsel %vm2418, %v2403, %v1685
      %v2437 = vsel %vm2418, %v2404, %v1687
      %v2438 = vsel %vm2418, %v2405, %v1689
      %v2439 = vsel %vm2418, %v2406, %v1691
      %v2440 = vsel %vm2418, %v2407, %v1693
      %v2441 = vsel %vm2418, %v2408, %v1695
      %v2442 = vsel %vm2418, %v2409, %v1697
      %v2443 = vsel %vm2418, %v2410, %v1699
      %v2444 = vsel %vm2418, %v2411, %v1701
      %v2445 = vsel %vm2418, %v2412, %v1703
      %v2446 = vsel %vm2418, %v2413, %v1705
      %v2447 = vsel %vm2418, %v2414, %v1707
      %v2448 = vsel %vm2418, %v2415, %v1709
      %v2449 = vsel %vm2418, %v2416, %v1711
      %v2450 = vsel %vm2418, %v2417, %v1713
      %vm2451 = vcmask 392192
      %v2452 = vsel %vm2451, %v2419, %v1779
      %v2453 = vsel %vm2451, %v2420, %v1781
      %v2454 = vsel %vm2451, %v2421, %v1783
      %v2455 = vsel %vm2451, %v2422, %v1785
      %v2456 = vsel %vm2451, %v2423, %v1787
      %v2457 = vsel %vm2451, %v2424, %v1789
      %v2458 = vsel %vm2451, %v2425, %v1791
      %v2459 = vsel %vm2451, %v2426, %v1793
      %v2460 = vsel %vm2451, %v2427, %v1795
      %v2461 = vsel %vm2451, %v2428, %v1797
      %v2462 = vsel %vm2451, %v2429, %v1799
      %v2463 = vsel %vm2451, %v2430, %v1801
      %v2464 = vsel %vm2451, %v2431, %v1803
      %v2465 = vsel %vm2451, %v2432, %v1805
      %v2466 = vsel %vm2451, %v2433, %v1807
      %v2467 = vsel %vm2451, %v2434, %v1809
      %v2468 = vsel %vm2451, %v2435, %v1811
      %v2469 = vsel %vm2451, %v2436, %v1813
      %v2470 = vsel %vm2451, %v2437, %v1815
      %v2471 = vsel %vm2451, %v2438, %v1817
      %v2472 = vsel %vm2451, %v2439, %v1819
      %v2473 = vsel %vm2451, %v2440, %v1821
      %v2474 = vsel %vm2451, %v2441, %v1823
      %v2475 = vsel %vm2451, %v2442, %v1825
      %v2476 = vsel %vm2451, %v2443, %v1827
      %v2477 = vsel %vm2451, %v2444, %v1829
      %v2478 = vsel %vm2451, %v2445, %v1831
      %v2479 = vsel %vm2451, %v2446, %v1833
      %v2480 = vsel %vm2451, %v2447, %v1835
      %v2481 = vsel %vm2451, %v2448, %v1837
      %v2482 = vsel %vm2451, %v2449, %v1839
      %v2483 = vsel %vm2451, %v2450, %v1841
      %vm2484 = vcmask 523264
      %v2485 = vsel %vm2484, %v2452, %v1907
      %v2486 = vsel %vm2484, %v2453, %v1909
      %v2487 = vsel %vm2484, %v2454, %v1911
      %v2488 = vsel %vm2484, %v2455, %v1913
      %v2489 = vsel %vm2484, %v2456, %v1915
      %v2490 = vsel %vm2484, %v2457, %v1917
      %v2491 = vsel %vm2484, %v2458, %v1919
      %v2492 = vsel %vm2484, %v2459, %v1921
      %v2493 = vsel %vm2484, %v2460, %v1923
      %v2494 = vsel %vm2484, %v2461, %v1925
      %v2495 = vsel %vm2484, %v2462, %v1927
      %v2496 = vsel %vm2484, %v2463, %v1929
      %v2497 = vsel %vm2484, %v2464, %v1931
      %v2498 = vsel %vm2484, %v2465, %v1933
      %v2499 = vsel %vm2484, %v2466, %v1935
      %v2500 = vsel %vm2484, %v2467, %v1937
      %v2501 = vsel %vm2484, %v2468, %v1939
      %v2502 = vsel %vm2484, %v2469, %v1941
      %v2503 = vsel %vm2484, %v2470, %v1943
      %v2504 = vsel %vm2484, %v2471, %v1945
      %v2505 = vsel %vm2484, %v2472, %v1947
      %v2506 = vsel %vm2484, %v2473, %v1949
      %v2507 = vsel %vm2484, %v2474, %v1951
      %v2508 = vsel %vm2484, %v2475, %v1953
      %v2509 = vsel %vm2484, %v2476, %v1955
      %v2510 = vsel %vm2484, %v2477, %v1957
      %v2511 = vsel %vm2484, %v2478, %v1959
      %v2512 = vsel %vm2484, %v2479, %v1961
      %v2513 = vsel %vm2484, %v2480, %v1963
      %v2514 = vsel %vm2484, %v2481, %v1965
      %v2515 = vsel %vm2484, %v2482, %v1967
      %v2516 = vsel %vm2484, %v2483, %v1969
      %vm2517 = vcmask 654336
      %v2518 = vsel %vm2517, %v2485, %v2035
      %v2519 = vsel %vm2517, %v2486, %v2037
      %v2520 = vsel %vm2517, %v2487, %v2039
      %v2521 = vsel %vm2517, %v2488, %v2041
      %v2522 = vsel %vm2517, %v2489, %v2043
      %v2523 = vsel %vm2517, %v2490, %v2045
      %v2524 = vsel %vm2517, %v2491, %v2047
      %v2525 = vsel %vm2517, %v2492, %v2049
      %v2526 = vsel %vm2517, %v2493, %v2051
      %v2527 = vsel %vm2517, %v2494, %v2053
      %v2528 = vsel %vm2517, %v2495, %v2055
      %v2529 = vsel %vm2517, %v2496, %v2057
      %v2530 = vsel %vm2517, %v2497, %v2059
      %v2531 = vsel %vm2517, %v2498, %v2061
      %v2532 = vsel %vm2517, %v2499, %v2063
      %v2533 = vsel %vm2517, %v2500, %v2065
      %v2534 = vsel %vm2517, %v2501, %v2067
      %v2535 = vsel %vm2517, %v2502, %v2069
      %v2536 = vsel %vm2517, %v2503, %v2071
      %v2537 = vsel %vm2517, %v2504, %v2073
      %v2538 = vsel %vm2517, %v2505, %v2075
      %v2539 = vsel %vm2517, %v2506, %v2077
      %v2540 = vsel %vm2517, %v2507, %v2079
      %v2541 = vsel %vm2517, %v2508, %v2081
      %v2542 = vsel %vm2517, %v2509, %v2083
      %v2543 = vsel %vm2517, %v2510, %v2085
      %v2544 = vsel %vm2517, %v2511, %v2087
      %v2545 = vsel %vm2517, %v2512, %v2089
      %v2546 = vsel %vm2517, %v2513, %v2091
      %v2547 = vsel %vm2517, %v2514, %v2093
      %v2548 = vsel %vm2517, %v2515, %v2095
      %v2549 = vsel %vm2517, %v2516, %v2097
      %vm2550 = vcmask 785408
      %v2551 = vsel %vm2550, %v2518, %v2163
      %v2552 = vsel %vm2550, %v2519, %v2165
      %v2553 = vsel %vm2550, %v2520, %v2167
      %v2554 = vsel %vm2550, %v2521, %v2169
      %v2555 = vsel %vm2550, %v2522, %v2171
      %v2556 = vsel %vm2550, %v2523, %v2173
      %v2557 = vsel %vm2550, %v2524, %v2175
      %v2558 = vsel %vm2550, %v2525, %v2177
      %v2559 = vsel %vm2550, %v2526, %v2179
      %v2560 = vsel %vm2550, %v2527, %v2181
      %v2561 = vsel %vm2550, %v2528, %v2183
      %v2562 = vsel %vm2550, %v2529, %v2185
      %v2563 = vsel %vm2550, %v2530, %v2187
      %v2564 = vsel %vm2550, %v2531, %v2189
      %v2565 = vsel %vm2550, %v2532, %v2191
      %v2566 = vsel %vm2550, %v2533, %v2193
      %v2567 = vsel %vm2550, %v2534, %v2195
      %v2568 = vsel %vm2550, %v2535, %v2197
      %v2569 = vsel %vm2550, %v2536, %v2199
      %v2570 = vsel %vm2550, %v2537, %v2201
      %v2571 = vsel %vm2550, %v2538, %v2203
      %v2572 = vsel %vm2550, %v2539, %v2205
      %v2573 = vsel %vm2550, %v2540, %v2207
      %v2574 = vsel %vm2550, %v2541, %v2209
      %v2575 = vsel %vm2550, %v2542, %v2211
      %v2576 = vsel %vm2550, %v2543, %v2213
      %v2577 = vsel %vm2550, %v2544, %v2215
      %v2578 = vsel %vm2550, %v2545, %v2217
      %v2579 = vsel %vm2550, %v2546, %v2219
      %v2580 = vsel %vm2550, %v2547, %v2221
      %v2581 = vsel %vm2550, %v2548, %v2223
      %v2582 = vsel %vm2550, %v2549, %v2225
      %vm2583 = vcmask 916480
      %v2584 = vsel %vm2583, %v2551, %v2291
      %v2585 = vsel %vm2583, %v2552, %v2293
      %v2586 = vsel %vm2583, %v2553, %v2295
      %v2587 = vsel %vm2583, %v2554, %v2297
      %v2588 = vsel %vm2583, %v2555, %v2299
      %v2589 = vsel %vm2583, %v2556, %v2301
      %v2590 = vsel %vm2583, %v2557, %v2303
      %v2591 = vsel %vm2583, %v2558, %v2305
      %v2592 = vsel %vm2583, %v2559, %v2307
      %v2593 = vsel %vm2583, %v2560, %v2309
      %v2594 = vsel %vm2583, %v2561, %v2311
      %v2595 = vsel %vm2583, %v2562, %v2313
      %v2596 = vsel %vm2583, %v2563, %v2315
      %v2597 = vsel %vm2583, %v2564, %v2317
      %v2598 = vsel %vm2583, %v2565, %v2319
      %v2599 = vsel %vm2583, %v2566, %v2321
      %v2600 = vsel %vm2583, %v2567, %v2323
      %v2601 = vsel %vm2583, %v2568, %v2325
      %v2602 = vsel %vm2583, %v2569, %v2327
      %v2603 = vsel %vm2583, %v2570, %v2329
      %v2604 = vsel %vm2583, %v2571, %v2331
      %v2605 = vsel %vm2583, %v2572, %v2333
      %v2606 = vsel %vm2583, %v2573, %v2335
      %v2607 = vsel %vm2583, %v2574, %v2337
      %v2608 = vsel %vm2583, %v2575, %v2339
      %v2609 = vsel %vm2583, %v2576, %v2341
      %v2610 = vsel %vm2583, %v2577, %v2343
      %v2611 = vsel %vm2583, %v2578, %v2345
      %v2612 = vsel %vm2583, %v2579, %v2347
      %v2613 = vsel %vm2583, %v2580, %v2349
      %v2614 = vsel %vm2583, %v2581, %v2351
      %v2615 = vsel %vm2583, %v2582, %v2353
      %v2616 = vld [vmem:[%s3] sm:$0xff]
      %v2617 = vld [vmem:[%s3 + $0x8] sm:$0xff]
      %v2618 = vld [vmem:[%s3 + $0x10] sm:$0xff]
      %v2619 = vld [vmem:[%s3 + $0x18] sm:$0xff]
      %v2620 = vld [vmem:[%s3 + $0x20] sm:$0xff]
      %v2621 = vld [vmem:[%s3 + $0x28] sm:$0xff]
      %v2622 = vld [vmem:[%s3 + $0x30] sm:$0xff]
      %v2623 = vld [vmem:[%s3 + $0x38] sm:$0xff]
      %v2624 = vld [vmem:[%s3 + $0x40] sm:$0xff]
      %v2625 = vld [vmem:[%s3 + $0x48] sm:$0xff]
      %v2626 = vld [vmem:[%s3 + $0x50] sm:$0xff]
      %v2627 = vld [vmem:[%s3 + $0x58] sm:$0xff]
      %v2628 = vld [vmem:[%s3 + $0x60] sm:$0xff]
      %v2629 = vld [vmem:[%s3 + $0x68] sm:$0xff]
      %v2630 = vld [vmem:[%s3 + $0x70] sm:$0xff]
      %v2631 = vld [vmem:[%s3 + $0x78] sm:$0xff]
      %v2632 = vld [vmem:[%s3 + $0x80] sm:$0xff]
      %v2633 = vld [vmem:[%s3 + $0x88] sm:$0xff]
      %v2634 = vld [vmem:[%s4] sm:$0x1]
      %v2636 = vperm.slane %v2634, 0
      %v2639 = vsel %vm263, %v1458, 0
      %v2642 = vsel %vm263, %v1459, 0
      %v2645 = vsel %vm263, %v1460, 0
      %v2648 = vsel %vm263, %v1461, 0
      %v2651 = vsel %vm263, %v1462, 0
      %v2654 = vsel %vm263, %v1463, 0
      %v2657 = vsel %vm263, %v1464, 0
      %v2660 = vsel %vm263, %v1465, 0
      %v2663 = vsel %vm263, %v1466, 0
      %v2666 = vsel %vm263, %v1467, 0
      %v2669 = vsel %vm263, %v1468, 0
      %v2672 = vsel %vm263, %v1469, 0
      %v2675 = vsel %vm263, %v1470, 0
      %v2678 = vsel %vm263, %v1471, 0
      %v2681 = vsel %vm263, %v1472, 0
      %v2684 = vsel %vm263, %v1473, 0
      %v2687 = vsel %vm263, %v1474, 0
      %v2690 = vsel %vm263, %v1475, 0
      %v2693 = vsel %vm263, %v1476, 0
      %v2696 = vsel %vm263, %v1477, 0
      %v2699 = vsel %vm263, %v1478, 0
      %v2702 = vsel %vm263, %v1479, 0
      %v2705 = vsel %vm263, %v1480, 0
      %v2708 = vsel %vm263, %v1481, 0
      %v2711 = vsel %vm263, %v1482, 0
      %v2714 = vsel %vm263, %v1483, 0
      %v2717 = vsel %vm263, %v1484, 0
      %v2720 = vsel %vm263, %v1485, 0
      %v2723 = vsel %vm263, %v1486, 0
      %v2726 = vsel %vm263, %v1487, 0
      %v2729 = vsel %vm263, %v1488, 0
      %v2732 = vsel %vm263, %v1489, 0
      %2734 = vmatpush.msra.mxu0 %v2631
      %2735 = vmatpush.msra.mxu0 %v2630
      %2736 = vmatpush.msra.mxu0 %v2629
      %2737 = vmatpush.msra.mxu0 %v2628
      %2738 = vmatpush.msra.mxu0 %v2627
      %2739 = vmatpush.msra.mxu0 %v2626
      %2740 = vmatpush.msra.mxu0 %v2625
      %2741 = vmatpush.msra.mxu0 %v2624
      %2742 = vmatpush.msra.mxu0 %v2623
      %2743 = vmatpush.msra.mxu0 %v2622
      %2744 = vmatpush.msra.mxu0 %v2621
      %2745 = vmatpush.msra.mxu0 %v2620
      %2746 = vmatpush.msra.mxu0 %v2619
      %2747 = vmatpush.msra.mxu0 %v2618
      %2748 = vmatpush.msra.mxu0 %v2617
      %2749 = vmatpush.msra.mxu0 %v2616
      %2750 = vmatmul.f32.gmra.mxu0 %v2584
      %v2751 = vpop.f32.mrf.mxu0
      %v2752 = vadd.f32 %v2636, %v2751
      %2753 = vmatmul.f32.gmra.mxu0 %v2585
      %v2754 = vpop.f32.mrf.mxu0
      %v2755 = vadd.f32 %v2636, %v2754
      %2756 = vmatmul.f32.gmra.mxu0 %v2586
      %v2757 = vpop.f32.mrf.mxu0
      %v2758 = vadd.f32 %v2636, %v2757
      %2759 = vmatmul.f32.gmra.mxu0 %v2587
      %v2760 = vpop.f32.mrf.mxu0
      %v2761 = vadd.f32 %v2636, %v2760
      %2762 = vmatmul.f32.gmra.mxu0 %v2588
      %v2763 = vpop.f32.mrf.mxu0
      %v2764 = vadd.f32 %v2636, %v2763
      %2765 = vmatmul.f32.gmra.mxu0 %v2589
      %v2766 = vpop.f32.mrf.mxu0
      %v2767 = vadd.f32 %v2636, %v2766
      %2768 = vmatmul.f32.gmra.mxu0 %v2590
      %v2769 = vpop.f32.mrf.mxu0
      %v2770 = vadd.f32 %v2636, %v2769
      %2771 = vmatmul.f32.gmra.mxu0 %v2591
      %v2772 = vpop.f32.mrf.mxu0
      %v2773 = vadd.f32 %v2636, %v2772
      %2774 = vmatmul.f32.gmra.mxu0 %v2592
      %v2775 = vpop.f32.mrf.mxu0
      %v2776 = vadd.f32 %v2636, %v2775
      %2777 = vmatmul.f32.gmra.mxu0 %v2593
      %v2778 = vpop.f32.mrf.mxu0
      %v2779 = vadd.f32 %v2636, %v2778
      %2780 = vmatmul.f32.gmra.mxu0 %v2594
      %v2781 = vpop.f32.mrf.mxu0
      %v2782 = vadd.f32 %v2636, %v2781
      %2783 = vmatmul.f32.gmra.mxu0 %v2595
      %v2784 = vpop.f32.mrf.mxu0
      %v2785 = vadd.f32 %v2636, %v2784
      %2786 = vmatmul.f32.gmra.mxu0 %v2596
      %v2787 = vpop.f32.mrf.mxu0
      %v2788 = vadd.f32 %v2636, %v2787
      %2789 = vmatmul.f32.gmra.mxu0 %v2597
      %v2790 = vpop.f32.mrf.mxu0
      %v2791 = vadd.f32 %v2636, %v2790
      %2792 = vmatmul.f32.gmra.mxu0 %v2598
      %v2793 = vpop.f32.mrf.mxu0
      %v2794 = vadd.f32 %v2636, %v2793
      %2795 = vmatmul.f32.gmra.mxu0 %v2599
      %v2796 = vpop.f32.mrf.mxu0
      %v2797 = vadd.f32 %v2636, %v2796
      %2798 = vmatmul.f32.gmra.mxu0 %v2600
      %v2799 = vpop.f32.mrf.mxu0
      %v2800 = vadd.f32 %v2636, %v2799
      %2801 = vmatmul.f32.gmra.mxu0 %v2601
      %v2802 = vpop.f32.mrf.mxu0
      %v2803 = vadd.f32 %v2636, %v2802
      %2804 = vmatmul.f32.gmra.mxu0 %v2602
      %v2805 = vpop.f32.mrf.mxu0
      %v2806 = vadd.f32 %v2636, %v2805
      %2807 = vmatmul.f32.gmra.mxu0 %v2603
      %v2808 = vpop.f32.mrf.mxu0
      %v2809 = vadd.f32 %v2636, %v2808
      %2810 = vmatmul.f32.gmra.mxu0 %v2604
      %v2811 = vpop.f32.mrf.mxu0
      %v2812 = vadd.f32 %v2636, %v2811
      %2813 = vmatmul.f32.gmra.mxu0 %v2605
      %v2814 = vpop.f32.mrf.mxu0
      %v2815 = vadd.f32 %v2636, %v2814
      %2816 = vmatmul.f32.gmra.mxu0 %v2606
      %v2817 = vpop.f32.mrf.mxu0
      %v2818 = vadd.f32 %v2636, %v2817
      %2819 = vmatmul.f32.gmra.mxu0 %v2607
      %v2820 = vpop.f32.mrf.mxu0
      %v2821 = vadd.f32 %v2636, %v2820
      %2822 = vmatmul.f32.gmra.mxu0 %v2608
      %v2823 = vpop.f32.mrf.mxu0
      %v2824 = vadd.f32 %v2636, %v2823
      %2825 = vmatmul.f32.gmra.mxu0 %v2609
      %v2826 = vpop.f32.mrf.mxu0
      %v2827 = vadd.f32 %v2636, %v2826
      %2828 = vmatmul.f32.gmra.mxu0 %v2610
      %v2829 = vpop.f32.mrf.mxu0
      %v2830 = vadd.f32 %v2636, %v2829
      %2831 = vmatmul.f32.gmra.mxu0 %v2611
      %v2832 = vpop.f32.mrf.mxu0
      %v2833 = vadd.f32 %v2636, %v2832
      %2834 = vmatmul.f32.gmra.mxu0 %v2612
      %v2835 = vpop.f32.mrf.mxu0
      %v2836 = vadd.f32 %v2636, %v2835
      %2837 = vmatmul.f32.gmra.mxu0 %v2613
      %v2838 = vpop.f32.mrf.mxu0
      %v2839 = vadd.f32 %v2636, %v2838
      %2840 = vmatmul.f32.gmra.mxu0 %v2614
      %v2841 = vpop.f32.mrf.mxu0
      %v2842 = vadd.f32 %v2636, %v2841
      %2843 = vmatmul.f32.gmra.mxu0 %v2615
      %v2844 = vpop.f32.mrf.mxu0
      %v2845 = vadd.f32 %v2636, %v2844
      %2846 = vdwg.mxu0
      %2847 = vmatpush.msra.mxu0 0.0
      %2848 = vmatpush.msra.mxu0 0.0
      %2849 = vmatpush.msra.mxu0 0.0
      %2850 = vmatpush.msra.mxu0 0.0
      %2851 = vmatpush.msra.mxu0 0.0
      %2852 = vmatpush.msra.mxu0 0.0
      %2853 = vmatpush.msra.mxu0 0.0
      %2854 = vmatpush.msra.mxu0 0.0
      %2855 = vmatpush.msra.mxu0 0.0
      %2856 = vmatpush.msra.mxu0 0.0
      %2857 = vmatpush.msra.mxu0 0.0
      %2858 = vmatpush.msra.mxu0 0.0
      %2859 = vmatpush.msra.mxu0 0.0
      %2860 = vmatpush.msra.mxu0 0.0
      %2861 = vmatpush.msra.mxu0 %v2633
      %2862 = vmatpush.msra.mxu0 %v2632
      %2863 = vmatmul.f32.gmra.mxu0 %v2639
      %v2864 = vpop.f32.mrf.mxu0
      %v2865 = vadd.f32 %v2752, %v2864
      %2866 = vmatmul.f32.gmra.mxu0 %v2642
      %v2867 = vpop.f32.mrf.mxu0
      %v2868 = vadd.f32 %v2755, %v2867
      %2869 = vmatmul.f32.gmra.mxu0 %v2645
      %v2870 = vpop.f32.mrf.mxu0
      %v2871 = vadd.f32 %v2758, %v2870
      %2872 = vmatmul.f32.gmra.mxu0 %v2648
      %v2873 = vpop.f32.mrf.mxu0
      %v2874 = vadd.f32 %v2761, %v2873
      %2875 = vmatmul.f32.gmra.mxu0 %v2651
      %v2876 = vpop.f32.mrf.mxu0
      %v2877 = vadd.f32 %v2764, %v2876
      %2878 = vmatmul.f32.gmra.mxu0 %v2654
      %v2879 = vpop.f32.mrf.mxu0
      %v2880 = vadd.f32 %v2767, %v2879
      %2881 = vmatmul.f32.gmra.mxu0 %v2657
      %v2882 = vpop.f32.mrf.mxu0
      %v2883 = vadd.f32 %v2770, %v2882
      %2884 = vmatmul.f32.gmra.mxu0 %v2660
      %v2885 = vpop.f32.mrf.mxu0
      %v2886 = vadd.f32 %v2773, %v2885
      %2887 = vmatmul.f32.gmra.mxu0 %v2663
      %v2888 = vpop.f32.mrf.mxu0
      %v2889 = vadd.f32 %v2776, %v2888
      %2890 = vmatmul.f32.gmra.mxu0 %v2666
      %v2891 = vpop.f32.mrf.mxu0
      %v2892 = vadd.f32 %v2779, %v2891
      %2893 = vmatmul.f32.gmra.mxu0 %v2669
      %v2894 = vpop.f32.mrf.mxu0
      %v2895 = vadd.f32 %v2782, %v2894
      %2896 = vmatmul.f32.gmra.mxu0 %v2672
      %v2897 = vpop.f32.mrf.mxu0
      %v2898 = vadd.f32 %v2785, %v2897
      %2899 = vmatmul.f32.gmra.mxu0 %v2675
      %v2900 = vpop.f32.mrf.mxu0
      %v2901 = vadd.f32 %v2788, %v2900
      %2902 = vmatmul.f32.gmra.mxu0 %v2678
      %v2903 = vpop.f32.mrf.mxu0
      %v2904 = vadd.f32 %v2791, %v2903
      %2905 = vmatmul.f32.gmra.mxu0 %v2681
      %v2906 = vpop.f32.mrf.mxu0
      %v2907 = vadd.f32 %v2794, %v2906
      %2908 = vmatmul.f32.gmra.mxu0 %v2684
      %v2909 = vpop.f32.mrf.mxu0
      %v2910 = vadd.f32 %v2797, %v2909
      %2911 = vmatmul.f32.gmra.mxu0 %v2687
      %v2912 = vpop.f32.mrf.mxu0
      %v2913 = vadd.f32 %v2800, %v2912
      %2914 = vmatmul.f32.gmra.mxu0 %v2690
      %v2915 = vpop.f32.mrf.mxu0
      %v2916 = vadd.f32 %v2803, %v2915
      %2917 = vmatmul.f32.gmra.mxu0 %v2693
      %v2918 = vpop.f32.mrf.mxu0
      %v2919 = vadd.f32 %v2806, %v2918
      %2920 = vmatmul.f32.gmra.mxu0 %v2696
      %v2921 = vpop.f32.mrf.mxu0
      %v2922 = vadd.f32 %v2809, %v2921
      %2923 = vmatmul.f32.gmra.mxu0 %v2699
      %v2924 = vpop.f32.mrf.mxu0
      %v2925 = vadd.f32 %v2812, %v2924
      %2926 = vmatmul.f32.gmra.mxu0 %v2702
      %v2927 = vpop.f32.mrf.mxu0
      %v2928 = vadd.f32 %v2815, %v2927
      %2929 = vmatmul.f32.gmra.mxu0 %v2705
      %v2930 = vpop.f32.mrf.mxu0
      %v2931 = vadd.f32 %v2818, %v2930
      %2932 = vmatmul.f32.gmra.mxu0 %v2708
      %v2933 = vpop.f32.mrf.mxu0
      %v2934 = vadd.f32 %v2821, %v2933
      %2935 = vmatmul.f32.gmra.mxu0 %v2711
      %v2936 = vpop.f32.mrf.mxu0
      %v2937 = vadd.f32 %v2824, %v2936
      %2938 = vmatmul.f32.gmra.mxu0 %v2714
      %v2939 = vpop.f32.mrf.mxu0
      %v2940 = vadd.f32 %v2827, %v2939
      %2941 = vmatmul.f32.gmra.mxu0 %v2717
      %v2942 = vpop.f32.mrf.mxu0
      %v2943 = vadd.f32 %v2830, %v2942
      %2944 = vmatmul.f32.gmra.mxu0 %v2720
      %v2945 = vpop.f32.mrf.mxu0
      %v2946 = vadd.f32 %v2833, %v2945
      %2947 = vmatmul.f32.gmra.mxu0 %v2723
      %v2948 = vpop.f32.mrf.mxu0
      %v2949 = vadd.f32 %v2836, %v2948
      %2950 = vmatmul.f32.gmra.mxu0 %v2726
      %v2951 = vpop.f32.mrf.mxu0
      %v2952 = vadd.f32 %v2839, %v2951
      %2953 = vmatmul.f32.gmra.mxu0 %v2729
      %v2954 = vpop.f32.mrf.mxu0
      %v2955 = vadd.f32 %v2842, %v2954
      %2956 = vmatmul.f32.gmra.mxu0 %v2732
      %v2957 = vpop.f32.mrf.mxu0
      %v2958 = vadd.f32 %v2845, %v2957
      %2959 = vdwg.mxu0
      %v2960 = vxor.u32 %v2865, 2147483648
      %v2961 = vxor.u32 %v2868, 2147483648
      %v2962 = vxor.u32 %v2871, 2147483648
      %v2963 = vxor.u32 %v2874, 2147483648
      %v2964 = vxor.u32 %v2877, 2147483648
      %v2965 = vxor.u32 %v2880, 2147483648
      %v2966 = vxor.u32 %v2883, 2147483648
      %v2967 = vxor.u32 %v2886, 2147483648
      %v2968 = vxor.u32 %v2889, 2147483648
      %v2969 = vxor.u32 %v2892, 2147483648
      %v2970 = vxor.u32 %v2895, 2147483648
      %v2971 = vxor.u32 %v2898, 2147483648
      %v2972 = vxor.u32 %v2901, 2147483648
      %v2973 = vxor.u32 %v2904, 2147483648
      %v2974 = vxor.u32 %v2907, 2147483648
      %v2975 = vxor.u32 %v2910, 2147483648
      %v2976 = vxor.u32 %v2913, 2147483648
      %v2977 = vxor.u32 %v2916, 2147483648
      %v2978 = vxor.u32 %v2919, 2147483648
      %v2979 = vxor.u32 %v2922, 2147483648
      %v2980 = vxor.u32 %v2925, 2147483648
      %v2981 = vxor.u32 %v2928, 2147483648
      %v2982 = vxor.u32 %v2931, 2147483648
      %v2983 = vxor.u32 %v2934, 2147483648
      %v2984 = vxor.u32 %v2937, 2147483648
      %v2985 = vxor.u32 %v2940, 2147483648
      %v2986 = vxor.u32 %v2943, 2147483648
      %v2987 = vxor.u32 %v2946, 2147483648
      %v2988 = vxor.u32 %v2949, 2147483648
      %v2989 = vxor.u32 %v2952, 2147483648
      %v2990 = vxor.u32 %v2955, 2147483648
      %v2991 = vxor.u32 %v2958, 2147483648
      %v2992 = vmul.f32 %v2960, 1.442695
      %v2993 = vpow.pop %v2992
      %v2994 = vmul.f32 %v2961, 1.442695
      %v2995 = vpow.pop %v2994
      %v2996 = vmul.f32 %v2962, 1.442695
      %v2997 = vpow.pop %v2996
      %v2998 = vmul.f32 %v2963, 1.442695
      %v2999 = vpow.pop %v2998
      %v3000 = vmul.f32 %v2964, 1.442695
      %v3001 = vpow.pop %v3000
      %v3002 = vmul.f32 %v2965, 1.442695
      %v3003 = vpow.pop %v3002
      %v3004 = vmul.f32 %v2966, 1.442695
      %v3005 = vpow.pop %v3004
      %v3006 = vmul.f32 %v2967, 1.442695
      %v3007 = vpow.pop %v3006
      %v3008 = vmul.f32 %v2968, 1.442695
      %v3009 = vpow.pop %v3008
      %v3010 = vmul.f32 %v2969, 1.442695
      %v3011 = vpow.pop %v3010
      %v3012 = vmul.f32 %v2970, 1.442695
      %v3013 = vpow.pop %v3012
      %v3014 = vmul.f32 %v2971, 1.442695
      %v3015 = vpow.pop %v3014
      %v3016 = vmul.f32 %v2972, 1.442695
      %v3017 = vpow.pop %v3016
      %v3018 = vmul.f32 %v2973, 1.442695
      %v3019 = vpow.pop %v3018
      %v3020 = vmul.f32 %v2974, 1.442695
      %v3021 = vpow.pop %v3020
      %v3022 = vmul.f32 %v2975, 1.442695
      %v3023 = vpow.pop %v3022
      %v3024 = vmul.f32 %v2976, 1.442695
      %v3025 = vpow.pop %v3024
      %v3026 = vmul.f32 %v2977, 1.442695
      %v3027 = vpow.pop %v3026
      %v3028 = vmul.f32 %v2978, 1.442695
      %v3029 = vpow.pop %v3028
      %v3030 = vmul.f32 %v2979, 1.442695
      %v3031 = vpow.pop %v3030
      %v3032 = vmul.f32 %v2980, 1.442695
      %v3033 = vpow.pop %v3032
      %v3034 = vmul.f32 %v2981, 1.442695
      %v3035 = vpow.pop %v3034
      %v3036 = vmul.f32 %v2982, 1.442695
      %v3037 = vpow.pop %v3036
      %v3038 = vmul.f32 %v2983, 1.442695
      %v3039 = vpow.pop %v3038
      %v3040 = vmul.f32 %v2984, 1.442695
      %v3041 = vpow.pop %v3040
      %v3042 = vmul.f32 %v2985, 1.442695
      %v3043 = vpow.pop %v3042
      %v3044 = vmul.f32 %v2986, 1.442695
      %v3045 = vpow.pop %v3044
      %v3046 = vmul.f32 %v2987, 1.442695
      %v3047 = vpow.pop %v3046
      %v3048 = vmul.f32 %v2988, 1.442695
      %v3049 = vpow.pop %v3048
      %v3050 = vmul.f32 %v2989, 1.442695
      %v3051 = vpow.pop %v3050
      %v3052 = vmul.f32 %v2990, 1.442695
      %v3053 = vpow.pop %v3052
      %v3054 = vmul.f32 %v2991, 1.442695
      %v3055 = vpow.pop %v3054
      %v3056 = vadd.f32 %v2993, 1.0
      %v3057 = vadd.f32 %v2995, 1.0
      %v3058 = vadd.f32 %v2997, 1.0
      %v3059 = vadd.f32 %v2999, 1.0
      %v3060 = vadd.f32 %v3001, 1.0
      %v3061 = vadd.f32 %v3003, 1.0
      %v3062 = vadd.f32 %v3005, 1.0
      %v3063 = vadd.f32 %v3007, 1.0
      %v3064 = vadd.f32 %v3009, 1.0
      %v3065 = vadd.f32 %v3011, 1.0
      %v3066 = vadd.f32 %v3013, 1.0
      %v3067 = vadd.f32 %v3015, 1.0
      %v3068 = vadd.f32 %v3017, 1.0
      %v3069 = vadd.f32 %v3019, 1.0
      %v3070 = vadd.f32 %v3021, 1.0
      %v3071 = vadd.f32 %v3023, 1.0
      %v3072 = vadd.f32 %v3025, 1.0
      %v3073 = vadd.f32 %v3027, 1.0
      %v3074 = vadd.f32 %v3029, 1.0
      %v3075 = vadd.f32 %v3031, 1.0
      %v3076 = vadd.f32 %v3033, 1.0
      %v3077 = vadd.f32 %v3035, 1.0
      %v3078 = vadd.f32 %v3037, 1.0
      %v3079 = vadd.f32 %v3039, 1.0
      %v3080 = vadd.f32 %v3041, 1.0
      %v3081 = vadd.f32 %v3043, 1.0
      %v3082 = vadd.f32 %v3045, 1.0
      %v3083 = vadd.f32 %v3047, 1.0
      %v3084 = vadd.f32 %v3049, 1.0
      %v3085 = vadd.f32 %v3051, 1.0
      %v3086 = vadd.f32 %v3053, 1.0
      %v3087 = vadd.f32 %v3055, 1.0
      %v3088 = vrcp.pop %v3056
      %v3089 = vmul.f32 %v3056, %v3088
      %v3090 = vsub.f32 1.0, %v3089
      %v3091 = vmul.f32 %v3088, %v3090
      %v3092 = vadd.f32 %v3088, %v3091
      %vm3093 = vweird.f32 %v3056
      %vm3094 = vweird.f32 %v3088
      %vm3095 = vmor %vm3093, %vm3094
      %v3096 = vsel %vm3095, %v3088, %v3092
      %v3097 = vand.u32 2147483647, %v3056
      %vm3098 = vcmp.eq.f32.partialorder %v3097, 8.507059e+37
      %v3099 = vand.u32 %v3056, 2147483648
      %v3100 = vor.u32 1.1754944e-38, %v3099
      %v3101 = vsel %vm3098, %v3100, %v3096
      %v3102 = vmul.f32 1.0, %v3101
      %v3103 = vrcp.pop %v3057
      %v3104 = vmul.f32 %v3057, %v3103
      %v3105 = vsub.f32 1.0, %v3104
      %v3106 = vmul.f32 %v3103, %v3105
      %v3107 = vadd.f32 %v3103, %v3106
      %vm3108 = vweird.f32 %v3057
      %vm3109 = vweird.f32 %v3103
      %vm3110 = vmor %vm3108, %vm3109
      %v3111 = vsel %vm3110, %v3103, %v3107
      %v3112 = vand.u32 2147483647, %v3057
      %vm3113 = vcmp.eq.f32.partialorder %v3112, 8.507059e+37
      %v3114 = vand.u32 %v3057, 2147483648
      %v3115 = vor.u32 1.1754944e-38, %v3114
      %v3116 = vsel %vm3113, %v3115, %v3111
      %v3117 = vmul.f32 1.0, %v3116
      %v3118 = vrcp.pop %v3058
      %v3119 = vmul.f32 %v3058, %v3118
      %v3120 = vsub.f32 1.0, %v3119
      %v3121 = vmul.f32 %v3118, %v3120
      %v3122 = vadd.f32 %v3118, %v3121
      %vm3123 = vweird.f32 %v3058
      %vm3124 = vweird.f32 %v3118
      %vm3125 = vmor %vm3123, %vm3124
      %v3126 = vsel %vm3125, %v3118, %v3122
      %v3127 = vand.u32 2147483647, %v3058
      %vm3128 = vcmp.eq.f32.partialorder %v3127, 8.507059e+37
      %v3129 = vand.u32 %v3058, 2147483648
      %v3130 = vor.u32 1.1754944e-38, %v3129
      %v3131 = vsel %vm3128, %v3130, %v3126
      %v3132 = vmul.f32 1.0, %v3131
      %v3133 = vrcp.pop %v3059
      %v3134 = vmul.f32 %v3059, %v3133
      %v3135 = vsub.f32 1.0, %v3134
      %v3136 = vmul.f32 %v3133, %v3135
      %v3137 = vadd.f32 %v3133, %v3136
      %vm3138 = vweird.f32 %v3059
      %vm3139 = vweird.f32 %v3133
      %vm3140 = vmor %vm3138, %vm3139
      %v3141 = vsel %vm3140, %v3133, %v3137
      %v3142 = vand.u32 2147483647, %v3059
      %vm3143 = vcmp.eq.f32.partialorder %v3142, 8.507059e+37
      %v3144 = vand.u32 %v3059, 2147483648
      %v3145 = vor.u32 1.1754944e-38, %v3144
      %v3146 = vsel %vm3143, %v3145, %v3141
      %v3147 = vmul.f32 1.0, %v3146
      %v3148 = vrcp.pop %v3060
      %v3149 = vmul.f32 %v3060, %v3148
      %v3150 = vsub.f32 1.0, %v3149
      %v3151 = vmul.f32 %v3148, %v3150
      %v3152 = vadd.f32 %v3148, %v3151
      %vm3153 = vweird.f32 %v3060
      %vm3154 = vweird.f32 %v3148
      %vm3155 = vmor %vm3153, %vm3154
      %v3156 = vsel %vm3155, %v3148, %v3152
      %v3157 = vand.u32 2147483647, %v3060
      %vm3158 = vcmp.eq.f32.partialorder %v3157, 8.507059e+37
      %v3159 = vand.u32 %v3060, 2147483648
      %v3160 = vor.u32 1.1754944e-38, %v3159
      %v3161 = vsel %vm3158, %v3160, %v3156
      %v3162 = vmul.f32 1.0, %v3161
      %v3163 = vrcp.pop %v3061
      %v3164 = vmul.f32 %v3061, %v3163
      %v3165 = vsub.f32 1.0, %v3164
      %v3166 = vmul.f32 %v3163, %v3165
      %v3167 = vadd.f32 %v3163, %v3166
      %vm3168 = vweird.f32 %v3061
      %vm3169 = vweird.f32 %v3163
      %vm3170 = vmor %vm3168, %vm3169
      %v3171 = vsel %vm3170, %v3163, %v3167
      %v3172 = vand.u32 2147483647, %v3061
      %vm3173 = vcmp.eq.f32.partialorder %v3172, 8.507059e+37
      %v3174 = vand.u32 %v3061, 2147483648
      %v3175 = vor.u32 1.1754944e-38, %v3174
      %v3176 = vsel %vm3173, %v3175, %v3171
      %v3177 = vmul.f32 1.0, %v3176
      %v3178 = vrcp.pop %v3062
      %v3179 = vmul.f32 %v3062, %v3178
      %v3180 = vsub.f32 1.0, %v3179
      %v3181 = vmul.f32 %v3178, %v3180
      %v3182 = vadd.f32 %v3178, %v3181
      %vm3183 = vweird.f32 %v3062
      %vm3184 = vweird.f32 %v3178
      %vm3185 = vmor %vm3183, %vm3184
      %v3186 = vsel %vm3185, %v3178, %v3182
      %v3187 = vand.u32 2147483647, %v3062
      %vm3188 = vcmp.eq.f32.partialorder %v3187, 8.507059e+37
      %v3189 = vand.u32 %v3062, 2147483648
      %v3190 = vor.u32 1.1754944e-38, %v3189
      %v3191 = vsel %vm3188, %v3190, %v3186
      %v3192 = vmul.f32 1.0, %v3191
      %v3193 = vrcp.pop %v3063
      %v3194 = vmul.f32 %v3063, %v3193
      %v3195 = vsub.f32 1.0, %v3194
      %v3196 = vmul.f32 %v3193, %v3195
      %v3197 = vadd.f32 %v3193, %v3196
      %vm3198 = vweird.f32 %v3063
      %vm3199 = vweird.f32 %v3193
      %vm3200 = vmor %vm3198, %vm3199
      %v3201 = vsel %vm3200, %v3193, %v3197
      %v3202 = vand.u32 2147483647, %v3063
      %vm3203 = vcmp.eq.f32.partialorder %v3202, 8.507059e+37
      %v3204 = vand.u32 %v3063, 2147483648
      %v3205 = vor.u32 1.1754944e-38, %v3204
      %v3206 = vsel %vm3203, %v3205, %v3201
      %v3207 = vmul.f32 1.0, %v3206
      %v3208 = vrcp.pop %v3064
      %v3209 = vmul.f32 %v3064, %v3208
      %v3210 = vsub.f32 1.0, %v3209
      %v3211 = vmul.f32 %v3208, %v3210
      %v3212 = vadd.f32 %v3208, %v3211
      %vm3213 = vweird.f32 %v3064
      %vm3214 = vweird.f32 %v3208
      %vm3215 = vmor %vm3213, %vm3214
      %v3216 = vsel %vm3215, %v3208, %v3212
      %v3217 = vand.u32 2147483647, %v3064
      %vm3218 = vcmp.eq.f32.partialorder %v3217, 8.507059e+37
      %v3219 = vand.u32 %v3064, 2147483648
      %v3220 = vor.u32 1.1754944e-38, %v3219
      %v3221 = vsel %vm3218, %v3220, %v3216
      %v3222 = vmul.f32 1.0, %v3221
      %v3223 = vrcp.pop %v3065
      %v3224 = vmul.f32 %v3065, %v3223
      %v3225 = vsub.f32 1.0, %v3224
      %v3226 = vmul.f32 %v3223, %v3225
      %v3227 = vadd.f32 %v3223, %v3226
      %vm3228 = vweird.f32 %v3065
      %vm3229 = vweird.f32 %v3223
      %vm3230 = vmor %vm3228, %vm3229
      %v3231 = vsel %vm3230, %v3223, %v3227
      %v3232 = vand.u32 2147483647, %v3065
      %vm3233 = vcmp.eq.f32.partialorder %v3232, 8.507059e+37
      %v3234 = vand.u32 %v3065, 2147483648
      %v3235 = vor.u32 1.1754944e-38, %v3234
      %v3236 = vsel %vm3233, %v3235, %v3231
      %v3237 = vmul.f32 1.0, %v3236
      %v3238 = vrcp.pop %v3066
      %v3239 = vmul.f32 %v3066, %v3238
      %v3240 = vsub.f32 1.0, %v3239
      %v3241 = vmul.f32 %v3238, %v3240
      %v3242 = vadd.f32 %v3238, %v3241
      %vm3243 = vweird.f32 %v3066
      %vm3244 = vweird.f32 %v3238
      %vm3245 = vmor %vm3243, %vm3244
      %v3246 = vsel %vm3245, %v3238, %v3242
      %v3247 = vand.u32 2147483647, %v3066
      %vm3248 = vcmp.eq.f32.partialorder %v3247, 8.507059e+37
      %v3249 = vand.u32 %v3066, 2147483648
      %v3250 = vor.u32 1.1754944e-38, %v3249
      %v3251 = vsel %vm3248, %v3250, %v3246
      %v3252 = vmul.f32 1.0, %v3251
      %v3253 = vrcp.pop %v3067
      %v3254 = vmul.f32 %v3067, %v3253
      %v3255 = vsub.f32 1.0, %v3254
      %v3256 = vmul.f32 %v3253, %v3255
      %v3257 = vadd.f32 %v3253, %v3256
      %vm3258 = vweird.f32 %v3067
      %vm3259 = vweird.f32 %v3253
      %vm3260 = vmor %vm3258, %vm3259
      %v3261 = vsel %vm3260, %v3253, %v3257
      %v3262 = vand.u32 2147483647, %v3067
      %vm3263 = vcmp.eq.f32.partialorder %v3262, 8.507059e+37
      %v3264 = vand.u32 %v3067, 2147483648
      %v3265 = vor.u32 1.1754944e-38, %v3264
      %v3266 = vsel %vm3263, %v3265, %v3261
      %v3267 = vmul.f32 1.0, %v3266
      %v3268 = vrcp.pop %v3068
      %v3269 = vmul.f32 %v3068, %v3268
      %v3270 = vsub.f32 1.0, %v3269
      %v3271 = vmul.f32 %v3268, %v3270
      %v3272 = vadd.f32 %v3268, %v3271
      %vm3273 = vweird.f32 %v3068
      %vm3274 = vweird.f32 %v3268
      %vm3275 = vmor %vm3273, %vm3274
      %v3276 = vsel %vm3275, %v3268, %v3272
      %v3277 = vand.u32 2147483647, %v3068
      %vm3278 = vcmp.eq.f32.partialorder %v3277, 8.507059e+37
      %v3279 = vand.u32 %v3068, 2147483648
      %v3280 = vor.u32 1.1754944e-38, %v3279
      %v3281 = vsel %vm3278, %v3280, %v3276
      %v3282 = vmul.f32 1.0, %v3281
      %v3283 = vrcp.pop %v3069
      %v3284 = vmul.f32 %v3069, %v3283
      %v3285 = vsub.f32 1.0, %v3284
      %v3286 = vmul.f32 %v3283, %v3285
      %v3287 = vadd.f32 %v3283, %v3286
      %vm3288 = vweird.f32 %v3069
      %vm3289 = vweird.f32 %v3283
      %vm3290 = vmor %vm3288, %vm3289
      %v3291 = vsel %vm3290, %v3283, %v3287
      %v3292 = vand.u32 2147483647, %v3069
      %vm3293 = vcmp.eq.f32.partialorder %v3292, 8.507059e+37
      %v3294 = vand.u32 %v3069, 2147483648
      %v3295 = vor.u32 1.1754944e-38, %v3294
      %v3296 = vsel %vm3293, %v3295, %v3291
      %v3297 = vmul.f32 1.0, %v3296
      %v3298 = vrcp.pop %v3070
      %v3299 = vmul.f32 %v3070, %v3298
      %v3300 = vsub.f32 1.0, %v3299
      %v3301 = vmul.f32 %v3298, %v3300
      %v3302 = vadd.f32 %v3298, %v3301
      %vm3303 = vweird.f32 %v3070
      %vm3304 = vweird.f32 %v3298
      %vm3305 = vmor %vm3303, %vm3304
      %v3306 = vsel %vm3305, %v3298, %v3302
      %v3307 = vand.u32 2147483647, %v3070
      %vm3308 = vcmp.eq.f32.partialorder %v3307, 8.507059e+37
      %v3309 = vand.u32 %v3070, 2147483648
      %v3310 = vor.u32 1.1754944e-38, %v3309
      %v3311 = vsel %vm3308, %v3310, %v3306
      %v3312 = vmul.f32 1.0, %v3311
      %v3313 = vrcp.pop %v3071
      %v3314 = vmul.f32 %v3071, %v3313
      %v3315 = vsub.f32 1.0, %v3314
      %v3316 = vmul.f32 %v3313, %v3315
      %v3317 = vadd.f32 %v3313, %v3316
      %vm3318 = vweird.f32 %v3071
      %vm3319 = vweird.f32 %v3313
      %vm3320 = vmor %vm3318, %vm3319
      %v3321 = vsel %vm3320, %v3313, %v3317
      %v3322 = vand.u32 2147483647, %v3071
      %vm3323 = vcmp.eq.f32.partialorder %v3322, 8.507059e+37
      %v3324 = vand.u32 %v3071, 2147483648
      %v3325 = vor.u32 1.1754944e-38, %v3324
      %v3326 = vsel %vm3323, %v3325, %v3321
      %v3327 = vmul.f32 1.0, %v3326
      %v3328 = vrcp.pop %v3072
      %v3329 = vmul.f32 %v3072, %v3328
      %v3330 = vsub.f32 1.0, %v3329
      %v3331 = vmul.f32 %v3328, %v3330
      %v3332 = vadd.f32 %v3328, %v3331
      %vm3333 = vweird.f32 %v3072
      %vm3334 = vweird.f32 %v3328
      %vm3335 = vmor %vm3333, %vm3334
      %v3336 = vsel %vm3335, %v3328, %v3332
      %v3337 = vand.u32 2147483647, %v3072
      %vm3338 = vcmp.eq.f32.partialorder %v3337, 8.507059e+37
      %v3339 = vand.u32 %v3072, 2147483648
      %v3340 = vor.u32 1.1754944e-38, %v3339
      %v3341 = vsel %vm3338, %v3340, %v3336
      %v3342 = vmul.f32 1.0, %v3341
      %v3343 = vrcp.pop %v3073
      %v3344 = vmul.f32 %v3073, %v3343
      %v3345 = vsub.f32 1.0, %v3344
      %v3346 = vmul.f32 %v3343, %v3345
      %v3347 = vadd.f32 %v3343, %v3346
      %vm3348 = vweird.f32 %v3073
      %vm3349 = vweird.f32 %v3343
      %vm3350 = vmor %vm3348, %vm3349
      %v3351 = vsel %vm3350, %v3343, %v3347
      %v3352 = vand.u32 2147483647, %v3073
      %vm3353 = vcmp.eq.f32.partialorder %v3352, 8.507059e+37
      %v3354 = vand.u32 %v3073, 2147483648
      %v3355 = vor.u32 1.1754944e-38, %v3354
      %v3356 = vsel %vm3353, %v3355, %v3351
      %v3357 = vmul.f32 1.0, %v3356
      %v3358 = vrcp.pop %v3074
      %v3359 = vmul.f32 %v3074, %v3358
      %v3360 = vsub.f32 1.0, %v3359
      %v3361 = vmul.f32 %v3358, %v3360
      %v3362 = vadd.f32 %v3358, %v3361
      %vm3363 = vweird.f32 %v3074
      %vm3364 = vweird.f32 %v3358
      %vm3365 = vmor %vm3363, %vm3364
      %v3366 = vsel %vm3365, %v3358, %v3362
      %v3367 = vand.u32 2147483647, %v3074
      %vm3368 = vcmp.eq.f32.partialorder %v3367, 8.507059e+37
      %v3369 = vand.u32 %v3074, 2147483648
      %v3370 = vor.u32 1.1754944e-38, %v3369
      %v3371 = vsel %vm3368, %v3370, %v3366
      %v3372 = vmul.f32 1.0, %v3371
      %v3373 = vrcp.pop %v3075
      %v3374 = vmul.f32 %v3075, %v3373
      %v3375 = vsub.f32 1.0, %v3374
      %v3376 = vmul.f32 %v3373, %v3375
      %v3377 = vadd.f32 %v3373, %v3376
      %vm3378 = vweird.f32 %v3075
      %vm3379 = vweird.f32 %v3373
      %vm3380 = vmor %vm3378, %vm3379
      %v3381 = vsel %vm3380, %v3373, %v3377
      %v3382 = vand.u32 2147483647, %v3075
      %vm3383 = vcmp.eq.f32.partialorder %v3382, 8.507059e+37
      %v3384 = vand.u32 %v3075, 2147483648
      %v3385 = vor.u32 1.1754944e-38, %v3384
      %v3386 = vsel %vm3383, %v3385, %v3381
      %v3387 = vmul.f32 1.0, %v3386
      %v3388 = vrcp.pop %v3076
      %v3389 = vmul.f32 %v3076, %v3388
      %v3390 = vsub.f32 1.0, %v3389
      %v3391 = vmul.f32 %v3388, %v3390
      %v3392 = vadd.f32 %v3388, %v3391
      %vm3393 = vweird.f32 %v3076
      %vm3394 = vweird.f32 %v3388
      %vm3395 = vmor %vm3393, %vm3394
      %v3396 = vsel %vm3395, %v3388, %v3392
      %v3397 = vand.u32 2147483647, %v3076
      %vm3398 = vcmp.eq.f32.partialorder %v3397, 8.507059e+37
      %v3399 = vand.u32 %v3076, 2147483648
      %v3400 = vor.u32 1.1754944e-38, %v3399
      %v3401 = vsel %vm3398, %v3400, %v3396
      %v3402 = vmul.f32 1.0, %v3401
      %v3403 = vrcp.pop %v3077
      %v3404 = vmul.f32 %v3077, %v3403
      %v3405 = vsub.f32 1.0, %v3404
      %v3406 = vmul.f32 %v3403, %v3405
      %v3407 = vadd.f32 %v3403, %v3406
      %vm3408 = vweird.f32 %v3077
      %vm3409 = vweird.f32 %v3403
      %vm3410 = vmor %vm3408, %vm3409
      %v3411 = vsel %vm3410, %v3403, %v3407
      %v3412 = vand.u32 2147483647, %v3077
      %vm3413 = vcmp.eq.f32.partialorder %v3412, 8.507059e+37
      %v3414 = vand.u32 %v3077, 2147483648
      %v3415 = vor.u32 1.1754944e-38, %v3414
      %v3416 = vsel %vm3413, %v3415, %v3411
      %v3417 = vmul.f32 1.0, %v3416
      %v3418 = vrcp.pop %v3078
      %v3419 = vmul.f32 %v3078, %v3418
      %v3420 = vsub.f32 1.0, %v3419
      %v3421 = vmul.f32 %v3418, %v3420
      %v3422 = vadd.f32 %v3418, %v3421
      %vm3423 = vweird.f32 %v3078
      %vm3424 = vweird.f32 %v3418
      %vm3425 = vmor %vm3423, %vm3424
      %v3426 = vsel %vm3425, %v3418, %v3422
      %v3427 = vand.u32 2147483647, %v3078
      %vm3428 = vcmp.eq.f32.partialorder %v3427, 8.507059e+37
      %v3429 = vand.u32 %v3078, 2147483648
      %v3430 = vor.u32 1.1754944e-38, %v3429
      %v3431 = vsel %vm3428, %v3430, %v3426
      %v3432 = vmul.f32 1.0, %v3431
      %v3433 = vrcp.pop %v3079
      %v3434 = vmul.f32 %v3079, %v3433
      %v3435 = vsub.f32 1.0, %v3434
      %v3436 = vmul.f32 %v3433, %v3435
      %v3437 = vadd.f32 %v3433, %v3436
      %vm3438 = vweird.f32 %v3079
      %vm3439 = vweird.f32 %v3433
      %vm3440 = vmor %vm3438, %vm3439
      %v3441 = vsel %vm3440, %v3433, %v3437
      %v3442 = vand.u32 2147483647, %v3079
      %vm3443 = vcmp.eq.f32.partialorder %v3442, 8.507059e+37
      %v3444 = vand.u32 %v3079, 2147483648
      %v3445 = vor.u32 1.1754944e-38, %v3444
      %v3446 = vsel %vm3443, %v3445, %v3441
      %v3447 = vmul.f32 1.0, %v3446
      %v3448 = vrcp.pop %v3080
      %v3449 = vmul.f32 %v3080, %v3448
      %v3450 = vsub.f32 1.0, %v3449
      %v3451 = vmul.f32 %v3448, %v3450
      %v3452 = vadd.f32 %v3448, %v3451
      %vm3453 = vweird.f32 %v3080
      %vm3454 = vweird.f32 %v3448
      %vm3455 = vmor %vm3453, %vm3454
      %v3456 = vsel %vm3455, %v3448, %v3452
      %v3457 = vand.u32 2147483647, %v3080
      %vm3458 = vcmp.eq.f32.partialorder %v3457, 8.507059e+37
      %v3459 = vand.u32 %v3080, 2147483648
      %v3460 = vor.u32 1.1754944e-38, %v3459
      %v3461 = vsel %vm3458, %v3460, %v3456
      %v3462 = vmul.f32 1.0, %v3461
      %v3463 = vrcp.pop %v3081
      %v3464 = vmul.f32 %v3081, %v3463
      %v3465 = vsub.f32 1.0, %v3464
      %v3466 = vmul.f32 %v3463, %v3465
      %v3467 = vadd.f32 %v3463, %v3466
      %vm3468 = vweird.f32 %v3081
      %vm3469 = vweird.f32 %v3463
      %vm3470 = vmor %vm3468, %vm3469
      %v3471 = vsel %vm3470, %v3463, %v3467
      %v3472 = vand.u32 2147483647, %v3081
      %vm3473 = vcmp.eq.f32.partialorder %v3472, 8.507059e+37
      %v3474 = vand.u32 %v3081, 2147483648
      %v3475 = vor.u32 1.1754944e-38, %v3474
      %v3476 = vsel %vm3473, %v3475, %v3471
      %v3477 = vmul.f32 1.0, %v3476
      %v3478 = vrcp.pop %v3082
      %v3479 = vmul.f32 %v3082, %v3478
      %v3480 = vsub.f32 1.0, %v3479
      %v3481 = vmul.f32 %v3478, %v3480
      %v3482 = vadd.f32 %v3478, %v3481
      %vm3483 = vweird.f32 %v3082
      %vm3484 = vweird.f32 %v3478
      %vm3485 = vmor %vm3483, %vm3484
      %v3486 = vsel %vm3485, %v3478, %v3482
      %v3487 = vand.u32 2147483647, %v3082
      %vm3488 = vcmp.eq.f32.partialorder %v3487, 8.507059e+37
      %v3489 = vand.u32 %v3082, 2147483648
      %v3490 = vor.u32 1.1754944e-38, %v3489
      %v3491 = vsel %vm3488, %v3490, %v3486
      %v3492 = vmul.f32 1.0, %v3491
      %v3493 = vrcp.pop %v3083
      %v3494 = vmul.f32 %v3083, %v3493
      %v3495 = vsub.f32 1.0, %v3494
      %v3496 = vmul.f32 %v3493, %v3495
      %v3497 = vadd.f32 %v3493, %v3496
      %vm3498 = vweird.f32 %v3083
      %vm3499 = vweird.f32 %v3493
      %vm3500 = vmor %vm3498, %vm3499
      %v3501 = vsel %vm3500, %v3493, %v3497
      %v3502 = vand.u32 2147483647, %v3083
      %vm3503 = vcmp.eq.f32.partialorder %v3502, 8.507059e+37
      %v3504 = vand.u32 %v3083, 2147483648
      %v3505 = vor.u32 1.1754944e-38, %v3504
      %v3506 = vsel %vm3503, %v3505, %v3501
      %v3507 = vmul.f32 1.0, %v3506
      %v3508 = vrcp.pop %v3084
      %v3509 = vmul.f32 %v3084, %v3508
      %v3510 = vsub.f32 1.0, %v3509
      %v3511 = vmul.f32 %v3508, %v3510
      %v3512 = vadd.f32 %v3508, %v3511
      %vm3513 = vweird.f32 %v3084
      %vm3514 = vweird.f32 %v3508
      %vm3515 = vmor %vm3513, %vm3514
      %v3516 = vsel %vm3515, %v3508, %v3512
      %v3517 = vand.u32 2147483647, %v3084
      %vm3518 = vcmp.eq.f32.partialorder %v3517, 8.507059e+37
      %v3519 = vand.u32 %v3084, 2147483648
      %v3520 = vor.u32 1.1754944e-38, %v3519
      %v3521 = vsel %vm3518, %v3520, %v3516
      %v3522 = vmul.f32 1.0, %v3521
      %v3523 = vrcp.pop %v3085
      %v3524 = vmul.f32 %v3085, %v3523
      %v3525 = vsub.f32 1.0, %v3524
      %v3526 = vmul.f32 %v3523, %v3525
      %v3527 = vadd.f32 %v3523, %v3526
      %vm3528 = vweird.f32 %v3085
      %vm3529 = vweird.f32 %v3523
      %vm3530 = vmor %vm3528, %vm3529
      %v3531 = vsel %vm3530, %v3523, %v3527
      %v3532 = vand.u32 2147483647, %v3085
      %vm3533 = vcmp.eq.f32.partialorder %v3532, 8.507059e+37
      %v3534 = vand.u32 %v3085, 2147483648
      %v3535 = vor.u32 1.1754944e-38, %v3534
      %v3536 = vsel %vm3533, %v3535, %v3531
      %v3537 = vmul.f32 1.0, %v3536
      %v3538 = vrcp.pop %v3086
      %v3539 = vmul.f32 %v3086, %v3538
      %v3540 = vsub.f32 1.0, %v3539
      %v3541 = vmul.f32 %v3538, %v3540
      %v3542 = vadd.f32 %v3538, %v3541
      %vm3543 = vweird.f32 %v3086
      %vm3544 = vweird.f32 %v3538
      %vm3545 = vmor %vm3543, %vm3544
      %v3546 = vsel %vm3545, %v3538, %v3542
      %v3547 = vand.u32 2147483647, %v3086
      %vm3548 = vcmp.eq.f32.partialorder %v3547, 8.507059e+37
      %v3549 = vand.u32 %v3086, 2147483648
      %v3550 = vor.u32 1.1754944e-38, %v3549
      %v3551 = vsel %vm3548, %v3550, %v3546
      %v3552 = vmul.f32 1.0, %v3551
      %v3553 = vrcp.pop %v3087
      %v3554 = vmul.f32 %v3087, %v3553
      %v3555 = vsub.f32 1.0, %v3554
      %v3556 = vmul.f32 %v3553, %v3555
      %v3557 = vadd.f32 %v3553, %v3556
      %vm3558 = vweird.f32 %v3087
      %vm3559 = vweird.f32 %v3553
      %vm3560 = vmor %vm3558, %vm3559
      %v3561 = vsel %vm3560, %v3553, %v3557
      %v3562 = vand.u32 2147483647, %v3087
      %vm3563 = vcmp.eq.f32.partialorder %v3562, 8.507059e+37
      %v3564 = vand.u32 %v3087, 2147483648
      %v3565 = vor.u32 1.1754944e-38, %v3564
      %v3566 = vsel %vm3563, %v3565, %v3561
      %v3567 = vmul.f32 1.0, %v3566
      %v3568 = vmul.f32 %v2865, %v3102
      %v3569 = vmul.f32 %v2868, %v3117
      %v3570 = vmul.f32 %v2871, %v3132
      %v3571 = vmul.f32 %v2874, %v3147
      %v3572 = vmul.f32 %v2877, %v3162
      %v3573 = vmul.f32 %v2880, %v3177
      %v3574 = vmul.f32 %v2883, %v3192
      %v3575 = vmul.f32 %v2886, %v3207
      %v3576 = vmul.f32 %v2889, %v3222
      %v3577 = vmul.f32 %v2892, %v3237
      %v3578 = vmul.f32 %v2895, %v3252
      %v3579 = vmul.f32 %v2898, %v3267
      %v3580 = vmul.f32 %v2901, %v3282
      %v3581 = vmul.f32 %v2904, %v3297
      %v3582 = vmul.f32 %v2907, %v3312
      %v3583 = vmul.f32 %v2910, %v3327
      %v3584 = vmul.f32 %v2913, %v3342
      %v3585 = vmul.f32 %v2916, %v3357
      %v3586 = vmul.f32 %v2919, %v3372
      %v3587 = vmul.f32 %v2922, %v3387
      %v3588 = vmul.f32 %v2925, %v3402
      %v3589 = vmul.f32 %v2928, %v3417
      %v3590 = vmul.f32 %v2931, %v3432
      %v3591 = vmul.f32 %v2934, %v3447
      %v3592 = vmul.f32 %v2937, %v3462
      %v3593 = vmul.f32 %v2940, %v3477
      %v3594 = vmul.f32 %v2943, %v3492
      %v3595 = vmul.f32 %v2946, %v3507
      %v3596 = vmul.f32 %v2949, %v3522
      %v3597 = vmul.f32 %v2952, %v3537
      %v3598 = vmul.f32 %v2955, %v3552
      %v3599 = vmul.f32 %v2958, %v3567
      %v3600 = vadd.f32 %v3568, %v225
      %v3601 = vadd.f32 %v3569, %v226
      %v3602 = vadd.f32 %v3570, %v227
      %v3603 = vadd.f32 %v3571, %v228
      %v3604 = vadd.f32 %v3572, %v229
      %v3605 = vadd.f32 %v3573, %v230
      %v3606 = vadd.f32 %v3574, %v231
      %v3607 = vadd.f32 %v3575, %v232
      %v3608 = vadd.f32 %v3576, %v233
      %v3609 = vadd.f32 %v3577, %v234
      %v3610 = vadd.f32 %v3578, %v235
      %v3611 = vadd.f32 %v3579, %v236
      %v3612 = vadd.f32 %v3580, %v237
      %v3613 = vadd.f32 %v3581, %v238
      %v3614 = vadd.f32 %v3582, %v239
      %v3615 = vadd.f32 %v3583, %v240
      %v3616 = vadd.f32 %v3584, %v241
      %v3617 = vadd.f32 %v3585, %v242
      %v3618 = vadd.f32 %v3586, %v243
      %v3619 = vadd.f32 %v3587, %v244
      %v3620 = vadd.f32 %v3588, %v245
      %v3621 = vadd.f32 %v3589, %v246
      %v3622 = vadd.f32 %v3590, %v247
      %v3623 = vadd.f32 %v3591, %v248
      %v3624 = vadd.f32 %v3592, %v249
      %v3625 = vadd.f32 %v3593, %v250
      %v3626 = vadd.f32 %v3594, %v251
      %v3627 = vadd.f32 %v3595, %v252
      %v3628 = vadd.f32 %v3596, %v253
      %v3629 = vadd.f32 %v3597, %v254
      %v3630 = vadd.f32 %v3598, %v255
      %v3631 = vadd.f32 %v3599, %v256
      %3632 = vst.msk [vmem:[%s224] sm:$0xff] %vm263, %v3600
      %3633 = vst.msk [vmem:[%s224 + $0x8] sm:$0xff] %vm263, %v3601
      %3634 = vst.msk [vmem:[%s224 + $0x10] sm:$0xff] %vm263, %v3602
      %3635 = vst.msk [vmem:[%s224 + $0x18] sm:$0xff] %vm263, %v3603
      %3636 = vst.msk [vmem:[%s224 + $0x20] sm:$0xff] %vm263, %v3604
      %3637 = vst.msk [vmem:[%s224 + $0x28] sm:$0xff] %vm263, %v3605
      %3638 = vst.msk [vmem:[%s224 + $0x30] sm:$0xff] %vm263, %v3606
      %3639 = vst.msk [vmem:[%s224 + $0x38] sm:$0xff] %vm263, %v3607
      %3640 = vst.msk [vmem:[%s224 + $0x40] sm:$0xff] %vm263, %v3608
      %3641 = vst.msk [vmem:[%s224 + $0x48] sm:$0xff] %vm263, %v3609
      %3642 = vst.msk [vmem:[%s224 + $0x50] sm:$0xff] %vm263, %v3610
      %3643 = vst.msk [vmem:[%s224 + $0x58] sm:$0xff] %vm263, %v3611
      %3644 = vst.msk [vmem:[%s224 + $0x60] sm:$0xff] %vm263, %v3612
      %3645 = vst.msk [vmem:[%s224 + $0x68] sm:$0xff] %vm263, %v3613
      %3646 = vst.msk [vmem:[%s224 + $0x70] sm:$0xff] %vm263, %v3614
      %3647 = vst.msk [vmem:[%s224 + $0x78] sm:$0xff] %vm263, %v3615
      %3648 = vst.msk [vmem:[%s224 + $0x80] sm:$0xff] %vm263, %v3616
      %3649 = vst.msk [vmem:[%s224 + $0x88] sm:$0xff] %vm263, %v3617
      %3650 = vst.msk [vmem:[%s224 + $0x90] sm:$0xff] %vm263, %v3618
      %3651 = vst.msk [vmem:[%s224 + $0x98] sm:$0xff] %vm263, %v3619
      %3652 = vst.msk [vmem:[%s224 + $0xa0] sm:$0xff] %vm263, %v3620
      %3653 = vst.msk [vmem:[%s224 + $0xa8] sm:$0xff] %vm263, %v3621
      %3654 = vst.msk [vmem:[%s224 + $0xb0] sm:$0xff] %vm263, %v3622
      %3655 = vst.msk [vmem:[%s224 + $0xb8] sm:$0xff] %vm263, %v3623
      %3656 = vst.msk [vmem:[%s224 + $0xc0] sm:$0xff] %vm263, %v3624
      %3657 = vst.msk [vmem:[%s224 + $0xc8] sm:$0xff] %vm263, %v3625
      %3658 = vst.msk [vmem:[%s224 + $0xd0] sm:$0xff] %vm263, %v3626
      %3659 = vst.msk [vmem:[%s224 + $0xd8] sm:$0xff] %vm263, %v3627
      %3660 = vst.msk [vmem:[%s224 + $0xe0] sm:$0xff] %vm263, %v3628
      %3661 = vst.msk [vmem:[%s224 + $0xe8] sm:$0xff] %vm263, %v3629
      %3662 = vst.msk [vmem:[%s224 + $0xf0] sm:$0xff] %vm263, %v3630
      %3663 = vst.msk [vmem:[%s224 + $0xf8] sm:$0xff] %vm263, %v3631
      %p3664 = scmp.lt.s32.totalorder %s16, 1
      %s3665 = scalar_select %p3664, %s16, 1
      %s3666 = smul.addr %s3665, 32
      %s3667 = smul.addr %s3666, 8
      %s3668 = scalar_lea.vmem %s5, %s3667
      // Predicated region
      $region41: #{c3_pallas.5} parent=39 // pred_check
        %p3669 = pneg %p144
      $region42: #{c3_pallas.5} parent=39 // pred_check_branch
        %3671 = sbr.rel (%p3669) target = $region44
      $region43: #{c3_pallas.5} parent=39 // pred_region
        _
      $region44: #{c3_pallas.5} parent=39 // pred_fallthru
        _
    $region40: #{c3_pallas.5} parent=5 // pred_fallthru
      _
    %p3672 = scmp.le.s32.totalorder 2, %s11
    // Predicated region
    $region45: #{c3_pallas.5} parent=5 // pred_check
      %p3673 = pneg %p3672
    $region46: #{c3_pallas.5} parent=5 // pred_check_branch
      %3675 = sbr.rel (%p3673) target = $region48
    $region47: #{c3_pallas.5} parent=5 // pred_region
      %s3676 = ssub.s32 %s11, 2
      // Predicated region
      $region49: #{c3_pallas.5} parent=47 // pred_check
        %p3677 = pneg %p150
      $region50: #{c3_pallas.5} parent=47 // pred_check_branch
        %3679 = sbr.rel (%p3677) target = $region52
      $region51: #{c3_pallas.5} parent=47 // pred_region
        %p3680 = scmp.lt.s32.totalorder %s17, 1
        %s3681 = scalar_select %p3680, %s17, 1
        %s3682 = smul.addr %s3681, 32
        %s3683 = smul.addr %s3682, 8
        %s3684 = scalar_lea.vmem %s5, %s3683
      $region52: #{c3_pallas.5} parent=47 // pred_fallthru
        _
    $region48: #{c3_pallas.5} parent=5 // pred_fallthru
      _
  $region6: #{c3_pallas.5} parent=0 // loop_footer
    %s15 = sadd.s32 1, %s11
  $region7: #{c3_pallas.5} parent=0 // loop_footer_branch
    %10 = sbr.rel target = $region3
  $region8: #{c3_pallas.5} parent=0 // loop_exit
    _

</llo_original>
